<compile_context>
chip_gen: v6e
topology: v6e:2x2x1
jax: 0.10.0
libtpu: 0.0.40
codegen_flags: <defaults>
</compile_context>

<pallas_src>
import functools

import jax
import jax.numpy as jnp
from jax.experimental import pallas as pl
from jax.experimental.pallas import tpu as pltpu

_LANE = 128
_SUB = 16                      # bf16 sublane packing (rows per vreg slab)
_COMPUTE_DTYPE = jnp.bfloat16  # MXU input dtype; accumulation stays f32


def _round_up(x, m):
    return (x + m - 1) // m * m


def _leaky(x, slope):
    return jnp.where(x > 0, x, slope * x)


def _conv_block_kernel(
    x_ref, w1_ref, b1_ref, w2_ref, b2_ref, w3_ref, b3_ref,
    o_ref, h1_ref, h2_ref, *, k2, k3, c1, c2, m_rows, slope,
):
    """Fused Conv1d(+LeakyReLU) x3 over a batch tile.

    Row layout: every sample occupies a fixed row stride S inside the block;
    all m_rows = B_TILE * S rows are pushed through every matmul so the batch
    is stacked into the MXU M dimension.  Rows past a sample's valid length
    carry garbage and are sliced off in the wrapper.
    """
    # ---- Layer 1: wrapper-side im2col -> one (M, 256) @ (256, 512) matmul.
    acc1 = jnp.dot(x_ref[...], w1_ref[...], preferred_element_type=jnp.float32)
    acc1 = acc1 + b1_ref[...]
    h1_ref[pl.ds(0, m_rows), :] = _leaky(acc1, slope).astype(h1_ref.dtype)
    # Zero the halo tail so layer-2 tap reads past the last sample are defined.
    r1 = h1_ref.shape[0]
    h1_ref[pl.ds(m_rows, r1 - m_rows), :] = jnp.zeros(
        (r1 - m_rows, h1_ref.shape[1]), h1_ref.dtype)

    # ---- Layer 2: per-tap accumulate (no materialized im2col concat).
    acc2 = jnp.dot(h1_ref[pl.ds(0, m_rows), :], w2_ref[pl.ds(0, c1), :],
                   preferred_element_type=jnp.float32)
    for k in range(1, k2):
        acc2 = acc2 + jnp.dot(h1_ref[pl.ds(k, m_rows), :],
                              w2_ref[pl.ds(k * c1, c1), :],
                              preferred_element_type=jnp.float32)
    acc2 = acc2 + b2_ref[...]
    h2_ref[pl.ds(0, m_rows), :] = _leaky(acc2, slope).astype(h2_ref.dtype)
    r2 = h2_ref.shape[0]
    h2_ref[pl.ds(m_rows, r2 - m_rows), :] = jnp.zeros(
        (r2 - m_rows, h2_ref.shape[1]), h2_ref.dtype)

    # ---- Layer 3: per-tap accumulate, result straight to the output block.
    acc3 = jnp.dot(h2_ref[pl.ds(0, m_rows), :], w3_ref[pl.ds(0, c2), :],
                   preferred_element_type=jnp.float32)
    for k in range(1, k3):
        acc3 = acc3 + jnp.dot(h2_ref[pl.ds(k, m_rows), :],
                              w3_ref[pl.ds(k * c2, c2), :],
                              preferred_element_type=jnp.float32)
    acc3 = acc3 + b3_ref[...]
    o_ref[...] = _leaky(acc3, slope).astype(o_ref.dtype)


def _flatten_weight(w, rows_pad=None):
    """PyTorch Conv1d weight (C_out, C_in, K) -> im2col (K*C_in, C_out) bf16,
    optionally zero-padded along the contraction rows (exact: padded rows are
    matched by zero input columns)."""
    c_out, c_in, k = w.shape
    wf = jnp.transpose(w, (2, 1, 0)).reshape(k * c_in, c_out)
    if rows_pad is not None and rows_pad > k * c_in:
        wf = jnp.pad(wf, ((0, rows_pad - k * c_in), (0, 0)))
    return wf.astype(_COMPUTE_DTYPE)


def conv_block_forward(x_ncl, params, *, slope=0.1, batch_tile=4):
    """Fused Pallas ConvBlock forward.  x_ncl: (N, C_in, L) -> (N, 128, L - 20)."""
    (w1, b1), (w2, b2), (w3, b3) = params
    N, C_in, L_in = x_ncl.shape
    C1, _, K1 = w1.shape
    C2, _, K2 = w2.shape
    C3, _, K3 = w3.shape
    L1 = L_in - K1 + 1
    L2 = L1 - K2 + 1
    L3 = L2 - K3 + 1
    assert L3 > 0, "input too short for the 21-sample receptive field"

    B = max(1, min(batch_tile, N))      # samples stacked per grid step
    N_pad = _round_up(N, B)
    S = _round_up(L1, _SUB)             # per-sample row stride (sublane aligned)
    M = B * S                           # matmul M rows per grid step

    # Layer-1 im2col in the wrapper: contraction is K1*C_in (=160) padded to
    # the next lane multiple (256) instead of a 4x zero-padded 128*K1.
    D1 = K1 * C_in
    D1_pad = _round_up(D1, _LANE)
    x_nlc = jnp.transpose(x_ncl, (0, 2, 1)).astype(_COMPUTE_DTYPE)  # (N, L_in, C_in)
    win = jnp.concatenate([x_nlc[:, k:k + L1, :] for k in range(K1)], axis=-1)
    win = jnp.pad(win, ((0, N_pad - N), (0, S - L1), (0, D1_pad - D1)))
    x2d = win.reshape(N_pad * S, D1_pad)                            # (N_pad*S, 256)

    w1f = _flatten_weight(w1, D1_pad)   # (256, 512)
    w2f = _flatten_weight(w2)           # (K2*512, 256)
    w3f = _flatten_weight(w3)           # (K3*256, 128)
    b1r = b1.reshape(1, C1).astype(jnp.float32)
    b2r = b2.reshape(1, C2).astype(jnp.float32)
    b3r = b3.reshape(1, C3).astype(jnp.float32)

    # Grid-invariant operands: constant index map (one DMA) + single buffer.
    def const_spec(arr):
        ndim = arr.ndim
        return pl.BlockSpec(arr.shape, lambda n: (0,) * ndim,
                            pipeline_mode=pl.Buffered(1))

    # VMEM scratch for the intermediate activations (+ halo rows for the
    # per-tap reads that run past the last sample's slab).
    R1 = _round_up(M + K2 - 1, _SUB)
    R2 = _round_up(M + K3 - 1, _SUB)

    steps = N_pad // B
    flops = 2 * steps * M * (D1_pad * C1 + K2 * C1 * C2 + K3 * C2 * C3)
    bytes_accessed = (
        x2d.size * 2 + w1f.size * 2 + w2f.size * 2 + w3f.size * 2
        + (b1r.size + b2r.size + b3r.size) * 4 + N_pad * S * C3 * 4)
    cost = pl.CostEstimate(flops=flops, transcendentals=0,
                           bytes_accessed=bytes_accessed)

    kernel = functools.partial(
        _conv_block_kernel, k2=K2, k3=K3, c1=C1, c2=C2, m_rows=M, slope=slope)

    out2d = pl.pallas_call(
        kernel,
        out_shape=jax.ShapeDtypeStruct((N_pad * S, C3), jnp.float32),
        grid=(steps,),
        in_specs=[
            pl.BlockSpec((M, D1_pad), lambda n: (n, 0)),
            const_spec(w1f), const_spec(b1r),
            const_spec(w2f), const_spec(b2r),
            const_spec(w3f), const_spec(b3r),
        ],
        out_specs=pl.BlockSpec((M, C3), lambda n: (n, 0)),
        scratch_shapes=[
            pltpu.VMEM((R1, C1), _COMPUTE_DTYPE),  # layer-1 activation (VMEM only)
            pltpu.VMEM((R2, C2), _COMPUTE_DTYPE),  # layer-2 activation (VMEM only)
        ],
        compiler_params=pltpu.CompilerParams(
            dimension_semantics=("parallel",),     # megacore / v7x 2-TC sharding
        ),
        cost_estimate=cost,
    )(x2d, w1f, b1r, w2f, b2r, w3f, b3r)

    # Valid rows per sample are the first L3 of each stride-S slab.
    out = out2d.reshape(N_pad, S, C3)[:N, :L3, :]
    return jnp.transpose(out, (0, 2, 1))           # NLC -> NCL


def conv_block_reference(x_ncl, params, *, slope=0.1):
    """Pure-JAX reference (NCL), mirroring the kernel's bf16-in / f32-acc math."""
    x = x_ncl
    for w, b in params:
        y = jax.lax.conv_general_dilated(
            x.astype(_COMPUTE_DTYPE), w.astype(_COMPUTE_DTYPE),
            window_strides=(1,), padding="VALID",
            dimension_numbers=("NCH", "OIH", "NCH"),
            preferred_element_type=jnp.float32,
        )
        y = y + b[None, :, None].astype(jnp.float32)
        x = jnp.where(y > 0, y, slope * y)
    return x


def init_conv_params(key, c_out, c_in, k):
    """PyTorch-default-like uniform init: U(-1/sqrt(fan_in), 1/sqrt(fan_in))."""
    kw, kb = jax.random.split(key)
    bound = 1.0 / jnp.sqrt(jnp.float32(c_in * k))
    w = jax.random.uniform(kw, (c_out, c_in, k), jnp.float32, -bound, bound)
    b = jax.random.uniform(kb, (c_out,), jnp.float32, -bound, bound)
    return w, b


if __name__ == "__main__":
    # Small shapes consistent with ConvBlock(input_dim=32): the conv channel
    # sizes 32 -> 512 -> 256 -> 128 and kernel sizes 5/7/11 are fixed by the
    # module; N=8 with batch_tile=4 gives 2 parallel grid steps.
    N, C_IN, L = 8, 32, 48

    root = jax.random.PRNGKey(0)
    k_x, k1, k2, k3 = jax.random.split(root, 4)

    x = jax.random.normal(k_x, (N, C_IN, L), jnp.float32)
    params = [
        init_conv_params(k1, 512, C_IN, 5),
        init_conv_params(k2, 256, 512, 7),
        init_conv_params(k3, 128, 256, 11),
    ]

    fwd = jax.jit(conv_block_forward)
    out = jax.block_until_ready(fwd(x, params))
    ref = jax.block_until_ready(conv_block_reference(x, params))

    assert out.shape == (N, 128, L - 20), out.shape
    max_err = float(jnp.max(jnp.abs(out - ref)))
    assert jnp.allclose(out, ref, rtol=5e-3, atol=5e-3), max_err
    print("KERNEL_OK")
</pallas_src>

<mosaic_0001>
module attributes {stable_mosaic.version = 11 : i64} {
  func.func @_conv_block_kernel(%arg0: i32, %arg1: memref<192x256xbf16, #tpu.memory_space<vmem>>, %arg2: memref<256x512xbf16, #tpu.memory_space<vmem>>, %arg3: memref<1x512xf32, #tpu.memory_space<vmem>>, %arg4: memref<3584x256xbf16, #tpu.memory_space<vmem>>, %arg5: memref<1x256xf32, #tpu.memory_space<vmem>>, %arg6: memref<2816x128xbf16, #tpu.memory_space<vmem>>, %arg7: memref<1x128xf32, #tpu.memory_space<vmem>>, %arg8: memref<192x128xf32, #tpu.memory_space<vmem>>, %arg9: memref<208x512xbf16, #tpu.memory_space<vmem>>, %arg10: memref<208x256xbf16, #tpu.memory_space<vmem>>) attributes {dimension_semantics = [#tpu.dimension_semantics<parallel>], iteration_bounds = array<i64: 2>, scalar_prefetch = 0 : i64, scratch_operands = 2 : i64, tpu.core_type = #tpu.core_type<tc>, window_params = [{transform_indices = @transform_0, window_bounds = array<i64: 192, 256>}, {pipeline_mode = #tpu.pipeline_mode<synchronous>, transform_indices = @transform_1, window_bounds = array<i64: 256, 512>}, {pipeline_mode = #tpu.pipeline_mode<synchronous>, transform_indices = @transform_2, window_bounds = array<i64: 1, 512>}, {pipeline_mode = #tpu.pipeline_mode<synchronous>, transform_indices = @transform_3, window_bounds = array<i64: 3584, 256>}, {pipeline_mode = #tpu.pipeline_mode<synchronous>, transform_indices = @transform_4, window_bounds = array<i64: 1, 256>}, {pipeline_mode = #tpu.pipeline_mode<synchronous>, transform_indices = @transform_5, window_bounds = array<i64: 2816, 128>}, {pipeline_mode = #tpu.pipeline_mode<synchronous>, transform_indices = @transform_6, window_bounds = array<i64: 1, 128>}, {transform_indices = @transform_7, window_bounds = array<i64: 192, 128>}]} {
    %c0 = arith.constant 0 : index
    %c0_0 = arith.constant 0 : index
    %0 = vector.load %arg1[%c0, %c0_0] : memref<192x256xbf16, #tpu.memory_space<vmem>>, vector<192x256xbf16>
    %c0_1 = arith.constant 0 : index
    %c0_2 = arith.constant 0 : index
    %1 = vector.load %arg2[%c0_1, %c0_2] : memref<256x512xbf16, #tpu.memory_space<vmem>>, vector<256x512xbf16>
    %cst = arith.constant dense<0.000000e+00> : vector<192x512xf32>
    %2 = tpu.matmul %0, %1, %cst {dimension_numbers = #tpu.dot_dimension_numbers<[1], [0], [0], [1], [0, 0, 1, 1], [], []>} : vector<192x256xbf16>, vector<256x512xbf16>, vector<192x512xf32> -> vector<192x512xf32>
    %c0_3 = arith.constant 0 : index
    %c0_4 = arith.constant 0 : index
    %3 = vector.load %arg3[%c0_3, %c0_4] : memref<1x512xf32, #tpu.memory_space<vmem>>, vector<1x512xf32>
    %4 = vector.broadcast %3 : vector<1x512xf32> to vector<192x512xf32>
    %5 = arith.addf %2, %4 : vector<192x512xf32>
    %cst_5 = arith.constant 0.000000e+00 : f32
    %6 = vector.broadcast %cst_5 : f32 to vector<192x512xf32>
    %7 = arith.cmpf ogt, %5, %6 : vector<192x512xf32>
    %cst_6 = arith.constant 1.000000e-01 : f32
    %8 = vector.broadcast %cst_6 : f32 to vector<192x512xf32>
    %9 = arith.mulf %8, %5 : vector<192x512xf32>
    %10 = arith.select %7, %5, %9 : vector<192x512xi1>, vector<192x512xf32>
    %11 = arith.truncf %10 : vector<192x512xf32> to vector<192x512xbf16>
    %c0_7 = arith.constant 0 : index
    %c0_8 = arith.constant 0 : index
    %12 = vector.load %arg9[%c0_7, %c0_8] : memref<208x512xbf16, #tpu.memory_space<vmem>>, vector<192x512xbf16>
    tpu.vector_store %arg9[%c0_7, %c0_8], %11 {strides = array<i32>} : memref<208x512xbf16, #tpu.memory_space<vmem>>, vector<192x512xbf16>,
    %cst_9 = arith.constant 0.000000e+00 : bf16
    %13 = vector.broadcast %cst_9 : bf16 to vector<16x512xbf16>
    %c192 = arith.constant 192 : index
    %c0_10 = arith.constant 0 : index
    %14 = vector.load %arg9[%c192, %c0_10] : memref<208x512xbf16, #tpu.memory_space<vmem>>, vector<16x512xbf16>
    tpu.vector_store %arg9[%c192, %c0_10], %13 {strides = array<i32>} : memref<208x512xbf16, #tpu.memory_space<vmem>>, vector<16x512xbf16>,
    %c0_11 = arith.constant 0 : index
    %c0_12 = arith.constant 0 : index
    %15 = vector.load %arg9[%c0_11, %c0_12] : memref<208x512xbf16, #tpu.memory_space<vmem>>, vector<192x512xbf16>
    %c0_13 = arith.constant 0 : index
    %c0_14 = arith.constant 0 : index
    %16 = vector.load %arg4[%c0_13, %c0_14] : memref<3584x256xbf16, #tpu.memory_space<vmem>>, vector<512x256xbf16>
    %cst_15 = arith.constant dense<0.000000e+00> : vector<192x256xf32>
    %17 = tpu.matmul %15, %16, %cst_15 {dimension_numbers = #tpu.dot_dimension_numbers<[1], [0], [0], [1], [0, 0, 1, 1], [], []>} : vector<192x512xbf16>, vector<512x256xbf16>, vector<192x256xf32> -> vector<192x256xf32>
    %c1 = arith.constant 1 : index
    %c0_16 = arith.constant 0 : index
    %18 = vector.load %arg9[%c1, %c0_16] : memref<208x512xbf16, #tpu.memory_space<vmem>>, vector<192x512xbf16>
    %c512 = arith.constant 512 : index
    %c0_17 = arith.constant 0 : index
    %19 = vector.load %arg4[%c512, %c0_17] : memref<3584x256xbf16, #tpu.memory_space<vmem>>, vector<512x256xbf16>
    %cst_18 = arith.constant dense<0.000000e+00> : vector<192x256xf32>
    %20 = tpu.matmul %18, %19, %cst_18 {dimension_numbers = #tpu.dot_dimension_numbers<[1], [0], [0], [1], [0, 0, 1, 1], [], []>} : vector<192x512xbf16>, vector<512x256xbf16>, vector<192x256xf32> -> vector<192x256xf32>
    %21 = arith.addf %17, %20 : vector<192x256xf32>
    %c2 = arith.constant 2 : index
    %c0_19 = arith.constant 0 : index
    %22 = vector.load %arg9[%c2, %c0_19] : memref<208x512xbf16, #tpu.memory_space<vmem>>, vector<192x512xbf16>
    %c1024 = arith.constant 1024 : index
    %c0_20 = arith.constant 0 : index
    %23 = vector.load %arg4[%c1024, %c0_20] : memref<3584x256xbf16, #tpu.memory_space<vmem>>, vector<512x256xbf16>
    %cst_21 = arith.constant dense<0.000000e+00> : vector<192x256xf32>
    %24 = tpu.matmul %22, %23, %cst_21 {dimension_numbers = #tpu.dot_dimension_numbers<[1], [0], [0], [1], [0, 0, 1, 1], [], []>} : vector<192x512xbf16>, vector<512x256xbf16>, vector<192x256xf32> -> vector<192x256xf32>
    %25 = arith.addf %21, %24 : vector<192x256xf32>
    %c3 = arith.constant 3 : index
    %c0_22 = arith.constant 0 : index
    %26 = vector.load %arg9[%c3, %c0_22] : memref<208x512xbf16, #tpu.memory_space<vmem>>, vector<192x512xbf16>
    %c1536 = arith.constant 1536 : index
    %c0_23 = arith.constant 0 : index
    %27 = vector.load %arg4[%c1536, %c0_23] : memref<3584x256xbf16, #tpu.memory_space<vmem>>, vector<512x256xbf16>
    %cst_24 = arith.constant dense<0.000000e+00> : vector<192x256xf32>
    %28 = tpu.matmul %26, %27, %cst_24 {dimension_numbers = #tpu.dot_dimension_numbers<[1], [0], [0], [1], [0, 0, 1, 1], [], []>} : vector<192x512xbf16>, vector<512x256xbf16>, vector<192x256xf32> -> vector<192x256xf32>
    %29 = arith.addf %25, %28 : vector<192x256xf32>
    %c4 = arith.constant 4 : index
    %c0_25 = arith.constant 0 : index
    %30 = vector.load %arg9[%c4, %c0_25] : memref<208x512xbf16, #tpu.memory_space<vmem>>, vector<192x512xbf16>
    %c2048 = arith.constant 2048 : index
    %c0_26 = arith.constant 0 : index
    %31 = vector.load %arg4[%c2048, %c0_26] : memref<3584x256xbf16, #tpu.memory_space<vmem>>, vector<512x256xbf16>
    %cst_27 = arith.constant dense<0.000000e+00> : vector<192x256xf32>
    %32 = tpu.matmul %30, %31, %cst_27 {dimension_numbers = #tpu.dot_dimension_numbers<[1], [0], [0], [1], [0, 0, 1, 1], [], []>} : vector<192x512xbf16>, vector<512x256xbf16>, vector<192x256xf32> -> vector<192x256xf32>
    %33 = arith.addf %29, %32 : vector<192x256xf32>
    %c5 = arith.constant 5 : index
    %c0_28 = arith.constant 0 : index
    %34 = vector.load %arg9[%c5, %c0_28] : memref<208x512xbf16, #tpu.memory_space<vmem>>, vector<192x512xbf16>
    %c2560 = arith.constant 2560 : index
    %c0_29 = arith.constant 0 : index
    %35 = vector.load %arg4[%c2560, %c0_29] : memref<3584x256xbf16, #tpu.memory_space<vmem>>, vector<512x256xbf16>
    %cst_30 = arith.constant dense<0.000000e+00> : vector<192x256xf32>
    %36 = tpu.matmul %34, %35, %cst_30 {dimension_numbers = #tpu.dot_dimension_numbers<[1], [0], [0], [1], [0, 0, 1, 1], [], []>} : vector<192x512xbf16>, vector<512x256xbf16>, vector<192x256xf32> -> vector<192x256xf32>
    %37 = arith.addf %33, %36 : vector<192x256xf32>
    %c6 = arith.constant 6 : index
    %c0_31 = arith.constant 0 : index
    %38 = vector.load %arg9[%c6, %c0_31] : memref<208x512xbf16, #tpu.memory_space<vmem>>, vector<192x512xbf16>
    %c3072 = arith.constant 3072 : index
    %c0_32 = arith.constant 0 : index
    %39 = vector.load %arg4[%c3072, %c0_32] : memref<3584x256xbf16, #tpu.memory_space<vmem>>, vector<512x256xbf16>
    %cst_33 = arith.constant dense<0.000000e+00> : vector<192x256xf32>
    %40 = tpu.matmul %38, %39, %cst_33 {dimension_numbers = #tpu.dot_dimension_numbers<[1], [0], [0], [1], [0, 0, 1, 1], [], []>} : vector<192x512xbf16>, vector<512x256xbf16>, vector<192x256xf32> -> vector<192x256xf32>
    %41 = arith.addf %37, %40 : vector<192x256xf32>
    %c0_34 = arith.constant 0 : index
    %c0_35 = arith.constant 0 : index
    %42 = vector.load %arg5[%c0_34, %c0_35] : memref<1x256xf32, #tpu.memory_space<vmem>>, vector<1x256xf32>
    %43 = vector.broadcast %42 : vector<1x256xf32> to vector<192x256xf32>
    %44 = arith.addf %41, %43 : vector<192x256xf32>
    %cst_36 = arith.constant 0.000000e+00 : f32
    %45 = vector.broadcast %cst_36 : f32 to vector<192x256xf32>
    %46 = arith.cmpf ogt, %44, %45 : vector<192x256xf32>
    %cst_37 = arith.constant 1.000000e-01 : f32
    %47 = vector.broadcast %cst_37 : f32 to vector<192x256xf32>
    %48 = arith.mulf %47, %44 : vector<192x256xf32>
    %49 = arith.select %46, %44, %48 : vector<192x256xi1>, vector<192x256xf32>
    %50 = arith.truncf %49 : vector<192x256xf32> to vector<192x256xbf16>
    %c0_38 = arith.constant 0 : index
    %c0_39 = arith.constant 0 : index
    %51 = vector.load %arg10[%c0_38, %c0_39] : memref<208x256xbf16, #tpu.memory_space<vmem>>, vector<192x256xbf16>
    tpu.vector_store %arg10[%c0_38, %c0_39], %50 {strides = array<i32>} : memref<208x256xbf16, #tpu.memory_space<vmem>>, vector<192x256xbf16>,
    %cst_40 = arith.constant 0.000000e+00 : bf16
    %52 = vector.broadcast %cst_40 : bf16 to vector<16x256xbf16>
    %c192_41 = arith.constant 192 : index
    %c0_42 = arith.constant 0 : index
    %53 = vector.load %arg10[%c192_41, %c0_42] : memref<208x256xbf16, #tpu.memory_space<vmem>>, vector<16x256xbf16>
    tpu.vector_store %arg10[%c192_41, %c0_42], %52 {strides = array<i32>} : memref<208x256xbf16, #tpu.memory_space<vmem>>, vector<16x256xbf16>,
    %c0_43 = arith.constant 0 : index
    %c0_44 = arith.constant 0 : index
    %54 = vector.load %arg10[%c0_43, %c0_44] : memref<208x256xbf16, #tpu.memory_space<vmem>>, vector<192x256xbf16>
    %c0_45 = arith.constant 0 : index
    %c0_46 = arith.constant 0 : index
    %55 = vector.load %arg6[%c0_45, %c0_46] : memref<2816x128xbf16, #tpu.memory_space<vmem>>, vector<256x128xbf16>
    %cst_47 = arith.constant dense<0.000000e+00> : vector<192x128xf32>
    %56 = tpu.matmul %54, %55, %cst_47 {dimension_numbers = #tpu.dot_dimension_numbers<[1], [0], [0], [1], [0, 0, 1, 1], [], []>} : vector<192x256xbf16>, vector<256x128xbf16>, vector<192x128xf32> -> vector<192x128xf32>
    %c1_48 = arith.constant 1 : index
    %c0_49 = arith.constant 0 : index
    %57 = vector.load %arg10[%c1_48, %c0_49] : memref<208x256xbf16, #tpu.memory_space<vmem>>, vector<192x256xbf16>
    %c256 = arith.constant 256 : index
    %c0_50 = arith.constant 0 : index
    %58 = vector.load %arg6[%c256, %c0_50] : memref<2816x128xbf16, #tpu.memory_space<vmem>>, vector<256x128xbf16>
    %cst_51 = arith.constant dense<0.000000e+00> : vector<192x128xf32>
    %59 = tpu.matmul %57, %58, %cst_51 {dimension_numbers = #tpu.dot_dimension_numbers<[1], [0], [0], [1], [0, 0, 1, 1], [], []>} : vector<192x256xbf16>, vector<256x128xbf16>, vector<192x128xf32> -> vector<192x128xf32>
    %60 = arith.addf %56, %59 : vector<192x128xf32>
    %c2_52 = arith.constant 2 : index
    %c0_53 = arith.constant 0 : index
    %61 = vector.load %arg10[%c2_52, %c0_53] : memref<208x256xbf16, #tpu.memory_space<vmem>>, vector<192x256xbf16>
    %c512_54 = arith.constant 512 : index
    %c0_55 = arith.constant 0 : index
    %62 = vector.load %arg6[%c512_54, %c0_55] : memref<2816x128xbf16, #tpu.memory_space<vmem>>, vector<256x128xbf16>
    %cst_56 = arith.constant dense<0.000000e+00> : vector<192x128xf32>
    %63 = tpu.matmul %61, %62, %cst_56 {dimension_numbers = #tpu.dot_dimension_numbers<[1], [0], [0], [1], [0, 0, 1, 1], [], []>} : vector<192x256xbf16>, vector<256x128xbf16>, vector<192x128xf32> -> vector<192x128xf32>
    %64 = arith.addf %60, %63 : vector<192x128xf32>
    %c3_57 = arith.constant 3 : index
    %c0_58 = arith.constant 0 : index
    %65 = vector.load %arg10[%c3_57, %c0_58] : memref<208x256xbf16, #tpu.memory_space<vmem>>, vector<192x256xbf16>
    %c768 = arith.constant 768 : index
    %c0_59 = arith.constant 0 : index
    %66 = vector.load %arg6[%c768, %c0_59] : memref<2816x128xbf16, #tpu.memory_space<vmem>>, vector<256x128xbf16>
    %cst_60 = arith.constant dense<0.000000e+00> : vector<192x128xf32>
    %67 = tpu.matmul %65, %66, %cst_60 {dimension_numbers = #tpu.dot_dimension_numbers<[1], [0], [0], [1], [0, 0, 1, 1], [], []>} : vector<192x256xbf16>, vector<256x128xbf16>, vector<192x128xf32> -> vector<192x128xf32>
    %68 = arith.addf %64, %67 : vector<192x128xf32>
    %c4_61 = arith.constant 4 : index
    %c0_62 = arith.constant 0 : index
    %69 = vector.load %arg10[%c4_61, %c0_62] : memref<208x256xbf16, #tpu.memory_space<vmem>>, vector<192x256xbf16>
    %c1024_63 = arith.constant 1024 : index
    %c0_64 = arith.constant 0 : index
    %70 = vector.load %arg6[%c1024_63, %c0_64] : memref<2816x128xbf16, #tpu.memory_space<vmem>>, vector<256x128xbf16>
    %cst_65 = arith.constant dense<0.000000e+00> : vector<192x128xf32>
    %71 = tpu.matmul %69, %70, %cst_65 {dimension_numbers = #tpu.dot_dimension_numbers<[1], [0], [0], [1], [0, 0, 1, 1], [], []>} : vector<192x256xbf16>, vector<256x128xbf16>, vector<192x128xf32> -> vector<192x128xf32>
    %72 = arith.addf %68, %71 : vector<192x128xf32>
    %c5_66 = arith.constant 5 : index
    %c0_67 = arith.constant 0 : index
    %73 = vector.load %arg10[%c5_66, %c0_67] : memref<208x256xbf16, #tpu.memory_space<vmem>>, vector<192x256xbf16>
    %c1280 = arith.constant 1280 : index
    %c0_68 = arith.constant 0 : index
    %74 = vector.load %arg6[%c1280, %c0_68] : memref<2816x128xbf16, #tpu.memory_space<vmem>>, vector<256x128xbf16>
    %cst_69 = arith.constant dense<0.000000e+00> : vector<192x128xf32>
    %75 = tpu.matmul %73, %74, %cst_69 {dimension_numbers = #tpu.dot_dimension_numbers<[1], [0], [0], [1], [0, 0, 1, 1], [], []>} : vector<192x256xbf16>, vector<256x128xbf16>, vector<192x128xf32> -> vector<192x128xf32>
    %76 = arith.addf %72, %75 : vector<192x128xf32>
    %c6_70 = arith.constant 6 : index
    %c0_71 = arith.constant 0 : index
    %77 = vector.load %arg10[%c6_70, %c0_71] : memref<208x256xbf16, #tpu.memory_space<vmem>>, vector<192x256xbf16>
    %c1536_72 = arith.constant 1536 : index
    %c0_73 = arith.constant 0 : index
    %78 = vector.load %arg6[%c1536_72, %c0_73] : memref<2816x128xbf16, #tpu.memory_space<vmem>>, vector<256x128xbf16>
    %cst_74 = arith.constant dense<0.000000e+00> : vector<192x128xf32>
    %79 = tpu.matmul %77, %78, %cst_74 {dimension_numbers = #tpu.dot_dimension_numbers<[1], [0], [0], [1], [0, 0, 1, 1], [], []>} : vector<192x256xbf16>, vector<256x128xbf16>, vector<192x128xf32> -> vector<192x128xf32>
    %80 = arith.addf %76, %79 : vector<192x128xf32>
    %c7 = arith.constant 7 : index
    %c0_75 = arith.constant 0 : index
    %81 = vector.load %arg10[%c7, %c0_75] : memref<208x256xbf16, #tpu.memory_space<vmem>>, vector<192x256xbf16>
    %c1792 = arith.constant 1792 : index
    %c0_76 = arith.constant 0 : index
    %82 = vector.load %arg6[%c1792, %c0_76] : memref<2816x128xbf16, #tpu.memory_space<vmem>>, vector<256x128xbf16>
    %cst_77 = arith.constant dense<0.000000e+00> : vector<192x128xf32>
    %83 = tpu.matmul %81, %82, %cst_77 {dimension_numbers = #tpu.dot_dimension_numbers<[1], [0], [0], [1], [0, 0, 1, 1], [], []>} : vector<192x256xbf16>, vector<256x128xbf16>, vector<192x128xf32> -> vector<192x128xf32>
    %84 = arith.addf %80, %83 : vector<192x128xf32>
    %c8 = arith.constant 8 : index
    %c0_78 = arith.constant 0 : index
    %85 = vector.load %arg10[%c8, %c0_78] : memref<208x256xbf16, #tpu.memory_space<vmem>>, vector<192x256xbf16>
    %c2048_79 = arith.constant 2048 : index
    %c0_80 = arith.constant 0 : index
    %86 = vector.load %arg6[%c2048_79, %c0_80] : memref<2816x128xbf16, #tpu.memory_space<vmem>>, vector<256x128xbf16>
    %cst_81 = arith.constant dense<0.000000e+00> : vector<192x128xf32>
    %87 = tpu.matmul %85, %86, %cst_81 {dimension_numbers = #tpu.dot_dimension_numbers<[1], [0], [0], [1], [0, 0, 1, 1], [], []>} : vector<192x256xbf16>, vector<256x128xbf16>, vector<192x128xf32> -> vector<192x128xf32>
    %88 = arith.addf %84, %87 : vector<192x128xf32>
    %c9 = arith.constant 9 : index
    %c0_82 = arith.constant 0 : index
    %89 = vector.load %arg10[%c9, %c0_82] : memref<208x256xbf16, #tpu.memory_space<vmem>>, vector<192x256xbf16>
    %c2304 = arith.constant 2304 : index
    %c0_83 = arith.constant 0 : index
    %90 = vector.load %arg6[%c2304, %c0_83] : memref<2816x128xbf16, #tpu.memory_space<vmem>>, vector<256x128xbf16>
    %cst_84 = arith.constant dense<0.000000e+00> : vector<192x128xf32>
    %91 = tpu.matmul %89, %90, %cst_84 {dimension_numbers = #tpu.dot_dimension_numbers<[1], [0], [0], [1], [0, 0, 1, 1], [], []>} : vector<192x256xbf16>, vector<256x128xbf16>, vector<192x128xf32> -> vector<192x128xf32>
    %92 = arith.addf %88, %91 : vector<192x128xf32>
    %c10 = arith.constant 10 : index
    %c0_85 = arith.constant 0 : index
    %93 = vector.load %arg10[%c10, %c0_85] : memref<208x256xbf16, #tpu.memory_space<vmem>>, vector<192x256xbf16>
    %c2560_86 = arith.constant 2560 : index
    %c0_87 = arith.constant 0 : index
    %94 = vector.load %arg6[%c2560_86, %c0_87] : memref<2816x128xbf16, #tpu.memory_space<vmem>>, vector<256x128xbf16>
    %cst_88 = arith.constant dense<0.000000e+00> : vector<192x128xf32>
    %95 = tpu.matmul %93, %94, %cst_88 {dimension_numbers = #tpu.dot_dimension_numbers<[1], [0], [0], [1], [0, 0, 1, 1], [], []>} : vector<192x256xbf16>, vector<256x128xbf16>, vector<192x128xf32> -> vector<192x128xf32>
    %96 = arith.addf %92, %95 : vector<192x128xf32>
    %c0_89 = arith.constant 0 : index
    %c0_90 = arith.constant 0 : index
    %97 = vector.load %arg7[%c0_89, %c0_90] : memref<1x128xf32, #tpu.memory_space<vmem>>, vector<1x128xf32>
    %98 = vector.broadcast %97 : vector<1x128xf32> to vector<192x128xf32>
    %99 = arith.addf %96, %98 : vector<192x128xf32>
    %cst_91 = arith.constant 0.000000e+00 : f32
    %100 = vector.broadcast %cst_91 : f32 to vector<192x128xf32>
    %101 = arith.cmpf ogt, %99, %100 : vector<192x128xf32>
    %cst_92 = arith.constant 1.000000e-01 : f32
    %102 = vector.broadcast %cst_92 : f32 to vector<192x128xf32>
    %103 = arith.mulf %102, %99 : vector<192x128xf32>
    %104 = arith.select %101, %99, %103 : vector<192x128xi1>, vector<192x128xf32>
    %c0_93 = arith.constant 0 : index
    %c0_94 = arith.constant 0 : index
    %105 = vector.load %arg8[%c0_93, %c0_94] : memref<192x128xf32, #tpu.memory_space<vmem>>, vector<192x128xf32>
    tpu.vector_store %arg8[%c0_93, %c0_94], %104 {strides = array<i32>} : memref<192x128xf32, #tpu.memory_space<vmem>>, vector<192x128xf32>,
    return
  }
  func.func @transform_0(%arg0: i32) -> (i32, i32) {
    %c0_i32 = arith.constant 0 : i32
    %c0_i32_0 = arith.constant 0 : i32
    return %arg0, %c0_i32 : i32, i32
  }
  func.func @transform_1(%arg0: i32) -> (i32, i32) {
    %c0_i32 = arith.constant 0 : i32
    %c0_i32_0 = arith.constant 0 : i32
    %c0_i32_1 = arith.constant 0 : i32
    return %c0_i32, %c0_i32_0 : i32, i32
  }
  func.func @transform_2(%arg0: i32) -> (i32, i32) {
    %c0_i32 = arith.constant 0 : i32
    %c0_i32_0 = arith.constant 0 : i32
    %c0_i32_1 = arith.constant 0 : i32
    return %c0_i32, %c0_i32_0 : i32, i32
  }
  func.func @transform_3(%arg0: i32) -> (i32, i32) {
    %c0_i32 = arith.constant 0 : i32
    %c0_i32_0 = arith.constant 0 : i32
    %c0_i32_1 = arith.constant 0 : i32
    return %c0_i32, %c0_i32_0 : i32, i32
  }
  func.func @transform_4(%arg0: i32) -> (i32, i32) {
    %c0_i32 = arith.constant 0 : i32
    %c0_i32_0 = arith.constant 0 : i32
    %c0_i32_1 = arith.constant 0 : i32
    return %c0_i32, %c0_i32_0 : i32, i32
  }
  func.func @transform_5(%arg0: i32) -> (i32, i32) {
    %c0_i32 = arith.constant 0 : i32
    %c0_i32_0 = arith.constant 0 : i32
    %c0_i32_1 = arith.constant 0 : i32
    return %c0_i32, %c0_i32_0 : i32, i32
  }
  func.func @transform_6(%arg0: i32) -> (i32, i32) {
    %c0_i32 = arith.constant 0 : i32
    %c0_i32_0 = arith.constant 0 : i32
    %c0_i32_1 = arith.constant 0 : i32
    return %c0_i32, %c0_i32_0 : i32, i32
  }
  func.func @transform_7(%arg0: i32) -> (i32, i32) {
    %c0_i32 = arith.constant 0 : i32
    %c0_i32_0 = arith.constant 0 : i32
    return %arg0, %c0_i32 : i32, i32
  }
}

</mosaic_0001>

<llo_original>
// kernel: conv_block_forward.1
$region0: #{conv_block_forward.1}
  #allocation0 [shape = 'u32[]', space=smem, size = 0x4, offset = 0x4, fixed_abs, tag = 'smem constant byte address 0x4 - core index']
  #allocation1 [shape = 'u32[144,128]{1,0:T(1,128)}', space=vmem, size = 0x12000, scoped, tag = 'internal scratch']
  #allocation2 [shape = 'bf16[208,512]{1,0:T(8,128)(2,1)}', space=vmem, size = 0x34000, scoped, tag = 'scratch operand']
  #allocation3 [shape = 'bf16[208,256]{1,0:T(8,128)(2,1)}', space=vmem, size = 0x1a000, scoped, tag = 'scratch operand']
  %s0 = inlined_call_operand.vmem [shape: bf16[384,256], index: 0, kind: input, shape index: {}]
  %s1 = inlined_call_operand.vmem [shape: bf16[256,512], index: 1, kind: input, shape index: {}]
  %s2 = inlined_call_operand.vmem [shape: f32[1,512], index: 2, kind: input, shape index: {}]
  %s3 = inlined_call_operand.vmem [shape: bf16[3584,256], index: 3, kind: input, shape index: {}]
  %s4 = inlined_call_operand.vmem [shape: f32[1,256], index: 4, kind: input, shape index: {}]
  %s5 = inlined_call_operand.vmem [shape: bf16[2816,128], index: 5, kind: input, shape index: {}]
  %s6 = inlined_call_operand.vmem [shape: f32[1,128], index: 6, kind: input, shape index: {}]
  %s7 = inlined_call_operand.vmem [shape: f32[384,128], index: 7, kind: output, shape index: {}]
  %s8 = sld [smem:[#allocation0]]
  $region61: #{conv_block_forward.1} parent=0
    _
  %s10 = ssub.s32 1, %s8
  %s11 = scalar_select 0, %s10, %s8
  loop: start=0, step=1, limit=4
  $region2: #{conv_block_forward.1} parent=0 // loop_pre_header
    _
  $region3: #{conv_block_forward.1} parent=0 // loop_header
    %s13 = sphi 0, %s17
    %p14 = scmp.ge.s32.totalorder %s13, 4
    %s23 = sphi 0, %s25
    %s26 = sphi 0, %s23
    %s27 = sphi 0, %s26
    %s43 = sphi 0, %s27
    %s47 = sphi 0, %s47
    %s49 = sphi 0, %s47
    %s50 = sphi 0, %s49
    %s64 = sphi 0, %s50
    %s68 = sphi 0, %s68
    %s70 = sphi 0, %s68
    %s71 = sphi 0, %s70
    %s85 = sphi 0, %s71
    %s89 = sphi 0, %s89
    %s91 = sphi 0, %s89
    %s92 = sphi 0, %s91
    %s106 = sphi 0, %s92
    %s110 = sphi 0, %s110
    %s112 = sphi 0, %s110
    %s113 = sphi 0, %s112
    %s127 = sphi 0, %s113
    %s131 = sphi 0, %s131
    %s133 = sphi 0, %s131
    %s134 = sphi 0, %s133
    %s148 = sphi 0, %s134
    %s152 = sphi 0, %s152
    %s154 = sphi 0, %s152
    %s155 = sphi 0, %s154
    %s169 = sphi 0, %s155
    %s175 = sphi 0, %s177
    %s178 = sphi 0, %s175
    %s179 = sphi 0, %s178
    %s195 = sphi 0, %s179
  $region4: #{conv_block_forward.1} parent=0 // loop_header_branch
    %16 = sbr.rel (%p14) target = $region8
  $region5: #{conv_block_forward.1} parent=0 // loop_body
    %s18 = ssub.s32 %s13, 1
    %s19 = ssub.s32 %s13, 2
    %s20 = sadd.s32 %s13, 1
    %s21 = ssub.s32 %s13, %s20
    %p22 = scmp.eq.s32.totalorder %s21, 0
    %s24 = sadd.s32 %s23, 1
    %s25 = scalar_select %p22, %s23, %s24
    %p28 = pneg %p22
    %p29 = scmp.eq.s32.totalorder %s13, 1
    %p30 = por %p28, %p29
    %p31 = scmp.ne.s32.totalorder %s23, %s26
    %p32 = scmp.eq.s32.totalorder %s13, 0
    %p33 = por %p31, %p32
    %p34 = scmp.ne.s32.totalorder %s23, %s26
    %p35 = scmp.eq.s32.totalorder %s18, 1
    %p36 = por %p34, %p35
    %p37 = scmp.ne.s32.totalorder %s26, %s27
    %p38 = scmp.eq.s32.totalorder %s18, 0
    %p39 = por %p37, %p38
    %p40 = scmp.ne.s32.totalorder %s26, %s27
    %p41 = scmp.eq.s32.totalorder %s19, 1
    %p42 = por %p40, %p41
    %p44 = scmp.ne.s32.totalorder %s27, %s43
    %p45 = scmp.eq.s32.totalorder %s19, 0
    %p46 = por %p44, %p45
    %s48 = sadd.s32 %s47, 1
    %p51 = scmp.eq.s32.totalorder %s13, 1
    %p52 = scmp.ne.s32.totalorder %s47, %s49
    %p53 = scmp.eq.s32.totalorder %s13, 0
    %p54 = por %p52, %p53
    %p55 = scmp.ne.s32.totalorder %s47, %s49
    %p56 = scmp.eq.s32.totalorder %s18, 1
    %p57 = por %p55, %p56
    %p58 = scmp.ne.s32.totalorder %s49, %s50
    %p59 = scmp.eq.s32.totalorder %s18, 0
    %p60 = por %p58, %p59
    %p61 = scmp.ne.s32.totalorder %s49, %s50
    %p62 = scmp.eq.s32.totalorder %s19, 1
    %p63 = por %p61, %p62
    %p65 = scmp.ne.s32.totalorder %s50, %s64
    %p66 = scmp.eq.s32.totalorder %s19, 0
    %p67 = por %p65, %p66
    %s69 = sadd.s32 %s68, 1
    %p72 = scmp.eq.s32.totalorder %s13, 1
    %p73 = scmp.ne.s32.totalorder %s68, %s70
    %p74 = scmp.eq.s32.totalorder %s13, 0
    %p75 = por %p73, %p74
    %p76 = scmp.ne.s32.totalorder %s68, %s70
    %p77 = scmp.eq.s32.totalorder %s18, 1
    %p78 = por %p76, %p77
    %p79 = scmp.ne.s32.totalorder %s70, %s71
    %p80 = scmp.eq.s32.totalorder %s18, 0
    %p81 = por %p79, %p80
    %p82 = scmp.ne.s32.totalorder %s70, %s71
    %p83 = scmp.eq.s32.totalorder %s19, 1
    %p84 = por %p82, %p83
    %p86 = scmp.ne.s32.totalorder %s71, %s85
    %p87 = scmp.eq.s32.totalorder %s19, 0
    %p88 = por %p86, %p87
    %s90 = sadd.s32 %s89, 1
    %p93 = scmp.eq.s32.totalorder %s13, 1
    %p94 = scmp.ne.s32.totalorder %s89, %s91
    %p95 = scmp.eq.s32.totalorder %s13, 0
    %p96 = por %p94, %p95
    %p97 = scmp.ne.s32.totalorder %s89, %s91
    %p98 = scmp.eq.s32.totalorder %s18, 1
    %p99 = por %p97, %p98
    %p100 = scmp.ne.s32.totalorder %s91, %s92
    %p101 = scmp.eq.s32.totalorder %s18, 0
    %p102 = por %p100, %p101
    %p103 = scmp.ne.s32.totalorder %s91, %s92
    %p104 = scmp.eq.s32.totalorder %s19, 1
    %p105 = por %p103, %p104
    %p107 = scmp.ne.s32.totalorder %s92, %s106
    %p108 = scmp.eq.s32.totalorder %s19, 0
    %p109 = por %p107, %p108
    %s111 = sadd.s32 %s110, 1
    %p114 = scmp.eq.s32.totalorder %s13, 1
    %p115 = scmp.ne.s32.totalorder %s110, %s112
    %p116 = scmp.eq.s32.totalorder %s13, 0
    %p117 = por %p115, %p116
    %p118 = scmp.ne.s32.totalorder %s110, %s112
    %p119 = scmp.eq.s32.totalorder %s18, 1
    %p120 = por %p118, %p119
    %p121 = scmp.ne.s32.totalorder %s112, %s113
    %p122 = scmp.eq.s32.totalorder %s18, 0
    %p123 = por %p121, %p122
    %p124 = scmp.ne.s32.totalorder %s112, %s113
    %p125 = scmp.eq.s32.totalorder %s19, 1
    %p126 = por %p124, %p125
    %p128 = scmp.ne.s32.totalorder %s113, %s127
    %p129 = scmp.eq.s32.totalorder %s19, 0
    %p130 = por %p128, %p129
    %s132 = sadd.s32 %s131, 1
    %p135 = scmp.eq.s32.totalorder %s13, 1
    %p136 = scmp.ne.s32.totalorder %s131, %s133
    %p137 = scmp.eq.s32.totalorder %s13, 0
    %p138 = por %p136, %p137
    %p139 = scmp.ne.s32.totalorder %s131, %s133
    %p140 = scmp.eq.s32.totalorder %s18, 1
    %p141 = por %p139, %p140
    %p142 = scmp.ne.s32.totalorder %s133, %s134
    %p143 = scmp.eq.s32.totalorder %s18, 0
    %p144 = por %p142, %p143
    %p145 = scmp.ne.s32.totalorder %s133, %s134
    %p146 = scmp.eq.s32.totalorder %s19, 1
    %p147 = por %p145, %p146
    %p149 = scmp.ne.s32.totalorder %s134, %s148
    %p150 = scmp.eq.s32.totalorder %s19, 0
    %p151 = por %p149, %p150
    %s153 = sadd.s32 %s152, 1
    %p156 = scmp.eq.s32.totalorder %s13, 1
    %p157 = scmp.ne.s32.totalorder %s152, %s154
    %p158 = scmp.eq.s32.totalorder %s13, 0
    %p159 = por %p157, %p158
    %p160 = scmp.ne.s32.totalorder %s152, %s154
    %p161 = scmp.eq.s32.totalorder %s18, 1
    %p162 = por %p160, %p161
    %p163 = scmp.ne.s32.totalorder %s154, %s155
    %p164 = scmp.eq.s32.totalorder %s18, 0
    %p165 = por %p163, %p164
    %p166 = scmp.ne.s32.totalorder %s154, %s155
    %p167 = scmp.eq.s32.totalorder %s19, 1
    %p168 = por %p166, %p167
    %p170 = scmp.ne.s32.totalorder %s155, %s169
    %p171 = scmp.eq.s32.totalorder %s19, 0
    %p172 = por %p170, %p171
    %s173 = ssub.s32 %s13, %s20
    %p174 = scmp.eq.s32.totalorder %s173, 0
    %s176 = sadd.s32 %s175, 1
    %s177 = scalar_select %p174, %s175, %s176
    %p180 = pneg %p174
    %p181 = scmp.eq.s32.totalorder %s13, 1
    %p182 = por %p180, %p181
    %p183 = scmp.ne.s32.totalorder %s175, %s178
    %p184 = scmp.eq.s32.totalorder %s13, 0
    %p185 = por %p183, %p184
    %p186 = scmp.ne.s32.totalorder %s175, %s178
    %p187 = scmp.eq.s32.totalorder %s18, 1
    %p188 = por %p186, %p187
    %p189 = scmp.ne.s32.totalorder %s178, %s179
    %p190 = scmp.eq.s32.totalorder %s18, 0
    %p191 = por %p189, %p190
    %p192 = scmp.ne.s32.totalorder %s178, %s179
    %p193 = scmp.eq.s32.totalorder %s19, 1
    %p194 = por %p192, %p193
    %p196 = scmp.ne.s32.totalorder %s179, %s195
    %p197 = scmp.eq.s32.totalorder %s19, 0
    %p198 = por %p196, %p197
    %p199 = scmp.le.s32.totalorder 1, %s13
    %p200 = scmp.lt.s32.totalorder %s13, 3
    %p201 = pnand %p199, %p200
    %p202 = pneg %p201
    // Predicated region
    $region9: #{conv_block_forward.1} parent=5 // pred_check
      _
    $region10: #{conv_block_forward.1} parent=5 // pred_check_branch
      %204 = sbr.rel (%p201) target = $region12
    $region11: #{conv_block_forward.1} parent=5 // pred_region
      %s205 = ssub.s32 %s13, 1
      // Predicated region
      $region13: #{conv_block_forward.1} parent=11 // pred_check
        %p206 = pneg %p60
      $region14: #{conv_block_forward.1} parent=11 // pred_check_branch
        %208 = sbr.rel (%p206) target = $region16
      $region15: #{conv_block_forward.1} parent=11 // pred_region
        _
      $region16: #{conv_block_forward.1} parent=11 // pred_fallthru
        _
      // Predicated region
      $region17: #{conv_block_forward.1} parent=11 // pred_check
        %p209 = pneg %p81
      $region18: #{conv_block_forward.1} parent=11 // pred_check_branch
        %211 = sbr.rel (%p209) target = $region20
      $region19: #{conv_block_forward.1} parent=11 // pred_region
        _
      $region20: #{conv_block_forward.1} parent=11 // pred_fallthru
        _
      // Predicated region
      $region21: #{conv_block_forward.1} parent=11 // pred_check
        %p212 = pneg %p102
      $region22: #{conv_block_forward.1} parent=11 // pred_check_branch
        %214 = sbr.rel (%p212) target = $region24
      $region23: #{conv_block_forward.1} parent=11 // pred_region
        _
      $region24: #{conv_block_forward.1} parent=11 // pred_fallthru
        _
      // Predicated region
      $region25: #{conv_block_forward.1} parent=11 // pred_check
        %p215 = pneg %p123
      $region26: #{conv_block_forward.1} parent=11 // pred_check_branch
        %217 = sbr.rel (%p215) target = $region28
      $region27: #{conv_block_forward.1} parent=11 // pred_region
        _
      $region28: #{conv_block_forward.1} parent=11 // pred_fallthru
        _
      // Predicated region
      $region29: #{conv_block_forward.1} parent=11 // pred_check
        %p218 = pneg %p144
      $region30: #{conv_block_forward.1} parent=11 // pred_check_branch
        %220 = sbr.rel (%p218) target = $region32
      $region31: #{conv_block_forward.1} parent=11 // pred_region
        _
      $region32: #{conv_block_forward.1} parent=11 // pred_fallthru
        _
      // Predicated region
      $region33: #{conv_block_forward.1} parent=11 // pred_check
        %p221 = pneg %p165
      $region34: #{conv_block_forward.1} parent=11 // pred_check_branch
        %223 = sbr.rel (%p221) target = $region36
      $region35: #{conv_block_forward.1} parent=11 // pred_region
        _
      $region36: #{conv_block_forward.1} parent=11 // pred_fallthru
        _
    $region12: #{conv_block_forward.1} parent=5 // pred_fallthru
      _
    %p224 = scmp.lt.s32.totalorder %s13, 2
    // Predicated region
    $region37: #{conv_block_forward.1} parent=5 // pred_check
      %p225 = pneg %p224
    $region38: #{conv_block_forward.1} parent=5 // pred_check_branch
      %227 = sbr.rel (%p225) target = $region40
    $region39: #{conv_block_forward.1} parent=5 // pred_region
      // Predicated region
      $region41: #{conv_block_forward.1} parent=39 // pred_check
        %p228 = pneg %p33
      $region42: #{conv_block_forward.1} parent=39 // pred_check_branch
        %230 = sbr.rel (%p228) target = $region44
      $region43: #{conv_block_forward.1} parent=39 // pred_region
        %s231 = smul.u32 24, %s13
        %p232 = scmp.lt.s32.totalorder %s231, 47
        %s233 = scalar_select %p232, %s231, 47
        %s234 = smul.addr %s233, 2
        %s235 = smul.addr %s234, 4
        %s236 = scalar_lea.vmem %s0, %s235
        %s237 = smul.u32 24, %s13
      $region44: #{conv_block_forward.1} parent=39 // pred_fallthru
        _
    $region40: #{conv_block_forward.1} parent=5 // pred_fallthru
      _
    %p238 = scmp.le.s32.totalorder 1, %s13
    %p239 = scmp.lt.s32.totalorder %s13, 3
    %p240 = pnand %p238, %p239
    %p241 = pneg %p240
    // Predicated region
    $region45: #{conv_block_forward.1} parent=5 // pred_check
      _
    $region46: #{conv_block_forward.1} parent=5 // pred_check_branch
      %243 = sbr.rel (%p240) target = $region48
    $region47: #{conv_block_forward.1} parent=5 // pred_region
      %s244 = ssub.s32 %s13, 1
      %s245 = smul.u32 24, %s18
      %p246 = scmp.lt.s32.totalorder %s245, 47
      %s247 = scalar_select %p246, %s245, 47
      %s248 = smul.addr %s247, 2
      %s249 = smul.addr %s248, 4
      %s250 = scalar_lea.vmem %s0, %s249
      %p251 = pneg %p39
      %p252 = pneg %p36
      %p253 = pneg %p60
      %p254 = pneg %p57
      %p255 = pneg %p81
      %p256 = pneg %p78
      %p257 = pneg %p102
      %p258 = pneg %p99
      %p259 = pneg %p123
      %p260 = pneg %p120
      %p261 = pneg %p144
      %p262 = pneg %p141
      %p263 = pneg %p165
      %p264 = pneg %p162
      %p265 = pneg %p191
      %p266 = pneg %p188
      %s267 = smul.u32 24, %s18
      %p268 = scmp.lt.s32.totalorder %s267, 47
      %s269 = scalar_select %p268, %s267, 47
      %s270 = smul.addr %s269, 8
      %s271 = scalar_lea.vmem %s7, %s270
      %s272 = smul.u32 24, %s18
      %p273 = scmp.lt.s32.totalorder %s272, 47
      %s274 = scalar_select %p273, %s272, 47
      %s275 = smul.addr %s274, 2
      %s276 = smul.addr %s275, 4
      %s277 = scalar_lea.vmem %s0, %s276
      %s278 = smul.u32 24, %s18
      %s279 = smul.u32 24, %s18
      %p280 = scmp.lt.s32.totalorder %s279, 47
      %s281 = scalar_select %p280, %s279, 47
      %s282 = smul.addr %s281, 8
      %s283 = scalar_lea.vmem %s7, %s282
      %s284 = smul.u32 24, %s18
      %v286 = vld [vmem:[%s277] sm:$0xff]
      %v287 = vld [vmem:[%s277 + $0x8] sm:$0xff]
      %v288 = vld [vmem:[%s277 + $0x10] sm:$0xff]
      %v289 = vld [vmem:[%s277 + $0x18] sm:$0xff]
      %v290 = vld [vmem:[%s277 + $0x20] sm:$0xff]
      %v291 = vld [vmem:[%s277 + $0x28] sm:$0xff]
      %v292 = vld [vmem:[%s277 + $0x30] sm:$0xff]
      %v293 = vld [vmem:[%s277 + $0x38] sm:$0xff]
      %v294 = vld [vmem:[%s277 + $0x40] sm:$0xff]
      %v295 = vld [vmem:[%s277 + $0x48] sm:$0xff]
      %v296 = vld [vmem:[%s277 + $0x50] sm:$0xff]
      %v297 = vld [vmem:[%s277 + $0x58] sm:$0xff]
      %v298 = vld [vmem:[%s277 + $0x60] sm:$0xff]
      %v299 = vld [vmem:[%s277 + $0x68] sm:$0xff]
      %v300 = vld [vmem:[%s277 + $0x70] sm:$0xff]
      %v301 = vld [vmem:[%s277 + $0x78] sm:$0xff]
      %v302 = vld [vmem:[%s277 + $0x80] sm:$0xff]
      %v303 = vld [vmem:[%s277 + $0x88] sm:$0xff]
      %v304 = vld [vmem:[%s277 + $0x90] sm:$0xff]
      %v305 = vld [vmem:[%s277 + $0x98] sm:$0xff]
      %v306 = vld [vmem:[%s277 + $0xa0] sm:$0xff]
      %v307 = vld [vmem:[%s277 + $0xa8] sm:$0xff]
      %v308 = vld [vmem:[%s277 + $0xb0] sm:$0xff]
      %v309 = vld [vmem:[%s277 + $0xb8] sm:$0xff]
      %v310 = vld [vmem:[%s1] sm:$0xff]
      %v311 = vld [vmem:[%s1 + $0x8] sm:$0xff]
      %v312 = vld [vmem:[%s1 + $0x10] sm:$0xff]
      %v313 = vld [vmem:[%s1 + $0x18] sm:$0xff]
      %v314 = vld [vmem:[%s1 + $0x20] sm:$0xff]
      %v315 = vld [vmem:[%s1 + $0x28] sm:$0xff]
      %v316 = vld [vmem:[%s1 + $0x30] sm:$0xff]
      %v317 = vld [vmem:[%s1 + $0x38] sm:$0xff]
      %v318 = vld [vmem:[%s1 + $0x40] sm:$0xff]
      %v319 = vld [vmem:[%s1 + $0x48] sm:$0xff]
      %v320 = vld [vmem:[%s1 + $0x50] sm:$0xff]
      %v321 = vld [vmem:[%s1 + $0x58] sm:$0xff]
      %v322 = vld [vmem:[%s1 + $0x60] sm:$0xff]
      %v323 = vld [vmem:[%s1 + $0x68] sm:$0xff]
      %v324 = vld [vmem:[%s1 + $0x70] sm:$0xff]
      %v325 = vld [vmem:[%s1 + $0x78] sm:$0xff]
      %v326 = vld [vmem:[%s1 + $0x80] sm:$0xff]
      %v327 = vld [vmem:[%s1 + $0x88] sm:$0xff]
      %v328 = vld [vmem:[%s1 + $0x90] sm:$0xff]
      %v329 = vld [vmem:[%s1 + $0x98] sm:$0xff]
      %v330 = vld [vmem:[%s1 + $0xa0] sm:$0xff]
      %v331 = vld [vmem:[%s1 + $0xa8] sm:$0xff]
      %v332 = vld [vmem:[%s1 + $0xb0] sm:$0xff]
      %v333 = vld [vmem:[%s1 + $0xb8] sm:$0xff]
      %v334 = vld [vmem:[%s1 + $0xc0] sm:$0xff]
      %v335 = vld [vmem:[%s1 + $0xc8] sm:$0xff]
      %v336 = vld [vmem:[%s1 + $0xd0] sm:$0xff]
      %v337 = vld [vmem:[%s1 + $0xd8] sm:$0xff]
      %v338 = vld [vmem:[%s1 + $0xe0] sm:$0xff]
      %v339 = vld [vmem:[%s1 + $0xe8] sm:$0xff]
      %v340 = vld [vmem:[%s1 + $0xf0] sm:$0xff]
      %v341 = vld [vmem:[%s1 + $0xf8] sm:$0xff]
      %v342 = vld [vmem:[%s1 + $0x100] sm:$0xff]
      %v343 = vld [vmem:[%s1 + $0x108] sm:$0xff]
      %v344 = vld [vmem:[%s1 + $0x110] sm:$0xff]
      %v345 = vld [vmem:[%s1 + $0x118] sm:$0xff]
      %v346 = vld [vmem:[%s1 + $0x120] sm:$0xff]
      %v347 = vld [vmem:[%s1 + $0x128] sm:$0xff]
      %v348 = vld [vmem:[%s1 + $0x130] sm:$0xff]
      %v349 = vld [vmem:[%s1 + $0x138] sm:$0xff]
      %v350 = vld [vmem:[%s1 + $0x140] sm:$0xff]
      %v351 = vld [vmem:[%s1 + $0x148] sm:$0xff]
      %v352 = vld [vmem:[%s1 + $0x150] sm:$0xff]
      %v353 = vld [vmem:[%s1 + $0x158] sm:$0xff]
      %v354 = vld [vmem:[%s1 + $0x160] sm:$0xff]
      %v355 = vld [vmem:[%s1 + $0x168] sm:$0xff]
      %v356 = vld [vmem:[%s1 + $0x170] sm:$0xff]
      %v357 = vld [vmem:[%s1 + $0x178] sm:$0xff]
      %v358 = vld [vmem:[%s1 + $0x180] sm:$0xff]
      %v359 = vld [vmem:[%s1 + $0x188] sm:$0xff]
      %v360 = vld [vmem:[%s1 + $0x190] sm:$0xff]
      %v361 = vld [vmem:[%s1 + $0x198] sm:$0xff]
      %v362 = vld [vmem:[%s1 + $0x1a0] sm:$0xff]
      %v363 = vld [vmem:[%s1 + $0x1a8] sm:$0xff]
      %v364 = vld [vmem:[%s1 + $0x1b0] sm:$0xff]
      %v365 = vld [vmem:[%s1 + $0x1b8] sm:$0xff]
      %v366 = vld [vmem:[%s1 + $0x1c0] sm:$0xff]
      %v367 = vld [vmem:[%s1 + $0x1c8] sm:$0xff]
      %v368 = vld [vmem:[%s1 + $0x1d0] sm:$0xff]
      %v369 = vld [vmem:[%s1 + $0x1d8] sm:$0xff]
      %v370 = vld [vmem:[%s1 + $0x1e0] sm:$0xff]
      %v371 = vld [vmem:[%s1 + $0x1e8] sm:$0xff]
      %v372 = vld [vmem:[%s1 + $0x1f0] sm:$0xff]
      %v373 = vld [vmem:[%s1 + $0x1f8] sm:$0xff]
      %v374 = vld [vmem:[%s2] sm:$0xf]
      %v376 = vlaneseq
      %v377 = vshrl.u32 %v376, 7
      %v378 = vsub.s32 0, %v377
      %v379 = vrot.slane %v374, %v378
      %v380 = vlaneseq
      %v381 = vshrl.u32 %v380, 7
      %v382 = vsub.s32 1, %v381
      %v383 = vrot.slane %v374, %v382
      %v384 = vlaneseq
      %v385 = vshrl.u32 %v384, 7
      %v386 = vsub.s32 2, %v385
      %v387 = vrot.slane %v374, %v386
      %v388 = vlaneseq
      %v389 = vshrl.u32 %v388, 7
      %v390 = vsub.s32 3, %v389
      %v391 = vrot.slane %v374, %v390
      %v420 = vunpack.c.l.b16 %v286
      %v421 = vunpack.c.h.b16 %v286
      %v422 = vunpack.c.l.b16 %v287
      %v423 = vunpack.c.h.b16 %v287
      %v424 = vunpack.c.l.b16 %v288
      %v425 = vunpack.c.h.b16 %v288
      %v426 = vunpack.c.l.b16 %v289
      %v427 = vunpack.c.h.b16 %v289
      %v428 = vunpack.c.l.b16 %v290
      %v429 = vunpack.c.h.b16 %v290
      %v430 = vunpack.c.l.b16 %v291
      %v431 = vunpack.c.h.b16 %v291
      %v432 = vunpack.c.l.b16 %v292
      %v433 = vunpack.c.h.b16 %v292
      %v434 = vunpack.c.l.b16 %v293
      %v435 = vunpack.c.h.b16 %v293
      %v436 = vunpack.c.l.b16 %v294
      %v437 = vunpack.c.h.b16 %v294
      %v438 = vunpack.c.l.b16 %v295
      %v439 = vunpack.c.h.b16 %v295
      %v440 = vunpack.c.l.b16 %v296
      %v441 = vunpack.c.h.b16 %v296
      %v442 = vunpack.c.l.b16 %v297
      %v443 = vunpack.c.h.b16 %v297
      %v444 = vunpack.c.l.b16 %v298
      %v445 = vunpack.c.h.b16 %v298
      %v446 = vunpack.c.l.b16 %v299
      %v447 = vunpack.c.h.b16 %v299
      %v448 = vunpack.c.l.b16 %v300
      %v449 = vunpack.c.h.b16 %v300
      %v450 = vunpack.c.l.b16 %v301
      %v451 = vunpack.c.h.b16 %v301
      %v452 = vunpack.c.l.b16 %v302
      %v453 = vunpack.c.h.b16 %v302
      %v454 = vunpack.c.l.b16 %v303
      %v455 = vunpack.c.h.b16 %v303
      %v456 = vunpack.c.l.b16 %v304
      %v457 = vunpack.c.h.b16 %v304
      %v458 = vunpack.c.l.b16 %v305
      %v459 = vunpack.c.h.b16 %v305
      %v460 = vunpack.c.l.b16 %v306
      %v461 = vunpack.c.h.b16 %v306
      %v462 = vunpack.c.l.b16 %v307
      %v463 = vunpack.c.h.b16 %v307
      %v464 = vunpack.c.l.b16 %v308
      %v465 = vunpack.c.h.b16 %v308
      %v466 = vunpack.c.l.b16 %v309
      %v467 = vunpack.c.h.b16 %v309
      %v468 = vpack.c.b16 %v422, %v420
      %v469 = vpack.c.b16 %v423, %v421
      %v470 = vpack.c.b16 %v426, %v424
      %v471 = vpack.c.b16 %v427, %v425
      %v472 = vpack.c.b16 %v430, %v428
      %v473 = vpack.c.b16 %v431, %v429
      %v474 = vpack.c.b16 %v434, %v432
      %v475 = vpack.c.b16 %v435, %v433
      %v476 = vpack.c.b16 %v438, %v436
      %v477 = vpack.c.b16 %v439, %v437
      %v478 = vpack.c.b16 %v442, %v440
      %v479 = vpack.c.b16 %v443, %v441
      %v480 = vpack.c.b16 %v446, %v444
      %v481 = vpack.c.b16 %v447, %v445
      %v482 = vpack.c.b16 %v450, %v448
      %v483 = vpack.c.b16 %v451, %v449
      %v484 = vpack.c.b16 %v454, %v452
      %v485 = vpack.c.b16 %v455, %v453
      %v486 = vpack.c.b16 %v458, %v456
      %v487 = vpack.c.b16 %v459, %v457
      %v488 = vpack.c.b16 %v462, %v460
      %v489 = vpack.c.b16 %v463, %v461
      %v490 = vpack.c.b16 %v466, %v464
      %v491 = vpack.c.b16 %v467, %v465
      %v580 = vunpack.c.l.b16 %v310
      %v581 = vunpack.c.h.b16 %v310
      %v582 = vunpack.c.l.b16 %v311
      %v583 = vunpack.c.h.b16 %v311
      %v584 = vunpack.c.l.b16 %v312
      %v585 = vunpack.c.h.b16 %v312
      %v586 = vunpack.c.l.b16 %v313
      %v587 = vunpack.c.h.b16 %v313
      %v588 = vunpack.c.l.b16 %v314
      %v589 = vunpack.c.h.b16 %v314
      %v590 = vunpack.c.l.b16 %v315
      %v591 = vunpack.c.h.b16 %v315
      %v592 = vunpack.c.l.b16 %v316
      %v593 = vunpack.c.h.b16 %v316
      %v594 = vunpack.c.l.b16 %v317
      %v595 = vunpack.c.h.b16 %v317
      %v596 = vunpack.c.l.b16 %v318
      %v597 = vunpack.c.h.b16 %v318
      %v598 = vunpack.c.l.b16 %v319
      %v599 = vunpack.c.h.b16 %v319
      %v600 = vunpack.c.l.b16 %v320
      %v601 = vunpack.c.h.b16 %v320
      %v602 = vunpack.c.l.b16 %v321
      %v603 = vunpack.c.h.b16 %v321
      %v604 = vunpack.c.l.b16 %v322
      %v605 = vunpack.c.h.b16 %v322
      %v606 = vunpack.c.l.b16 %v323
      %v607 = vunpack.c.h.b16 %v323
      %v608 = vunpack.c.l.b16 %v324
      %v609 = vunpack.c.h.b16 %v324
      %v610 = vunpack.c.l.b16 %v325
      %v611 = vunpack.c.h.b16 %v325
      %v612 = vunpack.c.l.b16 %v326
      %v613 = vunpack.c.h.b16 %v326
      %v614 = vunpack.c.l.b16 %v327
      %v615 = vunpack.c.h.b16 %v327
      %v616 = vunpack.c.l.b16 %v328
      %v617 = vunpack.c.h.b16 %v328
      %v618 = vunpack.c.l.b16 %v329
      %v619 = vunpack.c.h.b16 %v329
      %v620 = vunpack.c.l.b16 %v330
      %v621 = vunpack.c.h.b16 %v330
      %v622 = vunpack.c.l.b16 %v331
      %v623 = vunpack.c.h.b16 %v331
      %v624 = vunpack.c.l.b16 %v332
      %v625 = vunpack.c.h.b16 %v332
      %v626 = vunpack.c.l.b16 %v333
      %v627 = vunpack.c.h.b16 %v333
      %v628 = vunpack.c.l.b16 %v334
      %v629 = vunpack.c.h.b16 %v334
      %v630 = vunpack.c.l.b16 %v335
      %v631 = vunpack.c.h.b16 %v335
      %v632 = vunpack.c.l.b16 %v336
      %v633 = vunpack.c.h.b16 %v336
      %v634 = vunpack.c.l.b16 %v337
      %v635 = vunpack.c.h.b16 %v337
      %v636 = vunpack.c.l.b16 %v338
      %v637 = vunpack.c.h.b16 %v338
      %v638 = vunpack.c.l.b16 %v339
      %v639 = vunpack.c.h.b16 %v339
      %v640 = vunpack.c.l.b16 %v340
      %v641 = vunpack.c.h.b16 %v340
      %v642 = vunpack.c.l.b16 %v341
      %v643 = vunpack.c.h.b16 %v341
      %v644 = vunpack.c.l.b16 %v342
      %v645 = vunpack.c.h.b16 %v342
      %v646 = vunpack.c.l.b16 %v343
      %v647 = vunpack.c.h.b16 %v343
      %v648 = vunpack.c.l.b16 %v344
      %v649 = vunpack.c.h.b16 %v344
      %v650 = vunpack.c.l.b16 %v345
      %v651 = vunpack.c.h.b16 %v345
      %v652 = vunpack.c.l.b16 %v346
      %v653 = vunpack.c.h.b16 %v346
      %v654 = vunpack.c.l.b16 %v347
      %v655 = vunpack.c.h.b16 %v347
      %v656 = vunpack.c.l.b16 %v348
      %v657 = vunpack.c.h.b16 %v348
      %v658 = vunpack.c.l.b16 %v349
      %v659 = vunpack.c.h.b16 %v349
      %v660 = vunpack.c.l.b16 %v350
      %v661 = vunpack.c.h.b16 %v350
      %v662 = vunpack.c.l.b16 %v351
      %v663 = vunpack.c.h.b16 %v351
      %v664 = vunpack.c.l.b16 %v352
      %v665 = vunpack.c.h.b16 %v352
      %v666 = vunpack.c.l.b16 %v353
      %v667 = vunpack.c.h.b16 %v353
      %v668 = vunpack.c.l.b16 %v354
      %v669 = vunpack.c.h.b16 %v354
      %v670 = vunpack.c.l.b16 %v355
      %v671 = vunpack.c.h.b16 %v355
      %v672 = vunpack.c.l.b16 %v356
      %v673 = vunpack.c.h.b16 %v356
      %v674 = vunpack.c.l.b16 %v357
      %v675 = vunpack.c.h.b16 %v357
      %v676 = vunpack.c.l.b16 %v358
      %v677 = vunpack.c.h.b16 %v358
      %v678 = vunpack.c.l.b16 %v359
      %v679 = vunpack.c.h.b16 %v359
      %v680 = vunpack.c.l.b16 %v360
      %v681 = vunpack.c.h.b16 %v360
      %v682 = vunpack.c.l.b16 %v361
      %v683 = vunpack.c.h.b16 %v361
      %v684 = vunpack.c.l.b16 %v362
      %v685 = vunpack.c.h.b16 %v362
      %v686 = vunpack.c.l.b16 %v363
      %v687 = vunpack.c.h.b16 %v363
      %v688 = vunpack.c.l.b16 %v364
      %v689 = vunpack.c.h.b16 %v364
      %v690 = vunpack.c.l.b16 %v365
      %v691 = vunpack.c.h.b16 %v365
      %v692 = vunpack.c.l.b16 %v366
      %v693 = vunpack.c.h.b16 %v366
      %v694 = vunpack.c.l.b16 %v367
      %v695 = vunpack.c.h.b16 %v367
      %v696 = vunpack.c.l.b16 %v368
      %v697 = vunpack.c.h.b16 %v368
      %v698 = vunpack.c.l.b16 %v369
      %v699 = vunpack.c.h.b16 %v369
      %v700 = vunpack.c.l.b16 %v370
      %v701 = vunpack.c.h.b16 %v370
      %v702 = vunpack.c.l.b16 %v371
      %v703 = vunpack.c.h.b16 %v371
      %v704 = vunpack.c.l.b16 %v372
      %v705 = vunpack.c.h.b16 %v372
      %v706 = vunpack.c.l.b16 %v373
      %v707 = vunpack.c.h.b16 %v373
      %v708 = vpack.c.b16 %v584, %v580
      %v709 = vpack.c.b16 %v585, %v581
      %v710 = vpack.c.b16 %v586, %v582
      %v711 = vpack.c.b16 %v587, %v583
      %v712 = vpack.c.b16 %v592, %v588
      %v713 = vpack.c.b16 %v593, %v589
      %v714 = vpack.c.b16 %v594, %v590
      %v715 = vpack.c.b16 %v595, %v591
      %v716 = vpack.c.b16 %v600, %v596
      %v717 = vpack.c.b16 %v601, %v597
      %v718 = vpack.c.b16 %v602, %v598
      %v719 = vpack.c.b16 %v603, %v599
      %v720 = vpack.c.b16 %v608, %v604
      %v721 = vpack.c.b16 %v609, %v605
      %v722 = vpack.c.b16 %v610, %v606
      %v723 = vpack.c.b16 %v611, %v607
      %v724 = vpack.c.b16 %v616, %v612
      %v725 = vpack.c.b16 %v617, %v613
      %v726 = vpack.c.b16 %v618, %v614
      %v727 = vpack.c.b16 %v619, %v615
      %v728 = vpack.c.b16 %v624, %v620
      %v729 = vpack.c.b16 %v625, %v621
      %v730 = vpack.c.b16 %v626, %v622
      %v731 = vpack.c.b16 %v627, %v623
      %v732 = vpack.c.b16 %v632, %v628
      %v733 = vpack.c.b16 %v633, %v629
      %v734 = vpack.c.b16 %v634, %v630
      %v735 = vpack.c.b16 %v635, %v631
      %v736 = vpack.c.b16 %v640, %v636
      %v737 = vpack.c.b16 %v641, %v637
      %v738 = vpack.c.b16 %v642, %v638
      %v739 = vpack.c.b16 %v643, %v639
      %v740 = vpack.c.b16 %v648, %v644
      %v741 = vpack.c.b16 %v649, %v645
      %v742 = vpack.c.b16 %v650, %v646
      %v743 = vpack.c.b16 %v651, %v647
      %v744 = vpack.c.b16 %v656, %v652
      %v745 = vpack.c.b16 %v657, %v653
      %v746 = vpack.c.b16 %v658, %v654
      %v747 = vpack.c.b16 %v659, %v655
      %v748 = vpack.c.b16 %v664, %v660
      %v749 = vpack.c.b16 %v665, %v661
      %v750 = vpack.c.b16 %v666, %v662
      %v751 = vpack.c.b16 %v667, %v663
      %v752 = vpack.c.b16 %v672, %v668
      %v753 = vpack.c.b16 %v673, %v669
      %v754 = vpack.c.b16 %v674, %v670
      %v755 = vpack.c.b16 %v675, %v671
      %v756 = vpack.c.b16 %v680, %v676
      %v757 = vpack.c.b16 %v681, %v677
      %v758 = vpack.c.b16 %v682, %v678
      %v759 = vpack.c.b16 %v683, %v679
      %v760 = vpack.c.b16 %v688, %v684
      %v761 = vpack.c.b16 %v689, %v685
      %v762 = vpack.c.b16 %v690, %v686
      %v763 = vpack.c.b16 %v691, %v687
      %v764 = vpack.c.b16 %v696, %v692
      %v765 = vpack.c.b16 %v697, %v693
      %v766 = vpack.c.b16 %v698, %v694
      %v767 = vpack.c.b16 %v699, %v695
      %v768 = vpack.c.b16 %v704, %v700
      %v769 = vpack.c.b16 %v705, %v701
      %v770 = vpack.c.b16 %v706, %v702
      %v771 = vpack.c.b16 %v707, %v703
      %836 = vmatprep.subr.bf16.mxu0 %v737
      %837 = vmatpush1.bf16.msra.mxu0 %v736
      %838 = vmatprep.subr.bf16.mxu0 %v733
      %839 = vmatpush1.bf16.msra.mxu0 %v732
      %840 = vmatprep.subr.bf16.mxu0 %v729
      %841 = vmatpush1.bf16.msra.mxu0 %v728
      %842 = vmatprep.subr.bf16.mxu0 %v725
      %843 = vmatpush1.bf16.msra.mxu0 %v724
      %844 = vmatprep.subr.bf16.mxu0 %v721
      %845 = vmatpush1.bf16.msra.mxu0 %v720
      %846 = vmatprep.subr.bf16.mxu0 %v717
      %847 = vmatpush1.bf16.msra.mxu0 %v716
      %848 = vmatprep.subr.bf16.mxu0 %v713
      %849 = vmatpush1.bf16.msra.mxu0 %v712
      %850 = vmatprep.subr.bf16.mxu0 %v709
      %851 = vmatpush1.bf16.msra.mxu0 %v708
      %852 = vmatprep.subr.bf16.mxu0 %v769
      %853 = vmatpush2.bf16.msra.mxu0 %v768
      %854 = vmatprep.subr.bf16.mxu0 %v765
      %855 = vmatpush2.bf16.msra.mxu0 %v764
      %856 = vmatprep.subr.bf16.mxu0 %v761
      %857 = vmatpush2.bf16.msra.mxu0 %v760
      %858 = vmatprep.subr.bf16.mxu0 %v757
      %859 = vmatpush2.bf16.msra.mxu0 %v756
      %860 = vmatprep.subr.bf16.mxu0 %v753
      %861 = vmatpush2.bf16.msra.mxu0 %v752
      %862 = vmatprep.subr.bf16.mxu0 %v749
      %863 = vmatpush2.bf16.msra.mxu0 %v748
      %864 = vmatprep.subr.bf16.mxu0 %v745
      %865 = vmatpush2.bf16.msra.mxu0 %v744
      %866 = vmatprep.subr.bf16.mxu0 %v741
      %867 = vmatpush2.bf16.msra.mxu0 %v740
      %868 = vmatprep.mubr.bf16.mxu0 %v469
      %869 = vmatmul.mubr.bf16.gmra.mxu0 %v468
      %v870 = vpop.f32.mrf.mxu0
      %v871 = vadd.f32 %v379, %v870
      %v872 = vpop.f32.mrf.mxu0
      %v873 = vadd.f32 %v383, %v872
      %v874 = vpop.f32.mrf.mxu0
      %v875 = vadd.f32 %v379, %v874
      %v876 = vpop.f32.mrf.mxu0
      %v877 = vadd.f32 %v383, %v876
      %878 = vmatprep.mubr.bf16.mxu0 %v471
      %879 = vmatmul.mubr.bf16.gmra.mxu0 %v470
      %v880 = vpop.f32.mrf.mxu0
      %v881 = vadd.f32 %v379, %v880
      %v882 = vpop.f32.mrf.mxu0
      %v883 = vadd.f32 %v383, %v882
      %v884 = vpop.f32.mrf.mxu0
      %v885 = vadd.f32 %v379, %v884
      %v886 = vpop.f32.mrf.mxu0
      %v887 = vadd.f32 %v383, %v886
      %888 = vmatprep.mubr.bf16.mxu0 %v473
      %889 = vmatmul.mubr.bf16.gmra.mxu0 %v472
      %v890 = vpop.f32.mrf.mxu0
      %v891 = vadd.f32 %v379, %v890
      %v892 = vpop.f32.mrf.mxu0
      %v893 = vadd.f32 %v383, %v892
      %v894 = vpop.f32.mrf.mxu0
      %v895 = vadd.f32 %v379, %v894
      %v896 = vpop.f32.mrf.mxu0
      %v897 = vadd.f32 %v383, %v896
      %898 = vmatprep.mubr.bf16.mxu0 %v475
      %899 = vmatmul.mubr.bf16.gmra.mxu0 %v474
      %v900 = vpop.f32.mrf.mxu0
      %v901 = vadd.f32 %v379, %v900
      %v902 = vpop.f32.mrf.mxu0
      %v903 = vadd.f32 %v383, %v902
      %v904 = vpop.f32.mrf.mxu0
      %v905 = vadd.f32 %v379, %v904
      %v906 = vpop.f32.mrf.mxu0
      %v907 = vadd.f32 %v383, %v906
      %908 = vmatprep.mubr.bf16.mxu0 %v477
      %909 = vmatmul.mubr.bf16.gmra.mxu0 %v476
      %v910 = vpop.f32.mrf.mxu0
      %v911 = vadd.f32 %v379, %v910
      %v912 = vpop.f32.mrf.mxu0
      %v913 = vadd.f32 %v383, %v912
      %v914 = vpop.f32.mrf.mxu0
      %v915 = vadd.f32 %v379, %v914
      %v916 = vpop.f32.mrf.mxu0
      %v917 = vadd.f32 %v383, %v916
      %918 = vmatprep.mubr.bf16.mxu0 %v479
      %919 = vmatmul.mubr.bf16.gmra.mxu0 %v478
      %v920 = vpop.f32.mrf.mxu0
      %v921 = vadd.f32 %v379, %v920
      %v922 = vpop.f32.mrf.mxu0
      %v923 = vadd.f32 %v383, %v922
      %v924 = vpop.f32.mrf.mxu0
      %v925 = vadd.f32 %v379, %v924
      %v926 = vpop.f32.mrf.mxu0
      %v927 = vadd.f32 %v383, %v926
      %928 = vmatprep.mubr.bf16.mxu0 %v481
      %929 = vmatmul.mubr.bf16.gmra.mxu0 %v480
      %v930 = vpop.f32.mrf.mxu0
      %v931 = vadd.f32 %v379, %v930
      %v932 = vpop.f32.mrf.mxu0
      %v933 = vadd.f32 %v383, %v932
      %v934 = vpop.f32.mrf.mxu0
      %v935 = vadd.f32 %v379, %v934
      %v936 = vpop.f32.mrf.mxu0
      %v937 = vadd.f32 %v383, %v936
      %938 = vmatprep.mubr.bf16.mxu0 %v483
      %939 = vmatmul.mubr.bf16.gmra.mxu0 %v482
      %v940 = vpop.f32.mrf.mxu0
      %v941 = vadd.f32 %v379, %v940
      %v942 = vpop.f32.mrf.mxu0
      %v943 = vadd.f32 %v383, %v942
      %v944 = vpop.f32.mrf.mxu0
      %v945 = vadd.f32 %v379, %v944
      %v946 = vpop.f32.mrf.mxu0
      %v947 = vadd.f32 %v383, %v946
      %948 = vmatprep.mubr.bf16.mxu0 %v485
      %949 = vmatmul.mubr.bf16.gmra.mxu0 %v484
      %v950 = vpop.f32.mrf.mxu0
      %v951 = vadd.f32 %v379, %v950
      %v952 = vpop.f32.mrf.mxu0
      %v953 = vadd.f32 %v383, %v952
      %v954 = vpop.f32.mrf.mxu0
      %v955 = vadd.f32 %v379, %v954
      %v956 = vpop.f32.mrf.mxu0
      %v957 = vadd.f32 %v383, %v956
      %958 = vmatprep.mubr.bf16.mxu0 %v487
      %959 = vmatmul.mubr.bf16.gmra.mxu0 %v486
      %v960 = vpop.f32.mrf.mxu0
      %v961 = vadd.f32 %v379, %v960
      %v962 = vpop.f32.mrf.mxu0
      %v963 = vadd.f32 %v383, %v962
      %v964 = vpop.f32.mrf.mxu0
      %v965 = vadd.f32 %v379, %v964
      %v966 = vpop.f32.mrf.mxu0
      %v967 = vadd.f32 %v383, %v966
      %968 = vmatprep.mubr.bf16.mxu0 %v489
      %969 = vmatmul.mubr.bf16.gmra.mxu0 %v488
      %v970 = vpop.f32.mrf.mxu0
      %v971 = vadd.f32 %v379, %v970
      %v972 = vpop.f32.mrf.mxu0
      %v973 = vadd.f32 %v383, %v972
      %v974 = vpop.f32.mrf.mxu0
      %v975 = vadd.f32 %v379, %v974
      %v976 = vpop.f32.mrf.mxu0
      %v977 = vadd.f32 %v383, %v976
      %978 = vmatprep.mubr.bf16.mxu0 %v491
      %979 = vmatmul.mubr.bf16.gmra.mxu0 %v490
      %v980 = vpop.f32.mrf.mxu0
      %v981 = vadd.f32 %v379, %v980
      %v982 = vpop.f32.mrf.mxu0
      %v983 = vadd.f32 %v383, %v982
      %v984 = vpop.f32.mrf.mxu0
      %v985 = vadd.f32 %v379, %v984
      %v986 = vpop.f32.mrf.mxu0
      %v987 = vadd.f32 %v383, %v986
      %988 = vdwg.mxu0
      %989 = vmatprep.subr.bf16.mxu0 %v739
      %990 = vmatpush1.bf16.msra.mxu0 %v738
      %991 = vmatprep.subr.bf16.mxu0 %v735
      %992 = vmatpush1.bf16.msra.mxu0 %v734
      %993 = vmatprep.subr.bf16.mxu0 %v731
      %994 = vmatpush1.bf16.msra.mxu0 %v730
      %995 = vmatprep.subr.bf16.mxu0 %v727
      %996 = vmatpush1.bf16.msra.mxu0 %v726
      %997 = vmatprep.subr.bf16.mxu0 %v723
      %998 = vmatpush1.bf16.msra.mxu0 %v722
      %999 = vmatprep.subr.bf16.mxu0 %v719
      %1000 = vmatpush1.bf16.msra.mxu0 %v718
      %1001 = vmatprep.subr.bf16.mxu0 %v715
      %1002 = vmatpush1.bf16.msra.mxu0 %v714
      %1003 = vmatprep.subr.bf16.mxu0 %v711
      %1004 = vmatpush1.bf16.msra.mxu0 %v710
      %1005 = vmatprep.subr.bf16.mxu0 %v771
      %1006 = vmatpush2.bf16.msra.mxu0 %v770
      %1007 = vmatprep.subr.bf16.mxu0 %v767
      %1008 = vmatpush2.bf16.msra.mxu0 %v766
      %1009 = vmatprep.subr.bf16.mxu0 %v763
      %1010 = vmatpush2.bf16.msra.mxu0 %v762
      %1011 = vmatprep.subr.bf16.mxu0 %v759
      %1012 = vmatpush2.bf16.msra.mxu0 %v758
      %1013 = vmatprep.subr.bf16.mxu0 %v755
      %1014 = vmatpush2.bf16.msra.mxu0 %v754
      %1015 = vmatprep.subr.bf16.mxu0 %v751
      %1016 = vmatpush2.bf16.msra.mxu0 %v750
      %1017 = vmatprep.subr.bf16.mxu0 %v747
      %1018 = vmatpush2.bf16.msra.mxu0 %v746
      %1019 = vmatprep.subr.bf16.mxu0 %v743
      %1020 = vmatpush2.bf16.msra.mxu0 %v742
      %1021 = vmatprep.mubr.bf16.mxu0 %v469
      %1022 = vmatmul.mubr.bf16.gmra.mxu0 %v468
      %v1023 = vpop.f32.mrf.mxu0
      %v1024 = vadd.f32 %v387, %v1023
      %v1025 = vpop.f32.mrf.mxu0
      %v1026 = vadd.f32 %v391, %v1025
      %v1027 = vpop.f32.mrf.mxu0
      %v1028 = vadd.f32 %v387, %v1027
      %v1029 = vpop.f32.mrf.mxu0
      %v1030 = vadd.f32 %v391, %v1029
      %1031 = vmatprep.mubr.bf16.mxu0 %v471
      %1032 = vmatmul.mubr.bf16.gmra.mxu0 %v470
      %v1033 = vpop.f32.mrf.mxu0
      %v1034 = vadd.f32 %v387, %v1033
      %v1035 = vpop.f32.mrf.mxu0
      %v1036 = vadd.f32 %v391, %v1035
      %v1037 = vpop.f32.mrf.mxu0
      %v1038 = vadd.f32 %v387, %v1037
      %v1039 = vpop.f32.mrf.mxu0
      %v1040 = vadd.f32 %v391, %v1039
      %1041 = vmatprep.mubr.bf16.mxu0 %v473
      %1042 = vmatmul.mubr.bf16.gmra.mxu0 %v472
      %v1043 = vpop.f32.mrf.mxu0
      %v1044 = vadd.f32 %v387, %v1043
      %v1045 = vpop.f32.mrf.mxu0
      %v1046 = vadd.f32 %v391, %v1045
      %v1047 = vpop.f32.mrf.mxu0
      %v1048 = vadd.f32 %v387, %v1047
      %v1049 = vpop.f32.mrf.mxu0
      %v1050 = vadd.f32 %v391, %v1049
      %1051 = vmatprep.mubr.bf16.mxu0 %v475
      %1052 = vmatmul.mubr.bf16.gmra.mxu0 %v474
      %v1053 = vpop.f32.mrf.mxu0
      %v1054 = vadd.f32 %v387, %v1053
      %v1055 = vpop.f32.mrf.mxu0
      %v1056 = vadd.f32 %v391, %v1055
      %v1057 = vpop.f32.mrf.mxu0
      %v1058 = vadd.f32 %v387, %v1057
      %v1059 = vpop.f32.mrf.mxu0
      %v1060 = vadd.f32 %v391, %v1059
      %1061 = vmatprep.mubr.bf16.mxu0 %v477
      %1062 = vmatmul.mubr.bf16.gmra.mxu0 %v476
      %v1063 = vpop.f32.mrf.mxu0
      %v1064 = vadd.f32 %v387, %v1063
      %v1065 = vpop.f32.mrf.mxu0
      %v1066 = vadd.f32 %v391, %v1065
      %v1067 = vpop.f32.mrf.mxu0
      %v1068 = vadd.f32 %v387, %v1067
      %v1069 = vpop.f32.mrf.mxu0
      %v1070 = vadd.f32 %v391, %v1069
      %1071 = vmatprep.mubr.bf16.mxu0 %v479
      %1072 = vmatmul.mubr.bf16.gmra.mxu0 %v478
      %v1073 = vpop.f32.mrf.mxu0
      %v1074 = vadd.f32 %v387, %v1073
      %v1075 = vpop.f32.mrf.mxu0
      %v1076 = vadd.f32 %v391, %v1075
      %v1077 = vpop.f32.mrf.mxu0
      %v1078 = vadd.f32 %v387, %v1077
      %v1079 = vpop.f32.mrf.mxu0
      %v1080 = vadd.f32 %v391, %v1079
      %1081 = vmatprep.mubr.bf16.mxu0 %v481
      %1082 = vmatmul.mubr.bf16.gmra.mxu0 %v480
      %v1083 = vpop.f32.mrf.mxu0
      %v1084 = vadd.f32 %v387, %v1083
      %v1085 = vpop.f32.mrf.mxu0
      %v1086 = vadd.f32 %v391, %v1085
      %v1087 = vpop.f32.mrf.mxu0
      %v1088 = vadd.f32 %v387, %v1087
      %v1089 = vpop.f32.mrf.mxu0
      %v1090 = vadd.f32 %v391, %v1089
      %1091 = vmatprep.mubr.bf16.mxu0 %v483
      %1092 = vmatmul.mubr.bf16.gmra.mxu0 %v482
      %v1093 = vpop.f32.mrf.mxu0
      %v1094 = vadd.f32 %v387, %v1093
      %v1095 = vpop.f32.mrf.mxu0
      %v1096 = vadd.f32 %v391, %v1095
      %v1097 = vpop.f32.mrf.mxu0
      %v1098 = vadd.f32 %v387, %v1097
      %v1099 = vpop.f32.mrf.mxu0
      %v1100 = vadd.f32 %v391, %v1099
      %1101 = vmatprep.mubr.bf16.mxu0 %v485
      %1102 = vmatmul.mubr.bf16.gmra.mxu0 %v484
      %v1103 = vpop.f32.mrf.mxu0
      %v1104 = vadd.f32 %v387, %v1103
      %v1105 = vpop.f32.mrf.mxu0
      %v1106 = vadd.f32 %v391, %v1105
      %v1107 = vpop.f32.mrf.mxu0
      %v1108 = vadd.f32 %v387, %v1107
      %v1109 = vpop.f32.mrf.mxu0
      %v1110 = vadd.f32 %v391, %v1109
      %1111 = vmatprep.mubr.bf16.mxu0 %v487
      %1112 = vmatmul.mubr.bf16.gmra.mxu0 %v486
      %v1113 = vpop.f32.mrf.mxu0
      %v1114 = vadd.f32 %v387, %v1113
      %v1115 = vpop.f32.mrf.mxu0
      %v1116 = vadd.f32 %v391, %v1115
      %v1117 = vpop.f32.mrf.mxu0
      %v1118 = vadd.f32 %v387, %v1117
      %v1119 = vpop.f32.mrf.mxu0
      %v1120 = vadd.f32 %v391, %v1119
      %1121 = vmatprep.mubr.bf16.mxu0 %v489
      %1122 = vmatmul.mubr.bf16.gmra.mxu0 %v488
      %v1123 = vpop.f32.mrf.mxu0
      %v1124 = vadd.f32 %v387, %v1123
      %v1125 = vpop.f32.mrf.mxu0
      %v1126 = vadd.f32 %v391, %v1125
      %v1127 = vpop.f32.mrf.mxu0
      %v1128 = vadd.f32 %v387, %v1127
      %v1129 = vpop.f32.mrf.mxu0
      %v1130 = vadd.f32 %v391, %v1129
      %1131 = vmatprep.mubr.bf16.mxu0 %v491
      %1132 = vmatmul.mubr.bf16.gmra.mxu0 %v490
      %v1133 = vpop.f32.mrf.mxu0
      %v1134 = vadd.f32 %v387, %v1133
      %v1135 = vpop.f32.mrf.mxu0
      %v1136 = vadd.f32 %v391, %v1135
      %v1137 = vpop.f32.mrf.mxu0
      %v1138 = vadd.f32 %v387, %v1137
      %v1139 = vpop.f32.mrf.mxu0
      %v1140 = vadd.f32 %v391, %v1139
      %1141 = vdwg.mxu0
      %vm1142 = vcmp.gt.f32.partialorder %v871, 0.0
      %vm1143 = vcmp.gt.f32.partialorder %v873, 0.0
      %vm1144 = vcmp.gt.f32.partialorder %v1024, 0.0
      %vm1145 = vcmp.gt.f32.partialorder %v1026, 0.0
      %vm1146 = vcmp.gt.f32.partialorder %v875, 0.0
      %vm1147 = vcmp.gt.f32.partialorder %v877, 0.0
      %vm1148 = vcmp.gt.f32.partialorder %v1028, 0.0
      %vm1149 = vcmp.gt.f32.partialorder %v1030, 0.0
      %vm1150 = vcmp.gt.f32.partialorder %v881, 0.0
      %vm1151 = vcmp.gt.f32.partialorder %v883, 0.0
      %vm1152 = vcmp.gt.f32.partialorder %v1034, 0.0
      %vm1153 = vcmp.gt.f32.partialorder %v1036, 0.0
      %vm1154 = vcmp.gt.f32.partialorder %v885, 0.0
      %vm1155 = vcmp.gt.f32.partialorder %v887, 0.0
      %vm1156 = vcmp.gt.f32.partialorder %v1038, 0.0
      %vm1157 = vcmp.gt.f32.partialorder %v1040, 0.0
      %vm1158 = vcmp.gt.f32.partialorder %v891, 0.0
      %vm1159 = vcmp.gt.f32.partialorder %v893, 0.0
      %vm1160 = vcmp.gt.f32.partialorder %v1044, 0.0
      %vm1161 = vcmp.gt.f32.partialorder %v1046, 0.0
      %vm1162 = vcmp.gt.f32.partialorder %v895, 0.0
      %vm1163 = vcmp.gt.f32.partialorder %v897, 0.0
      %vm1164 = vcmp.gt.f32.partialorder %v1048, 0.0
      %vm1165 = vcmp.gt.f32.partialorder %v1050, 0.0
      %vm1166 = vcmp.gt.f32.partialorder %v901, 0.0
      %vm1167 = vcmp.gt.f32.partialorder %v903, 0.0
      %vm1168 = vcmp.gt.f32.partialorder %v1054, 0.0
      %vm1169 = vcmp.gt.f32.partialorder %v1056, 0.0
      %vm1170 = vcmp.gt.f32.partialorder %v905, 0.0
      %vm1171 = vcmp.gt.f32.partialorder %v907, 0.0
      %vm1172 = vcmp.gt.f32.partialorder %v1058, 0.0
      %vm1173 = vcmp.gt.f32.partialorder %v1060, 0.0
      %vm1174 = vcmp.gt.f32.partialorder %v911, 0.0
      %vm1175 = vcmp.gt.f32.partialorder %v913, 0.0
      %vm1176 = vcmp.gt.f32.partialorder %v1064, 0.0
      %vm1177 = vcmp.gt.f32.partialorder %v1066, 0.0
      %vm1178 = vcmp.gt.f32.partialorder %v915, 0.0
      %vm1179 = vcmp.gt.f32.partialorder %v917, 0.0
      %vm1180 = vcmp.gt.f32.partialorder %v1068, 0.0
      %vm1181 = vcmp.gt.f32.partialorder %v1070, 0.0
      %vm1182 = vcmp.gt.f32.partialorder %v921, 0.0
      %vm1183 = vcmp.gt.f32.partialorder %v923, 0.0
      %vm1184 = vcmp.gt.f32.partialorder %v1074, 0.0
      %vm1185 = vcmp.gt.f32.partialorder %v1076, 0.0
      %vm1186 = vcmp.gt.f32.partialorder %v925, 0.0
      %vm1187 = vcmp.gt.f32.partialorder %v927, 0.0
      %vm1188 = vcmp.gt.f32.partialorder %v1078, 0.0
      %vm1189 = vcmp.gt.f32.partialorder %v1080, 0.0
      %vm1190 = vcmp.gt.f32.partialorder %v931, 0.0
      %vm1191 = vcmp.gt.f32.partialorder %v933, 0.0
      %vm1192 = vcmp.gt.f32.partialorder %v1084, 0.0
      %vm1193 = vcmp.gt.f32.partialorder %v1086, 0.0
      %vm1194 = vcmp.gt.f32.partialorder %v935, 0.0
      %vm1195 = vcmp.gt.f32.partialorder %v937, 0.0
      %vm1196 = vcmp.gt.f32.partialorder %v1088, 0.0
      %vm1197 = vcmp.gt.f32.partialorder %v1090, 0.0
      %vm1198 = vcmp.gt.f32.partialorder %v941, 0.0
      %vm1199 = vcmp.gt.f32.partialorder %v943, 0.0
      %vm1200 = vcmp.gt.f32.partialorder %v1094, 0.0
      %vm1201 = vcmp.gt.f32.partialorder %v1096, 0.0
      %vm1202 = vcmp.gt.f32.partialorder %v945, 0.0
      %vm1203 = vcmp.gt.f32.partialorder %v947, 0.0
      %vm1204 = vcmp.gt.f32.partialorder %v1098, 0.0
      %vm1205 = vcmp.gt.f32.partialorder %v1100, 0.0
      %vm1206 = vcmp.gt.f32.partialorder %v951, 0.0
      %vm1207 = vcmp.gt.f32.partialorder %v953, 0.0
      %vm1208 = vcmp.gt.f32.partialorder %v1104, 0.0
      %vm1209 = vcmp.gt.f32.partialorder %v1106, 0.0
      %vm1210 = vcmp.gt.f32.partialorder %v955, 0.0
      %vm1211 = vcmp.gt.f32.partialorder %v957, 0.0
      %vm1212 = vcmp.gt.f32.partialorder %v1108, 0.0
      %vm1213 = vcmp.gt.f32.partialorder %v1110, 0.0
      %vm1214 = vcmp.gt.f32.partialorder %v961, 0.0
      %vm1215 = vcmp.gt.f32.partialorder %v963, 0.0
      %vm1216 = vcmp.gt.f32.partialorder %v1114, 0.0
      %vm1217 = vcmp.gt.f32.partialorder %v1116, 0.0
      %vm1218 = vcmp.gt.f32.partialorder %v965, 0.0
      %vm1219 = vcmp.gt.f32.partialorder %v967, 0.0
      %vm1220 = vcmp.gt.f32.partialorder %v1118, 0.0
      %vm1221 = vcmp.gt.f32.partialorder %v1120, 0.0
      %vm1222 = vcmp.gt.f32.partialorder %v971, 0.0
      %vm1223 = vcmp.gt.f32.partialorder %v973, 0.0
      %vm1224 = vcmp.gt.f32.partialorder %v1124, 0.0
      %vm1225 = vcmp.gt.f32.partialorder %v1126, 0.0
      %vm1226 = vcmp.gt.f32.partialorder %v975, 0.0
      %vm1227 = vcmp.gt.f32.partialorder %v977, 0.0
      %vm1228 = vcmp.gt.f32.partialorder %v1128, 0.0
      %vm1229 = vcmp.gt.f32.partialorder %v1130, 0.0
      %vm1230 = vcmp.gt.f32.partialorder %v981, 0.0
      %vm1231 = vcmp.gt.f32.partialorder %v983, 0.0
      %vm1232 = vcmp.gt.f32.partialorder %v1134, 0.0
      %vm1233 = vcmp.gt.f32.partialorder %v1136, 0.0
      %vm1234 = vcmp.gt.f32.partialorder %v985, 0.0
      %vm1235 = vcmp.gt.f32.partialorder %v987, 0.0
      %vm1236 = vcmp.gt.f32.partialorder %v1138, 0.0
      %vm1237 = vcmp.gt.f32.partialorder %v1140, 0.0
      %v1238 = vmul.f32 %v871, 0.1
      %v1239 = vmul.f32 %v873, 0.1
      %v1240 = vmul.f32 %v1024, 0.1
      %v1241 = vmul.f32 %v1026, 0.1
      %v1242 = vmul.f32 %v875, 0.1
      %v1243 = vmul.f32 %v877, 0.1
      %v1244 = vmul.f32 %v1028, 0.1
      %v1245 = vmul.f32 %v1030, 0.1
      %v1246 = vmul.f32 %v881, 0.1
      %v1247 = vmul.f32 %v883, 0.1
      %v1248 = vmul.f32 %v1034, 0.1
      %v1249 = vmul.f32 %v1036, 0.1
      %v1250 = vmul.f32 %v885, 0.1
      %v1251 = vmul.f32 %v887, 0.1
      %v1252 = vmul.f32 %v1038, 0.1
      %v1253 = vmul.f32 %v1040, 0.1
      %v1254 = vmul.f32 %v891, 0.1
      %v1255 = vmul.f32 %v893, 0.1
      %v1256 = vmul.f32 %v1044, 0.1
      %v1257 = vmul.f32 %v1046, 0.1
      %v1258 = vmul.f32 %v895, 0.1
      %v1259 = vmul.f32 %v897, 0.1
      %v1260 = vmul.f32 %v1048, 0.1
      %v1261 = vmul.f32 %v1050, 0.1
      %v1262 = vmul.f32 %v901, 0.1
      %v1263 = vmul.f32 %v903, 0.1
      %v1264 = vmul.f32 %v1054, 0.1
      %v1265 = vmul.f32 %v1056, 0.1
      %v1266 = vmul.f32 %v905, 0.1
      %v1267 = vmul.f32 %v907, 0.1
      %v1268 = vmul.f32 %v1058, 0.1
      %v1269 = vmul.f32 %v1060, 0.1
      %v1270 = vmul.f32 %v911, 0.1
      %v1271 = vmul.f32 %v913, 0.1
      %v1272 = vmul.f32 %v1064, 0.1
      %v1273 = vmul.f32 %v1066, 0.1
      %v1274 = vmul.f32 %v915, 0.1
      %v1275 = vmul.f32 %v917, 0.1
      %v1276 = vmul.f32 %v1068, 0.1
      %v1277 = vmul.f32 %v1070, 0.1
      %v1278 = vmul.f32 %v921, 0.1
      %v1279 = vmul.f32 %v923, 0.1
      %v1280 = vmul.f32 %v1074, 0.1
      %v1281 = vmul.f32 %v1076, 0.1
      %v1282 = vmul.f32 %v925, 0.1
      %v1283 = vmul.f32 %v927, 0.1
      %v1284 = vmul.f32 %v1078, 0.1
      %v1285 = vmul.f32 %v1080, 0.1
      %v1286 = vmul.f32 %v931, 0.1
      %v1287 = vmul.f32 %v933, 0.1
      %v1288 = vmul.f32 %v1084, 0.1
      %v1289 = vmul.f32 %v1086, 0.1
      %v1290 = vmul.f32 %v935, 0.1
      %v1291 = vmul.f32 %v937, 0.1
      %v1292 = vmul.f32 %v1088, 0.1
      %v1293 = vmul.f32 %v1090, 0.1
      %v1294 = vmul.f32 %v941, 0.1
      %v1295 = vmul.f32 %v943, 0.1
      %v1296 = vmul.f32 %v1094, 0.1
      %v1297 = vmul.f32 %v1096, 0.1
      %v1298 = vmul.f32 %v945, 0.1
      %v1299 = vmul.f32 %v947, 0.1
      %v1300 = vmul.f32 %v1098, 0.1
      %v1301 = vmul.f32 %v1100, 0.1
      %v1302 = vmul.f32 %v951, 0.1
      %v1303 = vmul.f32 %v953, 0.1
      %v1304 = vmul.f32 %v1104, 0.1
      %v1305 = vmul.f32 %v1106, 0.1
      %v1306 = vmul.f32 %v955, 0.1
      %v1307 = vmul.f32 %v957, 0.1
      %v1308 = vmul.f32 %v1108, 0.1
      %v1309 = vmul.f32 %v1110, 0.1
      %v1310 = vmul.f32 %v961, 0.1
      %v1311 = vmul.f32 %v963, 0.1
      %v1312 = vmul.f32 %v1114, 0.1
      %v1313 = vmul.f32 %v1116, 0.1
      %v1314 = vmul.f32 %v965, 0.1
      %v1315 = vmul.f32 %v967, 0.1
      %v1316 = vmul.f32 %v1118, 0.1
      %v1317 = vmul.f32 %v1120, 0.1
      %v1318 = vmul.f32 %v971, 0.1
      %v1319 = vmul.f32 %v973, 0.1
      %v1320 = vmul.f32 %v1124, 0.1
      %v1321 = vmul.f32 %v1126, 0.1
      %v1322 = vmul.f32 %v975, 0.1
      %v1323 = vmul.f32 %v977, 0.1
      %v1324 = vmul.f32 %v1128, 0.1
      %v1325 = vmul.f32 %v1130, 0.1
      %v1326 = vmul.f32 %v981, 0.1
      %v1327 = vmul.f32 %v983, 0.1
      %v1328 = vmul.f32 %v1134, 0.1
      %v1329 = vmul.f32 %v1136, 0.1
      %v1330 = vmul.f32 %v985, 0.1
      %v1331 = vmul.f32 %v987, 0.1
      %v1332 = vmul.f32 %v1138, 0.1
      %v1333 = vmul.f32 %v1140, 0.1
      %v1334 = vsel %vm1142, %v871, %v1238
      %v1335 = vsel %vm1143, %v873, %v1239
      %v1336 = vsel %vm1144, %v1024, %v1240
      %v1337 = vsel %vm1145, %v1026, %v1241
      %v1338 = vsel %vm1146, %v875, %v1242
      %v1339 = vsel %vm1147, %v877, %v1243
      %v1340 = vsel %vm1148, %v1028, %v1244
      %v1341 = vsel %vm1149, %v1030, %v1245
      %v1342 = vsel %vm1150, %v881, %v1246
      %v1343 = vsel %vm1151, %v883, %v1247
      %v1344 = vsel %vm1152, %v1034, %v1248
      %v1345 = vsel %vm1153, %v1036, %v1249
      %v1346 = vsel %vm1154, %v885, %v1250
      %v1347 = vsel %vm1155, %v887, %v1251
      %v1348 = vsel %vm1156, %v1038, %v1252
      %v1349 = vsel %vm1157, %v1040, %v1253
      %v1350 = vsel %vm1158, %v891, %v1254
      %v1351 = vsel %vm1159, %v893, %v1255
      %v1352 = vsel %vm1160, %v1044, %v1256
      %v1353 = vsel %vm1161, %v1046, %v1257
      %v1354 = vsel %vm1162, %v895, %v1258
      %v1355 = vsel %vm1163, %v897, %v1259
      %v1356 = vsel %vm1164, %v1048, %v1260
      %v1357 = vsel %vm1165, %v1050, %v1261
      %v1358 = vsel %vm1166, %v901, %v1262
      %v1359 = vsel %vm1167, %v903, %v1263
      %v1360 = vsel %vm1168, %v1054, %v1264
      %v1361 = vsel %vm1169, %v1056, %v1265
      %v1362 = vsel %vm1170, %v905, %v1266
      %v1363 = vsel %vm1171, %v907, %v1267
      %v1364 = vsel %vm1172, %v1058, %v1268
      %v1365 = vsel %vm1173, %v1060, %v1269
      %v1366 = vsel %vm1174, %v911, %v1270
      %v1367 = vsel %vm1175, %v913, %v1271
      %v1368 = vsel %vm1176, %v1064, %v1272
      %v1369 = vsel %vm1177, %v1066, %v1273
      %v1370 = vsel %vm1178, %v915, %v1274
      %v1371 = vsel %vm1179, %v917, %v1275
      %v1372 = vsel %vm1180, %v1068, %v1276
      %v1373 = vsel %vm1181, %v1070, %v1277
      %v1374 = vsel %vm1182, %v921, %v1278
      %v1375 = vsel %vm1183, %v923, %v1279
      %v1376 = vsel %vm1184, %v1074, %v1280
      %v1377 = vsel %vm1185, %v1076, %v1281
      %v1378 = vsel %vm1186, %v925, %v1282
      %v1379 = vsel %vm1187, %v927, %v1283
      %v1380 = vsel %vm1188, %v1078, %v1284
      %v1381 = vsel %vm1189, %v1080, %v1285
      %v1382 = vsel %vm1190, %v931, %v1286
      %v1383 = vsel %vm1191, %v933, %v1287
      %v1384 = vsel %vm1192, %v1084, %v1288
      %v1385 = vsel %vm1193, %v1086, %v1289
      %v1386 = vsel %vm1194, %v935, %v1290
      %v1387 = vsel %vm1195, %v937, %v1291
      %v1388 = vsel %vm1196, %v1088, %v1292
      %v1389 = vsel %vm1197, %v1090, %v1293
      %v1390 = vsel %vm1198, %v941, %v1294
      %v1391 = vsel %vm1199, %v943, %v1295
      %v1392 = vsel %vm1200, %v1094, %v1296
      %v1393 = vsel %vm1201, %v1096, %v1297
      %v1394 = vsel %vm1202, %v945, %v1298
      %v1395 = vsel %vm1203, %v947, %v1299
      %v1396 = vsel %vm1204, %v1098, %v1300
      %v1397 = vsel %vm1205, %v1100, %v1301
      %v1398 = vsel %vm1206, %v951, %v1302
      %v1399 = vsel %vm1207, %v953, %v1303
      %v1400 = vsel %vm1208, %v1104, %v1304
      %v1401 = vsel %vm1209, %v1106, %v1305
      %v1402 = vsel %vm1210, %v955, %v1306
      %v1403 = vsel %vm1211, %v957, %v1307
      %v1404 = vsel %vm1212, %v1108, %v1308
      %v1405 = vsel %vm1213, %v1110, %v1309
      %v1406 = vsel %vm1214, %v961, %v1310
      %v1407 = vsel %vm1215, %v963, %v1311
      %v1408 = vsel %vm1216, %v1114, %v1312
      %v1409 = vsel %vm1217, %v1116, %v1313
      %v1410 = vsel %vm1218, %v965, %v1314
      %v1411 = vsel %vm1219, %v967, %v1315
      %v1412 = vsel %vm1220, %v1118, %v1316
      %v1413 = vsel %vm1221, %v1120, %v1317
      %v1414 = vsel %vm1222, %v971, %v1318
      %v1415 = vsel %vm1223, %v973, %v1319
      %v1416 = vsel %vm1224, %v1124, %v1320
      %v1417 = vsel %vm1225, %v1126, %v1321
      %v1418 = vsel %vm1226, %v975, %v1322
      %v1419 = vsel %vm1227, %v977, %v1323
      %v1420 = vsel %vm1228, %v1128, %v1324
      %v1421 = vsel %vm1229, %v1130, %v1325
      %v1422 = vsel %vm1230, %v981, %v1326
      %v1423 = vsel %vm1231, %v983, %v1327
      %v1424 = vsel %vm1232, %v1134, %v1328
      %v1425 = vsel %vm1233, %v1136, %v1329
      %v1426 = vsel %vm1234, %v985, %v1330
      %v1427 = vsel %vm1235, %v987, %v1331
      %v1428 = vsel %vm1236, %v1138, %v1332
      %v1429 = vsel %vm1237, %v1140, %v1333
      %v1430 = vpack.c.bf16 %v1338, %v1334
      %v1431 = vpack.c.bf16 %v1339, %v1335
      %v1432 = vpack.c.bf16 %v1340, %v1336
      %v1433 = vpack.c.bf16 %v1341, %v1337
      %v1434 = vpack.c.bf16 %v1346, %v1342
      %v1435 = vpack.c.bf16 %v1347, %v1343
      %v1436 = vpack.c.bf16 %v1348, %v1344
      %v1437 = vpack.c.bf16 %v1349, %v1345
      %v1438 = vpack.c.bf16 %v1354, %v1350
      %v1439 = vpack.c.bf16 %v1355, %v1351
      %v1440 = vpack.c.bf16 %v1356, %v1352
      %v1441 = vpack.c.bf16 %v1357, %v1353
      %v1442 = vpack.c.bf16 %v1362, %v1358
      %v1443 = vpack.c.bf16 %v1363, %v1359
      %v1444 = vpack.c.bf16 %v1364, %v1360
      %v1445 = vpack.c.bf16 %v1365, %v1361
      %v1446 = vpack.c.bf16 %v1370, %v1366
      %v1447 = vpack.c.bf16 %v1371, %v1367
      %v1448 = vpack.c.bf16 %v1372, %v1368
      %v1449 = vpack.c.bf16 %v1373, %v1369
      %v1450 = vpack.c.bf16 %v1378, %v1374
      %v1451 = vpack.c.bf16 %v1379, %v1375
      %v1452 = vpack.c.bf16 %v1380, %v1376
      %v1453 = vpack.c.bf16 %v1381, %v1377
      %v1454 = vpack.c.bf16 %v1386, %v1382
      %v1455 = vpack.c.bf16 %v1387, %v1383
      %v1456 = vpack.c.bf16 %v1388, %v1384
      %v1457 = vpack.c.bf16 %v1389, %v1385
      %v1458 = vpack.c.bf16 %v1394, %v1390
      %v1459 = vpack.c.bf16 %v1395, %v1391
      %v1460 = vpack.c.bf16 %v1396, %v1392
      %v1461 = vpack.c.bf16 %v1397, %v1393
      %v1462 = vpack.c.bf16 %v1402, %v1398
      %v1463 = vpack.c.bf16 %v1403, %v1399
      %v1464 = vpack.c.bf16 %v1404, %v1400
      %v1465 = vpack.c.bf16 %v1405, %v1401
      %v1466 = vpack.c.bf16 %v1410, %v1406
      %v1467 = vpack.c.bf16 %v1411, %v1407
      %v1468 = vpack.c.bf16 %v1412, %v1408
      %v1469 = vpack.c.bf16 %v1413, %v1409
      %v1470 = vpack.c.bf16 %v1418, %v1414
      %v1471 = vpack.c.bf16 %v1419, %v1415
      %v1472 = vpack.c.bf16 %v1420, %v1416
      %v1473 = vpack.c.bf16 %v1421, %v1417
      %v1474 = vpack.c.bf16 %v1426, %v1422
      %v1475 = vpack.c.bf16 %v1427, %v1423
      %v1476 = vpack.c.bf16 %v1428, %v1424
      %v1477 = vpack.c.bf16 %v1429, %v1425
      %v1526 = vunpack.c.l.b16 %v1430
      %v1527 = vunpack.c.l.b16 %v1431
      %v1528 = vunpack.c.l.b16 %v1432
      %v1529 = vunpack.c.l.b16 %v1433
      %v1530 = vunpack.c.h.b16 %v1430
      %v1531 = vunpack.c.h.b16 %v1431
      %v1532 = vunpack.c.h.b16 %v1432
      %v1533 = vunpack.c.h.b16 %v1433
      %v1534 = vunpack.c.l.b16 %v1434
      %v1535 = vunpack.c.l.b16 %v1435
      %v1536 = vunpack.c.l.b16 %v1436
      %v1537 = vunpack.c.l.b16 %v1437
      %v1538 = vunpack.c.h.b16 %v1434
      %v1539 = vunpack.c.h.b16 %v1435
      %v1540 = vunpack.c.h.b16 %v1436
      %v1541 = vunpack.c.h.b16 %v1437
      %v1542 = vunpack.c.l.b16 %v1438
      %v1543 = vunpack.c.l.b16 %v1439
      %v1544 = vunpack.c.l.b16 %v1440
      %v1545 = vunpack.c.l.b16 %v1441
      %v1546 = vunpack.c.h.b16 %v1438
      %v1547 = vunpack.c.h.b16 %v1439
      %v1548 = vunpack.c.h.b16 %v1440
      %v1549 = vunpack.c.h.b16 %v1441
      %v1550 = vunpack.c.l.b16 %v1442
      %v1551 = vunpack.c.l.b16 %v1443
      %v1552 = vunpack.c.l.b16 %v1444
      %v1553 = vunpack.c.l.b16 %v1445
      %v1554 = vunpack.c.h.b16 %v1442
      %v1555 = vunpack.c.h.b16 %v1443
      %v1556 = vunpack.c.h.b16 %v1444
      %v1557 = vunpack.c.h.b16 %v1445
      %v1558 = vunpack.c.l.b16 %v1446
      %v1559 = vunpack.c.l.b16 %v1447
      %v1560 = vunpack.c.l.b16 %v1448
      %v1561 = vunpack.c.l.b16 %v1449
      %v1562 = vunpack.c.h.b16 %v1446
      %v1563 = vunpack.c.h.b16 %v1447
      %v1564 = vunpack.c.h.b16 %v1448
      %v1565 = vunpack.c.h.b16 %v1449
      %v1566 = vunpack.c.l.b16 %v1450
      %v1567 = vunpack.c.l.b16 %v1451
      %v1568 = vunpack.c.l.b16 %v1452
      %v1569 = vunpack.c.l.b16 %v1453
      %v1570 = vunpack.c.h.b16 %v1450
      %v1571 = vunpack.c.h.b16 %v1451
      %v1572 = vunpack.c.h.b16 %v1452
      %v1573 = vunpack.c.h.b16 %v1453
      %v1574 = vunpack.c.l.b16 %v1454
      %v1575 = vunpack.c.l.b16 %v1455
      %v1576 = vunpack.c.l.b16 %v1456
      %v1577 = vunpack.c.l.b16 %v1457
      %v1578 = vunpack.c.h.b16 %v1454
      %v1579 = vunpack.c.h.b16 %v1455
      %v1580 = vunpack.c.h.b16 %v1456
      %v1581 = vunpack.c.h.b16 %v1457
      %v1582 = vunpack.c.l.b16 %v1458
      %v1583 = vunpack.c.l.b16 %v1459
      %v1584 = vunpack.c.l.b16 %v1460
      %v1585 = vunpack.c.l.b16 %v1461
      %v1586 = vunpack.c.h.b16 %v1458
      %v1587 = vunpack.c.h.b16 %v1459
      %v1588 = vunpack.c.h.b16 %v1460
      %v1589 = vunpack.c.h.b16 %v1461
      %v1590 = vunpack.c.l.b16 %v1462
      %v1591 = vunpack.c.l.b16 %v1463
      %v1592 = vunpack.c.l.b16 %v1464
      %v1593 = vunpack.c.l.b16 %v1465
      %v1594 = vunpack.c.h.b16 %v1462
      %v1595 = vunpack.c.h.b16 %v1463
      %v1596 = vunpack.c.h.b16 %v1464
      %v1597 = vunpack.c.h.b16 %v1465
      %v1598 = vunpack.c.l.b16 %v1466
      %v1599 = vunpack.c.l.b16 %v1467
      %v1600 = vunpack.c.l.b16 %v1468
      %v1601 = vunpack.c.l.b16 %v1469
      %v1602 = vunpack.c.h.b16 %v1466
      %v1603 = vunpack.c.h.b16 %v1467
      %v1604 = vunpack.c.h.b16 %v1468
      %v1605 = vunpack.c.h.b16 %v1469
      %v1606 = vunpack.c.l.b16 %v1470
      %v1607 = vunpack.c.l.b16 %v1471
      %v1608 = vunpack.c.l.b16 %v1472
      %v1609 = vunpack.c.l.b16 %v1473
      %v1610 = vunpack.c.h.b16 %v1470
      %v1611 = vunpack.c.h.b16 %v1471
      %v1612 = vunpack.c.h.b16 %v1472
      %v1613 = vunpack.c.h.b16 %v1473
      %v1614 = vunpack.c.l.b16 %v1474
      %v1615 = vunpack.c.l.b16 %v1475
      %v1616 = vunpack.c.l.b16 %v1476
      %v1617 = vunpack.c.l.b16 %v1477
      %v1618 = vunpack.c.h.b16 %v1474
      %v1619 = vunpack.c.h.b16 %v1475
      %v1620 = vunpack.c.h.b16 %v1476
      %v1621 = vunpack.c.h.b16 %v1477
      %v1622 = vpack.c.b16 %v1527, %v1526
      %v1623 = vpack.c.b16 %v1529, %v1528
      %v1624 = vpack.c.b16 %v1531, %v1530
      %v1625 = vpack.c.b16 %v1533, %v1532
      %v1626 = vpack.c.b16 %v1535, %v1534
      %v1627 = vpack.c.b16 %v1537, %v1536
      %v1628 = vpack.c.b16 %v1539, %v1538
      %v1629 = vpack.c.b16 %v1541, %v1540
      %v1630 = vpack.c.b16 %v1543, %v1542
      %v1631 = vpack.c.b16 %v1545, %v1544
      %v1632 = vpack.c.b16 %v1547, %v1546
      %v1633 = vpack.c.b16 %v1549, %v1548
      %v1634 = vpack.c.b16 %v1551, %v1550
      %v1635 = vpack.c.b16 %v1553, %v1552
      %v1636 = vpack.c.b16 %v1555, %v1554
      %v1637 = vpack.c.b16 %v1557, %v1556
      %v1638 = vpack.c.b16 %v1559, %v1558
      %v1639 = vpack.c.b16 %v1561, %v1560
      %v1640 = vpack.c.b16 %v1563, %v1562
      %v1641 = vpack.c.b16 %v1565, %v1564
      %v1642 = vpack.c.b16 %v1567, %v1566
      %v1643 = vpack.c.b16 %v1569, %v1568
      %v1644 = vpack.c.b16 %v1571, %v1570
      %v1645 = vpack.c.b16 %v1573, %v1572
      %v1646 = vpack.c.b16 %v1575, %v1574
      %v1647 = vpack.c.b16 %v1577, %v1576
      %v1648 = vpack.c.b16 %v1579, %v1578
      %v1649 = vpack.c.b16 %v1581, %v1580
      %v1650 = vpack.c.b16 %v1583, %v1582
      %v1651 = vpack.c.b16 %v1585, %v1584
      %v1652 = vpack.c.b16 %v1587, %v1586
      %v1653 = vpack.c.b16 %v1589, %v1588
      %v1654 = vpack.c.b16 %v1591, %v1590
      %v1655 = vpack.c.b16 %v1593, %v1592
      %v1656 = vpack.c.b16 %v1595, %v1594
      %v1657 = vpack.c.b16 %v1597, %v1596
      %v1658 = vpack.c.b16 %v1599, %v1598
      %v1659 = vpack.c.b16 %v1601, %v1600
      %v1660 = vpack.c.b16 %v1603, %v1602
      %v1661 = vpack.c.b16 %v1605, %v1604
      %v1662 = vpack.c.b16 %v1607, %v1606
      %v1663 = vpack.c.b16 %v1609, %v1608
      %v1664 = vpack.c.b16 %v1611, %v1610
      %v1665 = vpack.c.b16 %v1613, %v1612
      %v1666 = vpack.c.b16 %v1615, %v1614
      %v1667 = vpack.c.b16 %v1617, %v1616
      %v1668 = vpack.c.b16 %v1619, %v1618
      %v1669 = vpack.c.b16 %v1621, %v1620
      %1718 = vst [vmem:[#allocation2] sm:$0xff] %v1622
      %1719 = vst [vmem:[#allocation2 + $0x8] sm:$0xff] %v1623
      %1720 = vst [vmem:[#allocation2 + $0x10] sm:$0xff] %v1624
      %1721 = vst [vmem:[#allocation2 + $0x18] sm:$0xff] %v1625
      %1722 = vst [vmem:[#allocation2 + $0x20] sm:$0xff] %v1626
      %1723 = vst [vmem:[#allocation2 + $0x28] sm:$0xff] %v1627
      %1724 = vst [vmem:[#allocation2 + $0x30] sm:$0xff] %v1628
      %1725 = vst [vmem:[#allocation2 + $0x38] sm:$0xff] %v1629
      %1726 = vst [vmem:[#allocation2 + $0x40] sm:$0xff] %v1630
      %1727 = vst [vmem:[#allocation2 + $0x48] sm:$0xff] %v1631
      %1728 = vst [vmem:[#allocation2 + $0x50] sm:$0xff] %v1632
      %1729 = vst [vmem:[#allocation2 + $0x58] sm:$0xff] %v1633
      %1730 = vst [vmem:[#allocation2 + $0x60] sm:$0xff] %v1634
      %1731 = vst [vmem:[#allocation2 + $0x68] sm:$0xff] %v1635
      %1732 = vst [vmem:[#allocation2 + $0x70] sm:$0xff] %v1636
      %1733 = vst [vmem:[#allocation2 + $0x78] sm:$0xff] %v1637
      %1734 = vst [vmem:[#allocation2 + $0x80] sm:$0xff] %v1638
      %1735 = vst [vmem:[#allocation2 + $0x88] sm:$0xff] %v1639
      %1736 = vst [vmem:[#allocation2 + $0x90] sm:$0xff] %v1640
      %1737 = vst [vmem:[#allocation2 + $0x98] sm:$0xff] %v1641
      %1738 = vst [vmem:[#allocation2 + $0xa0] sm:$0xff] %v1642
      %1739 = vst [vmem:[#allocation2 + $0xa8] sm:$0xff] %v1643
      %1740 = vst [vmem:[#allocation2 + $0xb0] sm:$0xff] %v1644
      %1741 = vst [vmem:[#allocation2 + $0xb8] sm:$0xff] %v1645
      %1742 = vst [vmem:[#allocation2 + $0xc0] sm:$0xff] %v1646
      %1743 = vst [vmem:[#allocation2 + $0xc8] sm:$0xff] %v1647
      %1744 = vst [vmem:[#allocation2 + $0xd0] sm:$0xff] %v1648
      %1745 = vst [vmem:[#allocation2 + $0xd8] sm:$0xff] %v1649
      %1746 = vst [vmem:[#allocation2 + $0xe0] sm:$0xff] %v1650
      %1747 = vst [vmem:[#allocation2 + $0xe8] sm:$0xff] %v1651
      %1748 = vst [vmem:[#allocation2 + $0xf0] sm:$0xff] %v1652
      %1749 = vst [vmem:[#allocation2 + $0xf8] sm:$0xff] %v1653
      %1750 = vst [vmem:[#allocation2 + $0x100] sm:$0xff] %v1654
      %1751 = vst [vmem:[#allocation2 + $0x108] sm:$0xff] %v1655
      %1752 = vst [vmem:[#allocation2 + $0x110] sm:$0xff] %v1656
      %1753 = vst [vmem:[#allocation2 + $0x118] sm:$0xff] %v1657
      %1754 = vst [vmem:[#allocation2 + $0x120] sm:$0xff] %v1658
      %1755 = vst [vmem:[#allocation2 + $0x128] sm:$0xff] %v1659
      %1756 = vst [vmem:[#allocation2 + $0x130] sm:$0xff] %v1660
      %1757 = vst [vmem:[#allocation2 + $0x138] sm:$0xff] %v1661
      %1758 = vst [vmem:[#allocation2 + $0x140] sm:$0xff] %v1662
      %1759 = vst [vmem:[#allocation2 + $0x148] sm:$0xff] %v1663
      %1760 = vst [vmem:[#allocation2 + $0x150] sm:$0xff] %v1664
      %1761 = vst [vmem:[#allocation2 + $0x158] sm:$0xff] %v1665
      %1762 = vst [vmem:[#allocation2 + $0x160] sm:$0xff] %v1666
      %1763 = vst [vmem:[#allocation2 + $0x168] sm:$0xff] %v1667
      %1764 = vst [vmem:[#allocation2 + $0x170] sm:$0xff] %v1668
      %1765 = vst [vmem:[#allocation2 + $0x178] sm:$0xff] %v1669
      %1766 = vst [vmem:[#allocation2 + $0x180] sm:$0xff] 0
      %1767 = vst [vmem:[#allocation2 + $0x188] sm:$0xff] 0
      %1768 = vst [vmem:[#allocation2 + $0x190] sm:$0xff] 0
      %1769 = vst [vmem:[#allocation2 + $0x198] sm:$0xff] 0
      %v1770 = vld [vmem:[#allocation2] sm:$0xff]
      %v1771 = vld [vmem:[#allocation2 + $0x8] sm:$0xff]
      %v1772 = vld [vmem:[#allocation2 + $0x10] sm:$0xff]
      %v1773 = vld [vmem:[#allocation2 + $0x18] sm:$0xff]
      %v1774 = vld [vmem:[#allocation2 + $0x20] sm:$0xff]
      %v1775 = vld [vmem:[#allocation2 + $0x28] sm:$0xff]
      %v1776 = vld [vmem:[#allocation2 + $0x30] sm:$0xff]
      %v1777 = vld [vmem:[#allocation2 + $0x38] sm:$0xff]
      %v1778 = vld [vmem:[#allocation2 + $0x40] sm:$0xff]
      %v1779 = vld [vmem:[#allocation2 + $0x48] sm:$0xff]
      %v1780 = vld [vmem:[#allocation2 + $0x50] sm:$0xff]
      %v1781 = vld [vmem:[#allocation2 + $0x58] sm:$0xff]
      %v1782 = vld [vmem:[#allocation2 + $0x60] sm:$0xff]
      %v1783 = vld [vmem:[#allocation2 + $0x68] sm:$0xff]
      %v1784 = vld [vmem:[#allocation2 + $0x70] sm:$0xff]
      %v1785 = vld [vmem:[#allocation2 + $0x78] sm:$0xff]
      %v1786 = vld [vmem:[#allocation2 + $0x80] sm:$0xff]
      %v1787 = vld [vmem:[#allocation2 + $0x88] sm:$0xff]
      %v1788 = vld [vmem:[#allocation2 + $0x90] sm:$0xff]
      %v1789 = vld [vmem:[#allocation2 + $0x98] sm:$0xff]
      %v1790 = vld [vmem:[#allocation2 + $0xa0] sm:$0xff]
      %v1791 = vld [vmem:[#allocation2 + $0xa8] sm:$0xff]
      %v1792 = vld [vmem:[#allocation2 + $0xb0] sm:$0xff]
      %v1793 = vld [vmem:[#allocation2 + $0xb8] sm:$0xff]
      %v1794 = vld [vmem:[#allocation2 + $0xc0] sm:$0xff]
      %v1795 = vld [vmem:[#allocation2 + $0xc8] sm:$0xff]
      %v1796 = vld [vmem:[#allocation2 + $0xd0] sm:$0xff]
      %v1797 = vld [vmem:[#allocation2 + $0xd8] sm:$0xff]
      %v1798 = vld [vmem:[#allocation2 + $0xe0] sm:$0xff]
      %v1799 = vld [vmem:[#allocation2 + $0xe8] sm:$0xff]
      %v1800 = vld [vmem:[#allocation2 + $0xf0] sm:$0xff]
      %v1801 = vld [vmem:[#allocation2 + $0xf8] sm:$0xff]
      %v1802 = vld [vmem:[#allocation2 + $0x100] sm:$0xff]
      %v1803 = vld [vmem:[#allocation2 + $0x108] sm:$0xff]
      %v1804 = vld [vmem:[#allocation2 + $0x110] sm:$0xff]
      %v1805 = vld [vmem:[#allocation2 + $0x118] sm:$0xff]
      %v1806 = vld [vmem:[#allocation2 + $0x120] sm:$0xff]
      %v1807 = vld [vmem:[#allocation2 + $0x128] sm:$0xff]
      %v1808 = vld [vmem:[#allocation2 + $0x130] sm:$0xff]
      %v1809 = vld [vmem:[#allocation2 + $0x138] sm:$0xff]
      %v1810 = vld [vmem:[#allocation2 + $0x140] sm:$0xff]
      %v1811 = vld [vmem:[#allocation2 + $0x148] sm:$0xff]
      %v1812 = vld [vmem:[#allocation2 + $0x150] sm:$0xff]
      %v1813 = vld [vmem:[#allocation2 + $0x158] sm:$0xff]
      %v1814 = vld [vmem:[#allocation2 + $0x160] sm:$0xff]
      %v1815 = vld [vmem:[#allocation2 + $0x168] sm:$0xff]
      %v1816 = vld [vmem:[#allocation2 + $0x170] sm:$0xff]
      %v1817 = vld [vmem:[#allocation2 + $0x178] sm:$0xff]
      %v1818 = vld [vmem:[%s3] sm:$0xff]
      %v1819 = vld [vmem:[%s3 + $0x8] sm:$0xff]
      %v1820 = vld [vmem:[%s3 + $0x10] sm:$0xff]
      %v1821 = vld [vmem:[%s3 + $0x18] sm:$0xff]
      %v1822 = vld [vmem:[%s3 + $0x20] sm:$0xff]
      %v1823 = vld [vmem:[%s3 + $0x28] sm:$0xff]
      %v1824 = vld [vmem:[%s3 + $0x30] sm:$0xff]
      %v1825 = vld [vmem:[%s3 + $0x38] sm:$0xff]
      %v1826 = vld [vmem:[%s3 + $0x40] sm:$0xff]
      %v1827 = vld [vmem:[%s3 + $0x48] sm:$0xff]
      %v1828 = vld [vmem:[%s3 + $0x50] sm:$0xff]
      %v1829 = vld [vmem:[%s3 + $0x58] sm:$0xff]
      %v1830 = vld [vmem:[%s3 + $0x60] sm:$0xff]
      %v1831 = vld [vmem:[%s3 + $0x68] sm:$0xff]
      %v1832 = vld [vmem:[%s3 + $0x70] sm:$0xff]
      %v1833 = vld [vmem:[%s3 + $0x78] sm:$0xff]
      %v1834 = vld [vmem:[%s3 + $0x80] sm:$0xff]
      %v1835 = vld [vmem:[%s3 + $0x88] sm:$0xff]
      %v1836 = vld [vmem:[%s3 + $0x90] sm:$0xff]
      %v1837 = vld [vmem:[%s3 + $0x98] sm:$0xff]
      %v1838 = vld [vmem:[%s3 + $0xa0] sm:$0xff]
      %v1839 = vld [vmem:[%s3 + $0xa8] sm:$0xff]
      %v1840 = vld [vmem:[%s3 + $0xb0] sm:$0xff]
      %v1841 = vld [vmem:[%s3 + $0xb8] sm:$0xff]
      %v1842 = vld [vmem:[%s3 + $0xc0] sm:$0xff]
      %v1843 = vld [vmem:[%s3 + $0xc8] sm:$0xff]
      %v1844 = vld [vmem:[%s3 + $0xd0] sm:$0xff]
      %v1845 = vld [vmem:[%s3 + $0xd8] sm:$0xff]
      %v1846 = vld [vmem:[%s3 + $0xe0] sm:$0xff]
      %v1847 = vld [vmem:[%s3 + $0xe8] sm:$0xff]
      %v1848 = vld [vmem:[%s3 + $0xf0] sm:$0xff]
      %v1849 = vld [vmem:[%s3 + $0xf8] sm:$0xff]
      %v1850 = vld [vmem:[%s3 + $0x100] sm:$0xff]
      %v1851 = vld [vmem:[%s3 + $0x108] sm:$0xff]
      %v1852 = vld [vmem:[%s3 + $0x110] sm:$0xff]
      %v1853 = vld [vmem:[%s3 + $0x118] sm:$0xff]
      %v1854 = vld [vmem:[%s3 + $0x120] sm:$0xff]
      %v1855 = vld [vmem:[%s3 + $0x128] sm:$0xff]
      %v1856 = vld [vmem:[%s3 + $0x130] sm:$0xff]
      %v1857 = vld [vmem:[%s3 + $0x138] sm:$0xff]
      %v1858 = vld [vmem:[%s3 + $0x140] sm:$0xff]
      %v1859 = vld [vmem:[%s3 + $0x148] sm:$0xff]
      %v1860 = vld [vmem:[%s3 + $0x150] sm:$0xff]
      %v1861 = vld [vmem:[%s3 + $0x158] sm:$0xff]
      %v1862 = vld [vmem:[%s3 + $0x160] sm:$0xff]
      %v1863 = vld [vmem:[%s3 + $0x168] sm:$0xff]
      %v1864 = vld [vmem:[%s3 + $0x170] sm:$0xff]
      %v1865 = vld [vmem:[%s3 + $0x178] sm:$0xff]
      %v1866 = vld [vmem:[%s3 + $0x180] sm:$0xff]
      %v1867 = vld [vmem:[%s3 + $0x188] sm:$0xff]
      %v1868 = vld [vmem:[%s3 + $0x190] sm:$0xff]
      %v1869 = vld [vmem:[%s3 + $0x198] sm:$0xff]
      %v1870 = vld [vmem:[%s3 + $0x1a0] sm:$0xff]
      %v1871 = vld [vmem:[%s3 + $0x1a8] sm:$0xff]
      %v1872 = vld [vmem:[%s3 + $0x1b0] sm:$0xff]
      %v1873 = vld [vmem:[%s3 + $0x1b8] sm:$0xff]
      %v1874 = vld [vmem:[%s3 + $0x1c0] sm:$0xff]
      %v1875 = vld [vmem:[%s3 + $0x1c8] sm:$0xff]
      %v1876 = vld [vmem:[%s3 + $0x1d0] sm:$0xff]
      %v1877 = vld [vmem:[%s3 + $0x1d8] sm:$0xff]
      %v1878 = vld [vmem:[%s3 + $0x1e0] sm:$0xff]
      %v1879 = vld [vmem:[%s3 + $0x1e8] sm:$0xff]
      %v1880 = vld [vmem:[%s3 + $0x1f0] sm:$0xff]
      %v1881 = vld [vmem:[%s3 + $0x1f8] sm:$0xff]
      %v1882 = vld [vmem:[#allocation2 + $0x180] sm:$0x11]
      %v1883 = vld [vmem:[#allocation2 + $0x188] sm:$0x11]
      %v1884 = vld [vmem:[%s3 + $0x200] sm:$0xff]
      %v1885 = vld [vmem:[%s3 + $0x208] sm:$0xff]
      %v1886 = vld [vmem:[%s3 + $0x210] sm:$0xff]
      %v1887 = vld [vmem:[%s3 + $0x218] sm:$0xff]
      %v1888 = vld [vmem:[%s3 + $0x220] sm:$0xff]
      %v1889 = vld [vmem:[%s3 + $0x228] sm:$0xff]
      %v1890 = vld [vmem:[%s3 + $0x230] sm:$0xff]
      %v1891 = vld [vmem:[%s3 + $0x238] sm:$0xff]
      %v1892 = vld [vmem:[%s3 + $0x240] sm:$0xff]
      %v1893 = vld [vmem:[%s3 + $0x248] sm:$0xff]
      %v1894 = vld [vmem:[%s3 + $0x250] sm:$0xff]
      %v1895 = vld [vmem:[%s3 + $0x258] sm:$0xff]
      %v1896 = vld [vmem:[%s3 + $0x260] sm:$0xff]
      %v1897 = vld [vmem:[%s3 + $0x268] sm:$0xff]
      %v1898 = vld [vmem:[%s3 + $0x270] sm:$0xff]
      %v1899 = vld [vmem:[%s3 + $0x278] sm:$0xff]
      %v1900 = vld [vmem:[%s3 + $0x280] sm:$0xff]
      %v1901 = vld [vmem:[%s3 + $0x288] sm:$0xff]
      %v1902 = vld [vmem:[%s3 + $0x290] sm:$0xff]
      %v1903 = vld [vmem:[%s3 + $0x298] sm:$0xff]
      %v1904 = vld [vmem:[%s3 + $0x2a0] sm:$0xff]
      %v1905 = vld [vmem:[%s3 + $0x2a8] sm:$0xff]
      %v1906 = vld [vmem:[%s3 + $0x2b0] sm:$0xff]
      %v1907 = vld [vmem:[%s3 + $0x2b8] sm:$0xff]
      %v1908 = vld [vmem:[%s3 + $0x2c0] sm:$0xff]
      %v1909 = vld [vmem:[%s3 + $0x2c8] sm:$0xff]
      %v1910 = vld [vmem:[%s3 + $0x2d0] sm:$0xff]
      %v1911 = vld [vmem:[%s3 + $0x2d8] sm:$0xff]
      %v1912 = vld [vmem:[%s3 + $0x2e0] sm:$0xff]
      %v1913 = vld [vmem:[%s3 + $0x2e8] sm:$0xff]
      %v1914 = vld [vmem:[%s3 + $0x2f0] sm:$0xff]
      %v1915 = vld [vmem:[%s3 + $0x2f8] sm:$0xff]
      %v1916 = vld [vmem:[%s3 + $0x300] sm:$0xff]
      %v1917 = vld [vmem:[%s3 + $0x308] sm:$0xff]
      %v1918 = vld [vmem:[%s3 + $0x310] sm:$0xff]
      %v1919 = vld [vmem:[%s3 + $0x318] sm:$0xff]
      %v1920 = vld [vmem:[%s3 + $0x320] sm:$0xff]
      %v1921 = vld [vmem:[%s3 + $0x328] sm:$0xff]
      %v1922 = vld [vmem:[%s3 + $0x330] sm:$0xff]
      %v1923 = vld [vmem:[%s3 + $0x338] sm:$0xff]
      %v1924 = vld [vmem:[%s3 + $0x340] sm:$0xff]
      %v1925 = vld [vmem:[%s3 + $0x348] sm:$0xff]
      %v1926 = vld [vmem:[%s3 + $0x350] sm:$0xff]
      %v1927 = vld [vmem:[%s3 + $0x358] sm:$0xff]
      %v1928 = vld [vmem:[%s3 + $0x360] sm:$0xff]
      %v1929 = vld [vmem:[%s3 + $0x368] sm:$0xff]
      %v1930 = vld [vmem:[%s3 + $0x370] sm:$0xff]
      %v1931 = vld [vmem:[%s3 + $0x378] sm:$0xff]
      %v1932 = vld [vmem:[%s3 + $0x380] sm:$0xff]
      %v1933 = vld [vmem:[%s3 + $0x388] sm:$0xff]
      %v1934 = vld [vmem:[%s3 + $0x390] sm:$0xff]
      %v1935 = vld [vmem:[%s3 + $0x398] sm:$0xff]
      %v1936 = vld [vmem:[%s3 + $0x3a0] sm:$0xff]
      %v1937 = vld [vmem:[%s3 + $0x3a8] sm:$0xff]
      %v1938 = vld [vmem:[%s3 + $0x3b0] sm:$0xff]
      %v1939 = vld [vmem:[%s3 + $0x3b8] sm:$0xff]
      %v1940 = vld [vmem:[%s3 + $0x3c0] sm:$0xff]
      %v1941 = vld [vmem:[%s3 + $0x3c8] sm:$0xff]
      %v1942 = vld [vmem:[%s3 + $0x3d0] sm:$0xff]
      %v1943 = vld [vmem:[%s3 + $0x3d8] sm:$0xff]
      %v1944 = vld [vmem:[%s3 + $0x3e0] sm:$0xff]
      %v1945 = vld [vmem:[%s3 + $0x3e8] sm:$0xff]
      %v1946 = vld [vmem:[%s3 + $0x3f0] sm:$0xff]
      %v1947 = vld [vmem:[%s3 + $0x3f8] sm:$0xff]
      %v1998 = vunpack.c.l.b16 %v1770
      %v1999 = vunpack.c.h.b16 %v1770
      %v2000 = vunpack.c.l.b16 %v1771
      %v2001 = vunpack.c.h.b16 %v1771
      %v2002 = vunpack.c.l.b16 %v1772
      %v2003 = vunpack.c.h.b16 %v1772
      %v2004 = vunpack.c.l.b16 %v1773
      %v2005 = vunpack.c.h.b16 %v1773
      %v2006 = vunpack.c.l.b16 %v1774
      %v2007 = vunpack.c.h.b16 %v1774
      %v2008 = vunpack.c.l.b16 %v1775
      %v2009 = vunpack.c.h.b16 %v1775
      %v2010 = vunpack.c.l.b16 %v1776
      %v2011 = vunpack.c.h.b16 %v1776
      %v2012 = vunpack.c.l.b16 %v1777
      %v2013 = vunpack.c.h.b16 %v1777
      %v2014 = vunpack.c.l.b16 %v1778
      %v2015 = vunpack.c.h.b16 %v1778
      %v2016 = vunpack.c.l.b16 %v1779
      %v2017 = vunpack.c.h.b16 %v1779
      %v2018 = vunpack.c.l.b16 %v1780
      %v2019 = vunpack.c.h.b16 %v1780
      %v2020 = vunpack.c.l.b16 %v1781
      %v2021 = vunpack.c.h.b16 %v1781
      %v2022 = vunpack.c.l.b16 %v1782
      %v2023 = vunpack.c.h.b16 %v1782
      %v2024 = vunpack.c.l.b16 %v1783
      %v2025 = vunpack.c.h.b16 %v1783
      %v2026 = vunpack.c.l.b16 %v1784
      %v2027 = vunpack.c.h.b16 %v1784
      %v2028 = vunpack.c.l.b16 %v1785
      %v2029 = vunpack.c.h.b16 %v1785
      %v2030 = vunpack.c.l.b16 %v1786
      %v2031 = vunpack.c.h.b16 %v1786
      %v2032 = vunpack.c.l.b16 %v1787
      %v2033 = vunpack.c.h.b16 %v1787
      %v2034 = vunpack.c.l.b16 %v1788
      %v2035 = vunpack.c.h.b16 %v1788
      %v2036 = vunpack.c.l.b16 %v1789
      %v2037 = vunpack.c.h.b16 %v1789
      %v2038 = vunpack.c.l.b16 %v1790
      %v2039 = vunpack.c.h.b16 %v1790
      %v2040 = vunpack.c.l.b16 %v1791
      %v2041 = vunpack.c.h.b16 %v1791
      %v2042 = vunpack.c.l.b16 %v1792
      %v2043 = vunpack.c.h.b16 %v1792
      %v2044 = vunpack.c.l.b16 %v1793
      %v2045 = vunpack.c.h.b16 %v1793
      %v2046 = vunpack.c.l.b16 %v1794
      %v2047 = vunpack.c.h.b16 %v1794
      %v2048 = vunpack.c.l.b16 %v1795
      %v2049 = vunpack.c.h.b16 %v1795
      %v2050 = vunpack.c.l.b16 %v1796
      %v2051 = vunpack.c.h.b16 %v1796
      %v2052 = vunpack.c.l.b16 %v1797
      %v2053 = vunpack.c.h.b16 %v1797
      %v2054 = vunpack.c.l.b16 %v1798
      %v2055 = vunpack.c.h.b16 %v1798
      %v2056 = vunpack.c.l.b16 %v1799
      %v2057 = vunpack.c.h.b16 %v1799
      %v2058 = vunpack.c.l.b16 %v1800
      %v2059 = vunpack.c.h.b16 %v1800
      %v2060 = vunpack.c.l.b16 %v1801
      %v2061 = vunpack.c.h.b16 %v1801
      %v2062 = vunpack.c.l.b16 %v1802
      %v2063 = vunpack.c.h.b16 %v1802
      %v2064 = vunpack.c.l.b16 %v1803
      %v2065 = vunpack.c.h.b16 %v1803
      %v2066 = vunpack.c.l.b16 %v1804
      %v2067 = vunpack.c.h.b16 %v1804
      %v2068 = vunpack.c.l.b16 %v1805
      %v2069 = vunpack.c.h.b16 %v1805
      %v2070 = vunpack.c.l.b16 %v1806
      %v2071 = vunpack.c.h.b16 %v1806
      %v2072 = vunpack.c.l.b16 %v1807
      %v2073 = vunpack.c.h.b16 %v1807
      %v2074 = vunpack.c.l.b16 %v1808
      %v2075 = vunpack.c.h.b16 %v1808
      %v2076 = vunpack.c.l.b16 %v1809
      %v2077 = vunpack.c.h.b16 %v1809
      %v2078 = vunpack.c.l.b16 %v1810
      %v2079 = vunpack.c.h.b16 %v1810
      %v2080 = vunpack.c.l.b16 %v1811
      %v2081 = vunpack.c.h.b16 %v1811
      %v2082 = vunpack.c.l.b16 %v1812
      %v2083 = vunpack.c.h.b16 %v1812
      %v2084 = vunpack.c.l.b16 %v1813
      %v2085 = vunpack.c.h.b16 %v1813
      %v2086 = vunpack.c.l.b16 %v1814
      %v2087 = vunpack.c.h.b16 %v1814
      %v2088 = vunpack.c.l.b16 %v1815
      %v2089 = vunpack.c.h.b16 %v1815
      %v2090 = vunpack.c.l.b16 %v1816
      %v2091 = vunpack.c.h.b16 %v1816
      %v2092 = vunpack.c.l.b16 %v1817
      %v2093 = vunpack.c.h.b16 %v1817
      %v2094 = vunpack.c.l.b16 %v1882
      %v2095 = vunpack.c.h.b16 %v1882
      %v2096 = vunpack.c.l.b16 %v1883
      %v2097 = vunpack.c.h.b16 %v1883
      %v2098 = vpack.c.b16 %v2002, %v1998
      %v2099 = vpack.c.b16 %v2003, %v1999
      %v2100 = vpack.c.b16 %v2004, %v2000
      %v2101 = vpack.c.b16 %v2005, %v2001
      %v2102 = vpack.c.b16 %v2010, %v2006
      %v2103 = vpack.c.b16 %v2011, %v2007
      %v2104 = vpack.c.b16 %v2012, %v2008
      %v2105 = vpack.c.b16 %v2013, %v2009
      %v2106 = vpack.c.b16 %v2018, %v2014
      %v2107 = vpack.c.b16 %v2019, %v2015
      %v2108 = vpack.c.b16 %v2020, %v2016
      %v2109 = vpack.c.b16 %v2021, %v2017
      %v2110 = vpack.c.b16 %v2026, %v2022
      %v2111 = vpack.c.b16 %v2027, %v2023
      %v2112 = vpack.c.b16 %v2028, %v2024
      %v2113 = vpack.c.b16 %v2029, %v2025
      %v2114 = vpack.c.b16 %v2034, %v2030
      %v2115 = vpack.c.b16 %v2035, %v2031
      %v2116 = vpack.c.b16 %v2036, %v2032
      %v2117 = vpack.c.b16 %v2037, %v2033
      %v2118 = vpack.c.b16 %v2042, %v2038
      %v2119 = vpack.c.b16 %v2043, %v2039
      %v2120 = vpack.c.b16 %v2044, %v2040
      %v2121 = vpack.c.b16 %v2045, %v2041
      %v2122 = vpack.c.b16 %v2050, %v2046
      %v2123 = vpack.c.b16 %v2051, %v2047
      %v2124 = vpack.c.b16 %v2052, %v2048
      %v2125 = vpack.c.b16 %v2053, %v2049
      %v2126 = vpack.c.b16 %v2058, %v2054
      %v2127 = vpack.c.b16 %v2059, %v2055
      %v2128 = vpack.c.b16 %v2060, %v2056
      %v2129 = vpack.c.b16 %v2061, %v2057
      %v2130 = vpack.c.b16 %v2066, %v2062
      %v2131 = vpack.c.b16 %v2067, %v2063
      %v2132 = vpack.c.b16 %v2068, %v2064
      %v2133 = vpack.c.b16 %v2069, %v2065
      %v2134 = vpack.c.b16 %v2074, %v2070
      %v2135 = vpack.c.b16 %v2075, %v2071
      %v2136 = vpack.c.b16 %v2076, %v2072
      %v2137 = vpack.c.b16 %v2077, %v2073
      %v2138 = vpack.c.b16 %v2082, %v2078
      %v2139 = vpack.c.b16 %v2083, %v2079
      %v2140 = vpack.c.b16 %v2084, %v2080
      %v2141 = vpack.c.b16 %v2085, %v2081
      %v2142 = vpack.c.b16 %v2090, %v2086
      %v2143 = vpack.c.b16 %v2091, %v2087
      %v2144 = vpack.c.b16 %v2092, %v2088
      %v2145 = vpack.c.b16 %v2093, %v2089
      %v2146 = vpack.c.b16 %v2094, %v2094
      %v2147 = vpack.c.b16 %v2095, %v2095
      %v2148 = vpack.c.b16 %v2096, %v2096
      %v2149 = vpack.c.b16 %v2097, %v2097
      %vm2150 = vsmask.f32 7424
      %v2152 = vshrl.u32 %v2098, 16
      %v2154 = vshll.u32 %v2098, 16
      %v2156 = vrot.slane %v2154, 1
      %v2157 = vor.u32 %v2152, %v2156
      %v2159 = vshll.u32 %v2102, 16
      %v2161 = vrot.slane %v2159, 1
      %v2162 = vsel %vm2150, %v2157, %v2161
      %v2164 = vshrl.u32 %v2099, 16
      %v2166 = vshll.u32 %v2099, 16
      %v2168 = vrot.slane %v2166, 1
      %v2169 = vor.u32 %v2164, %v2168
      %v2171 = vshll.u32 %v2103, 16
      %v2173 = vrot.slane %v2171, 1
      %v2174 = vsel %vm2150, %v2169, %v2173
      %v2176 = vshrl.u32 %v2100, 16
      %v2178 = vshll.u32 %v2100, 16
      %v2180 = vrot.slane %v2178, 1
      %v2181 = vor.u32 %v2176, %v2180
      %v2183 = vshll.u32 %v2104, 16
      %v2185 = vrot.slane %v2183, 1
      %v2186 = vsel %vm2150, %v2181, %v2185
      %v2188 = vshrl.u32 %v2101, 16
      %v2190 = vshll.u32 %v2101, 16
      %v2192 = vrot.slane %v2190, 1
      %v2193 = vor.u32 %v2188, %v2192
      %v2195 = vshll.u32 %v2105, 16
      %v2197 = vrot.slane %v2195, 1
      %v2198 = vsel %vm2150, %v2193, %v2197
      %v2199 = vshrl.u32 %v2102, 16
      %v2201 = vor.u32 %v2199, %v2161
      %v2203 = vshll.u32 %v2106, 16
      %v2205 = vrot.slane %v2203, 1
      %v2206 = vsel %vm2150, %v2201, %v2205
      %v2207 = vshrl.u32 %v2103, 16
      %v2209 = vor.u32 %v2207, %v2173
      %v2211 = vshll.u32 %v2107, 16
      %v2213 = vrot.slane %v2211, 1
      %v2214 = vsel %vm2150, %v2209, %v2213
      %v2215 = vshrl.u32 %v2104, 16
      %v2217 = vor.u32 %v2215, %v2185
      %v2219 = vshll.u32 %v2108, 16
      %v2221 = vrot.slane %v2219, 1
      %v2222 = vsel %vm2150, %v2217, %v2221
      %v2223 = vshrl.u32 %v2105, 16
      %v2225 = vor.u32 %v2223, %v2197
      %v2227 = vshll.u32 %v2109, 16
      %v2229 = vrot.slane %v2227, 1
      %v2230 = vsel %vm2150, %v2225, %v2229
      %v2231 = vshrl.u32 %v2106, 16
      %v2233 = vor.u32 %v2231, %v2205
      %v2235 = vshll.u32 %v2110, 16
      %v2237 = vrot.slane %v2235, 1
      %v2238 = vsel %vm2150, %v2233, %v2237
      %v2239 = vshrl.u32 %v2107, 16
      %v2241 = vor.u32 %v2239, %v2213
      %v2243 = vshll.u32 %v2111, 16
      %v2245 = vrot.slane %v2243, 1
      %v2246 = vsel %vm2150, %v2241, %v2245
      %v2247 = vshrl.u32 %v2108, 16
      %v2249 = vor.u32 %v2247, %v2221
      %v2251 = vshll.u32 %v2112, 16
      %v2253 = vrot.slane %v2251, 1
      %v2254 = vsel %vm2150, %v2249, %v2253
      %v2255 = vshrl.u32 %v2109, 16
      %v2257 = vor.u32 %v2255, %v2229
      %v2259 = vshll.u32 %v2113, 16
      %v2261 = vrot.slane %v2259, 1
      %v2262 = vsel %vm2150, %v2257, %v2261
      %v2263 = vshrl.u32 %v2110, 16
      %v2265 = vor.u32 %v2263, %v2237
      %v2267 = vshll.u32 %v2114, 16
      %v2269 = vrot.slane %v2267, 1
      %v2270 = vsel %vm2150, %v2265, %v2269
      %v2271 = vshrl.u32 %v2111, 16
      %v2273 = vor.u32 %v2271, %v2245
      %v2275 = vshll.u32 %v2115, 16
      %v2277 = vrot.slane %v2275, 1
      %v2278 = vsel %vm2150, %v2273, %v2277
      %v2279 = vshrl.u32 %v2112, 16
      %v2281 = vor.u32 %v2279, %v2253
      %v2283 = vshll.u32 %v2116, 16
      %v2285 = vrot.slane %v2283, 1
      %v2286 = vsel %vm2150, %v2281, %v2285
      %v2287 = vshrl.u32 %v2113, 16
      %v2289 = vor.u32 %v2287, %v2261
      %v2291 = vshll.u32 %v2117, 16
      %v2293 = vrot.slane %v2291, 1
      %v2294 = vsel %vm2150, %v2289, %v2293
      %v2295 = vshrl.u32 %v2114, 16
      %v2297 = vor.u32 %v2295, %v2269
      %v2299 = vshll.u32 %v2118, 16
      %v2301 = vrot.slane %v2299, 1
      %v2302 = vsel %vm2150, %v2297, %v2301
      %v2303 = vshrl.u32 %v2115, 16
      %v2305 = vor.u32 %v2303, %v2277
      %v2307 = vshll.u32 %v2119, 16
      %v2309 = vrot.slane %v2307, 1
      %v2310 = vsel %vm2150, %v2305, %v2309
      %v2311 = vshrl.u32 %v2116, 16
      %v2313 = vor.u32 %v2311, %v2285
      %v2315 = vshll.u32 %v2120, 16
      %v2317 = vrot.slane %v2315, 1
      %v2318 = vsel %vm2150, %v2313, %v2317
      %v2319 = vshrl.u32 %v2117, 16
      %v2321 = vor.u32 %v2319, %v2293
      %v2323 = vshll.u32 %v2121, 16
      %v2325 = vrot.slane %v2323, 1
      %v2326 = vsel %vm2150, %v2321, %v2325
      %v2327 = vshrl.u32 %v2118, 16
      %v2329 = vor.u32 %v2327, %v2301
      %v2331 = vshll.u32 %v2122, 16
      %v2333 = vrot.slane %v2331, 1
      %v2334 = vsel %vm2150, %v2329, %v2333
      %v2335 = vshrl.u32 %v2119, 16
      %v2337 = vor.u32 %v2335, %v2309
      %v2339 = vshll.u32 %v2123, 16
      %v2341 = vrot.slane %v2339, 1
      %v2342 = vsel %vm2150, %v2337, %v2341
      %v2343 = vshrl.u32 %v2120, 16
      %v2345 = vor.u32 %v2343, %v2317
      %v2347 = vshll.u32 %v2124, 16
      %v2349 = vrot.slane %v2347, 1
      %v2350 = vsel %vm2150, %v2345, %v2349
      %v2351 = vshrl.u32 %v2121, 16
      %v2353 = vor.u32 %v2351, %v2325
      %v2355 = vshll.u32 %v2125, 16
      %v2357 = vrot.slane %v2355, 1
      %v2358 = vsel %vm2150, %v2353, %v2357
      %v2359 = vshrl.u32 %v2122, 16
      %v2361 = vor.u32 %v2359, %v2333
      %v2363 = vshll.u32 %v2126, 16
      %v2365 = vrot.slane %v2363, 1
      %v2366 = vsel %vm2150, %v2361, %v2365
      %v2367 = vshrl.u32 %v2123, 16
      %v2369 = vor.u32 %v2367, %v2341
      %v2371 = vshll.u32 %v2127, 16
      %v2373 = vrot.slane %v2371, 1
      %v2374 = vsel %vm2150, %v2369, %v2373
      %v2375 = vshrl.u32 %v2124, 16
      %v2377 = vor.u32 %v2375, %v2349
      %v2379 = vshll.u32 %v2128, 16
      %v2381 = vrot.slane %v2379, 1
      %v2382 = vsel %vm2150, %v2377, %v2381
      %v2383 = vshrl.u32 %v2125, 16
      %v2385 = vor.u32 %v2383, %v2357
      %v2387 = vshll.u32 %v2129, 16
      %v2389 = vrot.slane %v2387, 1
      %v2390 = vsel %vm2150, %v2385, %v2389
      %v2391 = vshrl.u32 %v2126, 16
      %v2393 = vor.u32 %v2391, %v2365
      %v2395 = vshll.u32 %v2130, 16
      %v2397 = vrot.slane %v2395, 1
      %v2398 = vsel %vm2150, %v2393, %v2397
      %v2399 = vshrl.u32 %v2127, 16
      %v2401 = vor.u32 %v2399, %v2373
      %v2403 = vshll.u32 %v2131, 16
      %v2405 = vrot.slane %v2403, 1
      %v2406 = vsel %vm2150, %v2401, %v2405
      %v2407 = vshrl.u32 %v2128, 16
      %v2409 = vor.u32 %v2407, %v2381
      %v2411 = vshll.u32 %v2132, 16
      %v2413 = vrot.slane %v2411, 1
      %v2414 = vsel %vm2150, %v2409, %v2413
      %v2415 = vshrl.u32 %v2129, 16
      %v2417 = vor.u32 %v2415, %v2389
      %v2419 = vshll.u32 %v2133, 16
      %v2421 = vrot.slane %v2419, 1
      %v2422 = vsel %vm2150, %v2417, %v2421
      %v2423 = vshrl.u32 %v2130, 16
      %v2425 = vor.u32 %v2423, %v2397
      %v2427 = vshll.u32 %v2134, 16
      %v2429 = vrot.slane %v2427, 1
      %v2430 = vsel %vm2150, %v2425, %v2429
      %v2431 = vshrl.u32 %v2131, 16
      %v2433 = vor.u32 %v2431, %v2405
      %v2435 = vshll.u32 %v2135, 16
      %v2437 = vrot.slane %v2435, 1
      %v2438 = vsel %vm2150, %v2433, %v2437
      %v2439 = vshrl.u32 %v2132, 16
      %v2441 = vor.u32 %v2439, %v2413
      %v2443 = vshll.u32 %v2136, 16
      %v2445 = vrot.slane %v2443, 1
      %v2446 = vsel %vm2150, %v2441, %v2445
      %v2447 = vshrl.u32 %v2133, 16
      %v2449 = vor.u32 %v2447, %v2421
      %v2451 = vshll.u32 %v2137, 16
      %v2453 = vrot.slane %v2451, 1
      %v2454 = vsel %vm2150, %v2449, %v2453
      %v2455 = vshrl.u32 %v2134, 16
      %v2457 = vor.u32 %v2455, %v2429
      %v2459 = vshll.u32 %v2138, 16
      %v2461 = vrot.slane %v2459, 1
      %v2462 = vsel %vm2150, %v2457, %v2461
      %v2463 = vshrl.u32 %v2135, 16
      %v2465 = vor.u32 %v2463, %v2437
      %v2467 = vshll.u32 %v2139, 16
      %v2469 = vrot.slane %v2467, 1
      %v2470 = vsel %vm2150, %v2465, %v2469
      %v2471 = vshrl.u32 %v2136, 16
      %v2473 = vor.u32 %v2471, %v2445
      %v2475 = vshll.u32 %v2140, 16
      %v2477 = vrot.slane %v2475, 1
      %v2478 = vsel %vm2150, %v2473, %v2477
      %v2479 = vshrl.u32 %v2137, 16
      %v2481 = vor.u32 %v2479, %v2453
      %v2483 = vshll.u32 %v2141, 16
      %v2485 = vrot.slane %v2483, 1
      %v2486 = vsel %vm2150, %v2481, %v2485
      %v2487 = vshrl.u32 %v2138, 16
      %v2489 = vor.u32 %v2487, %v2461
      %v2491 = vshll.u32 %v2142, 16
      %v2493 = vrot.slane %v2491, 1
      %v2494 = vsel %vm2150, %v2489, %v2493
      %v2495 = vshrl.u32 %v2139, 16
      %v2497 = vor.u32 %v2495, %v2469
      %v2499 = vshll.u32 %v2143, 16
      %v2501 = vrot.slane %v2499, 1
      %v2502 = vsel %vm2150, %v2497, %v2501
      %v2503 = vshrl.u32 %v2140, 16
      %v2505 = vor.u32 %v2503, %v2477
      %v2507 = vshll.u32 %v2144, 16
      %v2509 = vrot.slane %v2507, 1
      %v2510 = vsel %vm2150, %v2505, %v2509
      %v2511 = vshrl.u32 %v2141, 16
      %v2513 = vor.u32 %v2511, %v2485
      %v2515 = vshll.u32 %v2145, 16
      %v2517 = vrot.slane %v2515, 1
      %v2518 = vsel %vm2150, %v2513, %v2517
      %v2519 = vshrl.u32 %v2142, 16
      %v2521 = vor.u32 %v2519, %v2493
      %v2523 = vshll.u32 %v2146, 16
      %v2525 = vrot.slane %v2523, 1
      %v2526 = vsel %vm2150, %v2521, %v2525
      %v2527 = vshrl.u32 %v2143, 16
      %v2529 = vor.u32 %v2527, %v2501
      %v2531 = vshll.u32 %v2147, 16
      %v2533 = vrot.slane %v2531, 1
      %v2534 = vsel %vm2150, %v2529, %v2533
      %v2535 = vshrl.u32 %v2144, 16
      %v2537 = vor.u32 %v2535, %v2509
      %v2539 = vshll.u32 %v2148, 16
      %v2541 = vrot.slane %v2539, 1
      %v2542 = vsel %vm2150, %v2537, %v2541
      %v2543 = vshrl.u32 %v2145, 16
      %v2545 = vor.u32 %v2543, %v2517
      %v2547 = vshll.u32 %v2149, 16
      %v2549 = vrot.slane %v2547, 1
      %v2550 = vsel %vm2150, %v2545, %v2549
      %v2663 = vunpack.c.l.b16 %v1884
      %v2664 = vunpack.c.h.b16 %v1884
      %v2665 = vunpack.c.l.b16 %v1885
      %v2666 = vunpack.c.h.b16 %v1885
      %v2667 = vunpack.c.l.b16 %v1886
      %v2668 = vunpack.c.h.b16 %v1886
      %v2669 = vunpack.c.l.b16 %v1887
      %v2670 = vunpack.c.h.b16 %v1887
      %v2671 = vunpack.c.l.b16 %v1888
      %v2672 = vunpack.c.h.b16 %v1888
      %v2673 = vunpack.c.l.b16 %v1889
      %v2674 = vunpack.c.h.b16 %v1889
      %v2675 = vunpack.c.l.b16 %v1890
      %v2676 = vunpack.c.h.b16 %v1890
      %v2677 = vunpack.c.l.b16 %v1891
      %v2678 = vunpack.c.h.b16 %v1891
      %v2679 = vunpack.c.l.b16 %v1892
      %v2680 = vunpack.c.h.b16 %v1892
      %v2681 = vunpack.c.l.b16 %v1893
      %v2682 = vunpack.c.h.b16 %v1893
      %v2683 = vunpack.c.l.b16 %v1894
      %v2684 = vunpack.c.h.b16 %v1894
      %v2685 = vunpack.c.l.b16 %v1895
      %v2686 = vunpack.c.h.b16 %v1895
      %v2687 = vunpack.c.l.b16 %v1896
      %v2688 = vunpack.c.h.b16 %v1896
      %v2689 = vunpack.c.l.b16 %v1897
      %v2690 = vunpack.c.h.b16 %v1897
      %v2691 = vunpack.c.l.b16 %v1898
      %v2692 = vunpack.c.h.b16 %v1898
      %v2693 = vunpack.c.l.b16 %v1899
      %v2694 = vunpack.c.h.b16 %v1899
      %v2695 = vunpack.c.l.b16 %v1900
      %v2696 = vunpack.c.h.b16 %v1900
      %v2697 = vunpack.c.l.b16 %v1901
      %v2698 = vunpack.c.h.b16 %v1901
      %v2699 = vunpack.c.l.b16 %v1902
      %v2700 = vunpack.c.h.b16 %v1902
      %v2701 = vunpack.c.l.b16 %v1903
      %v2702 = vunpack.c.h.b16 %v1903
      %v2703 = vunpack.c.l.b16 %v1904
      %v2704 = vunpack.c.h.b16 %v1904
      %v2705 = vunpack.c.l.b16 %v1905
      %v2706 = vunpack.c.h.b16 %v1905
      %v2707 = vunpack.c.l.b16 %v1906
      %v2708 = vunpack.c.h.b16 %v1906
      %v2709 = vunpack.c.l.b16 %v1907
      %v2710 = vunpack.c.h.b16 %v1907
      %v2711 = vunpack.c.l.b16 %v1908
      %v2712 = vunpack.c.h.b16 %v1908
      %v2713 = vunpack.c.l.b16 %v1909
      %v2714 = vunpack.c.h.b16 %v1909
      %v2715 = vunpack.c.l.b16 %v1910
      %v2716 = vunpack.c.h.b16 %v1910
      %v2717 = vunpack.c.l.b16 %v1911
      %v2718 = vunpack.c.h.b16 %v1911
      %v2719 = vunpack.c.l.b16 %v1912
      %v2720 = vunpack.c.h.b16 %v1912
      %v2721 = vunpack.c.l.b16 %v1913
      %v2722 = vunpack.c.h.b16 %v1913
      %v2723 = vunpack.c.l.b16 %v1914
      %v2724 = vunpack.c.h.b16 %v1914
      %v2725 = vunpack.c.l.b16 %v1915
      %v2726 = vunpack.c.h.b16 %v1915
      %v2727 = vunpack.c.l.b16 %v1916
      %v2728 = vunpack.c.h.b16 %v1916
      %v2729 = vunpack.c.l.b16 %v1917
      %v2730 = vunpack.c.h.b16 %v1917
      %v2731 = vunpack.c.l.b16 %v1918
      %v2732 = vunpack.c.h.b16 %v1918
      %v2733 = vunpack.c.l.b16 %v1919
      %v2734 = vunpack.c.h.b16 %v1919
      %v2735 = vunpack.c.l.b16 %v1920
      %v2736 = vunpack.c.h.b16 %v1920
      %v2737 = vunpack.c.l.b16 %v1921
      %v2738 = vunpack.c.h.b16 %v1921
      %v2739 = vunpack.c.l.b16 %v1922
      %v2740 = vunpack.c.h.b16 %v1922
      %v2741 = vunpack.c.l.b16 %v1923
      %v2742 = vunpack.c.h.b16 %v1923
      %v2743 = vunpack.c.l.b16 %v1924
      %v2744 = vunpack.c.h.b16 %v1924
      %v2745 = vunpack.c.l.b16 %v1925
      %v2746 = vunpack.c.h.b16 %v1925
      %v2747 = vunpack.c.l.b16 %v1926
      %v2748 = vunpack.c.h.b16 %v1926
      %v2749 = vunpack.c.l.b16 %v1927
      %v2750 = vunpack.c.h.b16 %v1927
      %v2751 = vunpack.c.l.b16 %v1928
      %v2752 = vunpack.c.h.b16 %v1928
      %v2753 = vunpack.c.l.b16 %v1929
      %v2754 = vunpack.c.h.b16 %v1929
      %v2755 = vunpack.c.l.b16 %v1930
      %v2756 = vunpack.c.h.b16 %v1930
      %v2757 = vunpack.c.l.b16 %v1931
      %v2758 = vunpack.c.h.b16 %v1931
      %v2759 = vunpack.c.l.b16 %v1932
      %v2760 = vunpack.c.h.b16 %v1932
      %v2761 = vunpack.c.l.b16 %v1933
      %v2762 = vunpack.c.h.b16 %v1933
      %v2763 = vunpack.c.l.b16 %v1934
      %v2764 = vunpack.c.h.b16 %v1934
      %v2765 = vunpack.c.l.b16 %v1935
      %v2766 = vunpack.c.h.b16 %v1935
      %v2767 = vunpack.c.l.b16 %v1936
      %v2768 = vunpack.c.h.b16 %v1936
      %v2769 = vunpack.c.l.b16 %v1937
      %v2770 = vunpack.c.h.b16 %v1937
      %v2771 = vunpack.c.l.b16 %v1938
      %v2772 = vunpack.c.h.b16 %v1938
      %v2773 = vunpack.c.l.b16 %v1939
      %v2774 = vunpack.c.h.b16 %v1939
      %v2775 = vunpack.c.l.b16 %v1940
      %v2776 = vunpack.c.h.b16 %v1940
      %v2777 = vunpack.c.l.b16 %v1941
      %v2778 = vunpack.c.h.b16 %v1941
      %v2779 = vunpack.c.l.b16 %v1942
      %v2780 = vunpack.c.h.b16 %v1942
      %v2781 = vunpack.c.l.b16 %v1943
      %v2782 = vunpack.c.h.b16 %v1943
      %v2783 = vunpack.c.l.b16 %v1944
      %v2784 = vunpack.c.h.b16 %v1944
      %v2785 = vunpack.c.l.b16 %v1945
      %v2786 = vunpack.c.h.b16 %v1945
      %v2787 = vunpack.c.l.b16 %v1946
      %v2788 = vunpack.c.h.b16 %v1946
      %v2789 = vunpack.c.l.b16 %v1947
      %v2790 = vunpack.c.h.b16 %v1947
      %v2791 = vpack.c.b16 %v2665, %v2663
      %v2792 = vpack.c.b16 %v2666, %v2664
      %v2793 = vpack.c.b16 %v2669, %v2667
      %v2794 = vpack.c.b16 %v2670, %v2668
      %v2795 = vpack.c.b16 %v2673, %v2671
      %v2796 = vpack.c.b16 %v2674, %v2672
      %v2797 = vpack.c.b16 %v2677, %v2675
      %v2798 = vpack.c.b16 %v2678, %v2676
      %v2799 = vpack.c.b16 %v2681, %v2679
      %v2800 = vpack.c.b16 %v2682, %v2680
      %v2801 = vpack.c.b16 %v2685, %v2683
      %v2802 = vpack.c.b16 %v2686, %v2684
      %v2803 = vpack.c.b16 %v2689, %v2687
      %v2804 = vpack.c.b16 %v2690, %v2688
      %v2805 = vpack.c.b16 %v2693, %v2691
      %v2806 = vpack.c.b16 %v2694, %v2692
      %v2807 = vpack.c.b16 %v2697, %v2695
      %v2808 = vpack.c.b16 %v2698, %v2696
      %v2809 = vpack.c.b16 %v2701, %v2699
      %v2810 = vpack.c.b16 %v2702, %v2700
      %v2811 = vpack.c.b16 %v2705, %v2703
      %v2812 = vpack.c.b16 %v2706, %v2704
      %v2813 = vpack.c.b16 %v2709, %v2707
      %v2814 = vpack.c.b16 %v2710, %v2708
      %v2815 = vpack.c.b16 %v2713, %v2711
      %v2816 = vpack.c.b16 %v2714, %v2712
      %v2817 = vpack.c.b16 %v2717, %v2715
      %v2818 = vpack.c.b16 %v2718, %v2716
      %v2819 = vpack.c.b16 %v2721, %v2719
      %v2820 = vpack.c.b16 %v2722, %v2720
      %v2821 = vpack.c.b16 %v2725, %v2723
      %v2822 = vpack.c.b16 %v2726, %v2724
      %v2823 = vpack.c.b16 %v2729, %v2727
      %v2824 = vpack.c.b16 %v2730, %v2728
      %v2825 = vpack.c.b16 %v2733, %v2731
      %v2826 = vpack.c.b16 %v2734, %v2732
      %v2827 = vpack.c.b16 %v2737, %v2735
      %v2828 = vpack.c.b16 %v2738, %v2736
      %v2829 = vpack.c.b16 %v2741, %v2739
      %v2830 = vpack.c.b16 %v2742, %v2740
      %v2831 = vpack.c.b16 %v2745, %v2743
      %v2832 = vpack.c.b16 %v2746, %v2744
      %v2833 = vpack.c.b16 %v2749, %v2747
      %v2834 = vpack.c.b16 %v2750, %v2748
      %v2835 = vpack.c.b16 %v2753, %v2751
      %v2836 = vpack.c.b16 %v2754, %v2752
      %v2837 = vpack.c.b16 %v2757, %v2755
      %v2838 = vpack.c.b16 %v2758, %v2756
      %v2839 = vpack.c.b16 %v2761, %v2759
      %v2840 = vpack.c.b16 %v2762, %v2760
      %v2841 = vpack.c.b16 %v2765, %v2763
      %v2842 = vpack.c.b16 %v2766, %v2764
      %v2843 = vpack.c.b16 %v2769, %v2767
      %v2844 = vpack.c.b16 %v2770, %v2768
      %v2845 = vpack.c.b16 %v2773, %v2771
      %v2846 = vpack.c.b16 %v2774, %v2772
      %v2847 = vpack.c.b16 %v2777, %v2775
      %v2848 = vpack.c.b16 %v2778, %v2776
      %v2849 = vpack.c.b16 %v2781, %v2779
      %v2850 = vpack.c.b16 %v2782, %v2780
      %v2851 = vpack.c.b16 %v2785, %v2783
      %v2852 = vpack.c.b16 %v2786, %v2784
      %v2853 = vpack.c.b16 %v2789, %v2787
      %v2854 = vpack.c.b16 %v2790, %v2788
      %2919 = vmatprep.subr.bf16.mxu0 %v2806
      %2920 = vmatpush1.bf16.msra.mxu0 %v2805
      %2921 = vmatprep.subr.bf16.mxu0 %v2804
      %2922 = vmatpush1.bf16.msra.mxu0 %v2803
      %2923 = vmatprep.subr.bf16.mxu0 %v2802
      %2924 = vmatpush1.bf16.msra.mxu0 %v2801
      %2925 = vmatprep.subr.bf16.mxu0 %v2800
      %2926 = vmatpush1.bf16.msra.mxu0 %v2799
      %2927 = vmatprep.subr.bf16.mxu0 %v2798
      %2928 = vmatpush1.bf16.msra.mxu0 %v2797
      %2929 = vmatprep.subr.bf16.mxu0 %v2796
      %2930 = vmatpush1.bf16.msra.mxu0 %v2795
      %2931 = vmatprep.subr.bf16.mxu0 %v2794
      %2932 = vmatpush1.bf16.msra.mxu0 %v2793
      %2933 = vmatprep.subr.bf16.mxu0 %v2792
      %2934 = vmatpush1.bf16.msra.mxu0 %v2791
      %2935 = vmatprep.subr.bf16.mxu0 %v2822
      %2936 = vmatpush2.bf16.msra.mxu0 %v2821
      %2937 = vmatprep.subr.bf16.mxu0 %v2820
      %2938 = vmatpush2.bf16.msra.mxu0 %v2819
      %2939 = vmatprep.subr.bf16.mxu0 %v2818
      %2940 = vmatpush2.bf16.msra.mxu0 %v2817
      %2941 = vmatprep.subr.bf16.mxu0 %v2816
      %2942 = vmatpush2.bf16.msra.mxu0 %v2815
      %2943 = vmatprep.subr.bf16.mxu0 %v2814
      %2944 = vmatpush2.bf16.msra.mxu0 %v2813
      %2945 = vmatprep.subr.bf16.mxu0 %v2812
      %2946 = vmatpush2.bf16.msra.mxu0 %v2811
      %2947 = vmatprep.subr.bf16.mxu0 %v2810
      %2948 = vmatpush2.bf16.msra.mxu0 %v2809
      %2949 = vmatprep.subr.bf16.mxu0 %v2808
      %2950 = vmatpush2.bf16.msra.mxu0 %v2807
      %2951 = vmatprep.mubr.bf16.mxu0 %v2174
      %2952 = vmatmul.mubr.bf16.gmra.mxu0 %v2162
      %v2953 = vpop.f32.mrf.mxu0
      %v2954 = vadd.f32 0.0, %v2953
      %v2955 = vpop.f32.mrf.mxu0
      %v2956 = vadd.f32 0.0, %v2955
      %v2957 = vpop.f32.mrf.mxu0
      %v2958 = vadd.f32 0.0, %v2957
      %v2959 = vpop.f32.mrf.mxu0
      %v2960 = vadd.f32 0.0, %v2959
      %2961 = vmatprep.mubr.bf16.mxu0 %v2214
      %2962 = vmatmul.mubr.bf16.gmra.mxu0 %v2206
      %v2963 = vpop.f32.mrf.mxu0
      %v2964 = vadd.f32 0.0, %v2963
      %v2965 = vpop.f32.mrf.mxu0
      %v2966 = vadd.f32 0.0, %v2965
      %v2967 = vpop.f32.mrf.mxu0
      %v2968 = vadd.f32 0.0, %v2967
      %v2969 = vpop.f32.mrf.mxu0
      %v2970 = vadd.f32 0.0, %v2969
      %2971 = vmatprep.mubr.bf16.mxu0 %v2246
      %2972 = vmatmul.mubr.bf16.gmra.mxu0 %v2238
      %v2973 = vpop.f32.mrf.mxu0
      %v2974 = vadd.f32 0.0, %v2973
      %v2975 = vpop.f32.mrf.mxu0
      %v2976 = vadd.f32 0.0, %v2975
      %v2977 = vpop.f32.mrf.mxu0
      %v2978 = vadd.f32 0.0, %v2977
      %v2979 = vpop.f32.mrf.mxu0
      %v2980 = vadd.f32 0.0, %v2979
      %2981 = vmatprep.mubr.bf16.mxu0 %v2278
      %2982 = vmatmul.mubr.bf16.gmra.mxu0 %v2270
      %v2983 = vpop.f32.mrf.mxu0
      %v2984 = vadd.f32 0.0, %v2983
      %v2985 = vpop.f32.mrf.mxu0
      %v2986 = vadd.f32 0.0, %v2985
      %v2987 = vpop.f32.mrf.mxu0
      %v2988 = vadd.f32 0.0, %v2987
      %v2989 = vpop.f32.mrf.mxu0
      %v2990 = vadd.f32 0.0, %v2989
      %2991 = vmatprep.mubr.bf16.mxu0 %v2310
      %2992 = vmatmul.mubr.bf16.gmra.mxu0 %v2302
      %v2993 = vpop.f32.mrf.mxu0
      %v2994 = vadd.f32 0.0, %v2993
      %v2995 = vpop.f32.mrf.mxu0
      %v2996 = vadd.f32 0.0, %v2995
      %v2997 = vpop.f32.mrf.mxu0
      %v2998 = vadd.f32 0.0, %v2997
      %v2999 = vpop.f32.mrf.mxu0
      %v3000 = vadd.f32 0.0, %v2999
      %3001 = vmatprep.mubr.bf16.mxu0 %v2342
      %3002 = vmatmul.mubr.bf16.gmra.mxu0 %v2334
      %v3003 = vpop.f32.mrf.mxu0
      %v3004 = vadd.f32 0.0, %v3003
      %v3005 = vpop.f32.mrf.mxu0
      %v3006 = vadd.f32 0.0, %v3005
      %v3007 = vpop.f32.mrf.mxu0
      %v3008 = vadd.f32 0.0, %v3007
      %v3009 = vpop.f32.mrf.mxu0
      %v3010 = vadd.f32 0.0, %v3009
      %3011 = vmatprep.mubr.bf16.mxu0 %v2374
      %3012 = vmatmul.mubr.bf16.gmra.mxu0 %v2366
      %v3013 = vpop.f32.mrf.mxu0
      %v3014 = vadd.f32 0.0, %v3013
      %v3015 = vpop.f32.mrf.mxu0
      %v3016 = vadd.f32 0.0, %v3015
      %v3017 = vpop.f32.mrf.mxu0
      %v3018 = vadd.f32 0.0, %v3017
      %v3019 = vpop.f32.mrf.mxu0
      %v3020 = vadd.f32 0.0, %v3019
      %3021 = vmatprep.mubr.bf16.mxu0 %v2406
      %3022 = vmatmul.mubr.bf16.gmra.mxu0 %v2398
      %v3023 = vpop.f32.mrf.mxu0
      %v3024 = vadd.f32 0.0, %v3023
      %v3025 = vpop.f32.mrf.mxu0
      %v3026 = vadd.f32 0.0, %v3025
      %v3027 = vpop.f32.mrf.mxu0
      %v3028 = vadd.f32 0.0, %v3027
      %v3029 = vpop.f32.mrf.mxu0
      %v3030 = vadd.f32 0.0, %v3029
      %3031 = vmatprep.mubr.bf16.mxu0 %v2438
      %3032 = vmatmul.mubr.bf16.gmra.mxu0 %v2430
      %v3033 = vpop.f32.mrf.mxu0
      %v3034 = vadd.f32 0.0, %v3033
      %v3035 = vpop.f32.mrf.mxu0
      %v3036 = vadd.f32 0.0, %v3035
      %v3037 = vpop.f32.mrf.mxu0
      %v3038 = vadd.f32 0.0, %v3037
      %v3039 = vpop.f32.mrf.mxu0
      %v3040 = vadd.f32 0.0, %v3039
      %3041 = vmatprep.mubr.bf16.mxu0 %v2470
      %3042 = vmatmul.mubr.bf16.gmra.mxu0 %v2462
      %v3043 = vpop.f32.mrf.mxu0
      %v3044 = vadd.f32 0.0, %v3043
      %v3045 = vpop.f32.mrf.mxu0
      %v3046 = vadd.f32 0.0, %v3045
      %v3047 = vpop.f32.mrf.mxu0
      %v3048 = vadd.f32 0.0, %v3047
      %v3049 = vpop.f32.mrf.mxu0
      %v3050 = vadd.f32 0.0, %v3049
      %3051 = vmatprep.mubr.bf16.mxu0 %v2502
      %3052 = vmatmul.mubr.bf16.gmra.mxu0 %v2494
      %v3053 = vpop.f32.mrf.mxu0
      %v3054 = vadd.f32 0.0, %v3053
      %v3055 = vpop.f32.mrf.mxu0
      %v3056 = vadd.f32 0.0, %v3055
      %v3057 = vpop.f32.mrf.mxu0
      %v3058 = vadd.f32 0.0, %v3057
      %v3059 = vpop.f32.mrf.mxu0
      %v3060 = vadd.f32 0.0, %v3059
      %3061 = vmatprep.mubr.bf16.mxu0 %v2534
      %3062 = vmatmul.mubr.bf16.gmra.mxu0 %v2526
      %v3063 = vpop.f32.mrf.mxu0
      %v3064 = vadd.f32 0.0, %v3063
      %v3065 = vpop.f32.mrf.mxu0
      %v3066 = vadd.f32 0.0, %v3065
      %v3067 = vpop.f32.mrf.mxu0
      %v3068 = vadd.f32 0.0, %v3067
      %v3069 = vpop.f32.mrf.mxu0
      %v3070 = vadd.f32 0.0, %v3069
      %3071 = vdwg.mxu0
      %3072 = vmatprep.subr.bf16.mxu0 %v2838
      %3073 = vmatpush1.bf16.msra.mxu0 %v2837
      %3074 = vmatprep.subr.bf16.mxu0 %v2836
      %3075 = vmatpush1.bf16.msra.mxu0 %v2835
      %3076 = vmatprep.subr.bf16.mxu0 %v2834
      %3077 = vmatpush1.bf16.msra.mxu0 %v2833
      %3078 = vmatprep.subr.bf16.mxu0 %v2832
      %3079 = vmatpush1.bf16.msra.mxu0 %v2831
      %3080 = vmatprep.subr.bf16.mxu0 %v2830
      %3081 = vmatpush1.bf16.msra.mxu0 %v2829
      %3082 = vmatprep.subr.bf16.mxu0 %v2828
      %3083 = vmatpush1.bf16.msra.mxu0 %v2827
      %3084 = vmatprep.subr.bf16.mxu0 %v2826
      %3085 = vmatpush1.bf16.msra.mxu0 %v2825
      %3086 = vmatprep.subr.bf16.mxu0 %v2824
      %3087 = vmatpush1.bf16.msra.mxu0 %v2823
      %3088 = vmatprep.subr.bf16.mxu0 %v2854
      %3089 = vmatpush2.bf16.msra.mxu0 %v2853
      %3090 = vmatprep.subr.bf16.mxu0 %v2852
      %3091 = vmatpush2.bf16.msra.mxu0 %v2851
      %3092 = vmatprep.subr.bf16.mxu0 %v2850
      %3093 = vmatpush2.bf16.msra.mxu0 %v2849
      %3094 = vmatprep.subr.bf16.mxu0 %v2848
      %3095 = vmatpush2.bf16.msra.mxu0 %v2847
      %3096 = vmatprep.subr.bf16.mxu0 %v2846
      %3097 = vmatpush2.bf16.msra.mxu0 %v2845
      %3098 = vmatprep.subr.bf16.mxu0 %v2844
      %3099 = vmatpush2.bf16.msra.mxu0 %v2843
      %3100 = vmatprep.subr.bf16.mxu0 %v2842
      %3101 = vmatpush2.bf16.msra.mxu0 %v2841
      %3102 = vmatprep.subr.bf16.mxu0 %v2840
      %3103 = vmatpush2.bf16.msra.mxu0 %v2839
      %3104 = vmatprep.mubr.bf16.mxu0 %v2198
      %3105 = vmatmul.mubr.bf16.gmra.mxu0 %v2186
      %v3106 = vpop.f32.mrf.mxu0
      %v3107 = vadd.f32 %v2954, %v3106
      %v3108 = vpop.f32.mrf.mxu0
      %v3109 = vadd.f32 %v2956, %v3108
      %v3110 = vpop.f32.mrf.mxu0
      %v3111 = vadd.f32 %v2958, %v3110
      %v3112 = vpop.f32.mrf.mxu0
      %v3113 = vadd.f32 %v2960, %v3112
      %3114 = vmatprep.mubr.bf16.mxu0 %v2230
      %3115 = vmatmul.mubr.bf16.gmra.mxu0 %v2222
      %v3116 = vpop.f32.mrf.mxu0
      %v3117 = vadd.f32 %v2964, %v3116
      %v3118 = vpop.f32.mrf.mxu0
      %v3119 = vadd.f32 %v2966, %v3118
      %v3120 = vpop.f32.mrf.mxu0
      %v3121 = vadd.f32 %v2968, %v3120
      %v3122 = vpop.f32.mrf.mxu0
      %v3123 = vadd.f32 %v2970, %v3122
      %3124 = vmatprep.mubr.bf16.mxu0 %v2262
      %3125 = vmatmul.mubr.bf16.gmra.mxu0 %v2254
      %v3126 = vpop.f32.mrf.mxu0
      %v3127 = vadd.f32 %v2974, %v3126
      %v3128 = vpop.f32.mrf.mxu0
      %v3129 = vadd.f32 %v2976, %v3128
      %v3130 = vpop.f32.mrf.mxu0
      %v3131 = vadd.f32 %v2978, %v3130
      %v3132 = vpop.f32.mrf.mxu0
      %v3133 = vadd.f32 %v2980, %v3132
      %3134 = vmatprep.mubr.bf16.mxu0 %v2294
      %3135 = vmatmul.mubr.bf16.gmra.mxu0 %v2286
      %v3136 = vpop.f32.mrf.mxu0
      %v3137 = vadd.f32 %v2984, %v3136
      %v3138 = vpop.f32.mrf.mxu0
      %v3139 = vadd.f32 %v2986, %v3138
      %v3140 = vpop.f32.mrf.mxu0
      %v3141 = vadd.f32 %v2988, %v3140
      %v3142 = vpop.f32.mrf.mxu0
      %v3143 = vadd.f32 %v2990, %v3142
      %3144 = vmatprep.mubr.bf16.mxu0 %v2326
      %3145 = vmatmul.mubr.bf16.gmra.mxu0 %v2318
      %v3146 = vpop.f32.mrf.mxu0
      %v3147 = vadd.f32 %v2994, %v3146
      %v3148 = vpop.f32.mrf.mxu0
      %v3149 = vadd.f32 %v2996, %v3148
      %v3150 = vpop.f32.mrf.mxu0
      %v3151 = vadd.f32 %v2998, %v3150
      %v3152 = vpop.f32.mrf.mxu0
      %v3153 = vadd.f32 %v3000, %v3152
      %3154 = vmatprep.mubr.bf16.mxu0 %v2358
      %3155 = vmatmul.mubr.bf16.gmra.mxu0 %v2350
      %v3156 = vpop.f32.mrf.mxu0
      %v3157 = vadd.f32 %v3004, %v3156
      %v3158 = vpop.f32.mrf.mxu0
      %v3159 = vadd.f32 %v3006, %v3158
      %v3160 = vpop.f32.mrf.mxu0
      %v3161 = vadd.f32 %v3008, %v3160
      %v3162 = vpop.f32.mrf.mxu0
      %v3163 = vadd.f32 %v3010, %v3162
      %3164 = vmatprep.mubr.bf16.mxu0 %v2390
      %3165 = vmatmul.mubr.bf16.gmra.mxu0 %v2382
      %v3166 = vpop.f32.mrf.mxu0
      %v3167 = vadd.f32 %v3014, %v3166
      %v3168 = vpop.f32.mrf.mxu0
      %v3169 = vadd.f32 %v3016, %v3168
      %v3170 = vpop.f32.mrf.mxu0
      %v3171 = vadd.f32 %v3018, %v3170
      %v3172 = vpop.f32.mrf.mxu0
      %v3173 = vadd.f32 %v3020, %v3172
      %3174 = vmatprep.mubr.bf16.mxu0 %v2422
      %3175 = vmatmul.mubr.bf16.gmra.mxu0 %v2414
      %v3176 = vpop.f32.mrf.mxu0
      %v3177 = vadd.f32 %v3024, %v3176
      %v3178 = vpop.f32.mrf.mxu0
      %v3179 = vadd.f32 %v3026, %v3178
      %v3180 = vpop.f32.mrf.mxu0
      %v3181 = vadd.f32 %v3028, %v3180
      %v3182 = vpop.f32.mrf.mxu0
      %v3183 = vadd.f32 %v3030, %v3182
      %3184 = vmatprep.mubr.bf16.mxu0 %v2454
      %3185 = vmatmul.mubr.bf16.gmra.mxu0 %v2446
      %v3186 = vpop.f32.mrf.mxu0
      %v3187 = vadd.f32 %v3034, %v3186
      %v3188 = vpop.f32.mrf.mxu0
      %v3189 = vadd.f32 %v3036, %v3188
      %v3190 = vpop.f32.mrf.mxu0
      %v3191 = vadd.f32 %v3038, %v3190
      %v3192 = vpop.f32.mrf.mxu0
      %v3193 = vadd.f32 %v3040, %v3192
      %3194 = vmatprep.mubr.bf16.mxu0 %v2486
      %3195 = vmatmul.mubr.bf16.gmra.mxu0 %v2478
      %v3196 = vpop.f32.mrf.mxu0
      %v3197 = vadd.f32 %v3044, %v3196
      %v3198 = vpop.f32.mrf.mxu0
      %v3199 = vadd.f32 %v3046, %v3198
      %v3200 = vpop.f32.mrf.mxu0
      %v3201 = vadd.f32 %v3048, %v3200
      %v3202 = vpop.f32.mrf.mxu0
      %v3203 = vadd.f32 %v3050, %v3202
      %3204 = vmatprep.mubr.bf16.mxu0 %v2518
      %3205 = vmatmul.mubr.bf16.gmra.mxu0 %v2510
      %v3206 = vpop.f32.mrf.mxu0
      %v3207 = vadd.f32 %v3054, %v3206
      %v3208 = vpop.f32.mrf.mxu0
      %v3209 = vadd.f32 %v3056, %v3208
      %v3210 = vpop.f32.mrf.mxu0
      %v3211 = vadd.f32 %v3058, %v3210
      %v3212 = vpop.f32.mrf.mxu0
      %v3213 = vadd.f32 %v3060, %v3212
      %3214 = vmatprep.mubr.bf16.mxu0 %v2550
      %3215 = vmatmul.mubr.bf16.gmra.mxu0 %v2542
      %v3216 = vpop.f32.mrf.mxu0
      %v3217 = vadd.f32 %v3064, %v3216
      %v3218 = vpop.f32.mrf.mxu0
      %v3219 = vadd.f32 %v3066, %v3218
      %v3220 = vpop.f32.mrf.mxu0
      %v3221 = vadd.f32 %v3068, %v3220
      %v3222 = vpop.f32.mrf.mxu0
      %v3223 = vadd.f32 %v3070, %v3222
      %3224 = vdwg.mxu0
      %v3337 = vunpack.c.l.b16 %v1818
      %v3338 = vunpack.c.h.b16 %v1818
      %v3339 = vunpack.c.l.b16 %v1819
      %v3340 = vunpack.c.h.b16 %v1819
      %v3341 = vunpack.c.l.b16 %v1820
      %v3342 = vunpack.c.h.b16 %v1820
      %v3343 = vunpack.c.l.b16 %v1821
      %v3344 = vunpack.c.h.b16 %v1821
      %v3345 = vunpack.c.l.b16 %v1822
      %v3346 = vunpack.c.h.b16 %v1822
      %v3347 = vunpack.c.l.b16 %v1823
      %v3348 = vunpack.c.h.b16 %v1823
      %v3349 = vunpack.c.l.b16 %v1824
      %v3350 = vunpack.c.h.b16 %v1824
      %v3351 = vunpack.c.l.b16 %v1825
      %v3352 = vunpack.c.h.b16 %v1825
      %v3353 = vunpack.c.l.b16 %v1826
      %v3354 = vunpack.c.h.b16 %v1826
      %v3355 = vunpack.c.l.b16 %v1827
      %v3356 = vunpack.c.h.b16 %v1827
      %v3357 = vunpack.c.l.b16 %v1828
      %v3358 = vunpack.c.h.b16 %v1828
      %v3359 = vunpack.c.l.b16 %v1829
      %v3360 = vunpack.c.h.b16 %v1829
      %v3361 = vunpack.c.l.b16 %v1830
      %v3362 = vunpack.c.h.b16 %v1830
      %v3363 = vunpack.c.l.b16 %v1831
      %v3364 = vunpack.c.h.b16 %v1831
      %v3365 = vunpack.c.l.b16 %v1832
      %v3366 = vunpack.c.h.b16 %v1832
      %v3367 = vunpack.c.l.b16 %v1833
      %v3368 = vunpack.c.h.b16 %v1833
      %v3369 = vunpack.c.l.b16 %v1834
      %v3370 = vunpack.c.h.b16 %v1834
      %v3371 = vunpack.c.l.b16 %v1835
      %v3372 = vunpack.c.h.b16 %v1835
      %v3373 = vunpack.c.l.b16 %v1836
      %v3374 = vunpack.c.h.b16 %v1836
      %v3375 = vunpack.c.l.b16 %v1837
      %v3376 = vunpack.c.h.b16 %v1837
      %v3377 = vunpack.c.l.b16 %v1838
      %v3378 = vunpack.c.h.b16 %v1838
      %v3379 = vunpack.c.l.b16 %v1839
      %v3380 = vunpack.c.h.b16 %v1839
      %v3381 = vunpack.c.l.b16 %v1840
      %v3382 = vunpack.c.h.b16 %v1840
      %v3383 = vunpack.c.l.b16 %v1841
      %v3384 = vunpack.c.h.b16 %v1841
      %v3385 = vunpack.c.l.b16 %v1842
      %v3386 = vunpack.c.h.b16 %v1842
      %v3387 = vunpack.c.l.b16 %v1843
      %v3388 = vunpack.c.h.b16 %v1843
      %v3389 = vunpack.c.l.b16 %v1844
      %v3390 = vunpack.c.h.b16 %v1844
      %v3391 = vunpack.c.l.b16 %v1845
      %v3392 = vunpack.c.h.b16 %v1845
      %v3393 = vunpack.c.l.b16 %v1846
      %v3394 = vunpack.c.h.b16 %v1846
      %v3395 = vunpack.c.l.b16 %v1847
      %v3396 = vunpack.c.h.b16 %v1847
      %v3397 = vunpack.c.l.b16 %v1848
      %v3398 = vunpack.c.h.b16 %v1848
      %v3399 = vunpack.c.l.b16 %v1849
      %v3400 = vunpack.c.h.b16 %v1849
      %v3401 = vunpack.c.l.b16 %v1850
      %v3402 = vunpack.c.h.b16 %v1850
      %v3403 = vunpack.c.l.b16 %v1851
      %v3404 = vunpack.c.h.b16 %v1851
      %v3405 = vunpack.c.l.b16 %v1852
      %v3406 = vunpack.c.h.b16 %v1852
      %v3407 = vunpack.c.l.b16 %v1853
      %v3408 = vunpack.c.h.b16 %v1853
      %v3409 = vunpack.c.l.b16 %v1854
      %v3410 = vunpack.c.h.b16 %v1854
      %v3411 = vunpack.c.l.b16 %v1855
      %v3412 = vunpack.c.h.b16 %v1855
      %v3413 = vunpack.c.l.b16 %v1856
      %v3414 = vunpack.c.h.b16 %v1856
      %v3415 = vunpack.c.l.b16 %v1857
      %v3416 = vunpack.c.h.b16 %v1857
      %v3417 = vunpack.c.l.b16 %v1858
      %v3418 = vunpack.c.h.b16 %v1858
      %v3419 = vunpack.c.l.b16 %v1859
      %v3420 = vunpack.c.h.b16 %v1859
      %v3421 = vunpack.c.l.b16 %v1860
      %v3422 = vunpack.c.h.b16 %v1860
      %v3423 = vunpack.c.l.b16 %v1861
      %v3424 = vunpack.c.h.b16 %v1861
      %v3425 = vunpack.c.l.b16 %v1862
      %v3426 = vunpack.c.h.b16 %v1862
      %v3427 = vunpack.c.l.b16 %v1863
      %v3428 = vunpack.c.h.b16 %v1863
      %v3429 = vunpack.c.l.b16 %v1864
      %v3430 = vunpack.c.h.b16 %v1864
      %v3431 = vunpack.c.l.b16 %v1865
      %v3432 = vunpack.c.h.b16 %v1865
      %v3433 = vunpack.c.l.b16 %v1866
      %v3434 = vunpack.c.h.b16 %v1866
      %v3435 = vunpack.c.l.b16 %v1867
      %v3436 = vunpack.c.h.b16 %v1867
      %v3437 = vunpack.c.l.b16 %v1868
      %v3438 = vunpack.c.h.b16 %v1868
      %v3439 = vunpack.c.l.b16 %v1869
      %v3440 = vunpack.c.h.b16 %v1869
      %v3441 = vunpack.c.l.b16 %v1870
      %v3442 = vunpack.c.h.b16 %v1870
      %v3443 = vunpack.c.l.b16 %v1871
      %v3444 = vunpack.c.h.b16 %v1871
      %v3445 = vunpack.c.l.b16 %v1872
      %v3446 = vunpack.c.h.b16 %v1872
      %v3447 = vunpack.c.l.b16 %v1873
      %v3448 = vunpack.c.h.b16 %v1873
      %v3449 = vunpack.c.l.b16 %v1874
      %v3450 = vunpack.c.h.b16 %v1874
      %v3451 = vunpack.c.l.b16 %v1875
      %v3452 = vunpack.c.h.b16 %v1875
      %v3453 = vunpack.c.l.b16 %v1876
      %v3454 = vunpack.c.h.b16 %v1876
      %v3455 = vunpack.c.l.b16 %v1877
      %v3456 = vunpack.c.h.b16 %v1877
      %v3457 = vunpack.c.l.b16 %v1878
      %v3458 = vunpack.c.h.b16 %v1878
      %v3459 = vunpack.c.l.b16 %v1879
      %v3460 = vunpack.c.h.b16 %v1879
      %v3461 = vunpack.c.l.b16 %v1880
      %v3462 = vunpack.c.h.b16 %v1880
      %v3463 = vunpack.c.l.b16 %v1881
      %v3464 = vunpack.c.h.b16 %v1881
      %v3465 = vpack.c.b16 %v3339, %v3337
      %v3466 = vpack.c.b16 %v3340, %v3338
      %v3467 = vpack.c.b16 %v3343, %v3341
      %v3468 = vpack.c.b16 %v3344, %v3342
      %v3469 = vpack.c.b16 %v3347, %v3345
      %v3470 = vpack.c.b16 %v3348, %v3346
      %v3471 = vpack.c.b16 %v3351, %v3349
      %v3472 = vpack.c.b16 %v3352, %v3350
      %v3473 = vpack.c.b16 %v3355, %v3353
      %v3474 = vpack.c.b16 %v3356, %v3354
      %v3475 = vpack.c.b16 %v3359, %v3357
      %v3476 = vpack.c.b16 %v3360, %v3358
      %v3477 = vpack.c.b16 %v3363, %v3361
      %v3478 = vpack.c.b16 %v3364, %v3362
      %v3479 = vpack.c.b16 %v3367, %v3365
      %v3480 = vpack.c.b16 %v3368, %v3366
      %v3481 = vpack.c.b16 %v3371, %v3369
      %v3482 = vpack.c.b16 %v3372, %v3370
      %v3483 = vpack.c.b16 %v3375, %v3373
      %v3484 = vpack.c.b16 %v3376, %v3374
      %v3485 = vpack.c.b16 %v3379, %v3377
      %v3486 = vpack.c.b16 %v3380, %v3378
      %v3487 = vpack.c.b16 %v3383, %v3381
      %v3488 = vpack.c.b16 %v3384, %v3382
      %v3489 = vpack.c.b16 %v3387, %v3385
      %v3490 = vpack.c.b16 %v3388, %v3386
      %v3491 = vpack.c.b16 %v3391, %v3389
      %v3492 = vpack.c.b16 %v3392, %v3390
      %v3493 = vpack.c.b16 %v3395, %v3393
      %v3494 = vpack.c.b16 %v3396, %v3394
      %v3495 = vpack.c.b16 %v3399, %v3397
      %v3496 = vpack.c.b16 %v3400, %v3398
      %v3497 = vpack.c.b16 %v3403, %v3401
      %v3498 = vpack.c.b16 %v3404, %v3402
      %v3499 = vpack.c.b16 %v3407, %v3405
      %v3500 = vpack.c.b16 %v3408, %v3406
      %v3501 = vpack.c.b16 %v3411, %v3409
      %v3502 = vpack.c.b16 %v3412, %v3410
      %v3503 = vpack.c.b16 %v3415, %v3413
      %v3504 = vpack.c.b16 %v3416, %v3414
      %v3505 = vpack.c.b16 %v3419, %v3417
      %v3506 = vpack.c.b16 %v3420, %v3418
      %v3507 = vpack.c.b16 %v3423, %v3421
      %v3508 = vpack.c.b16 %v3424, %v3422
      %v3509 = vpack.c.b16 %v3427, %v3425
      %v3510 = vpack.c.b16 %v3428, %v3426
      %v3511 = vpack.c.b16 %v3431, %v3429
      %v3512 = vpack.c.b16 %v3432, %v3430
      %v3513 = vpack.c.b16 %v3435, %v3433
      %v3514 = vpack.c.b16 %v3436, %v3434
      %v3515 = vpack.c.b16 %v3439, %v3437
      %v3516 = vpack.c.b16 %v3440, %v3438
      %v3517 = vpack.c.b16 %v3443, %v3441
      %v3518 = vpack.c.b16 %v3444, %v3442
      %v3519 = vpack.c.b16 %v3447, %v3445
      %v3520 = vpack.c.b16 %v3448, %v3446
      %v3521 = vpack.c.b16 %v3451, %v3449
      %v3522 = vpack.c.b16 %v3452, %v3450
      %v3523 = vpack.c.b16 %v3455, %v3453
      %v3524 = vpack.c.b16 %v3456, %v3454
      %v3525 = vpack.c.b16 %v3459, %v3457
      %v3526 = vpack.c.b16 %v3460, %v3458
      %v3527 = vpack.c.b16 %v3463, %v3461
      %v3528 = vpack.c.b16 %v3464, %v3462
      %3593 = vmatprep.subr.bf16.mxu0 %v3480
      %3594 = vmatpush1.bf16.msra.mxu0 %v3479
      %3595 = vmatprep.subr.bf16.mxu0 %v3478
      %3596 = vmatpush1.bf16.msra.mxu0 %v3477
      %3597 = vmatprep.subr.bf16.mxu0 %v3476
      %3598 = vmatpush1.bf16.msra.mxu0 %v3475
      %3599 = vmatprep.subr.bf16.mxu0 %v3474
      %3600 = vmatpush1.bf16.msra.mxu0 %v3473
      %3601 = vmatprep.subr.bf16.mxu0 %v3472
      %3602 = vmatpush1.bf16.msra.mxu0 %v3471
      %3603 = vmatprep.subr.bf16.mxu0 %v3470
      %3604 = vmatpush1.bf16.msra.mxu0 %v3469
      %3605 = vmatprep.subr.bf16.mxu0 %v3468
      %3606 = vmatpush1.bf16.msra.mxu0 %v3467
      %3607 = vmatprep.subr.bf16.mxu0 %v3466
      %3608 = vmatpush1.bf16.msra.mxu0 %v3465
      %3609 = vmatprep.subr.bf16.mxu0 %v3496
      %3610 = vmatpush2.bf16.msra.mxu0 %v3495
      %3611 = vmatprep.subr.bf16.mxu0 %v3494
      %3612 = vmatpush2.bf16.msra.mxu0 %v3493
      %3613 = vmatprep.subr.bf16.mxu0 %v3492
      %3614 = vmatpush2.bf16.msra.mxu0 %v3491
      %3615 = vmatprep.subr.bf16.mxu0 %v3490
      %3616 = vmatpush2.bf16.msra.mxu0 %v3489
      %3617 = vmatprep.subr.bf16.mxu0 %v3488
      %3618 = vmatpush2.bf16.msra.mxu0 %v3487
      %3619 = vmatprep.subr.bf16.mxu0 %v3486
      %3620 = vmatpush2.bf16.msra.mxu0 %v3485
      %3621 = vmatprep.subr.bf16.mxu0 %v3484
      %3622 = vmatpush2.bf16.msra.mxu0 %v3483
      %3623 = vmatprep.subr.bf16.mxu0 %v3482
      %3624 = vmatpush2.bf16.msra.mxu0 %v3481
      %3625 = vmatprep.mubr.bf16.mxu0 %v2099
      %3626 = vmatmul.mubr.bf16.gmra.mxu0 %v2098
      %v3627 = vpop.f32.mrf.mxu0
      %v3628 = vadd.f32 %v3107, %v3627
      %v3629 = vpop.f32.mrf.mxu0
      %v3630 = vadd.f32 %v3109, %v3629
      %v3631 = vpop.f32.mrf.mxu0
      %v3632 = vadd.f32 %v3111, %v3631
      %v3633 = vpop.f32.mrf.mxu0
      %v3634 = vadd.f32 %v3113, %v3633
      %3635 = vmatprep.mubr.bf16.mxu0 %v2103
      %3636 = vmatmul.mubr.bf16.gmra.mxu0 %v2102
      %v3637 = vpop.f32.mrf.mxu0
      %v3638 = vadd.f32 %v3117, %v3637
      %v3639 = vpop.f32.mrf.mxu0
      %v3640 = vadd.f32 %v3119, %v3639
      %v3641 = vpop.f32.mrf.mxu0
      %v3642 = vadd.f32 %v3121, %v3641
      %v3643 = vpop.f32.mrf.mxu0
      %v3644 = vadd.f32 %v3123, %v3643
      %3645 = vmatprep.mubr.bf16.mxu0 %v2107
      %3646 = vmatmul.mubr.bf16.gmra.mxu0 %v2106
      %v3647 = vpop.f32.mrf.mxu0
      %v3648 = vadd.f32 %v3127, %v3647
      %v3649 = vpop.f32.mrf.mxu0
      %v3650 = vadd.f32 %v3129, %v3649
      %v3651 = vpop.f32.mrf.mxu0
      %v3652 = vadd.f32 %v3131, %v3651
      %v3653 = vpop.f32.mrf.mxu0
      %v3654 = vadd.f32 %v3133, %v3653
      %3655 = vmatprep.mubr.bf16.mxu0 %v2111
      %3656 = vmatmul.mubr.bf16.gmra.mxu0 %v2110
      %v3657 = vpop.f32.mrf.mxu0
      %v3658 = vadd.f32 %v3137, %v3657
      %v3659 = vpop.f32.mrf.mxu0
      %v3660 = vadd.f32 %v3139, %v3659
      %v3661 = vpop.f32.mrf.mxu0
      %v3662 = vadd.f32 %v3141, %v3661
      %v3663 = vpop.f32.mrf.mxu0
      %v3664 = vadd.f32 %v3143, %v3663
      %3665 = vmatprep.mubr.bf16.mxu0 %v2115
      %3666 = vmatmul.mubr.bf16.gmra.mxu0 %v2114
      %v3667 = vpop.f32.mrf.mxu0
      %v3668 = vadd.f32 %v3147, %v3667
      %v3669 = vpop.f32.mrf.mxu0
      %v3670 = vadd.f32 %v3149, %v3669
      %v3671 = vpop.f32.mrf.mxu0
      %v3672 = vadd.f32 %v3151, %v3671
      %v3673 = vpop.f32.mrf.mxu0
      %v3674 = vadd.f32 %v3153, %v3673
      %3675 = vmatprep.mubr.bf16.mxu0 %v2119
      %3676 = vmatmul.mubr.bf16.gmra.mxu0 %v2118
      %v3677 = vpop.f32.mrf.mxu0
      %v3678 = vadd.f32 %v3157, %v3677
      %v3679 = vpop.f32.mrf.mxu0
      %v3680 = vadd.f32 %v3159, %v3679
      %v3681 = vpop.f32.mrf.mxu0
      %v3682 = vadd.f32 %v3161, %v3681
      %v3683 = vpop.f32.mrf.mxu0
      %v3684 = vadd.f32 %v3163, %v3683
      %3685 = vmatprep.mubr.bf16.mxu0 %v2123
      %3686 = vmatmul.mubr.bf16.gmra.mxu0 %v2122
      %v3687 = vpop.f32.mrf.mxu0
      %v3688 = vadd.f32 %v3167, %v3687
      %v3689 = vpop.f32.mrf.mxu0
      %v3690 = vadd.f32 %v3169, %v3689
      %v3691 = vpop.f32.mrf.mxu0
      %v3692 = vadd.f32 %v3171, %v3691
      %v3693 = vpop.f32.mrf.mxu0
      %v3694 = vadd.f32 %v3173, %v3693
      %3695 = vmatprep.mubr.bf16.mxu0 %v2127
      %3696 = vmatmul.mubr.bf16.gmra.mxu0 %v2126
      %v3697 = vpop.f32.mrf.mxu0
      %v3698 = vadd.f32 %v3177, %v3697
      %v3699 = vpop.f32.mrf.mxu0
      %v3700 = vadd.f32 %v3179, %v3699
      %v3701 = vpop.f32.mrf.mxu0
      %v3702 = vadd.f32 %v3181, %v3701
      %v3703 = vpop.f32.mrf.mxu0
      %v3704 = vadd.f32 %v3183, %v3703
      %3705 = vmatprep.mubr.bf16.mxu0 %v2131
      %3706 = vmatmul.mubr.bf16.gmra.mxu0 %v2130
      %v3707 = vpop.f32.mrf.mxu0
      %v3708 = vadd.f32 %v3187, %v3707
      %v3709 = vpop.f32.mrf.mxu0
      %v3710 = vadd.f32 %v3189, %v3709
      %v3711 = vpop.f32.mrf.mxu0
      %v3712 = vadd.f32 %v3191, %v3711
      %v3713 = vpop.f32.mrf.mxu0
      %v3714 = vadd.f32 %v3193, %v3713
      %3715 = vmatprep.mubr.bf16.mxu0 %v2135
      %3716 = vmatmul.mubr.bf16.gmra.mxu0 %v2134
      %v3717 = vpop.f32.mrf.mxu0
      %v3718 = vadd.f32 %v3197, %v3717
      %v3719 = vpop.f32.mrf.mxu0
      %v3720 = vadd.f32 %v3199, %v3719
      %v3721 = vpop.f32.mrf.mxu0
      %v3722 = vadd.f32 %v3201, %v3721
      %v3723 = vpop.f32.mrf.mxu0
      %v3724 = vadd.f32 %v3203, %v3723
      %3725 = vmatprep.mubr.bf16.mxu0 %v2139
      %3726 = vmatmul.mubr.bf16.gmra.mxu0 %v2138
      %v3727 = vpop.f32.mrf.mxu0
      %v3728 = vadd.f32 %v3207, %v3727
      %v3729 = vpop.f32.mrf.mxu0
      %v3730 = vadd.f32 %v3209, %v3729
      %v3731 = vpop.f32.mrf.mxu0
      %v3732 = vadd.f32 %v3211, %v3731
      %v3733 = vpop.f32.mrf.mxu0
      %v3734 = vadd.f32 %v3213, %v3733
      %3735 = vmatprep.mubr.bf16.mxu0 %v2143
      %3736 = vmatmul.mubr.bf16.gmra.mxu0 %v2142
      %v3737 = vpop.f32.mrf.mxu0
      %v3738 = vadd.f32 %v3217, %v3737
      %v3739 = vpop.f32.mrf.mxu0
      %v3740 = vadd.f32 %v3219, %v3739
      %v3741 = vpop.f32.mrf.mxu0
      %v3742 = vadd.f32 %v3221, %v3741
      %v3743 = vpop.f32.mrf.mxu0
      %v3744 = vadd.f32 %v3223, %v3743
      %3745 = vdwg.mxu0
      %3746 = vmatprep.subr.bf16.mxu0 %v3512
      %3747 = vmatpush1.bf16.msra.mxu0 %v3511
      %3748 = vmatprep.subr.bf16.mxu0 %v3510
      %3749 = vmatpush1.bf16.msra.mxu0 %v3509
      %3750 = vmatprep.subr.bf16.mxu0 %v3508
      %3751 = vmatpush1.bf16.msra.mxu0 %v3507
      %3752 = vmatprep.subr.bf16.mxu0 %v3506
      %3753 = vmatpush1.bf16.msra.mxu0 %v3505
      %3754 = vmatprep.subr.bf16.mxu0 %v3504
      %3755 = vmatpush1.bf16.msra.mxu0 %v3503
      %3756 = vmatprep.subr.bf16.mxu0 %v3502
      %3757 = vmatpush1.bf16.msra.mxu0 %v3501
      %3758 = vmatprep.subr.bf16.mxu0 %v3500
      %3759 = vmatpush1.bf16.msra.mxu0 %v3499
      %3760 = vmatprep.subr.bf16.mxu0 %v3498
      %3761 = vmatpush1.bf16.msra.mxu0 %v3497
      %3762 = vmatprep.subr.bf16.mxu0 %v3528
      %3763 = vmatpush2.bf16.msra.mxu0 %v3527
      %3764 = vmatprep.subr.bf16.mxu0 %v3526
      %3765 = vmatpush2.bf16.msra.mxu0 %v3525
      %3766 = vmatprep.subr.bf16.mxu0 %v3524
      %3767 = vmatpush2.bf16.msra.mxu0 %v3523
      %3768 = vmatprep.subr.bf16.mxu0 %v3522
      %3769 = vmatpush2.bf16.msra.mxu0 %v3521
      %3770 = vmatprep.subr.bf16.mxu0 %v3520
      %3771 = vmatpush2.bf16.msra.mxu0 %v3519
      %3772 = vmatprep.subr.bf16.mxu0 %v3518
      %3773 = vmatpush2.bf16.msra.mxu0 %v3517
      %3774 = vmatprep.subr.bf16.mxu0 %v3516
      %3775 = vmatpush2.bf16.msra.mxu0 %v3515
      %3776 = vmatprep.subr.bf16.mxu0 %v3514
      %3777 = vmatpush2.bf16.msra.mxu0 %v3513
      %3778 = vmatprep.mubr.bf16.mxu0 %v2101
      %3779 = vmatmul.mubr.bf16.gmra.mxu0 %v2100
      %v3780 = vpop.f32.mrf.mxu0
      %v3781 = vadd.f32 %v3628, %v3780
      %v3782 = vpop.f32.mrf.mxu0
      %v3783 = vadd.f32 %v3630, %v3782
      %v3784 = vpop.f32.mrf.mxu0
      %v3785 = vadd.f32 %v3632, %v3784
      %v3786 = vpop.f32.mrf.mxu0
      %v3787 = vadd.f32 %v3634, %v3786
      %3788 = vmatprep.mubr.bf16.mxu0 %v2105
      %3789 = vmatmul.mubr.bf16.gmra.mxu0 %v2104
      %v3790 = vpop.f32.mrf.mxu0
      %v3791 = vadd.f32 %v3638, %v3790
      %v3792 = vpop.f32.mrf.mxu0
      %v3793 = vadd.f32 %v3640, %v3792
      %v3794 = vpop.f32.mrf.mxu0
      %v3795 = vadd.f32 %v3642, %v3794
      %v3796 = vpop.f32.mrf.mxu0
      %v3797 = vadd.f32 %v3644, %v3796
      %3798 = vmatprep.mubr.bf16.mxu0 %v2109
      %3799 = vmatmul.mubr.bf16.gmra.mxu0 %v2108
      %v3800 = vpop.f32.mrf.mxu0
      %v3801 = vadd.f32 %v3648, %v3800
      %v3802 = vpop.f32.mrf.mxu0
      %v3803 = vadd.f32 %v3650, %v3802
      %v3804 = vpop.f32.mrf.mxu0
      %v3805 = vadd.f32 %v3652, %v3804
      %v3806 = vpop.f32.mrf.mxu0
      %v3807 = vadd.f32 %v3654, %v3806
      %3808 = vmatprep.mubr.bf16.mxu0 %v2113
      %3809 = vmatmul.mubr.bf16.gmra.mxu0 %v2112
      %v3810 = vpop.f32.mrf.mxu0
      %v3811 = vadd.f32 %v3658, %v3810
      %v3812 = vpop.f32.mrf.mxu0
      %v3813 = vadd.f32 %v3660, %v3812
      %v3814 = vpop.f32.mrf.mxu0
      %v3815 = vadd.f32 %v3662, %v3814
      %v3816 = vpop.f32.mrf.mxu0
      %v3817 = vadd.f32 %v3664, %v3816
      %3818 = vmatprep.mubr.bf16.mxu0 %v2117
      %3819 = vmatmul.mubr.bf16.gmra.mxu0 %v2116
      %v3820 = vpop.f32.mrf.mxu0
      %v3821 = vadd.f32 %v3668, %v3820
      %v3822 = vpop.f32.mrf.mxu0
      %v3823 = vadd.f32 %v3670, %v3822
      %v3824 = vpop.f32.mrf.mxu0
      %v3825 = vadd.f32 %v3672, %v3824
      %v3826 = vpop.f32.mrf.mxu0
      %v3827 = vadd.f32 %v3674, %v3826
      %3828 = vmatprep.mubr.bf16.mxu0 %v2121
      %3829 = vmatmul.mubr.bf16.gmra.mxu0 %v2120
      %v3830 = vpop.f32.mrf.mxu0
      %v3831 = vadd.f32 %v3678, %v3830
      %v3832 = vpop.f32.mrf.mxu0
      %v3833 = vadd.f32 %v3680, %v3832
      %v3834 = vpop.f32.mrf.mxu0
      %v3835 = vadd.f32 %v3682, %v3834
      %v3836 = vpop.f32.mrf.mxu0
      %v3837 = vadd.f32 %v3684, %v3836
      %3838 = vmatprep.mubr.bf16.mxu0 %v2125
      %3839 = vmatmul.mubr.bf16.gmra.mxu0 %v2124
      %v3840 = vpop.f32.mrf.mxu0
      %v3841 = vadd.f32 %v3688, %v3840
      %v3842 = vpop.f32.mrf.mxu0
      %v3843 = vadd.f32 %v3690, %v3842
      %v3844 = vpop.f32.mrf.mxu0
      %v3845 = vadd.f32 %v3692, %v3844
      %v3846 = vpop.f32.mrf.mxu0
      %v3847 = vadd.f32 %v3694, %v3846
      %3848 = vmatprep.mubr.bf16.mxu0 %v2129
      %3849 = vmatmul.mubr.bf16.gmra.mxu0 %v2128
      %v3850 = vpop.f32.mrf.mxu0
      %v3851 = vadd.f32 %v3698, %v3850
      %v3852 = vpop.f32.mrf.mxu0
      %v3853 = vadd.f32 %v3700, %v3852
      %v3854 = vpop.f32.mrf.mxu0
      %v3855 = vadd.f32 %v3702, %v3854
      %v3856 = vpop.f32.mrf.mxu0
      %v3857 = vadd.f32 %v3704, %v3856
      %3858 = vmatprep.mubr.bf16.mxu0 %v2133
      %3859 = vmatmul.mubr.bf16.gmra.mxu0 %v2132
      %v3860 = vpop.f32.mrf.mxu0
      %v3861 = vadd.f32 %v3708, %v3860
      %v3862 = vpop.f32.mrf.mxu0
      %v3863 = vadd.f32 %v3710, %v3862
      %v3864 = vpop.f32.mrf.mxu0
      %v3865 = vadd.f32 %v3712, %v3864
      %v3866 = vpop.f32.mrf.mxu0
      %v3867 = vadd.f32 %v3714, %v3866
      %3868 = vmatprep.mubr.bf16.mxu0 %v2137
      %3869 = vmatmul.mubr.bf16.gmra.mxu0 %v2136
      %v3870 = vpop.f32.mrf.mxu0
      %v3871 = vadd.f32 %v3718, %v3870
      %v3872 = vpop.f32.mrf.mxu0
      %v3873 = vadd.f32 %v3720, %v3872
      %v3874 = vpop.f32.mrf.mxu0
      %v3875 = vadd.f32 %v3722, %v3874
      %v3876 = vpop.f32.mrf.mxu0
      %v3877 = vadd.f32 %v3724, %v3876
      %3878 = vmatprep.mubr.bf16.mxu0 %v2141
      %3879 = vmatmul.mubr.bf16.gmra.mxu0 %v2140
      %v3880 = vpop.f32.mrf.mxu0
      %v3881 = vadd.f32 %v3728, %v3880
      %v3882 = vpop.f32.mrf.mxu0
      %v3883 = vadd.f32 %v3730, %v3882
      %v3884 = vpop.f32.mrf.mxu0
      %v3885 = vadd.f32 %v3732, %v3884
      %v3886 = vpop.f32.mrf.mxu0
      %v3887 = vadd.f32 %v3734, %v3886
      %3888 = vmatprep.mubr.bf16.mxu0 %v2145
      %3889 = vmatmul.mubr.bf16.gmra.mxu0 %v2144
      %v3890 = vpop.f32.mrf.mxu0
      %v3891 = vadd.f32 %v3738, %v3890
      %v3892 = vpop.f32.mrf.mxu0
      %v3893 = vadd.f32 %v3740, %v3892
      %v3894 = vpop.f32.mrf.mxu0
      %v3895 = vadd.f32 %v3742, %v3894
      %v3896 = vpop.f32.mrf.mxu0
      %v3897 = vadd.f32 %v3744, %v3896
      %3898 = vdwg.mxu0
      %v3899 = vld [vmem:[#allocation2] sm:$0xee]
      %v3900 = vld [vmem:[#allocation2 + $0x8] sm:$0xee]
      %v3901 = vld [vmem:[%s3 + $0x400] sm:$0xff]
      %v3902 = vld [vmem:[%s3 + $0x408] sm:$0xff]
      %v3903 = vld [vmem:[%s3 + $0x410] sm:$0xff]
      %v3904 = vld [vmem:[%s3 + $0x418] sm:$0xff]
      %v3905 = vld [vmem:[%s3 + $0x420] sm:$0xff]
      %v3906 = vld [vmem:[%s3 + $0x428] sm:$0xff]
      %v3907 = vld [vmem:[%s3 + $0x430] sm:$0xff]
      %v3908 = vld [vmem:[%s3 + $0x438] sm:$0xff]
      %v3909 = vld [vmem:[%s3 + $0x440] sm:$0xff]
      %v3910 = vld [vmem:[%s3 + $0x448] sm:$0xff]
      %v3911 = vld [vmem:[%s3 + $0x450] sm:$0xff]
      %v3912 = vld [vmem:[%s3 + $0x458] sm:$0xff]
      %v3913 = vld [vmem:[%s3 + $0x460] sm:$0xff]
      %v3914 = vld [vmem:[%s3 + $0x468] sm:$0xff]
      %v3915 = vld [vmem:[%s3 + $0x470] sm:$0xff]
      %v3916 = vld [vmem:[%s3 + $0x478] sm:$0xff]
      %v3917 = vld [vmem:[%s3 + $0x480] sm:$0xff]
      %v3918 = vld [vmem:[%s3 + $0x488] sm:$0xff]
      %v3919 = vld [vmem:[%s3 + $0x490] sm:$0xff]
      %v3920 = vld [vmem:[%s3 + $0x498] sm:$0xff]
      %v3921 = vld [vmem:[%s3 + $0x4a0] sm:$0xff]
      %v3922 = vld [vmem:[%s3 + $0x4a8] sm:$0xff]
      %v3923 = vld [vmem:[%s3 + $0x4b0] sm:$0xff]
      %v3924 = vld [vmem:[%s3 + $0x4b8] sm:$0xff]
      %v3925 = vld [vmem:[%s3 + $0x4c0] sm:$0xff]
      %v3926 = vld [vmem:[%s3 + $0x4c8] sm:$0xff]
      %v3927 = vld [vmem:[%s3 + $0x4d0] sm:$0xff]
      %v3928 = vld [vmem:[%s3 + $0x4d8] sm:$0xff]
      %v3929 = vld [vmem:[%s3 + $0x4e0] sm:$0xff]
      %v3930 = vld [vmem:[%s3 + $0x4e8] sm:$0xff]
      %v3931 = vld [vmem:[%s3 + $0x4f0] sm:$0xff]
      %v3932 = vld [vmem:[%s3 + $0x4f8] sm:$0xff]
      %v3933 = vld [vmem:[%s3 + $0x500] sm:$0xff]
      %v3934 = vld [vmem:[%s3 + $0x508] sm:$0xff]
      %v3935 = vld [vmem:[%s3 + $0x510] sm:$0xff]
      %v3936 = vld [vmem:[%s3 + $0x518] sm:$0xff]
      %v3937 = vld [vmem:[%s3 + $0x520] sm:$0xff]
      %v3938 = vld [vmem:[%s3 + $0x528] sm:$0xff]
      %v3939 = vld [vmem:[%s3 + $0x530] sm:$0xff]
      %v3940 = vld [vmem:[%s3 + $0x538] sm:$0xff]
      %v3941 = vld [vmem:[%s3 + $0x540] sm:$0xff]
      %v3942 = vld [vmem:[%s3 + $0x548] sm:$0xff]
      %v3943 = vld [vmem:[%s3 + $0x550] sm:$0xff]
      %v3944 = vld [vmem:[%s3 + $0x558] sm:$0xff]
      %v3945 = vld [vmem:[%s3 + $0x560] sm:$0xff]
      %v3946 = vld [vmem:[%s3 + $0x568] sm:$0xff]
      %v3947 = vld [vmem:[%s3 + $0x570] sm:$0xff]
      %v3948 = vld [vmem:[%s3 + $0x578] sm:$0xff]
      %v3949 = vld [vmem:[%s3 + $0x580] sm:$0xff]
      %v3950 = vld [vmem:[%s3 + $0x588] sm:$0xff]
      %v3951 = vld [vmem:[%s3 + $0x590] sm:$0xff]
      %v3952 = vld [vmem:[%s3 + $0x598] sm:$0xff]
      %v3953 = vld [vmem:[%s3 + $0x5a0] sm:$0xff]
      %v3954 = vld [vmem:[%s3 + $0x5a8] sm:$0xff]
      %v3955 = vld [vmem:[%s3 + $0x5b0] sm:$0xff]
      %v3956 = vld [vmem:[%s3 + $0x5b8] sm:$0xff]
      %v3957 = vld [vmem:[%s3 + $0x5c0] sm:$0xff]
      %v3958 = vld [vmem:[%s3 + $0x5c8] sm:$0xff]
      %v3959 = vld [vmem:[%s3 + $0x5d0] sm:$0xff]
      %v3960 = vld [vmem:[%s3 + $0x5d8] sm:$0xff]
      %v3961 = vld [vmem:[%s3 + $0x5e0] sm:$0xff]
      %v3962 = vld [vmem:[%s3 + $0x5e8] sm:$0xff]
      %v3963 = vld [vmem:[%s3 + $0x5f0] sm:$0xff]
      %v3964 = vld [vmem:[%s3 + $0x5f8] sm:$0xff]
      %v3967 = vunpack.c.l.b16 %v3899
      %v3968 = vunpack.c.h.b16 %v3899
      %v3969 = vunpack.c.l.b16 %v3900
      %v3970 = vunpack.c.h.b16 %v3900
      %v3971 = vpack.c.b16 %v2002, %v3967
      %v3972 = vpack.c.b16 %v2003, %v3968
      %v3973 = vpack.c.b16 %v2004, %v3969
      %v3974 = vpack.c.b16 %v2005, %v3970
      %vm3975 = vcmask 1046528
      %v3976 = vrot.slane %v3971, 1
      %v3977 = vrot.slane %v2102, 1
      %v3978 = vsel %vm3975, %v3976, %v3977
      %v3979 = vrot.slane %v3972, 1
      %v3980 = vrot.slane %v2103, 1
      %v3981 = vsel %vm3975, %v3979, %v3980
      %v3982 = vrot.slane %v3973, 1
      %v3983 = vrot.slane %v2104, 1
      %v3984 = vsel %vm3975, %v3982, %v3983
      %v3985 = vrot.slane %v3974, 1
      %v3986 = vrot.slane %v2105, 1
      %v3987 = vsel %vm3975, %v3985, %v3986
      %v3988 = vrot.slane %v2106, 1
      %v3989 = vsel %vm3975, %v3977, %v3988
      %v3990 = vrot.slane %v2107, 1
      %v3991 = vsel %vm3975, %v3980, %v3990
      %v3992 = vrot.slane %v2108, 1
      %v3993 = vsel %vm3975, %v3983, %v3992
      %v3994 = vrot.slane %v2109, 1
      %v3995 = vsel %vm3975, %v3986, %v3994
      %v3996 = vrot.slane %v2110, 1
      %v3997 = vsel %vm3975, %v3988, %v3996
      %v3998 = vrot.slane %v2111, 1
      %v3999 = vsel %vm3975, %v3990, %v3998
      %v4000 = vrot.slane %v2112, 1
      %v4001 = vsel %vm3975, %v3992, %v4000
      %v4002 = vrot.slane %v2113, 1
      %v4003 = vsel %vm3975, %v3994, %v4002
      %v4004 = vrot.slane %v2114, 1
      %v4005 = vsel %vm3975, %v3996, %v4004
      %v4006 = vrot.slane %v2115, 1
      %v4007 = vsel %vm3975, %v3998, %v4006
      %v4008 = vrot.slane %v2116, 1
      %v4009 = vsel %vm3975, %v4000, %v4008
      %v4010 = vrot.slane %v2117, 1
      %v4011 = vsel %vm3975, %v4002, %v4010
      %v4012 = vrot.slane %v2118, 1
      %v4013 = vsel %vm3975, %v4004, %v4012
      %v4014 = vrot.slane %v2119, 1
      %v4015 = vsel %vm3975, %v4006, %v4014
      %v4016 = vrot.slane %v2120, 1
      %v4017 = vsel %vm3975, %v4008, %v4016
      %v4018 = vrot.slane %v2121, 1
      %v4019 = vsel %vm3975, %v4010, %v4018
      %v4020 = vrot.slane %v2122, 1
      %v4021 = vsel %vm3975, %v4012, %v4020
      %v4022 = vrot.slane %v2123, 1
      %v4023 = vsel %vm3975, %v4014, %v4022
      %v4024 = vrot.slane %v2124, 1
      %v4025 = vsel %vm3975, %v4016, %v4024
      %v4026 = vrot.slane %v2125, 1
      %v4027 = vsel %vm3975, %v4018, %v4026
      %v4028 = vrot.slane %v2126, 1
      %v4029 = vsel %vm3975, %v4020, %v4028
      %v4030 = vrot.slane %v2127, 1
      %v4031 = vsel %vm3975, %v4022, %v4030
      %v4032 = vrot.slane %v2128, 1
      %v4033 = vsel %vm3975, %v4024, %v4032
      %v4034 = vrot.slane %v2129, 1
      %v4035 = vsel %vm3975, %v4026, %v4034
      %v4036 = vrot.slane %v2130, 1
      %v4037 = vsel %vm3975, %v4028, %v4036
      %v4038 = vrot.slane %v2131, 1
      %v4039 = vsel %vm3975, %v4030, %v4038
      %v4040 = vrot.slane %v2132, 1
      %v4041 = vsel %vm3975, %v4032, %v4040
      %v4042 = vrot.slane %v2133, 1
      %v4043 = vsel %vm3975, %v4034, %v4042
      %v4044 = vrot.slane %v2134, 1
      %v4045 = vsel %vm3975, %v4036, %v4044
      %v4046 = vrot.slane %v2135, 1
      %v4047 = vsel %vm3975, %v4038, %v4046
      %v4048 = vrot.slane %v2136, 1
      %v4049 = vsel %vm3975, %v4040, %v4048
      %v4050 = vrot.slane %v2137, 1
      %v4051 = vsel %vm3975, %v4042, %v4050
      %v4052 = vrot.slane %v2138, 1
      %v4053 = vsel %vm3975, %v4044, %v4052
      %v4054 = vrot.slane %v2139, 1
      %v4055 = vsel %vm3975, %v4046, %v4054
      %v4056 = vrot.slane %v2140, 1
      %v4057 = vsel %vm3975, %v4048, %v4056
      %v4058 = vrot.slane %v2141, 1
      %v4059 = vsel %vm3975, %v4050, %v4058
      %v4060 = vrot.slane %v2142, 1
      %v4061 = vsel %vm3975, %v4052, %v4060
      %v4062 = vrot.slane %v2143, 1
      %v4063 = vsel %vm3975, %v4054, %v4062
      %v4064 = vrot.slane %v2144, 1
      %v4065 = vsel %vm3975, %v4056, %v4064
      %v4066 = vrot.slane %v2145, 1
      %v4067 = vsel %vm3975, %v4058, %v4066
      %v4068 = vrot.slane %v2146, 1
      %v4069 = vsel %vm3975, %v4060, %v4068
      %v4070 = vrot.slane %v2147, 1
      %v4071 = vsel %vm3975, %v4062, %v4070
      %v4072 = vrot.slane %v2148, 1
      %v4073 = vsel %vm3975, %v4064, %v4072
      %v4074 = vrot.slane %v2149, 1
      %v4075 = vsel %vm3975, %v4066, %v4074
      %v4188 = vunpack.c.l.b16 %v3901
      %v4189 = vunpack.c.h.b16 %v3901
      %v4190 = vunpack.c.l.b16 %v3902
      %v4191 = vunpack.c.h.b16 %v3902
      %v4192 = vunpack.c.l.b16 %v3903
      %v4193 = vunpack.c.h.b16 %v3903
      %v4194 = vunpack.c.l.b16 %v3904
      %v4195 = vunpack.c.h.b16 %v3904
      %v4196 = vunpack.c.l.b16 %v3905
      %v4197 = vunpack.c.h.b16 %v3905
      %v4198 = vunpack.c.l.b16 %v3906
      %v4199 = vunpack.c.h.b16 %v3906
      %v4200 = vunpack.c.l.b16 %v3907
      %v4201 = vunpack.c.h.b16 %v3907
      %v4202 = vunpack.c.l.b16 %v3908
      %v4203 = vunpack.c.h.b16 %v3908
      %v4204 = vunpack.c.l.b16 %v3909
      %v4205 = vunpack.c.h.b16 %v3909
      %v4206 = vunpack.c.l.b16 %v3910
      %v4207 = vunpack.c.h.b16 %v3910
      %v4208 = vunpack.c.l.b16 %v3911
      %v4209 = vunpack.c.h.b16 %v3911
      %v4210 = vunpack.c.l.b16 %v3912
      %v4211 = vunpack.c.h.b16 %v3912
      %v4212 = vunpack.c.l.b16 %v3913
      %v4213 = vunpack.c.h.b16 %v3913
      %v4214 = vunpack.c.l.b16 %v3914
      %v4215 = vunpack.c.h.b16 %v3914
      %v4216 = vunpack.c.l.b16 %v3915
      %v4217 = vunpack.c.h.b16 %v3915
      %v4218 = vunpack.c.l.b16 %v3916
      %v4219 = vunpack.c.h.b16 %v3916
      %v4220 = vunpack.c.l.b16 %v3917
      %v4221 = vunpack.c.h.b16 %v3917
      %v4222 = vunpack.c.l.b16 %v3918
      %v4223 = vunpack.c.h.b16 %v3918
      %v4224 = vunpack.c.l.b16 %v3919
      %v4225 = vunpack.c.h.b16 %v3919
      %v4226 = vunpack.c.l.b16 %v3920
      %v4227 = vunpack.c.h.b16 %v3920
      %v4228 = vunpack.c.l.b16 %v3921
      %v4229 = vunpack.c.h.b16 %v3921
      %v4230 = vunpack.c.l.b16 %v3922
      %v4231 = vunpack.c.h.b16 %v3922
      %v4232 = vunpack.c.l.b16 %v3923
      %v4233 = vunpack.c.h.b16 %v3923
      %v4234 = vunpack.c.l.b16 %v3924
      %v4235 = vunpack.c.h.b16 %v3924
      %v4236 = vunpack.c.l.b16 %v3925
      %v4237 = vunpack.c.h.b16 %v3925
      %v4238 = vunpack.c.l.b16 %v3926
      %v4239 = vunpack.c.h.b16 %v3926
      %v4240 = vunpack.c.l.b16 %v3927
      %v4241 = vunpack.c.h.b16 %v3927
      %v4242 = vunpack.c.l.b16 %v3928
      %v4243 = vunpack.c.h.b16 %v3928
      %v4244 = vunpack.c.l.b16 %v3929
      %v4245 = vunpack.c.h.b16 %v3929
      %v4246 = vunpack.c.l.b16 %v3930
      %v4247 = vunpack.c.h.b16 %v3930
      %v4248 = vunpack.c.l.b16 %v3931
      %v4249 = vunpack.c.h.b16 %v3931
      %v4250 = vunpack.c.l.b16 %v3932
      %v4251 = vunpack.c.h.b16 %v3932
      %v4252 = vunpack.c.l.b16 %v3933
      %v4253 = vunpack.c.h.b16 %v3933
      %v4254 = vunpack.c.l.b16 %v3934
      %v4255 = vunpack.c.h.b16 %v3934
      %v4256 = vunpack.c.l.b16 %v3935
      %v4257 = vunpack.c.h.b16 %v3935
      %v4258 = vunpack.c.l.b16 %v3936
      %v4259 = vunpack.c.h.b16 %v3936
      %v4260 = vunpack.c.l.b16 %v3937
      %v4261 = vunpack.c.h.b16 %v3937
      %v4262 = vunpack.c.l.b16 %v3938
      %v4263 = vunpack.c.h.b16 %v3938
      %v4264 = vunpack.c.l.b16 %v3939
      %v4265 = vunpack.c.h.b16 %v3939
      %v4266 = vunpack.c.l.b16 %v3940
      %v4267 = vunpack.c.h.b16 %v3940
      %v4268 = vunpack.c.l.b16 %v3941
      %v4269 = vunpack.c.h.b16 %v3941
      %v4270 = vunpack.c.l.b16 %v3942
      %v4271 = vunpack.c.h.b16 %v3942
      %v4272 = vunpack.c.l.b16 %v3943
      %v4273 = vunpack.c.h.b16 %v3943
      %v4274 = vunpack.c.l.b16 %v3944
      %v4275 = vunpack.c.h.b16 %v3944
      %v4276 = vunpack.c.l.b16 %v3945
      %v4277 = vunpack.c.h.b16 %v3945
      %v4278 = vunpack.c.l.b16 %v3946
      %v4279 = vunpack.c.h.b16 %v3946
      %v4280 = vunpack.c.l.b16 %v3947
      %v4281 = vunpack.c.h.b16 %v3947
      %v4282 = vunpack.c.l.b16 %v3948
      %v4283 = vunpack.c.h.b16 %v3948
      %v4284 = vunpack.c.l.b16 %v3949
      %v4285 = vunpack.c.h.b16 %v3949
      %v4286 = vunpack.c.l.b16 %v3950
      %v4287 = vunpack.c.h.b16 %v3950
      %v4288 = vunpack.c.l.b16 %v3951
      %v4289 = vunpack.c.h.b16 %v3951
      %v4290 = vunpack.c.l.b16 %v3952
      %v4291 = vunpack.c.h.b16 %v3952
      %v4292 = vunpack.c.l.b16 %v3953
      %v4293 = vunpack.c.h.b16 %v3953
      %v4294 = vunpack.c.l.b16 %v3954
      %v4295 = vunpack.c.h.b16 %v3954
      %v4296 = vunpack.c.l.b16 %v3955
      %v4297 = vunpack.c.h.b16 %v3955
      %v4298 = vunpack.c.l.b16 %v3956
      %v4299 = vunpack.c.h.b16 %v3956
      %v4300 = vunpack.c.l.b16 %v3957
      %v4301 = vunpack.c.h.b16 %v3957
      %v4302 = vunpack.c.l.b16 %v3958
      %v4303 = vunpack.c.h.b16 %v3958
      %v4304 = vunpack.c.l.b16 %v3959
      %v4305 = vunpack.c.h.b16 %v3959
      %v4306 = vunpack.c.l.b16 %v3960
      %v4307 = vunpack.c.h.b16 %v3960
      %v4308 = vunpack.c.l.b16 %v3961
      %v4309 = vunpack.c.h.b16 %v3961
      %v4310 = vunpack.c.l.b16 %v3962
      %v4311 = vunpack.c.h.b16 %v3962
      %v4312 = vunpack.c.l.b16 %v3963
      %v4313 = vunpack.c.h.b16 %v3963
      %v4314 = vunpack.c.l.b16 %v3964
      %v4315 = vunpack.c.h.b16 %v3964
      %v4316 = vpack.c.b16 %v4190, %v4188
      %v4317 = vpack.c.b16 %v4191, %v4189
      %v4318 = vpack.c.b16 %v4194, %v4192
      %v4319 = vpack.c.b16 %v4195, %v4193
      %v4320 = vpack.c.b16 %v4198, %v4196
      %v4321 = vpack.c.b16 %v4199, %v4197
      %v4322 = vpack.c.b16 %v4202, %v4200
      %v4323 = vpack.c.b16 %v4203, %v4201
      %v4324 = vpack.c.b16 %v4206, %v4204
      %v4325 = vpack.c.b16 %v4207, %v4205
      %v4326 = vpack.c.b16 %v4210, %v4208
      %v4327 = vpack.c.b16 %v4211, %v4209
      %v4328 = vpack.c.b16 %v4214, %v4212
      %v4329 = vpack.c.b16 %v4215, %v4213
      %v4330 = vpack.c.b16 %v4218, %v4216
      %v4331 = vpack.c.b16 %v4219, %v4217
      %v4332 = vpack.c.b16 %v4222, %v4220
      %v4333 = vpack.c.b16 %v4223, %v4221
      %v4334 = vpack.c.b16 %v4226, %v4224
      %v4335 = vpack.c.b16 %v4227, %v4225
      %v4336 = vpack.c.b16 %v4230, %v4228
      %v4337 = vpack.c.b16 %v4231, %v4229
      %v4338 = vpack.c.b16 %v4234, %v4232
      %v4339 = vpack.c.b16 %v4235, %v4233
      %v4340 = vpack.c.b16 %v4238, %v4236
      %v4341 = vpack.c.b16 %v4239, %v4237
      %v4342 = vpack.c.b16 %v4242, %v4240
      %v4343 = vpack.c.b16 %v4243, %v4241
      %v4344 = vpack.c.b16 %v4246, %v4244
      %v4345 = vpack.c.b16 %v4247, %v4245
      %v4346 = vpack.c.b16 %v4250, %v4248
      %v4347 = vpack.c.b16 %v4251, %v4249
      %v4348 = vpack.c.b16 %v4254, %v4252
      %v4349 = vpack.c.b16 %v4255, %v4253
      %v4350 = vpack.c.b16 %v4258, %v4256
      %v4351 = vpack.c.b16 %v4259, %v4257
      %v4352 = vpack.c.b16 %v4262, %v4260
      %v4353 = vpack.c.b16 %v4263, %v4261
      %v4354 = vpack.c.b16 %v4266, %v4264
      %v4355 = vpack.c.b16 %v4267, %v4265
      %v4356 = vpack.c.b16 %v4270, %v4268
      %v4357 = vpack.c.b16 %v4271, %v4269
      %v4358 = vpack.c.b16 %v4274, %v4272
      %v4359 = vpack.c.b16 %v4275, %v4273
      %v4360 = vpack.c.b16 %v4278, %v4276
      %v4361 = vpack.c.b16 %v4279, %v4277
      %v4362 = vpack.c.b16 %v4282, %v4280
      %v4363 = vpack.c.b16 %v4283, %v4281
      %v4364 = vpack.c.b16 %v4286, %v4284
      %v4365 = vpack.c.b16 %v4287, %v4285
      %v4366 = vpack.c.b16 %v4290, %v4288
      %v4367 = vpack.c.b16 %v4291, %v4289
      %v4368 = vpack.c.b16 %v4294, %v4292
      %v4369 = vpack.c.b16 %v4295, %v4293
      %v4370 = vpack.c.b16 %v4298, %v4296
      %v4371 = vpack.c.b16 %v4299, %v4297
      %v4372 = vpack.c.b16 %v4302, %v4300
      %v4373 = vpack.c.b16 %v4303, %v4301
      %v4374 = vpack.c.b16 %v4306, %v4304
      %v4375 = vpack.c.b16 %v4307, %v4305
      %v4376 = vpack.c.b16 %v4310, %v4308
      %v4377 = vpack.c.b16 %v4311, %v4309
      %v4378 = vpack.c.b16 %v4314, %v4312
      %v4379 = vpack.c.b16 %v4315, %v4313
      %4444 = vmatprep.subr.bf16.mxu0 %v4331
      %4445 = vmatpush1.bf16.msra.mxu0 %v4330
      %4446 = vmatprep.subr.bf16.mxu0 %v4329
      %4447 = vmatpush1.bf16.msra.mxu0 %v4328
      %4448 = vmatprep.subr.bf16.mxu0 %v4327
      %4449 = vmatpush1.bf16.msra.mxu0 %v4326
      %4450 = vmatprep.subr.bf16.mxu0 %v4325
      %4451 = vmatpush1.bf16.msra.mxu0 %v4324
      %4452 = vmatprep.subr.bf16.mxu0 %v4323
      %4453 = vmatpush1.bf16.msra.mxu0 %v4322
      %4454 = vmatprep.subr.bf16.mxu0 %v4321
      %4455 = vmatpush1.bf16.msra.mxu0 %v4320
      %4456 = vmatprep.subr.bf16.mxu0 %v4319
      %4457 = vmatpush1.bf16.msra.mxu0 %v4318
      %4458 = vmatprep.subr.bf16.mxu0 %v4317
      %4459 = vmatpush1.bf16.msra.mxu0 %v4316
      %4460 = vmatprep.subr.bf16.mxu0 %v4347
      %4461 = vmatpush2.bf16.msra.mxu0 %v4346
      %4462 = vmatprep.subr.bf16.mxu0 %v4345
      %4463 = vmatpush2.bf16.msra.mxu0 %v4344
      %4464 = vmatprep.subr.bf16.mxu0 %v4343
      %4465 = vmatpush2.bf16.msra.mxu0 %v4342
      %4466 = vmatprep.subr.bf16.mxu0 %v4341
      %4467 = vmatpush2.bf16.msra.mxu0 %v4340
      %4468 = vmatprep.subr.bf16.mxu0 %v4339
      %4469 = vmatpush2.bf16.msra.mxu0 %v4338
      %4470 = vmatprep.subr.bf16.mxu0 %v4337
      %4471 = vmatpush2.bf16.msra.mxu0 %v4336
      %4472 = vmatprep.subr.bf16.mxu0 %v4335
      %4473 = vmatpush2.bf16.msra.mxu0 %v4334
      %4474 = vmatprep.subr.bf16.mxu0 %v4333
      %4475 = vmatpush2.bf16.msra.mxu0 %v4332
      %4476 = vmatprep.mubr.bf16.mxu0 %v3981
      %4477 = vmatmul.mubr.bf16.gmra.mxu0 %v3978
      %v4478 = vpop.f32.mrf.mxu0
      %v4479 = vadd.f32 0.0, %v4478
      %v4480 = vpop.f32.mrf.mxu0
      %v4481 = vadd.f32 0.0, %v4480
      %v4482 = vpop.f32.mrf.mxu0
      %v4483 = vadd.f32 0.0, %v4482
      %v4484 = vpop.f32.mrf.mxu0
      %v4485 = vadd.f32 0.0, %v4484
      %4486 = vmatprep.mubr.bf16.mxu0 %v3991
      %4487 = vmatmul.mubr.bf16.gmra.mxu0 %v3989
      %v4488 = vpop.f32.mrf.mxu0
      %v4489 = vadd.f32 0.0, %v4488
      %v4490 = vpop.f32.mrf.mxu0
      %v4491 = vadd.f32 0.0, %v4490
      %v4492 = vpop.f32.mrf.mxu0
      %v4493 = vadd.f32 0.0, %v4492
      %v4494 = vpop.f32.mrf.mxu0
      %v4495 = vadd.f32 0.0, %v4494
      %4496 = vmatprep.mubr.bf16.mxu0 %v3999
      %4497 = vmatmul.mubr.bf16.gmra.mxu0 %v3997
      %v4498 = vpop.f32.mrf.mxu0
      %v4499 = vadd.f32 0.0, %v4498
      %v4500 = vpop.f32.mrf.mxu0
      %v4501 = vadd.f32 0.0, %v4500
      %v4502 = vpop.f32.mrf.mxu0
      %v4503 = vadd.f32 0.0, %v4502
      %v4504 = vpop.f32.mrf.mxu0
      %v4505 = vadd.f32 0.0, %v4504
      %4506 = vmatprep.mubr.bf16.mxu0 %v4007
      %4507 = vmatmul.mubr.bf16.gmra.mxu0 %v4005
      %v4508 = vpop.f32.mrf.mxu0
      %v4509 = vadd.f32 0.0, %v4508
      %v4510 = vpop.f32.mrf.mxu0
      %v4511 = vadd.f32 0.0, %v4510
      %v4512 = vpop.f32.mrf.mxu0
      %v4513 = vadd.f32 0.0, %v4512
      %v4514 = vpop.f32.mrf.mxu0
      %v4515 = vadd.f32 0.0, %v4514
      %4516 = vmatprep.mubr.bf16.mxu0 %v4015
      %4517 = vmatmul.mubr.bf16.gmra.mxu0 %v4013
      %v4518 = vpop.f32.mrf.mxu0
      %v4519 = vadd.f32 0.0, %v4518
      %v4520 = vpop.f32.mrf.mxu0
      %v4521 = vadd.f32 0.0, %v4520
      %v4522 = vpop.f32.mrf.mxu0
      %v4523 = vadd.f32 0.0, %v4522
      %v4524 = vpop.f32.mrf.mxu0
      %v4525 = vadd.f32 0.0, %v4524
      %4526 = vmatprep.mubr.bf16.mxu0 %v4023
      %4527 = vmatmul.mubr.bf16.gmra.mxu0 %v4021
      %v4528 = vpop.f32.mrf.mxu0
      %v4529 = vadd.f32 0.0, %v4528
      %v4530 = vpop.f32.mrf.mxu0
      %v4531 = vadd.f32 0.0, %v4530
      %v4532 = vpop.f32.mrf.mxu0
      %v4533 = vadd.f32 0.0, %v4532
      %v4534 = vpop.f32.mrf.mxu0
      %v4535 = vadd.f32 0.0, %v4534
      %4536 = vmatprep.mubr.bf16.mxu0 %v4031
      %4537 = vmatmul.mubr.bf16.gmra.mxu0 %v4029
      %v4538 = vpop.f32.mrf.mxu0
      %v4539 = vadd.f32 0.0, %v4538
      %v4540 = vpop.f32.mrf.mxu0
      %v4541 = vadd.f32 0.0, %v4540
      %v4542 = vpop.f32.mrf.mxu0
      %v4543 = vadd.f32 0.0, %v4542
      %v4544 = vpop.f32.mrf.mxu0
      %v4545 = vadd.f32 0.0, %v4544
      %4546 = vmatprep.mubr.bf16.mxu0 %v4039
      %4547 = vmatmul.mubr.bf16.gmra.mxu0 %v4037
      %v4548 = vpop.f32.mrf.mxu0
      %v4549 = vadd.f32 0.0, %v4548
      %v4550 = vpop.f32.mrf.mxu0
      %v4551 = vadd.f32 0.0, %v4550
      %v4552 = vpop.f32.mrf.mxu0
      %v4553 = vadd.f32 0.0, %v4552
      %v4554 = vpop.f32.mrf.mxu0
      %v4555 = vadd.f32 0.0, %v4554
      %4556 = vmatprep.mubr.bf16.mxu0 %v4047
      %4557 = vmatmul.mubr.bf16.gmra.mxu0 %v4045
      %v4558 = vpop.f32.mrf.mxu0
      %v4559 = vadd.f32 0.0, %v4558
      %v4560 = vpop.f32.mrf.mxu0
      %v4561 = vadd.f32 0.0, %v4560
      %v4562 = vpop.f32.mrf.mxu0
      %v4563 = vadd.f32 0.0, %v4562
      %v4564 = vpop.f32.mrf.mxu0
      %v4565 = vadd.f32 0.0, %v4564
      %4566 = vmatprep.mubr.bf16.mxu0 %v4055
      %4567 = vmatmul.mubr.bf16.gmra.mxu0 %v4053
      %v4568 = vpop.f32.mrf.mxu0
      %v4569 = vadd.f32 0.0, %v4568
      %v4570 = vpop.f32.mrf.mxu0
      %v4571 = vadd.f32 0.0, %v4570
      %v4572 = vpop.f32.mrf.mxu0
      %v4573 = vadd.f32 0.0, %v4572
      %v4574 = vpop.f32.mrf.mxu0
      %v4575 = vadd.f32 0.0, %v4574
      %4576 = vmatprep.mubr.bf16.mxu0 %v4063
      %4577 = vmatmul.mubr.bf16.gmra.mxu0 %v4061
      %v4578 = vpop.f32.mrf.mxu0
      %v4579 = vadd.f32 0.0, %v4578
      %v4580 = vpop.f32.mrf.mxu0
      %v4581 = vadd.f32 0.0, %v4580
      %v4582 = vpop.f32.mrf.mxu0
      %v4583 = vadd.f32 0.0, %v4582
      %v4584 = vpop.f32.mrf.mxu0
      %v4585 = vadd.f32 0.0, %v4584
      %4586 = vmatprep.mubr.bf16.mxu0 %v4071
      %4587 = vmatmul.mubr.bf16.gmra.mxu0 %v4069
      %v4588 = vpop.f32.mrf.mxu0
      %v4589 = vadd.f32 0.0, %v4588
      %v4590 = vpop.f32.mrf.mxu0
      %v4591 = vadd.f32 0.0, %v4590
      %v4592 = vpop.f32.mrf.mxu0
      %v4593 = vadd.f32 0.0, %v4592
      %v4594 = vpop.f32.mrf.mxu0
      %v4595 = vadd.f32 0.0, %v4594
      %4596 = vdwg.mxu0
      %4597 = vmatprep.subr.bf16.mxu0 %v4363
      %4598 = vmatpush1.bf16.msra.mxu0 %v4362
      %4599 = vmatprep.subr.bf16.mxu0 %v4361
      %4600 = vmatpush1.bf16.msra.mxu0 %v4360
      %4601 = vmatprep.subr.bf16.mxu0 %v4359
      %4602 = vmatpush1.bf16.msra.mxu0 %v4358
      %4603 = vmatprep.subr.bf16.mxu0 %v4357
      %4604 = vmatpush1.bf16.msra.mxu0 %v4356
      %4605 = vmatprep.subr.bf16.mxu0 %v4355
      %4606 = vmatpush1.bf16.msra.mxu0 %v4354
      %4607 = vmatprep.subr.bf16.mxu0 %v4353
      %4608 = vmatpush1.bf16.msra.mxu0 %v4352
      %4609 = vmatprep.subr.bf16.mxu0 %v4351
      %4610 = vmatpush1.bf16.msra.mxu0 %v4350
      %4611 = vmatprep.subr.bf16.mxu0 %v4349
      %4612 = vmatpush1.bf16.msra.mxu0 %v4348
      %4613 = vmatprep.subr.bf16.mxu0 %v4379
      %4614 = vmatpush2.bf16.msra.mxu0 %v4378
      %4615 = vmatprep.subr.bf16.mxu0 %v4377
      %4616 = vmatpush2.bf16.msra.mxu0 %v4376
      %4617 = vmatprep.subr.bf16.mxu0 %v4375
      %4618 = vmatpush2.bf16.msra.mxu0 %v4374
      %4619 = vmatprep.subr.bf16.mxu0 %v4373
      %4620 = vmatpush2.bf16.msra.mxu0 %v4372
      %4621 = vmatprep.subr.bf16.mxu0 %v4371
      %4622 = vmatpush2.bf16.msra.mxu0 %v4370
      %4623 = vmatprep.subr.bf16.mxu0 %v4369
      %4624 = vmatpush2.bf16.msra.mxu0 %v4368
      %4625 = vmatprep.subr.bf16.mxu0 %v4367
      %4626 = vmatpush2.bf16.msra.mxu0 %v4366
      %4627 = vmatprep.subr.bf16.mxu0 %v4365
      %4628 = vmatpush2.bf16.msra.mxu0 %v4364
      %4629 = vmatprep.mubr.bf16.mxu0 %v3987
      %4630 = vmatmul.mubr.bf16.gmra.mxu0 %v3984
      %v4631 = vpop.f32.mrf.mxu0
      %v4632 = vadd.f32 %v4479, %v4631
      %v4633 = vpop.f32.mrf.mxu0
      %v4634 = vadd.f32 %v4481, %v4633
      %v4635 = vpop.f32.mrf.mxu0
      %v4636 = vadd.f32 %v4483, %v4635
      %v4637 = vpop.f32.mrf.mxu0
      %v4638 = vadd.f32 %v4485, %v4637
      %4639 = vmatprep.mubr.bf16.mxu0 %v3995
      %4640 = vmatmul.mubr.bf16.gmra.mxu0 %v3993
      %v4641 = vpop.f32.mrf.mxu0
      %v4642 = vadd.f32 %v4489, %v4641
      %v4643 = vpop.f32.mrf.mxu0
      %v4644 = vadd.f32 %v4491, %v4643
      %v4645 = vpop.f32.mrf.mxu0
      %v4646 = vadd.f32 %v4493, %v4645
      %v4647 = vpop.f32.mrf.mxu0
      %v4648 = vadd.f32 %v4495, %v4647
      %4649 = vmatprep.mubr.bf16.mxu0 %v4003
      %4650 = vmatmul.mubr.bf16.gmra.mxu0 %v4001
      %v4651 = vpop.f32.mrf.mxu0
      %v4652 = vadd.f32 %v4499, %v4651
      %v4653 = vpop.f32.mrf.mxu0
      %v4654 = vadd.f32 %v4501, %v4653
      %v4655 = vpop.f32.mrf.mxu0
      %v4656 = vadd.f32 %v4503, %v4655
      %v4657 = vpop.f32.mrf.mxu0
      %v4658 = vadd.f32 %v4505, %v4657
      %4659 = vmatprep.mubr.bf16.mxu0 %v4011
      %4660 = vmatmul.mubr.bf16.gmra.mxu0 %v4009
      %v4661 = vpop.f32.mrf.mxu0
      %v4662 = vadd.f32 %v4509, %v4661
      %v4663 = vpop.f32.mrf.mxu0
      %v4664 = vadd.f32 %v4511, %v4663
      %v4665 = vpop.f32.mrf.mxu0
      %v4666 = vadd.f32 %v4513, %v4665
      %v4667 = vpop.f32.mrf.mxu0
      %v4668 = vadd.f32 %v4515, %v4667
      %4669 = vmatprep.mubr.bf16.mxu0 %v4019
      %4670 = vmatmul.mubr.bf16.gmra.mxu0 %v4017
      %v4671 = vpop.f32.mrf.mxu0
      %v4672 = vadd.f32 %v4519, %v4671
      %v4673 = vpop.f32.mrf.mxu0
      %v4674 = vadd.f32 %v4521, %v4673
      %v4675 = vpop.f32.mrf.mxu0
      %v4676 = vadd.f32 %v4523, %v4675
      %v4677 = vpop.f32.mrf.mxu0
      %v4678 = vadd.f32 %v4525, %v4677
      %4679 = vmatprep.mubr.bf16.mxu0 %v4027
      %4680 = vmatmul.mubr.bf16.gmra.mxu0 %v4025
      %v4681 = vpop.f32.mrf.mxu0
      %v4682 = vadd.f32 %v4529, %v4681
      %v4683 = vpop.f32.mrf.mxu0
      %v4684 = vadd.f32 %v4531, %v4683
      %v4685 = vpop.f32.mrf.mxu0
      %v4686 = vadd.f32 %v4533, %v4685
      %v4687 = vpop.f32.mrf.mxu0
      %v4688 = vadd.f32 %v4535, %v4687
      %4689 = vmatprep.mubr.bf16.mxu0 %v4035
      %4690 = vmatmul.mubr.bf16.gmra.mxu0 %v4033
      %v4691 = vpop.f32.mrf.mxu0
      %v4692 = vadd.f32 %v4539, %v4691
      %v4693 = vpop.f32.mrf.mxu0
      %v4694 = vadd.f32 %v4541, %v4693
      %v4695 = vpop.f32.mrf.mxu0
      %v4696 = vadd.f32 %v4543, %v4695
      %v4697 = vpop.f32.mrf.mxu0
      %v4698 = vadd.f32 %v4545, %v4697
      %4699 = vmatprep.mubr.bf16.mxu0 %v4043
      %4700 = vmatmul.mubr.bf16.gmra.mxu0 %v4041
      %v4701 = vpop.f32.mrf.mxu0
      %v4702 = vadd.f32 %v4549, %v4701
      %v4703 = vpop.f32.mrf.mxu0
      %v4704 = vadd.f32 %v4551, %v4703
      %v4705 = vpop.f32.mrf.mxu0
      %v4706 = vadd.f32 %v4553, %v4705
      %v4707 = vpop.f32.mrf.mxu0
      %v4708 = vadd.f32 %v4555, %v4707
      %4709 = vmatprep.mubr.bf16.mxu0 %v4051
      %4710 = vmatmul.mubr.bf16.gmra.mxu0 %v4049
      %v4711 = vpop.f32.mrf.mxu0
      %v4712 = vadd.f32 %v4559, %v4711
      %v4713 = vpop.f32.mrf.mxu0
      %v4714 = vadd.f32 %v4561, %v4713
      %v4715 = vpop.f32.mrf.mxu0
      %v4716 = vadd.f32 %v4563, %v4715
      %v4717 = vpop.f32.mrf.mxu0
      %v4718 = vadd.f32 %v4565, %v4717
      %4719 = vmatprep.mubr.bf16.mxu0 %v4059
      %4720 = vmatmul.mubr.bf16.gmra.mxu0 %v4057
      %v4721 = vpop.f32.mrf.mxu0
      %v4722 = vadd.f32 %v4569, %v4721
      %v4723 = vpop.f32.mrf.mxu0
      %v4724 = vadd.f32 %v4571, %v4723
      %v4725 = vpop.f32.mrf.mxu0
      %v4726 = vadd.f32 %v4573, %v4725
      %v4727 = vpop.f32.mrf.mxu0
      %v4728 = vadd.f32 %v4575, %v4727
      %4729 = vmatprep.mubr.bf16.mxu0 %v4067
      %4730 = vmatmul.mubr.bf16.gmra.mxu0 %v4065
      %v4731 = vpop.f32.mrf.mxu0
      %v4732 = vadd.f32 %v4579, %v4731
      %v4733 = vpop.f32.mrf.mxu0
      %v4734 = vadd.f32 %v4581, %v4733
      %v4735 = vpop.f32.mrf.mxu0
      %v4736 = vadd.f32 %v4583, %v4735
      %v4737 = vpop.f32.mrf.mxu0
      %v4738 = vadd.f32 %v4585, %v4737
      %4739 = vmatprep.mubr.bf16.mxu0 %v4075
      %4740 = vmatmul.mubr.bf16.gmra.mxu0 %v4073
      %v4741 = vpop.f32.mrf.mxu0
      %v4742 = vadd.f32 %v4589, %v4741
      %v4743 = vpop.f32.mrf.mxu0
      %v4744 = vadd.f32 %v4591, %v4743
      %v4745 = vpop.f32.mrf.mxu0
      %v4746 = vadd.f32 %v4593, %v4745
      %v4747 = vpop.f32.mrf.mxu0
      %v4748 = vadd.f32 %v4595, %v4747
      %4749 = vdwg.mxu0
      %v4750 = vadd.f32 %v3781, %v4632
      %v4751 = vadd.f32 %v3783, %v4634
      %v4752 = vadd.f32 %v3785, %v4636
      %v4753 = vadd.f32 %v3787, %v4638
      %v4754 = vadd.f32 %v3791, %v4642
      %v4755 = vadd.f32 %v3793, %v4644
      %v4756 = vadd.f32 %v3795, %v4646
      %v4757 = vadd.f32 %v3797, %v4648
      %v4758 = vadd.f32 %v3801, %v4652
      %v4759 = vadd.f32 %v3803, %v4654
      %v4760 = vadd.f32 %v3805, %v4656
      %v4761 = vadd.f32 %v3807, %v4658
      %v4762 = vadd.f32 %v3811, %v4662
      %v4763 = vadd.f32 %v3813, %v4664
      %v4764 = vadd.f32 %v3815, %v4666
      %v4765 = vadd.f32 %v3817, %v4668
      %v4766 = vadd.f32 %v3821, %v4672
      %v4767 = vadd.f32 %v3823, %v4674
      %v4768 = vadd.f32 %v3825, %v4676
      %v4769 = vadd.f32 %v3827, %v4678
      %v4770 = vadd.f32 %v3831, %v4682
      %v4771 = vadd.f32 %v3833, %v4684
      %v4772 = vadd.f32 %v3835, %v4686
      %v4773 = vadd.f32 %v3837, %v4688
      %v4774 = vadd.f32 %v3841, %v4692
      %v4775 = vadd.f32 %v3843, %v4694
      %v4776 = vadd.f32 %v3845, %v4696
      %v4777 = vadd.f32 %v3847, %v4698
      %v4778 = vadd.f32 %v3851, %v4702
      %v4779 = vadd.f32 %v3853, %v4704
      %v4780 = vadd.f32 %v3855, %v4706
      %v4781 = vadd.f32 %v3857, %v4708
      %v4782 = vadd.f32 %v3861, %v4712
      %v4783 = vadd.f32 %v3863, %v4714
      %v4784 = vadd.f32 %v3865, %v4716
      %v4785 = vadd.f32 %v3867, %v4718
      %v4786 = vadd.f32 %v3871, %v4722
      %v4787 = vadd.f32 %v3873, %v4724
      %v4788 = vadd.f32 %v3875, %v4726
      %v4789 = vadd.f32 %v3877, %v4728
      %v4790 = vadd.f32 %v3881, %v4732
      %v4791 = vadd.f32 %v3883, %v4734
      %v4792 = vadd.f32 %v3885, %v4736
      %v4793 = vadd.f32 %v3887, %v4738
      %v4794 = vadd.f32 %v3891, %v4742
      %v4795 = vadd.f32 %v3893, %v4744
      %v4796 = vadd.f32 %v3895, %v4746
      %v4797 = vadd.f32 %v3897, %v4748
      %v4798 = vld [vmem:[#allocation2 + $0x180] sm:$0x33]
      %v4799 = vld [vmem:[#allocation2 + $0x188] sm:$0x33]
      %v4800 = vld [vmem:[%s3 + $0x600] sm:$0xff]
      %v4801 = vld [vmem:[%s3 + $0x608] sm:$0xff]
      %v4802 = vld [vmem:[%s3 + $0x610] sm:$0xff]
      %v4803 = vld [vmem:[%s3 + $0x618] sm:$0xff]
      %v4804 = vld [vmem:[%s3 + $0x620] sm:$0xff]
      %v4805 = vld [vmem:[%s3 + $0x628] sm:$0xff]
      %v4806 = vld [vmem:[%s3 + $0x630] sm:$0xff]
      %v4807 = vld [vmem:[%s3 + $0x638] sm:$0xff]
      %v4808 = vld [vmem:[%s3 + $0x640] sm:$0xff]
      %v4809 = vld [vmem:[%s3 + $0x648] sm:$0xff]
      %v4810 = vld [vmem:[%s3 + $0x650] sm:$0xff]
      %v4811 = vld [vmem:[%s3 + $0x658] sm:$0xff]
      %v4812 = vld [vmem:[%s3 + $0x660] sm:$0xff]
      %v4813 = vld [vmem:[%s3 + $0x668] sm:$0xff]
      %v4814 = vld [vmem:[%s3 + $0x670] sm:$0xff]
      %v4815 = vld [vmem:[%s3 + $0x678] sm:$0xff]
      %v4816 = vld [vmem:[%s3 + $0x680] sm:$0xff]
      %v4817 = vld [vmem:[%s3 + $0x688] sm:$0xff]
      %v4818 = vld [vmem:[%s3 + $0x690] sm:$0xff]
      %v4819 = vld [vmem:[%s3 + $0x698] sm:$0xff]
      %v4820 = vld [vmem:[%s3 + $0x6a0] sm:$0xff]
      %v4821 = vld [vmem:[%s3 + $0x6a8] sm:$0xff]
      %v4822 = vld [vmem:[%s3 + $0x6b0] sm:$0xff]
      %v4823 = vld [vmem:[%s3 + $0x6b8] sm:$0xff]
      %v4824 = vld [vmem:[%s3 + $0x6c0] sm:$0xff]
      %v4825 = vld [vmem:[%s3 + $0x6c8] sm:$0xff]
      %v4826 = vld [vmem:[%s3 + $0x6d0] sm:$0xff]
      %v4827 = vld [vmem:[%s3 + $0x6d8] sm:$0xff]
      %v4828 = vld [vmem:[%s3 + $0x6e0] sm:$0xff]
      %v4829 = vld [vmem:[%s3 + $0x6e8] sm:$0xff]
      %v4830 = vld [vmem:[%s3 + $0x6f0] sm:$0xff]
      %v4831 = vld [vmem:[%s3 + $0x6f8] sm:$0xff]
      %v4832 = vld [vmem:[%s3 + $0x700] sm:$0xff]
      %v4833 = vld [vmem:[%s3 + $0x708] sm:$0xff]
      %v4834 = vld [vmem:[%s3 + $0x710] sm:$0xff]
      %v4835 = vld [vmem:[%s3 + $0x718] sm:$0xff]
      %v4836 = vld [vmem:[%s3 + $0x720] sm:$0xff]
      %v4837 = vld [vmem:[%s3 + $0x728] sm:$0xff]
      %v4838 = vld [vmem:[%s3 + $0x730] sm:$0xff]
      %v4839 = vld [vmem:[%s3 + $0x738] sm:$0xff]
      %v4840 = vld [vmem:[%s3 + $0x740] sm:$0xff]
      %v4841 = vld [vmem:[%s3 + $0x748] sm:$0xff]
      %v4842 = vld [vmem:[%s3 + $0x750] sm:$0xff]
      %v4843 = vld [vmem:[%s3 + $0x758] sm:$0xff]
      %v4844 = vld [vmem:[%s3 + $0x760] sm:$0xff]
      %v4845 = vld [vmem:[%s3 + $0x768] sm:$0xff]
      %v4846 = vld [vmem:[%s3 + $0x770] sm:$0xff]
      %v4847 = vld [vmem:[%s3 + $0x778] sm:$0xff]
      %v4848 = vld [vmem:[%s3 + $0x780] sm:$0xff]
      %v4849 = vld [vmem:[%s3 + $0x788] sm:$0xff]
      %v4850 = vld [vmem:[%s3 + $0x790] sm:$0xff]
      %v4851 = vld [vmem:[%s3 + $0x798] sm:$0xff]
      %v4852 = vld [vmem:[%s3 + $0x7a0] sm:$0xff]
      %v4853 = vld [vmem:[%s3 + $0x7a8] sm:$0xff]
      %v4854 = vld [vmem:[%s3 + $0x7b0] sm:$0xff]
      %v4855 = vld [vmem:[%s3 + $0x7b8] sm:$0xff]
      %v4856 = vld [vmem:[%s3 + $0x7c0] sm:$0xff]
      %v4857 = vld [vmem:[%s3 + $0x7c8] sm:$0xff]
      %v4858 = vld [vmem:[%s3 + $0x7d0] sm:$0xff]
      %v4859 = vld [vmem:[%s3 + $0x7d8] sm:$0xff]
      %v4860 = vld [vmem:[%s3 + $0x7e0] sm:$0xff]
      %v4861 = vld [vmem:[%s3 + $0x7e8] sm:$0xff]
      %v4862 = vld [vmem:[%s3 + $0x7f0] sm:$0xff]
      %v4863 = vld [vmem:[%s3 + $0x7f8] sm:$0xff]
      %v4866 = vunpack.c.l.b16 %v4798
      %v4867 = vunpack.c.h.b16 %v4798
      %v4868 = vunpack.c.l.b16 %v4799
      %v4869 = vunpack.c.h.b16 %v4799
      %v4870 = vpack.c.b16 %v4866, %v4866
      %v4871 = vpack.c.b16 %v4867, %v4867
      %v4872 = vpack.c.b16 %v4868, %v4868
      %v4873 = vpack.c.b16 %v4869, %v4869
      %vm4874 = vsmask.f32 6400
      %v4876 = vshrl.u32 %v3971, 16
      %v4878 = vrot.slane %v4876, 1
      %v4879 = vshll.u32 %v3971, 16
      %v4881 = vrot.slane %v4879, 2
      %v4882 = vor.u32 %v4878, %v4881
      %v4883 = vrot.slane %v2199, 1
      %v4884 = vrot.slane %v2159, 2
      %v4885 = vor.u32 %v4883, %v4884
      %v4886 = vsel %vm4874, %v4882, %v4885
      %v4888 = vshrl.u32 %v3972, 16
      %v4890 = vrot.slane %v4888, 1
      %v4891 = vshll.u32 %v3972, 16
      %v4893 = vrot.slane %v4891, 2
      %v4894 = vor.u32 %v4890, %v4893
      %v4895 = vrot.slane %v2207, 1
      %v4896 = vrot.slane %v2171, 2
      %v4897 = vor.u32 %v4895, %v4896
      %v4898 = vsel %vm4874, %v4894, %v4897
      %v4900 = vshrl.u32 %v3973, 16
      %v4902 = vrot.slane %v4900, 1
      %v4903 = vshll.u32 %v3973, 16
      %v4905 = vrot.slane %v4903, 2
      %v4906 = vor.u32 %v4902, %v4905
      %v4907 = vrot.slane %v2215, 1
      %v4908 = vrot.slane %v2183, 2
      %v4909 = vor.u32 %v4907, %v4908
      %v4910 = vsel %vm4874, %v4906, %v4909
      %v4912 = vshrl.u32 %v3974, 16
      %v4914 = vrot.slane %v4912, 1
      %v4915 = vshll.u32 %v3974, 16
      %v4917 = vrot.slane %v4915, 2
      %v4918 = vor.u32 %v4914, %v4917
      %v4919 = vrot.slane %v2223, 1
      %v4920 = vrot.slane %v2195, 2
      %v4921 = vor.u32 %v4919, %v4920
      %v4922 = vsel %vm4874, %v4918, %v4921
      %v4923 = vrot.slane %v2231, 1
      %v4924 = vrot.slane %v2203, 2
      %v4925 = vor.u32 %v4923, %v4924
      %v4926 = vsel %vm4874, %v4885, %v4925
      %v4927 = vrot.slane %v2239, 1
      %v4928 = vrot.slane %v2211, 2
      %v4929 = vor.u32 %v4927, %v4928
      %v4930 = vsel %vm4874, %v4897, %v4929
      %v4931 = vrot.slane %v2247, 1
      %v4932 = vrot.slane %v2219, 2
      %v4933 = vor.u32 %v4931, %v4932
      %v4934 = vsel %vm4874, %v4909, %v4933
      %v4935 = vrot.slane %v2255, 1
      %v4936 = vrot.slane %v2227, 2
      %v4937 = vor.u32 %v4935, %v4936
      %v4938 = vsel %vm4874, %v4921, %v4937
      %v4939 = vrot.slane %v2263, 1
      %v4940 = vrot.slane %v2235, 2
      %v4941 = vor.u32 %v4939, %v4940
      %v4942 = vsel %vm4874, %v4925, %v4941
      %v4943 = vrot.slane %v2271, 1
      %v4944 = vrot.slane %v2243, 2
      %v4945 = vor.u32 %v4943, %v4944
      %v4946 = vsel %vm4874, %v4929, %v4945
      %v4947 = vrot.slane %v2279, 1
      %v4948 = vrot.slane %v2251, 2
      %v4949 = vor.u32 %v4947, %v4948
      %v4950 = vsel %vm4874, %v4933, %v4949
      %v4951 = vrot.slane %v2287, 1
      %v4952 = vrot.slane %v2259, 2
      %v4953 = vor.u32 %v4951, %v4952
      %v4954 = vsel %vm4874, %v4937, %v4953
      %v4955 = vrot.slane %v2295, 1
      %v4956 = vrot.slane %v2267, 2
      %v4957 = vor.u32 %v4955, %v4956
      %v4958 = vsel %vm4874, %v4941, %v4957
      %v4959 = vrot.slane %v2303, 1
      %v4960 = vrot.slane %v2275, 2
      %v4961 = vor.u32 %v4959, %v4960
      %v4962 = vsel %vm4874, %v4945, %v4961
      %v4963 = vrot.slane %v2311, 1
      %v4964 = vrot.slane %v2283, 2
      %v4965 = vor.u32 %v4963, %v4964
      %v4966 = vsel %vm4874, %v4949, %v4965
      %v4967 = vrot.slane %v2319, 1
      %v4968 = vrot.slane %v2291, 2
      %v4969 = vor.u32 %v4967, %v4968
      %v4970 = vsel %vm4874, %v4953, %v4969
      %v4971 = vrot.slane %v2327, 1
      %v4972 = vrot.slane %v2299, 2
      %v4973 = vor.u32 %v4971, %v4972
      %v4974 = vsel %vm4874, %v4957, %v4973
      %v4975 = vrot.slane %v2335, 1
      %v4976 = vrot.slane %v2307, 2
      %v4977 = vor.u32 %v4975, %v4976
      %v4978 = vsel %vm4874, %v4961, %v4977
      %v4979 = vrot.slane %v2343, 1
      %v4980 = vrot.slane %v2315, 2
      %v4981 = vor.u32 %v4979, %v4980
      %v4982 = vsel %vm4874, %v4965, %v4981
      %v4983 = vrot.slane %v2351, 1
      %v4984 = vrot.slane %v2323, 2
      %v4985 = vor.u32 %v4983, %v4984
      %v4986 = vsel %vm4874, %v4969, %v4985
      %v4987 = vrot.slane %v2359, 1
      %v4988 = vrot.slane %v2331, 2
      %v4989 = vor.u32 %v4987, %v4988
      %v4990 = vsel %vm4874, %v4973, %v4989
      %v4991 = vrot.slane %v2367, 1
      %v4992 = vrot.slane %v2339, 2
      %v4993 = vor.u32 %v4991, %v4992
      %v4994 = vsel %vm4874, %v4977, %v4993
      %v4995 = vrot.slane %v2375, 1
      %v4996 = vrot.slane %v2347, 2
      %v4997 = vor.u32 %v4995, %v4996
      %v4998 = vsel %vm4874, %v4981, %v4997
      %v4999 = vrot.slane %v2383, 1
      %v5000 = vrot.slane %v2355, 2
      %v5001 = vor.u32 %v4999, %v5000
      %v5002 = vsel %vm4874, %v4985, %v5001
      %v5003 = vrot.slane %v2391, 1
      %v5004 = vrot.slane %v2363, 2
      %v5005 = vor.u32 %v5003, %v5004
      %v5006 = vsel %vm4874, %v4989, %v5005
      %v5007 = vrot.slane %v2399, 1
      %v5008 = vrot.slane %v2371, 2
      %v5009 = vor.u32 %v5007, %v5008
      %v5010 = vsel %vm4874, %v4993, %v5009
      %v5011 = vrot.slane %v2407, 1
      %v5012 = vrot.slane %v2379, 2
      %v5013 = vor.u32 %v5011, %v5012
      %v5014 = vsel %vm4874, %v4997, %v5013
      %v5015 = vrot.slane %v2415, 1
      %v5016 = vrot.slane %v2387, 2
      %v5017 = vor.u32 %v5015, %v5016
      %v5018 = vsel %vm4874, %v5001, %v5017
      %v5019 = vrot.slane %v2423, 1
      %v5020 = vrot.slane %v2395, 2
      %v5021 = vor.u32 %v5019, %v5020
      %v5022 = vsel %vm4874, %v5005, %v5021
      %v5023 = vrot.slane %v2431, 1
      %v5024 = vrot.slane %v2403, 2
      %v5025 = vor.u32 %v5023, %v5024
      %v5026 = vsel %vm4874, %v5009, %v5025
      %v5027 = vrot.slane %v2439, 1
      %v5028 = vrot.slane %v2411, 2
      %v5029 = vor.u32 %v5027, %v5028
      %v5030 = vsel %vm4874, %v5013, %v5029
      %v5031 = vrot.slane %v2447, 1
      %v5032 = vrot.slane %v2419, 2
      %v5033 = vor.u32 %v5031, %v5032
      %v5034 = vsel %vm4874, %v5017, %v5033
      %v5035 = vrot.slane %v2455, 1
      %v5036 = vrot.slane %v2427, 2
      %v5037 = vor.u32 %v5035, %v5036
      %v5038 = vsel %vm4874, %v5021, %v5037
      %v5039 = vrot.slane %v2463, 1
      %v5040 = vrot.slane %v2435, 2
      %v5041 = vor.u32 %v5039, %v5040
      %v5042 = vsel %vm4874, %v5025, %v5041
      %v5043 = vrot.slane %v2471, 1
      %v5044 = vrot.slane %v2443, 2
      %v5045 = vor.u32 %v5043, %v5044
      %v5046 = vsel %vm4874, %v5029, %v5045
      %v5047 = vrot.slane %v2479, 1
      %v5048 = vrot.slane %v2451, 2
      %v5049 = vor.u32 %v5047, %v5048
      %v5050 = vsel %vm4874, %v5033, %v5049
      %v5051 = vrot.slane %v2487, 1
      %v5052 = vrot.slane %v2459, 2
      %v5053 = vor.u32 %v5051, %v5052
      %v5054 = vsel %vm4874, %v5037, %v5053
      %v5055 = vrot.slane %v2495, 1
      %v5056 = vrot.slane %v2467, 2
      %v5057 = vor.u32 %v5055, %v5056
      %v5058 = vsel %vm4874, %v5041, %v5057
      %v5059 = vrot.slane %v2503, 1
      %v5060 = vrot.slane %v2475, 2
      %v5061 = vor.u32 %v5059, %v5060
      %v5062 = vsel %vm4874, %v5045, %v5061
      %v5063 = vrot.slane %v2511, 1
      %v5064 = vrot.slane %v2483, 2
      %v5065 = vor.u32 %v5063, %v5064
      %v5066 = vsel %vm4874, %v5049, %v5065
      %v5067 = vrot.slane %v2519, 1
      %v5068 = vrot.slane %v2491, 2
      %v5069 = vor.u32 %v5067, %v5068
      %v5070 = vsel %vm4874, %v5053, %v5069
      %v5071 = vrot.slane %v2527, 1
      %v5072 = vrot.slane %v2499, 2
      %v5073 = vor.u32 %v5071, %v5072
      %v5074 = vsel %vm4874, %v5057, %v5073
      %v5075 = vrot.slane %v2535, 1
      %v5076 = vrot.slane %v2507, 2
      %v5077 = vor.u32 %v5075, %v5076
      %v5078 = vsel %vm4874, %v5061, %v5077
      %v5079 = vrot.slane %v2543, 1
      %v5080 = vrot.slane %v2515, 2
      %v5081 = vor.u32 %v5079, %v5080
      %v5082 = vsel %vm4874, %v5065, %v5081
      %v5084 = vshrl.u32 %v4870, 16
      %v5086 = vrot.slane %v5084, 1
      %v5087 = vshll.u32 %v4870, 16
      %v5089 = vrot.slane %v5087, 2
      %v5090 = vor.u32 %v5086, %v5089
      %v5091 = vsel %vm4874, %v5069, %v5090
      %v5093 = vshrl.u32 %v4871, 16
      %v5095 = vrot.slane %v5093, 1
      %v5096 = vshll.u32 %v4871, 16
      %v5098 = vrot.slane %v5096, 2
      %v5099 = vor.u32 %v5095, %v5098
      %v5100 = vsel %vm4874, %v5073, %v5099
      %v5102 = vshrl.u32 %v4872, 16
      %v5104 = vrot.slane %v5102, 1
      %v5105 = vshll.u32 %v4872, 16
      %v5107 = vrot.slane %v5105, 2
      %v5108 = vor.u32 %v5104, %v5107
      %v5109 = vsel %vm4874, %v5077, %v5108
      %v5111 = vshrl.u32 %v4873, 16
      %v5113 = vrot.slane %v5111, 1
      %v5114 = vshll.u32 %v4873, 16
      %v5116 = vrot.slane %v5114, 2
      %v5117 = vor.u32 %v5113, %v5116
      %v5118 = vsel %vm4874, %v5081, %v5117
      %v5231 = vunpack.c.l.b16 %v4800
      %v5232 = vunpack.c.h.b16 %v4800
      %v5233 = vunpack.c.l.b16 %v4801
      %v5234 = vunpack.c.h.b16 %v4801
      %v5235 = vunpack.c.l.b16 %v4802
      %v5236 = vunpack.c.h.b16 %v4802
      %v5237 = vunpack.c.l.b16 %v4803
      %v5238 = vunpack.c.h.b16 %v4803
      %v5239 = vunpack.c.l.b16 %v4804
      %v5240 = vunpack.c.h.b16 %v4804
      %v5241 = vunpack.c.l.b16 %v4805
      %v5242 = vunpack.c.h.b16 %v4805
      %v5243 = vunpack.c.l.b16 %v4806
      %v5244 = vunpack.c.h.b16 %v4806
      %v5245 = vunpack.c.l.b16 %v4807
      %v5246 = vunpack.c.h.b16 %v4807
      %v5247 = vunpack.c.l.b16 %v4808
      %v5248 = vunpack.c.h.b16 %v4808
      %v5249 = vunpack.c.l.b16 %v4809
      %v5250 = vunpack.c.h.b16 %v4809
      %v5251 = vunpack.c.l.b16 %v4810
      %v5252 = vunpack.c.h.b16 %v4810
      %v5253 = vunpack.c.l.b16 %v4811
      %v5254 = vunpack.c.h.b16 %v4811
      %v5255 = vunpack.c.l.b16 %v4812
      %v5256 = vunpack.c.h.b16 %v4812
      %v5257 = vunpack.c.l.b16 %v4813
      %v5258 = vunpack.c.h.b16 %v4813
      %v5259 = vunpack.c.l.b16 %v4814
      %v5260 = vunpack.c.h.b16 %v4814
      %v5261 = vunpack.c.l.b16 %v4815
      %v5262 = vunpack.c.h.b16 %v4815
      %v5263 = vunpack.c.l.b16 %v4816
      %v5264 = vunpack.c.h.b16 %v4816
      %v5265 = vunpack.c.l.b16 %v4817
      %v5266 = vunpack.c.h.b16 %v4817
      %v5267 = vunpack.c.l.b16 %v4818
      %v5268 = vunpack.c.h.b16 %v4818
      %v5269 = vunpack.c.l.b16 %v4819
      %v5270 = vunpack.c.h.b16 %v4819
      %v5271 = vunpack.c.l.b16 %v4820
      %v5272 = vunpack.c.h.b16 %v4820
      %v5273 = vunpack.c.l.b16 %v4821
      %v5274 = vunpack.c.h.b16 %v4821
      %v5275 = vunpack.c.l.b16 %v4822
      %v5276 = vunpack.c.h.b16 %v4822
      %v5277 = vunpack.c.l.b16 %v4823
      %v5278 = vunpack.c.h.b16 %v4823
      %v5279 = vunpack.c.l.b16 %v4824
      %v5280 = vunpack.c.h.b16 %v4824
      %v5281 = vunpack.c.l.b16 %v4825
      %v5282 = vunpack.c.h.b16 %v4825
      %v5283 = vunpack.c.l.b16 %v4826
      %v5284 = vunpack.c.h.b16 %v4826
      %v5285 = vunpack.c.l.b16 %v4827
      %v5286 = vunpack.c.h.b16 %v4827
      %v5287 = vunpack.c.l.b16 %v4828
      %v5288 = vunpack.c.h.b16 %v4828
      %v5289 = vunpack.c.l.b16 %v4829
      %v5290 = vunpack.c.h.b16 %v4829
      %v5291 = vunpack.c.l.b16 %v4830
      %v5292 = vunpack.c.h.b16 %v4830
      %v5293 = vunpack.c.l.b16 %v4831
      %v5294 = vunpack.c.h.b16 %v4831
      %v5295 = vunpack.c.l.b16 %v4832
      %v5296 = vunpack.c.h.b16 %v4832
      %v5297 = vunpack.c.l.b16 %v4833
      %v5298 = vunpack.c.h.b16 %v4833
      %v5299 = vunpack.c.l.b16 %v4834
      %v5300 = vunpack.c.h.b16 %v4834
      %v5301 = vunpack.c.l.b16 %v4835
      %v5302 = vunpack.c.h.b16 %v4835
      %v5303 = vunpack.c.l.b16 %v4836
      %v5304 = vunpack.c.h.b16 %v4836
      %v5305 = vunpack.c.l.b16 %v4837
      %v5306 = vunpack.c.h.b16 %v4837
      %v5307 = vunpack.c.l.b16 %v4838
      %v5308 = vunpack.c.h.b16 %v4838
      %v5309 = vunpack.c.l.b16 %v4839
      %v5310 = vunpack.c.h.b16 %v4839
      %v5311 = vunpack.c.l.b16 %v4840
      %v5312 = vunpack.c.h.b16 %v4840
      %v5313 = vunpack.c.l.b16 %v4841
      %v5314 = vunpack.c.h.b16 %v4841
      %v5315 = vunpack.c.l.b16 %v4842
      %v5316 = vunpack.c.h.b16 %v4842
      %v5317 = vunpack.c.l.b16 %v4843
      %v5318 = vunpack.c.h.b16 %v4843
      %v5319 = vunpack.c.l.b16 %v4844
      %v5320 = vunpack.c.h.b16 %v4844
      %v5321 = vunpack.c.l.b16 %v4845
      %v5322 = vunpack.c.h.b16 %v4845
      %v5323 = vunpack.c.l.b16 %v4846
      %v5324 = vunpack.c.h.b16 %v4846
      %v5325 = vunpack.c.l.b16 %v4847
      %v5326 = vunpack.c.h.b16 %v4847
      %v5327 = vunpack.c.l.b16 %v4848
      %v5328 = vunpack.c.h.b16 %v4848
      %v5329 = vunpack.c.l.b16 %v4849
      %v5330 = vunpack.c.h.b16 %v4849
      %v5331 = vunpack.c.l.b16 %v4850
      %v5332 = vunpack.c.h.b16 %v4850
      %v5333 = vunpack.c.l.b16 %v4851
      %v5334 = vunpack.c.h.b16 %v4851
      %v5335 = vunpack.c.l.b16 %v4852
      %v5336 = vunpack.c.h.b16 %v4852
      %v5337 = vunpack.c.l.b16 %v4853
      %v5338 = vunpack.c.h.b16 %v4853
      %v5339 = vunpack.c.l.b16 %v4854
      %v5340 = vunpack.c.h.b16 %v4854
      %v5341 = vunpack.c.l.b16 %v4855
      %v5342 = vunpack.c.h.b16 %v4855
      %v5343 = vunpack.c.l.b16 %v4856
      %v5344 = vunpack.c.h.b16 %v4856
      %v5345 = vunpack.c.l.b16 %v4857
      %v5346 = vunpack.c.h.b16 %v4857
      %v5347 = vunpack.c.l.b16 %v4858
      %v5348 = vunpack.c.h.b16 %v4858
      %v5349 = vunpack.c.l.b16 %v4859
      %v5350 = vunpack.c.h.b16 %v4859
      %v5351 = vunpack.c.l.b16 %v4860
      %v5352 = vunpack.c.h.b16 %v4860
      %v5353 = vunpack.c.l.b16 %v4861
      %v5354 = vunpack.c.h.b16 %v4861
      %v5355 = vunpack.c.l.b16 %v4862
      %v5356 = vunpack.c.h.b16 %v4862
      %v5357 = vunpack.c.l.b16 %v4863
      %v5358 = vunpack.c.h.b16 %v4863
      %v5359 = vpack.c.b16 %v5233, %v5231
      %v5360 = vpack.c.b16 %v5234, %v5232
      %v5361 = vpack.c.b16 %v5237, %v5235
      %v5362 = vpack.c.b16 %v5238, %v5236
      %v5363 = vpack.c.b16 %v5241, %v5239
      %v5364 = vpack.c.b16 %v5242, %v5240
      %v5365 = vpack.c.b16 %v5245, %v5243
      %v5366 = vpack.c.b16 %v5246, %v5244
      %v5367 = vpack.c.b16 %v5249, %v5247
      %v5368 = vpack.c.b16 %v5250, %v5248
      %v5369 = vpack.c.b16 %v5253, %v5251
      %v5370 = vpack.c.b16 %v5254, %v5252
      %v5371 = vpack.c.b16 %v5257, %v5255
      %v5372 = vpack.c.b16 %v5258, %v5256
      %v5373 = vpack.c.b16 %v5261, %v5259
      %v5374 = vpack.c.b16 %v5262, %v5260
      %v5375 = vpack.c.b16 %v5265, %v5263
      %v5376 = vpack.c.b16 %v5266, %v5264
      %v5377 = vpack.c.b16 %v5269, %v5267
      %v5378 = vpack.c.b16 %v5270, %v5268
      %v5379 = vpack.c.b16 %v5273, %v5271
      %v5380 = vpack.c.b16 %v5274, %v5272
      %v5381 = vpack.c.b16 %v5277, %v5275
      %v5382 = vpack.c.b16 %v5278, %v5276
      %v5383 = vpack.c.b16 %v5281, %v5279
      %v5384 = vpack.c.b16 %v5282, %v5280
      %v5385 = vpack.c.b16 %v5285, %v5283
      %v5386 = vpack.c.b16 %v5286, %v5284
      %v5387 = vpack.c.b16 %v5289, %v5287
      %v5388 = vpack.c.b16 %v5290, %v5288
      %v5389 = vpack.c.b16 %v5293, %v5291
      %v5390 = vpack.c.b16 %v5294, %v5292
      %v5391 = vpack.c.b16 %v5297, %v5295
      %v5392 = vpack.c.b16 %v5298, %v5296
      %v5393 = vpack.c.b16 %v5301, %v5299
      %v5394 = vpack.c.b16 %v5302, %v5300
      %v5395 = vpack.c.b16 %v5305, %v5303
      %v5396 = vpack.c.b16 %v5306, %v5304
      %v5397 = vpack.c.b16 %v5309, %v5307
      %v5398 = vpack.c.b16 %v5310, %v5308
      %v5399 = vpack.c.b16 %v5313, %v5311
      %v5400 = vpack.c.b16 %v5314, %v5312
      %v5401 = vpack.c.b16 %v5317, %v5315
      %v5402 = vpack.c.b16 %v5318, %v5316
      %v5403 = vpack.c.b16 %v5321, %v5319
      %v5404 = vpack.c.b16 %v5322, %v5320
      %v5405 = vpack.c.b16 %v5325, %v5323
      %v5406 = vpack.c.b16 %v5326, %v5324
      %v5407 = vpack.c.b16 %v5329, %v5327
      %v5408 = vpack.c.b16 %v5330, %v5328
      %v5409 = vpack.c.b16 %v5333, %v5331
      %v5410 = vpack.c.b16 %v5334, %v5332
      %v5411 = vpack.c.b16 %v5337, %v5335
      %v5412 = vpack.c.b16 %v5338, %v5336
      %v5413 = vpack.c.b16 %v5341, %v5339
      %v5414 = vpack.c.b16 %v5342, %v5340
      %v5415 = vpack.c.b16 %v5345, %v5343
      %v5416 = vpack.c.b16 %v5346, %v5344
      %v5417 = vpack.c.b16 %v5349, %v5347
      %v5418 = vpack.c.b16 %v5350, %v5348
      %v5419 = vpack.c.b16 %v5353, %v5351
      %v5420 = vpack.c.b16 %v5354, %v5352
      %v5421 = vpack.c.b16 %v5357, %v5355
      %v5422 = vpack.c.b16 %v5358, %v5356
      %5487 = vmatprep.subr.bf16.mxu0 %v5374
      %5488 = vmatpush1.bf16.msra.mxu0 %v5373
      %5489 = vmatprep.subr.bf16.mxu0 %v5372
      %5490 = vmatpush1.bf16.msra.mxu0 %v5371
      %5491 = vmatprep.subr.bf16.mxu0 %v5370
      %5492 = vmatpush1.bf16.msra.mxu0 %v5369
      %5493 = vmatprep.subr.bf16.mxu0 %v5368
      %5494 = vmatpush1.bf16.msra.mxu0 %v5367
      %5495 = vmatprep.subr.bf16.mxu0 %v5366
      %5496 = vmatpush1.bf16.msra.mxu0 %v5365
      %5497 = vmatprep.subr.bf16.mxu0 %v5364
      %5498 = vmatpush1.bf16.msra.mxu0 %v5363
      %5499 = vmatprep.subr.bf16.mxu0 %v5362
      %5500 = vmatpush1.bf16.msra.mxu0 %v5361
      %5501 = vmatprep.subr.bf16.mxu0 %v5360
      %5502 = vmatpush1.bf16.msra.mxu0 %v5359
      %5503 = vmatprep.subr.bf16.mxu0 %v5390
      %5504 = vmatpush2.bf16.msra.mxu0 %v5389
      %5505 = vmatprep.subr.bf16.mxu0 %v5388
      %5506 = vmatpush2.bf16.msra.mxu0 %v5387
      %5507 = vmatprep.subr.bf16.mxu0 %v5386
      %5508 = vmatpush2.bf16.msra.mxu0 %v5385
      %5509 = vmatprep.subr.bf16.mxu0 %v5384
      %5510 = vmatpush2.bf16.msra.mxu0 %v5383
      %5511 = vmatprep.subr.bf16.mxu0 %v5382
      %5512 = vmatpush2.bf16.msra.mxu0 %v5381
      %5513 = vmatprep.subr.bf16.mxu0 %v5380
      %5514 = vmatpush2.bf16.msra.mxu0 %v5379
      %5515 = vmatprep.subr.bf16.mxu0 %v5378
      %5516 = vmatpush2.bf16.msra.mxu0 %v5377
      %5517 = vmatprep.subr.bf16.mxu0 %v5376
      %5518 = vmatpush2.bf16.msra.mxu0 %v5375
      %5519 = vmatprep.mubr.bf16.mxu0 %v4898
      %5520 = vmatmul.mubr.bf16.gmra.mxu0 %v4886
      %v5521 = vpop.f32.mrf.mxu0
      %v5522 = vadd.f32 0.0, %v5521
      %v5523 = vpop.f32.mrf.mxu0
      %v5524 = vadd.f32 0.0, %v5523
      %v5525 = vpop.f32.mrf.mxu0
      %v5526 = vadd.f32 0.0, %v5525
      %v5527 = vpop.f32.mrf.mxu0
      %v5528 = vadd.f32 0.0, %v5527
      %5529 = vmatprep.mubr.bf16.mxu0 %v4930
      %5530 = vmatmul.mubr.bf16.gmra.mxu0 %v4926
      %v5531 = vpop.f32.mrf.mxu0
      %v5532 = vadd.f32 0.0, %v5531
      %v5533 = vpop.f32.mrf.mxu0
      %v5534 = vadd.f32 0.0, %v5533
      %v5535 = vpop.f32.mrf.mxu0
      %v5536 = vadd.f32 0.0, %v5535
      %v5537 = vpop.f32.mrf.mxu0
      %v5538 = vadd.f32 0.0, %v5537
      %5539 = vmatprep.mubr.bf16.mxu0 %v4946
      %5540 = vmatmul.mubr.bf16.gmra.mxu0 %v4942
      %v5541 = vpop.f32.mrf.mxu0
      %v5542 = vadd.f32 0.0, %v5541
      %v5543 = vpop.f32.mrf.mxu0
      %v5544 = vadd.f32 0.0, %v5543
      %v5545 = vpop.f32.mrf.mxu0
      %v5546 = vadd.f32 0.0, %v5545
      %v5547 = vpop.f32.mrf.mxu0
      %v5548 = vadd.f32 0.0, %v5547
      %5549 = vmatprep.mubr.bf16.mxu0 %v4962
      %5550 = vmatmul.mubr.bf16.gmra.mxu0 %v4958
      %v5551 = vpop.f32.mrf.mxu0
      %v5552 = vadd.f32 0.0, %v5551
      %v5553 = vpop.f32.mrf.mxu0
      %v5554 = vadd.f32 0.0, %v5553
      %v5555 = vpop.f32.mrf.mxu0
      %v5556 = vadd.f32 0.0, %v5555
      %v5557 = vpop.f32.mrf.mxu0
      %v5558 = vadd.f32 0.0, %v5557
      %5559 = vmatprep.mubr.bf16.mxu0 %v4978
      %5560 = vmatmul.mubr.bf16.gmra.mxu0 %v4974
      %v5561 = vpop.f32.mrf.mxu0
      %v5562 = vadd.f32 0.0, %v5561
      %v5563 = vpop.f32.mrf.mxu0
      %v5564 = vadd.f32 0.0, %v5563
      %v5565 = vpop.f32.mrf.mxu0
      %v5566 = vadd.f32 0.0, %v5565
      %v5567 = vpop.f32.mrf.mxu0
      %v5568 = vadd.f32 0.0, %v5567
      %5569 = vmatprep.mubr.bf16.mxu0 %v4994
      %5570 = vmatmul.mubr.bf16.gmra.mxu0 %v4990
      %v5571 = vpop.f32.mrf.mxu0
      %v5572 = vadd.f32 0.0, %v5571
      %v5573 = vpop.f32.mrf.mxu0
      %v5574 = vadd.f32 0.0, %v5573
      %v5575 = vpop.f32.mrf.mxu0
      %v5576 = vadd.f32 0.0, %v5575
      %v5577 = vpop.f32.mrf.mxu0
      %v5578 = vadd.f32 0.0, %v5577
      %5579 = vmatprep.mubr.bf16.mxu0 %v5010
      %5580 = vmatmul.mubr.bf16.gmra.mxu0 %v5006
      %v5581 = vpop.f32.mrf.mxu0
      %v5582 = vadd.f32 0.0, %v5581
      %v5583 = vpop.f32.mrf.mxu0
      %v5584 = vadd.f32 0.0, %v5583
      %v5585 = vpop.f32.mrf.mxu0
      %v5586 = vadd.f32 0.0, %v5585
      %v5587 = vpop.f32.mrf.mxu0
      %v5588 = vadd.f32 0.0, %v5587
      %5589 = vmatprep.mubr.bf16.mxu0 %v5026
      %5590 = vmatmul.mubr.bf16.gmra.mxu0 %v5022
      %v5591 = vpop.f32.mrf.mxu0
      %v5592 = vadd.f32 0.0, %v5591
      %v5593 = vpop.f32.mrf.mxu0
      %v5594 = vadd.f32 0.0, %v5593
      %v5595 = vpop.f32.mrf.mxu0
      %v5596 = vadd.f32 0.0, %v5595
      %v5597 = vpop.f32.mrf.mxu0
      %v5598 = vadd.f32 0.0, %v5597
      %5599 = vmatprep.mubr.bf16.mxu0 %v5042
      %5600 = vmatmul.mubr.bf16.gmra.mxu0 %v5038
      %v5601 = vpop.f32.mrf.mxu0
      %v5602 = vadd.f32 0.0, %v5601
      %v5603 = vpop.f32.mrf.mxu0
      %v5604 = vadd.f32 0.0, %v5603
      %v5605 = vpop.f32.mrf.mxu0
      %v5606 = vadd.f32 0.0, %v5605
      %v5607 = vpop.f32.mrf.mxu0
      %v5608 = vadd.f32 0.0, %v5607
      %5609 = vmatprep.mubr.bf16.mxu0 %v5058
      %5610 = vmatmul.mubr.bf16.gmra.mxu0 %v5054
      %v5611 = vpop.f32.mrf.mxu0
      %v5612 = vadd.f32 0.0, %v5611
      %v5613 = vpop.f32.mrf.mxu0
      %v5614 = vadd.f32 0.0, %v5613
      %v5615 = vpop.f32.mrf.mxu0
      %v5616 = vadd.f32 0.0, %v5615
      %v5617 = vpop.f32.mrf.mxu0
      %v5618 = vadd.f32 0.0, %v5617
      %5619 = vmatprep.mubr.bf16.mxu0 %v5074
      %5620 = vmatmul.mubr.bf16.gmra.mxu0 %v5070
      %v5621 = vpop.f32.mrf.mxu0
      %v5622 = vadd.f32 0.0, %v5621
      %v5623 = vpop.f32.mrf.mxu0
      %v5624 = vadd.f32 0.0, %v5623
      %v5625 = vpop.f32.mrf.mxu0
      %v5626 = vadd.f32 0.0, %v5625
      %v5627 = vpop.f32.mrf.mxu0
      %v5628 = vadd.f32 0.0, %v5627
      %5629 = vmatprep.mubr.bf16.mxu0 %v5100
      %5630 = vmatmul.mubr.bf16.gmra.mxu0 %v5091
      %v5631 = vpop.f32.mrf.mxu0
      %v5632 = vadd.f32 0.0, %v5631
      %v5633 = vpop.f32.mrf.mxu0
      %v5634 = vadd.f32 0.0, %v5633
      %v5635 = vpop.f32.mrf.mxu0
      %v5636 = vadd.f32 0.0, %v5635
      %v5637 = vpop.f32.mrf.mxu0
      %v5638 = vadd.f32 0.0, %v5637
      %5639 = vdwg.mxu0
      %5640 = vmatprep.subr.bf16.mxu0 %v5406
      %5641 = vmatpush1.bf16.msra.mxu0 %v5405
      %5642 = vmatprep.subr.bf16.mxu0 %v5404
      %5643 = vmatpush1.bf16.msra.mxu0 %v5403
      %5644 = vmatprep.subr.bf16.mxu0 %v5402
      %5645 = vmatpush1.bf16.msra.mxu0 %v5401
      %5646 = vmatprep.subr.bf16.mxu0 %v5400
      %5647 = vmatpush1.bf16.msra.mxu0 %v5399
      %5648 = vmatprep.subr.bf16.mxu0 %v5398
      %5649 = vmatpush1.bf16.msra.mxu0 %v5397
      %5650 = vmatprep.subr.bf16.mxu0 %v5396
      %5651 = vmatpush1.bf16.msra.mxu0 %v5395
      %5652 = vmatprep.subr.bf16.mxu0 %v5394
      %5653 = vmatpush1.bf16.msra.mxu0 %v5393
      %5654 = vmatprep.subr.bf16.mxu0 %v5392
      %5655 = vmatpush1.bf16.msra.mxu0 %v5391
      %5656 = vmatprep.subr.bf16.mxu0 %v5422
      %5657 = vmatpush2.bf16.msra.mxu0 %v5421
      %5658 = vmatprep.subr.bf16.mxu0 %v5420
      %5659 = vmatpush2.bf16.msra.mxu0 %v5419
      %5660 = vmatprep.subr.bf16.mxu0 %v5418
      %5661 = vmatpush2.bf16.msra.mxu0 %v5417
      %5662 = vmatprep.subr.bf16.mxu0 %v5416
      %5663 = vmatpush2.bf16.msra.mxu0 %v5415
      %5664 = vmatprep.subr.bf16.mxu0 %v5414
      %5665 = vmatpush2.bf16.msra.mxu0 %v5413
      %5666 = vmatprep.subr.bf16.mxu0 %v5412
      %5667 = vmatpush2.bf16.msra.mxu0 %v5411
      %5668 = vmatprep.subr.bf16.mxu0 %v5410
      %5669 = vmatpush2.bf16.msra.mxu0 %v5409
      %5670 = vmatprep.subr.bf16.mxu0 %v5408
      %5671 = vmatpush2.bf16.msra.mxu0 %v5407
      %5672 = vmatprep.mubr.bf16.mxu0 %v4922
      %5673 = vmatmul.mubr.bf16.gmra.mxu0 %v4910
      %v5674 = vpop.f32.mrf.mxu0
      %v5675 = vadd.f32 %v5522, %v5674
      %v5676 = vpop.f32.mrf.mxu0
      %v5677 = vadd.f32 %v5524, %v5676
      %v5678 = vpop.f32.mrf.mxu0
      %v5679 = vadd.f32 %v5526, %v5678
      %v5680 = vpop.f32.mrf.mxu0
      %v5681 = vadd.f32 %v5528, %v5680
      %5682 = vmatprep.mubr.bf16.mxu0 %v4938
      %5683 = vmatmul.mubr.bf16.gmra.mxu0 %v4934
      %v5684 = vpop.f32.mrf.mxu0
      %v5685 = vadd.f32 %v5532, %v5684
      %v5686 = vpop.f32.mrf.mxu0
      %v5687 = vadd.f32 %v5534, %v5686
      %v5688 = vpop.f32.mrf.mxu0
      %v5689 = vadd.f32 %v5536, %v5688
      %v5690 = vpop.f32.mrf.mxu0
      %v5691 = vadd.f32 %v5538, %v5690
      %5692 = vmatprep.mubr.bf16.mxu0 %v4954
      %5693 = vmatmul.mubr.bf16.gmra.mxu0 %v4950
      %v5694 = vpop.f32.mrf.mxu0
      %v5695 = vadd.f32 %v5542, %v5694
      %v5696 = vpop.f32.mrf.mxu0
      %v5697 = vadd.f32 %v5544, %v5696
      %v5698 = vpop.f32.mrf.mxu0
      %v5699 = vadd.f32 %v5546, %v5698
      %v5700 = vpop.f32.mrf.mxu0
      %v5701 = vadd.f32 %v5548, %v5700
      %5702 = vmatprep.mubr.bf16.mxu0 %v4970
      %5703 = vmatmul.mubr.bf16.gmra.mxu0 %v4966
      %v5704 = vpop.f32.mrf.mxu0
      %v5705 = vadd.f32 %v5552, %v5704
      %v5706 = vpop.f32.mrf.mxu0
      %v5707 = vadd.f32 %v5554, %v5706
      %v5708 = vpop.f32.mrf.mxu0
      %v5709 = vadd.f32 %v5556, %v5708
      %v5710 = vpop.f32.mrf.mxu0
      %v5711 = vadd.f32 %v5558, %v5710
      %5712 = vmatprep.mubr.bf16.mxu0 %v4986
      %5713 = vmatmul.mubr.bf16.gmra.mxu0 %v4982
      %v5714 = vpop.f32.mrf.mxu0
      %v5715 = vadd.f32 %v5562, %v5714
      %v5716 = vpop.f32.mrf.mxu0
      %v5717 = vadd.f32 %v5564, %v5716
      %v5718 = vpop.f32.mrf.mxu0
      %v5719 = vadd.f32 %v5566, %v5718
      %v5720 = vpop.f32.mrf.mxu0
      %v5721 = vadd.f32 %v5568, %v5720
      %5722 = vmatprep.mubr.bf16.mxu0 %v5002
      %5723 = vmatmul.mubr.bf16.gmra.mxu0 %v4998
      %v5724 = vpop.f32.mrf.mxu0
      %v5725 = vadd.f32 %v5572, %v5724
      %v5726 = vpop.f32.mrf.mxu0
      %v5727 = vadd.f32 %v5574, %v5726
      %v5728 = vpop.f32.mrf.mxu0
      %v5729 = vadd.f32 %v5576, %v5728
      %v5730 = vpop.f32.mrf.mxu0
      %v5731 = vadd.f32 %v5578, %v5730
      %5732 = vmatprep.mubr.bf16.mxu0 %v5018
      %5733 = vmatmul.mubr.bf16.gmra.mxu0 %v5014
      %v5734 = vpop.f32.mrf.mxu0
      %v5735 = vadd.f32 %v5582, %v5734
      %v5736 = vpop.f32.mrf.mxu0
      %v5737 = vadd.f32 %v5584, %v5736
      %v5738 = vpop.f32.mrf.mxu0
      %v5739 = vadd.f32 %v5586, %v5738
      %v5740 = vpop.f32.mrf.mxu0
      %v5741 = vadd.f32 %v5588, %v5740
      %5742 = vmatprep.mubr.bf16.mxu0 %v5034
      %5743 = vmatmul.mubr.bf16.gmra.mxu0 %v5030
      %v5744 = vpop.f32.mrf.mxu0
      %v5745 = vadd.f32 %v5592, %v5744
      %v5746 = vpop.f32.mrf.mxu0
      %v5747 = vadd.f32 %v5594, %v5746
      %v5748 = vpop.f32.mrf.mxu0
      %v5749 = vadd.f32 %v5596, %v5748
      %v5750 = vpop.f32.mrf.mxu0
      %v5751 = vadd.f32 %v5598, %v5750
      %5752 = vmatprep.mubr.bf16.mxu0 %v5050
      %5753 = vmatmul.mubr.bf16.gmra.mxu0 %v5046
      %v5754 = vpop.f32.mrf.mxu0
      %v5755 = vadd.f32 %v5602, %v5754
      %v5756 = vpop.f32.mrf.mxu0
      %v5757 = vadd.f32 %v5604, %v5756
      %v5758 = vpop.f32.mrf.mxu0
      %v5759 = vadd.f32 %v5606, %v5758
      %v5760 = vpop.f32.mrf.mxu0
      %v5761 = vadd.f32 %v5608, %v5760
      %5762 = vmatprep.mubr.bf16.mxu0 %v5066
      %5763 = vmatmul.mubr.bf16.gmra.mxu0 %v5062
      %v5764 = vpop.f32.mrf.mxu0
      %v5765 = vadd.f32 %v5612, %v5764
      %v5766 = vpop.f32.mrf.mxu0
      %v5767 = vadd.f32 %v5614, %v5766
      %v5768 = vpop.f32.mrf.mxu0
      %v5769 = vadd.f32 %v5616, %v5768
      %v5770 = vpop.f32.mrf.mxu0
      %v5771 = vadd.f32 %v5618, %v5770
      %5772 = vmatprep.mubr.bf16.mxu0 %v5082
      %5773 = vmatmul.mubr.bf16.gmra.mxu0 %v5078
      %v5774 = vpop.f32.mrf.mxu0
      %v5775 = vadd.f32 %v5622, %v5774
      %v5776 = vpop.f32.mrf.mxu0
      %v5777 = vadd.f32 %v5624, %v5776
      %v5778 = vpop.f32.mrf.mxu0
      %v5779 = vadd.f32 %v5626, %v5778
      %v5780 = vpop.f32.mrf.mxu0
      %v5781 = vadd.f32 %v5628, %v5780
      %5782 = vmatprep.mubr.bf16.mxu0 %v5118
      %5783 = vmatmul.mubr.bf16.gmra.mxu0 %v5109
      %v5784 = vpop.f32.mrf.mxu0
      %v5785 = vadd.f32 %v5632, %v5784
      %v5786 = vpop.f32.mrf.mxu0
      %v5787 = vadd.f32 %v5634, %v5786
      %v5788 = vpop.f32.mrf.mxu0
      %v5789 = vadd.f32 %v5636, %v5788
      %v5790 = vpop.f32.mrf.mxu0
      %v5791 = vadd.f32 %v5638, %v5790
      %5792 = vdwg.mxu0
      %v5793 = vadd.f32 %v4750, %v5675
      %v5794 = vadd.f32 %v4751, %v5677
      %v5795 = vadd.f32 %v4752, %v5679
      %v5796 = vadd.f32 %v4753, %v5681
      %v5797 = vadd.f32 %v4754, %v5685
      %v5798 = vadd.f32 %v4755, %v5687
      %v5799 = vadd.f32 %v4756, %v5689
      %v5800 = vadd.f32 %v4757, %v5691
      %v5801 = vadd.f32 %v4758, %v5695
      %v5802 = vadd.f32 %v4759, %v5697
      %v5803 = vadd.f32 %v4760, %v5699
      %v5804 = vadd.f32 %v4761, %v5701
      %v5805 = vadd.f32 %v4762, %v5705
      %v5806 = vadd.f32 %v4763, %v5707
      %v5807 = vadd.f32 %v4764, %v5709
      %v5808 = vadd.f32 %v4765, %v5711
      %v5809 = vadd.f32 %v4766, %v5715
      %v5810 = vadd.f32 %v4767, %v5717
      %v5811 = vadd.f32 %v4768, %v5719
      %v5812 = vadd.f32 %v4769, %v5721
      %v5813 = vadd.f32 %v4770, %v5725
      %v5814 = vadd.f32 %v4771, %v5727
      %v5815 = vadd.f32 %v4772, %v5729
      %v5816 = vadd.f32 %v4773, %v5731
      %v5817 = vadd.f32 %v4774, %v5735
      %v5818 = vadd.f32 %v4775, %v5737
      %v5819 = vadd.f32 %v4776, %v5739
      %v5820 = vadd.f32 %v4777, %v5741
      %v5821 = vadd.f32 %v4778, %v5745
      %v5822 = vadd.f32 %v4779, %v5747
      %v5823 = vadd.f32 %v4780, %v5749
      %v5824 = vadd.f32 %v4781, %v5751
      %v5825 = vadd.f32 %v4782, %v5755
      %v5826 = vadd.f32 %v4783, %v5757
      %v5827 = vadd.f32 %v4784, %v5759
      %v5828 = vadd.f32 %v4785, %v5761
      %v5829 = vadd.f32 %v4786, %v5765
      %v5830 = vadd.f32 %v4787, %v5767
      %v5831 = vadd.f32 %v4788, %v5769
      %v5832 = vadd.f32 %v4789, %v5771
      %v5833 = vadd.f32 %v4790, %v5775
      %v5834 = vadd.f32 %v4791, %v5777
      %v5835 = vadd.f32 %v4792, %v5779
      %v5836 = vadd.f32 %v4793, %v5781
      %v5837 = vadd.f32 %v4794, %v5785
      %v5838 = vadd.f32 %v4795, %v5787
      %v5839 = vadd.f32 %v4796, %v5789
      %v5840 = vadd.f32 %v4797, %v5791
      %v5841 = vld [vmem:[#allocation2] sm:$0xcc]
      %v5842 = vld [vmem:[#allocation2 + $0x8] sm:$0xcc]
      %v5843 = vld [vmem:[%s3 + $0x800] sm:$0xff]
      %v5844 = vld [vmem:[%s3 + $0x808] sm:$0xff]
      %v5845 = vld [vmem:[%s3 + $0x810] sm:$0xff]
      %v5846 = vld [vmem:[%s3 + $0x818] sm:$0xff]
      %v5847 = vld [vmem:[%s3 + $0x820] sm:$0xff]
      %v5848 = vld [vmem:[%s3 + $0x828] sm:$0xff]
      %v5849 = vld [vmem:[%s3 + $0x830] sm:$0xff]
      %v5850 = vld [vmem:[%s3 + $0x838] sm:$0xff]
      %v5851 = vld [vmem:[%s3 + $0x840] sm:$0xff]
      %v5852 = vld [vmem:[%s3 + $0x848] sm:$0xff]
      %v5853 = vld [vmem:[%s3 + $0x850] sm:$0xff]
      %v5854 = vld [vmem:[%s3 + $0x858] sm:$0xff]
      %v5855 = vld [vmem:[%s3 + $0x860] sm:$0xff]
      %v5856 = vld [vmem:[%s3 + $0x868] sm:$0xff]
      %v5857 = vld [vmem:[%s3 + $0x870] sm:$0xff]
      %v5858 = vld [vmem:[%s3 + $0x878] sm:$0xff]
      %v5859 = vld [vmem:[%s3 + $0x880] sm:$0xff]
      %v5860 = vld [vmem:[%s3 + $0x888] sm:$0xff]
      %v5861 = vld [vmem:[%s3 + $0x890] sm:$0xff]
      %v5862 = vld [vmem:[%s3 + $0x898] sm:$0xff]
      %v5863 = vld [vmem:[%s3 + $0x8a0] sm:$0xff]
      %v5864 = vld [vmem:[%s3 + $0x8a8] sm:$0xff]
      %v5865 = vld [vmem:[%s3 + $0x8b0] sm:$0xff]
      %v5866 = vld [vmem:[%s3 + $0x8b8] sm:$0xff]
      %v5867 = vld [vmem:[%s3 + $0x8c0] sm:$0xff]
      %v5868 = vld [vmem:[%s3 + $0x8c8] sm:$0xff]
      %v5869 = vld [vmem:[%s3 + $0x8d0] sm:$0xff]
      %v5870 = vld [vmem:[%s3 + $0x8d8] sm:$0xff]
      %v5871 = vld [vmem:[%s3 + $0x8e0] sm:$0xff]
      %v5872 = vld [vmem:[%s3 + $0x8e8] sm:$0xff]
      %v5873 = vld [vmem:[%s3 + $0x8f0] sm:$0xff]
      %v5874 = vld [vmem:[%s3 + $0x8f8] sm:$0xff]
      %v5875 = vld [vmem:[%s3 + $0x900] sm:$0xff]
      %v5876 = vld [vmem:[%s3 + $0x908] sm:$0xff]
      %v5877 = vld [vmem:[%s3 + $0x910] sm:$0xff]
      %v5878 = vld [vmem:[%s3 + $0x918] sm:$0xff]
      %v5879 = vld [vmem:[%s3 + $0x920] sm:$0xff]
      %v5880 = vld [vmem:[%s3 + $0x928] sm:$0xff]
      %v5881 = vld [vmem:[%s3 + $0x930] sm:$0xff]
      %v5882 = vld [vmem:[%s3 + $0x938] sm:$0xff]
      %v5883 = vld [vmem:[%s3 + $0x940] sm:$0xff]
      %v5884 = vld [vmem:[%s3 + $0x948] sm:$0xff]
      %v5885 = vld [vmem:[%s3 + $0x950] sm:$0xff]
      %v5886 = vld [vmem:[%s3 + $0x958] sm:$0xff]
      %v5887 = vld [vmem:[%s3 + $0x960] sm:$0xff]
      %v5888 = vld [vmem:[%s3 + $0x968] sm:$0xff]
      %v5889 = vld [vmem:[%s3 + $0x970] sm:$0xff]
      %v5890 = vld [vmem:[%s3 + $0x978] sm:$0xff]
      %v5891 = vld [vmem:[%s3 + $0x980] sm:$0xff]
      %v5892 = vld [vmem:[%s3 + $0x988] sm:$0xff]
      %v5893 = vld [vmem:[%s3 + $0x990] sm:$0xff]
      %v5894 = vld [vmem:[%s3 + $0x998] sm:$0xff]
      %v5895 = vld [vmem:[%s3 + $0x9a0] sm:$0xff]
      %v5896 = vld [vmem:[%s3 + $0x9a8] sm:$0xff]
      %v5897 = vld [vmem:[%s3 + $0x9b0] sm:$0xff]
      %v5898 = vld [vmem:[%s3 + $0x9b8] sm:$0xff]
      %v5899 = vld [vmem:[%s3 + $0x9c0] sm:$0xff]
      %v5900 = vld [vmem:[%s3 + $0x9c8] sm:$0xff]
      %v5901 = vld [vmem:[%s3 + $0x9d0] sm:$0xff]
      %v5902 = vld [vmem:[%s3 + $0x9d8] sm:$0xff]
      %v5903 = vld [vmem:[%s3 + $0x9e0] sm:$0xff]
      %v5904 = vld [vmem:[%s3 + $0x9e8] sm:$0xff]
      %v5905 = vld [vmem:[%s3 + $0x9f0] sm:$0xff]
      %v5906 = vld [vmem:[%s3 + $0x9f8] sm:$0xff]
      %v5909 = vunpack.c.l.b16 %v5841
      %v5910 = vunpack.c.h.b16 %v5841
      %v5911 = vunpack.c.l.b16 %v5842
      %v5912 = vunpack.c.h.b16 %v5842
      %v5913 = vpack.c.b16 %v2002, %v5909
      %v5914 = vpack.c.b16 %v2003, %v5910
      %v5915 = vpack.c.b16 %v2004, %v5911
      %v5916 = vpack.c.b16 %v2005, %v5912
      %vm5917 = vcmask 1045504
      %v5918 = vrot.slane %v5913, 2
      %v5919 = vrot.slane %v2102, 2
      %v5920 = vsel %vm5917, %v5918, %v5919
      %v5921 = vrot.slane %v5914, 2
      %v5922 = vrot.slane %v2103, 2
      %v5923 = vsel %vm5917, %v5921, %v5922
      %v5924 = vrot.slane %v5915, 2
      %v5925 = vrot.slane %v2104, 2
      %v5926 = vsel %vm5917, %v5924, %v5925
      %v5927 = vrot.slane %v5916, 2
      %v5928 = vrot.slane %v2105, 2
      %v5929 = vsel %vm5917, %v5927, %v5928
      %v5930 = vrot.slane %v2106, 2
      %v5931 = vsel %vm5917, %v5919, %v5930
      %v5932 = vrot.slane %v2107, 2
      %v5933 = vsel %vm5917, %v5922, %v5932
      %v5934 = vrot.slane %v2108, 2
      %v5935 = vsel %vm5917, %v5925, %v5934
      %v5936 = vrot.slane %v2109, 2
      %v5937 = vsel %vm5917, %v5928, %v5936
      %v5938 = vrot.slane %v2110, 2
      %v5939 = vsel %vm5917, %v5930, %v5938
      %v5940 = vrot.slane %v2111, 2
      %v5941 = vsel %vm5917, %v5932, %v5940
      %v5942 = vrot.slane %v2112, 2
      %v5943 = vsel %vm5917, %v5934, %v5942
      %v5944 = vrot.slane %v2113, 2
      %v5945 = vsel %vm5917, %v5936, %v5944
      %v5946 = vrot.slane %v2114, 2
      %v5947 = vsel %vm5917, %v5938, %v5946
      %v5948 = vrot.slane %v2115, 2
      %v5949 = vsel %vm5917, %v5940, %v5948
      %v5950 = vrot.slane %v2116, 2
      %v5951 = vsel %vm5917, %v5942, %v5950
      %v5952 = vrot.slane %v2117, 2
      %v5953 = vsel %vm5917, %v5944, %v5952
      %v5954 = vrot.slane %v2118, 2
      %v5955 = vsel %vm5917, %v5946, %v5954
      %v5956 = vrot.slane %v2119, 2
      %v5957 = vsel %vm5917, %v5948, %v5956
      %v5958 = vrot.slane %v2120, 2
      %v5959 = vsel %vm5917, %v5950, %v5958
      %v5960 = vrot.slane %v2121, 2
      %v5961 = vsel %vm5917, %v5952, %v5960
      %v5962 = vrot.slane %v2122, 2
      %v5963 = vsel %vm5917, %v5954, %v5962
      %v5964 = vrot.slane %v2123, 2
      %v5965 = vsel %vm5917, %v5956, %v5964
      %v5966 = vrot.slane %v2124, 2
      %v5967 = vsel %vm5917, %v5958, %v5966
      %v5968 = vrot.slane %v2125, 2
      %v5969 = vsel %vm5917, %v5960, %v5968
      %v5970 = vrot.slane %v2126, 2
      %v5971 = vsel %vm5917, %v5962, %v5970
      %v5972 = vrot.slane %v2127, 2
      %v5973 = vsel %vm5917, %v5964, %v5972
      %v5974 = vrot.slane %v2128, 2
      %v5975 = vsel %vm5917, %v5966, %v5974
      %v5976 = vrot.slane %v2129, 2
      %v5977 = vsel %vm5917, %v5968, %v5976
      %v5978 = vrot.slane %v2130, 2
      %v5979 = vsel %vm5917, %v5970, %v5978
      %v5980 = vrot.slane %v2131, 2
      %v5981 = vsel %vm5917, %v5972, %v5980
      %v5982 = vrot.slane %v2132, 2
      %v5983 = vsel %vm5917, %v5974, %v5982
      %v5984 = vrot.slane %v2133, 2
      %v5985 = vsel %vm5917, %v5976, %v5984
      %v5986 = vrot.slane %v2134, 2
      %v5987 = vsel %vm5917, %v5978, %v5986
      %v5988 = vrot.slane %v2135, 2
      %v5989 = vsel %vm5917, %v5980, %v5988
      %v5990 = vrot.slane %v2136, 2
      %v5991 = vsel %vm5917, %v5982, %v5990
      %v5992 = vrot.slane %v2137, 2
      %v5993 = vsel %vm5917, %v5984, %v5992
      %v5994 = vrot.slane %v2138, 2
      %v5995 = vsel %vm5917, %v5986, %v5994
      %v5996 = vrot.slane %v2139, 2
      %v5997 = vsel %vm5917, %v5988, %v5996
      %v5998 = vrot.slane %v2140, 2
      %v5999 = vsel %vm5917, %v5990, %v5998
      %v6000 = vrot.slane %v2141, 2
      %v6001 = vsel %vm5917, %v5992, %v6000
      %v6002 = vrot.slane %v2142, 2
      %v6003 = vsel %vm5917, %v5994, %v6002
      %v6004 = vrot.slane %v2143, 2
      %v6005 = vsel %vm5917, %v5996, %v6004
      %v6006 = vrot.slane %v2144, 2
      %v6007 = vsel %vm5917, %v5998, %v6006
      %v6008 = vrot.slane %v2145, 2
      %v6009 = vsel %vm5917, %v6000, %v6008
      %v6010 = vrot.slane %v4870, 2
      %v6011 = vsel %vm5917, %v6002, %v6010
      %v6012 = vrot.slane %v4871, 2
      %v6013 = vsel %vm5917, %v6004, %v6012
      %v6014 = vrot.slane %v4872, 2
      %v6015 = vsel %vm5917, %v6006, %v6014
      %v6016 = vrot.slane %v4873, 2
      %v6017 = vsel %vm5917, %v6008, %v6016
      %v6130 = vunpack.c.l.b16 %v5843
      %v6131 = vunpack.c.h.b16 %v5843
      %v6132 = vunpack.c.l.b16 %v5844
      %v6133 = vunpack.c.h.b16 %v5844
      %v6134 = vunpack.c.l.b16 %v5845
      %v6135 = vunpack.c.h.b16 %v5845
      %v6136 = vunpack.c.l.b16 %v5846
      %v6137 = vunpack.c.h.b16 %v5846
      %v6138 = vunpack.c.l.b16 %v5847
      %v6139 = vunpack.c.h.b16 %v5847
      %v6140 = vunpack.c.l.b16 %v5848
      %v6141 = vunpack.c.h.b16 %v5848
      %v6142 = vunpack.c.l.b16 %v5849
      %v6143 = vunpack.c.h.b16 %v5849
      %v6144 = vunpack.c.l.b16 %v5850
      %v6145 = vunpack.c.h.b16 %v5850
      %v6146 = vunpack.c.l.b16 %v5851
      %v6147 = vunpack.c.h.b16 %v5851
      %v6148 = vunpack.c.l.b16 %v5852
      %v6149 = vunpack.c.h.b16 %v5852
      %v6150 = vunpack.c.l.b16 %v5853
      %v6151 = vunpack.c.h.b16 %v5853
      %v6152 = vunpack.c.l.b16 %v5854
      %v6153 = vunpack.c.h.b16 %v5854
      %v6154 = vunpack.c.l.b16 %v5855
      %v6155 = vunpack.c.h.b16 %v5855
      %v6156 = vunpack.c.l.b16 %v5856
      %v6157 = vunpack.c.h.b16 %v5856
      %v6158 = vunpack.c.l.b16 %v5857
      %v6159 = vunpack.c.h.b16 %v5857
      %v6160 = vunpack.c.l.b16 %v5858
      %v6161 = vunpack.c.h.b16 %v5858
      %v6162 = vunpack.c.l.b16 %v5859
      %v6163 = vunpack.c.h.b16 %v5859
      %v6164 = vunpack.c.l.b16 %v5860
      %v6165 = vunpack.c.h.b16 %v5860
      %v6166 = vunpack.c.l.b16 %v5861
      %v6167 = vunpack.c.h.b16 %v5861
      %v6168 = vunpack.c.l.b16 %v5862
      %v6169 = vunpack.c.h.b16 %v5862
      %v6170 = vunpack.c.l.b16 %v5863
      %v6171 = vunpack.c.h.b16 %v5863
      %v6172 = vunpack.c.l.b16 %v5864
      %v6173 = vunpack.c.h.b16 %v5864
      %v6174 = vunpack.c.l.b16 %v5865
      %v6175 = vunpack.c.h.b16 %v5865
      %v6176 = vunpack.c.l.b16 %v5866
      %v6177 = vunpack.c.h.b16 %v5866
      %v6178 = vunpack.c.l.b16 %v5867
      %v6179 = vunpack.c.h.b16 %v5867
      %v6180 = vunpack.c.l.b16 %v5868
      %v6181 = vunpack.c.h.b16 %v5868
      %v6182 = vunpack.c.l.b16 %v5869
      %v6183 = vunpack.c.h.b16 %v5869
      %v6184 = vunpack.c.l.b16 %v5870
      %v6185 = vunpack.c.h.b16 %v5870
      %v6186 = vunpack.c.l.b16 %v5871
      %v6187 = vunpack.c.h.b16 %v5871
      %v6188 = vunpack.c.l.b16 %v5872
      %v6189 = vunpack.c.h.b16 %v5872
      %v6190 = vunpack.c.l.b16 %v5873
      %v6191 = vunpack.c.h.b16 %v5873
      %v6192 = vunpack.c.l.b16 %v5874
      %v6193 = vunpack.c.h.b16 %v5874
      %v6194 = vunpack.c.l.b16 %v5875
      %v6195 = vunpack.c.h.b16 %v5875
      %v6196 = vunpack.c.l.b16 %v5876
      %v6197 = vunpack.c.h.b16 %v5876
      %v6198 = vunpack.c.l.b16 %v5877
      %v6199 = vunpack.c.h.b16 %v5877
      %v6200 = vunpack.c.l.b16 %v5878
      %v6201 = vunpack.c.h.b16 %v5878
      %v6202 = vunpack.c.l.b16 %v5879
      %v6203 = vunpack.c.h.b16 %v5879
      %v6204 = vunpack.c.l.b16 %v5880
      %v6205 = vunpack.c.h.b16 %v5880
      %v6206 = vunpack.c.l.b16 %v5881
      %v6207 = vunpack.c.h.b16 %v5881
      %v6208 = vunpack.c.l.b16 %v5882
      %v6209 = vunpack.c.h.b16 %v5882
      %v6210 = vunpack.c.l.b16 %v5883
      %v6211 = vunpack.c.h.b16 %v5883
      %v6212 = vunpack.c.l.b16 %v5884
      %v6213 = vunpack.c.h.b16 %v5884
      %v6214 = vunpack.c.l.b16 %v5885
      %v6215 = vunpack.c.h.b16 %v5885
      %v6216 = vunpack.c.l.b16 %v5886
      %v6217 = vunpack.c.h.b16 %v5886
      %v6218 = vunpack.c.l.b16 %v5887
      %v6219 = vunpack.c.h.b16 %v5887
      %v6220 = vunpack.c.l.b16 %v5888
      %v6221 = vunpack.c.h.b16 %v5888
      %v6222 = vunpack.c.l.b16 %v5889
      %v6223 = vunpack.c.h.b16 %v5889
      %v6224 = vunpack.c.l.b16 %v5890
      %v6225 = vunpack.c.h.b16 %v5890
      %v6226 = vunpack.c.l.b16 %v5891
      %v6227 = vunpack.c.h.b16 %v5891
      %v6228 = vunpack.c.l.b16 %v5892
      %v6229 = vunpack.c.h.b16 %v5892
      %v6230 = vunpack.c.l.b16 %v5893
      %v6231 = vunpack.c.h.b16 %v5893
      %v6232 = vunpack.c.l.b16 %v5894
      %v6233 = vunpack.c.h.b16 %v5894
      %v6234 = vunpack.c.l.b16 %v5895
      %v6235 = vunpack.c.h.b16 %v5895
      %v6236 = vunpack.c.l.b16 %v5896
      %v6237 = vunpack.c.h.b16 %v5896
      %v6238 = vunpack.c.l.b16 %v5897
      %v6239 = vunpack.c.h.b16 %v5897
      %v6240 = vunpack.c.l.b16 %v5898
      %v6241 = vunpack.c.h.b16 %v5898
      %v6242 = vunpack.c.l.b16 %v5899
      %v6243 = vunpack.c.h.b16 %v5899
      %v6244 = vunpack.c.l.b16 %v5900
      %v6245 = vunpack.c.h.b16 %v5900
      %v6246 = vunpack.c.l.b16 %v5901
      %v6247 = vunpack.c.h.b16 %v5901
      %v6248 = vunpack.c.l.b16 %v5902
      %v6249 = vunpack.c.h.b16 %v5902
      %v6250 = vunpack.c.l.b16 %v5903
      %v6251 = vunpack.c.h.b16 %v5903
      %v6252 = vunpack.c.l.b16 %v5904
      %v6253 = vunpack.c.h.b16 %v5904
      %v6254 = vunpack.c.l.b16 %v5905
      %v6255 = vunpack.c.h.b16 %v5905
      %v6256 = vunpack.c.l.b16 %v5906
      %v6257 = vunpack.c.h.b16 %v5906
      %v6258 = vpack.c.b16 %v6132, %v6130
      %v6259 = vpack.c.b16 %v6133, %v6131
      %v6260 = vpack.c.b16 %v6136, %v6134
      %v6261 = vpack.c.b16 %v6137, %v6135
      %v6262 = vpack.c.b16 %v6140, %v6138
      %v6263 = vpack.c.b16 %v6141, %v6139
      %v6264 = vpack.c.b16 %v6144, %v6142
      %v6265 = vpack.c.b16 %v6145, %v6143
      %v6266 = vpack.c.b16 %v6148, %v6146
      %v6267 = vpack.c.b16 %v6149, %v6147
      %v6268 = vpack.c.b16 %v6152, %v6150
      %v6269 = vpack.c.b16 %v6153, %v6151
      %v6270 = vpack.c.b16 %v6156, %v6154
      %v6271 = vpack.c.b16 %v6157, %v6155
      %v6272 = vpack.c.b16 %v6160, %v6158
      %v6273 = vpack.c.b16 %v6161, %v6159
      %v6274 = vpack.c.b16 %v6164, %v6162
      %v6275 = vpack.c.b16 %v6165, %v6163
      %v6276 = vpack.c.b16 %v6168, %v6166
      %v6277 = vpack.c.b16 %v6169, %v6167
      %v6278 = vpack.c.b16 %v6172, %v6170
      %v6279 = vpack.c.b16 %v6173, %v6171
      %v6280 = vpack.c.b16 %v6176, %v6174
      %v6281 = vpack.c.b16 %v6177, %v6175
      %v6282 = vpack.c.b16 %v6180, %v6178
      %v6283 = vpack.c.b16 %v6181, %v6179
      %v6284 = vpack.c.b16 %v6184, %v6182
      %v6285 = vpack.c.b16 %v6185, %v6183
      %v6286 = vpack.c.b16 %v6188, %v6186
      %v6287 = vpack.c.b16 %v6189, %v6187
      %v6288 = vpack.c.b16 %v6192, %v6190
      %v6289 = vpack.c.b16 %v6193, %v6191
      %v6290 = vpack.c.b16 %v6196, %v6194
      %v6291 = vpack.c.b16 %v6197, %v6195
      %v6292 = vpack.c.b16 %v6200, %v6198
      %v6293 = vpack.c.b16 %v6201, %v6199
      %v6294 = vpack.c.b16 %v6204, %v6202
      %v6295 = vpack.c.b16 %v6205, %v6203
      %v6296 = vpack.c.b16 %v6208, %v6206
      %v6297 = vpack.c.b16 %v6209, %v6207
      %v6298 = vpack.c.b16 %v6212, %v6210
      %v6299 = vpack.c.b16 %v6213, %v6211
      %v6300 = vpack.c.b16 %v6216, %v6214
      %v6301 = vpack.c.b16 %v6217, %v6215
      %v6302 = vpack.c.b16 %v6220, %v6218
      %v6303 = vpack.c.b16 %v6221, %v6219
      %v6304 = vpack.c.b16 %v6224, %v6222
      %v6305 = vpack.c.b16 %v6225, %v6223
      %v6306 = vpack.c.b16 %v6228, %v6226
      %v6307 = vpack.c.b16 %v6229, %v6227
      %v6308 = vpack.c.b16 %v6232, %v6230
      %v6309 = vpack.c.b16 %v6233, %v6231
      %v6310 = vpack.c.b16 %v6236, %v6234
      %v6311 = vpack.c.b16 %v6237, %v6235
      %v6312 = vpack.c.b16 %v6240, %v6238
      %v6313 = vpack.c.b16 %v6241, %v6239
      %v6314 = vpack.c.b16 %v6244, %v6242
      %v6315 = vpack.c.b16 %v6245, %v6243
      %v6316 = vpack.c.b16 %v6248, %v6246
      %v6317 = vpack.c.b16 %v6249, %v6247
      %v6318 = vpack.c.b16 %v6252, %v6250
      %v6319 = vpack.c.b16 %v6253, %v6251
      %v6320 = vpack.c.b16 %v6256, %v6254
      %v6321 = vpack.c.b16 %v6257, %v6255
      %6386 = vmatprep.subr.bf16.mxu0 %v6273
      %6387 = vmatpush1.bf16.msra.mxu0 %v6272
      %6388 = vmatprep.subr.bf16.mxu0 %v6271
      %6389 = vmatpush1.bf16.msra.mxu0 %v6270
      %6390 = vmatprep.subr.bf16.mxu0 %v6269
      %6391 = vmatpush1.bf16.msra.mxu0 %v6268
      %6392 = vmatprep.subr.bf16.mxu0 %v6267
      %6393 = vmatpush1.bf16.msra.mxu0 %v6266
      %6394 = vmatprep.subr.bf16.mxu0 %v6265
      %6395 = vmatpush1.bf16.msra.mxu0 %v6264
      %6396 = vmatprep.subr.bf16.mxu0 %v6263
      %6397 = vmatpush1.bf16.msra.mxu0 %v6262
      %6398 = vmatprep.subr.bf16.mxu0 %v6261
      %6399 = vmatpush1.bf16.msra.mxu0 %v6260
      %6400 = vmatprep.subr.bf16.mxu0 %v6259
      %6401 = vmatpush1.bf16.msra.mxu0 %v6258
      %6402 = vmatprep.subr.bf16.mxu0 %v6289
      %6403 = vmatpush2.bf16.msra.mxu0 %v6288
      %6404 = vmatprep.subr.bf16.mxu0 %v6287
      %6405 = vmatpush2.bf16.msra.mxu0 %v6286
      %6406 = vmatprep.subr.bf16.mxu0 %v6285
      %6407 = vmatpush2.bf16.msra.mxu0 %v6284
      %6408 = vmatprep.subr.bf16.mxu0 %v6283
      %6409 = vmatpush2.bf16.msra.mxu0 %v6282
      %6410 = vmatprep.subr.bf16.mxu0 %v6281
      %6411 = vmatpush2.bf16.msra.mxu0 %v6280
      %6412 = vmatprep.subr.bf16.mxu0 %v6279
      %6413 = vmatpush2.bf16.msra.mxu0 %v6278
      %6414 = vmatprep.subr.bf16.mxu0 %v6277
      %6415 = vmatpush2.bf16.msra.mxu0 %v6276
      %6416 = vmatprep.subr.bf16.mxu0 %v6275
      %6417 = vmatpush2.bf16.msra.mxu0 %v6274
      %6418 = vmatprep.mubr.bf16.mxu0 %v5923
      %6419 = vmatmul.mubr.bf16.gmra.mxu0 %v5920
      %v6420 = vpop.f32.mrf.mxu0
      %v6421 = vadd.f32 0.0, %v6420
      %v6422 = vpop.f32.mrf.mxu0
      %v6423 = vadd.f32 0.0, %v6422
      %v6424 = vpop.f32.mrf.mxu0
      %v6425 = vadd.f32 0.0, %v6424
      %v6426 = vpop.f32.mrf.mxu0
      %v6427 = vadd.f32 0.0, %v6426
      %6428 = vmatprep.mubr.bf16.mxu0 %v5933
      %6429 = vmatmul.mubr.bf16.gmra.mxu0 %v5931
      %v6430 = vpop.f32.mrf.mxu0
      %v6431 = vadd.f32 0.0, %v6430
      %v6432 = vpop.f32.mrf.mxu0
      %v6433 = vadd.f32 0.0, %v6432
      %v6434 = vpop.f32.mrf.mxu0
      %v6435 = vadd.f32 0.0, %v6434
      %v6436 = vpop.f32.mrf.mxu0
      %v6437 = vadd.f32 0.0, %v6436
      %6438 = vmatprep.mubr.bf16.mxu0 %v5941
      %6439 = vmatmul.mubr.bf16.gmra.mxu0 %v5939
      %v6440 = vpop.f32.mrf.mxu0
      %v6441 = vadd.f32 0.0, %v6440
      %v6442 = vpop.f32.mrf.mxu0
      %v6443 = vadd.f32 0.0, %v6442
      %v6444 = vpop.f32.mrf.mxu0
      %v6445 = vadd.f32 0.0, %v6444
      %v6446 = vpop.f32.mrf.mxu0
      %v6447 = vadd.f32 0.0, %v6446
      %6448 = vmatprep.mubr.bf16.mxu0 %v5949
      %6449 = vmatmul.mubr.bf16.gmra.mxu0 %v5947
      %v6450 = vpop.f32.mrf.mxu0
      %v6451 = vadd.f32 0.0, %v6450
      %v6452 = vpop.f32.mrf.mxu0
      %v6453 = vadd.f32 0.0, %v6452
      %v6454 = vpop.f32.mrf.mxu0
      %v6455 = vadd.f32 0.0, %v6454
      %v6456 = vpop.f32.mrf.mxu0
      %v6457 = vadd.f32 0.0, %v6456
      %6458 = vmatprep.mubr.bf16.mxu0 %v5957
      %6459 = vmatmul.mubr.bf16.gmra.mxu0 %v5955
      %v6460 = vpop.f32.mrf.mxu0
      %v6461 = vadd.f32 0.0, %v6460
      %v6462 = vpop.f32.mrf.mxu0
      %v6463 = vadd.f32 0.0, %v6462
      %v6464 = vpop.f32.mrf.mxu0
      %v6465 = vadd.f32 0.0, %v6464
      %v6466 = vpop.f32.mrf.mxu0
      %v6467 = vadd.f32 0.0, %v6466
      %6468 = vmatprep.mubr.bf16.mxu0 %v5965
      %6469 = vmatmul.mubr.bf16.gmra.mxu0 %v5963
      %v6470 = vpop.f32.mrf.mxu0
      %v6471 = vadd.f32 0.0, %v6470
      %v6472 = vpop.f32.mrf.mxu0
      %v6473 = vadd.f32 0.0, %v6472
      %v6474 = vpop.f32.mrf.mxu0
      %v6475 = vadd.f32 0.0, %v6474
      %v6476 = vpop.f32.mrf.mxu0
      %v6477 = vadd.f32 0.0, %v6476
      %6478 = vmatprep.mubr.bf16.mxu0 %v5973
      %6479 = vmatmul.mubr.bf16.gmra.mxu0 %v5971
      %v6480 = vpop.f32.mrf.mxu0
      %v6481 = vadd.f32 0.0, %v6480
      %v6482 = vpop.f32.mrf.mxu0
      %v6483 = vadd.f32 0.0, %v6482
      %v6484 = vpop.f32.mrf.mxu0
      %v6485 = vadd.f32 0.0, %v6484
      %v6486 = vpop.f32.mrf.mxu0
      %v6487 = vadd.f32 0.0, %v6486
      %6488 = vmatprep.mubr.bf16.mxu0 %v5981
      %6489 = vmatmul.mubr.bf16.gmra.mxu0 %v5979
      %v6490 = vpop.f32.mrf.mxu0
      %v6491 = vadd.f32 0.0, %v6490
      %v6492 = vpop.f32.mrf.mxu0
      %v6493 = vadd.f32 0.0, %v6492
      %v6494 = vpop.f32.mrf.mxu0
      %v6495 = vadd.f32 0.0, %v6494
      %v6496 = vpop.f32.mrf.mxu0
      %v6497 = vadd.f32 0.0, %v6496
      %6498 = vmatprep.mubr.bf16.mxu0 %v5989
      %6499 = vmatmul.mubr.bf16.gmra.mxu0 %v5987
      %v6500 = vpop.f32.mrf.mxu0
      %v6501 = vadd.f32 0.0, %v6500
      %v6502 = vpop.f32.mrf.mxu0
      %v6503 = vadd.f32 0.0, %v6502
      %v6504 = vpop.f32.mrf.mxu0
      %v6505 = vadd.f32 0.0, %v6504
      %v6506 = vpop.f32.mrf.mxu0
      %v6507 = vadd.f32 0.0, %v6506
      %6508 = vmatprep.mubr.bf16.mxu0 %v5997
      %6509 = vmatmul.mubr.bf16.gmra.mxu0 %v5995
      %v6510 = vpop.f32.mrf.mxu0
      %v6511 = vadd.f32 0.0, %v6510
      %v6512 = vpop.f32.mrf.mxu0
      %v6513 = vadd.f32 0.0, %v6512
      %v6514 = vpop.f32.mrf.mxu0
      %v6515 = vadd.f32 0.0, %v6514
      %v6516 = vpop.f32.mrf.mxu0
      %v6517 = vadd.f32 0.0, %v6516
      %6518 = vmatprep.mubr.bf16.mxu0 %v6005
      %6519 = vmatmul.mubr.bf16.gmra.mxu0 %v6003
      %v6520 = vpop.f32.mrf.mxu0
      %v6521 = vadd.f32 0.0, %v6520
      %v6522 = vpop.f32.mrf.mxu0
      %v6523 = vadd.f32 0.0, %v6522
      %v6524 = vpop.f32.mrf.mxu0
      %v6525 = vadd.f32 0.0, %v6524
      %v6526 = vpop.f32.mrf.mxu0
      %v6527 = vadd.f32 0.0, %v6526
      %6528 = vmatprep.mubr.bf16.mxu0 %v6013
      %6529 = vmatmul.mubr.bf16.gmra.mxu0 %v6011
      %v6530 = vpop.f32.mrf.mxu0
      %v6531 = vadd.f32 0.0, %v6530
      %v6532 = vpop.f32.mrf.mxu0
      %v6533 = vadd.f32 0.0, %v6532
      %v6534 = vpop.f32.mrf.mxu0
      %v6535 = vadd.f32 0.0, %v6534
      %v6536 = vpop.f32.mrf.mxu0
      %v6537 = vadd.f32 0.0, %v6536
      %6538 = vdwg.mxu0
      %6539 = vmatprep.subr.bf16.mxu0 %v6305
      %6540 = vmatpush1.bf16.msra.mxu0 %v6304
      %6541 = vmatprep.subr.bf16.mxu0 %v6303
      %6542 = vmatpush1.bf16.msra.mxu0 %v6302
      %6543 = vmatprep.subr.bf16.mxu0 %v6301
      %6544 = vmatpush1.bf16.msra.mxu0 %v6300
      %6545 = vmatprep.subr.bf16.mxu0 %v6299
      %6546 = vmatpush1.bf16.msra.mxu0 %v6298
      %6547 = vmatprep.subr.bf16.mxu0 %v6297
      %6548 = vmatpush1.bf16.msra.mxu0 %v6296
      %6549 = vmatprep.subr.bf16.mxu0 %v6295
      %6550 = vmatpush1.bf16.msra.mxu0 %v6294
      %6551 = vmatprep.subr.bf16.mxu0 %v6293
      %6552 = vmatpush1.bf16.msra.mxu0 %v6292
      %6553 = vmatprep.subr.bf16.mxu0 %v6291
      %6554 = vmatpush1.bf16.msra.mxu0 %v6290
      %6555 = vmatprep.subr.bf16.mxu0 %v6321
      %6556 = vmatpush2.bf16.msra.mxu0 %v6320
      %6557 = vmatprep.subr.bf16.mxu0 %v6319
      %6558 = vmatpush2.bf16.msra.mxu0 %v6318
      %6559 = vmatprep.subr.bf16.mxu0 %v6317
      %6560 = vmatpush2.bf16.msra.mxu0 %v6316
      %6561 = vmatprep.subr.bf16.mxu0 %v6315
      %6562 = vmatpush2.bf16.msra.mxu0 %v6314
      %6563 = vmatprep.subr.bf16.mxu0 %v6313
      %6564 = vmatpush2.bf16.msra.mxu0 %v6312
      %6565 = vmatprep.subr.bf16.mxu0 %v6311
      %6566 = vmatpush2.bf16.msra.mxu0 %v6310
      %6567 = vmatprep.subr.bf16.mxu0 %v6309
      %6568 = vmatpush2.bf16.msra.mxu0 %v6308
      %6569 = vmatprep.subr.bf16.mxu0 %v6307
      %6570 = vmatpush2.bf16.msra.mxu0 %v6306
      %6571 = vmatprep.mubr.bf16.mxu0 %v5929
      %6572 = vmatmul.mubr.bf16.gmra.mxu0 %v5926
      %v6573 = vpop.f32.mrf.mxu0
      %v6574 = vadd.f32 %v6421, %v6573
      %v6575 = vpop.f32.mrf.mxu0
      %v6576 = vadd.f32 %v6423, %v6575
      %v6577 = vpop.f32.mrf.mxu0
      %v6578 = vadd.f32 %v6425, %v6577
      %v6579 = vpop.f32.mrf.mxu0
      %v6580 = vadd.f32 %v6427, %v6579
      %6581 = vmatprep.mubr.bf16.mxu0 %v5937
      %6582 = vmatmul.mubr.bf16.gmra.mxu0 %v5935
      %v6583 = vpop.f32.mrf.mxu0
      %v6584 = vadd.f32 %v6431, %v6583
      %v6585 = vpop.f32.mrf.mxu0
      %v6586 = vadd.f32 %v6433, %v6585
      %v6587 = vpop.f32.mrf.mxu0
      %v6588 = vadd.f32 %v6435, %v6587
      %v6589 = vpop.f32.mrf.mxu0
      %v6590 = vadd.f32 %v6437, %v6589
      %6591 = vmatprep.mubr.bf16.mxu0 %v5945
      %6592 = vmatmul.mubr.bf16.gmra.mxu0 %v5943
      %v6593 = vpop.f32.mrf.mxu0
      %v6594 = vadd.f32 %v6441, %v6593
      %v6595 = vpop.f32.mrf.mxu0
      %v6596 = vadd.f32 %v6443, %v6595
      %v6597 = vpop.f32.mrf.mxu0
      %v6598 = vadd.f32 %v6445, %v6597
      %v6599 = vpop.f32.mrf.mxu0
      %v6600 = vadd.f32 %v6447, %v6599
      %6601 = vmatprep.mubr.bf16.mxu0 %v5953
      %6602 = vmatmul.mubr.bf16.gmra.mxu0 %v5951
      %v6603 = vpop.f32.mrf.mxu0
      %v6604 = vadd.f32 %v6451, %v6603
      %v6605 = vpop.f32.mrf.mxu0
      %v6606 = vadd.f32 %v6453, %v6605
      %v6607 = vpop.f32.mrf.mxu0
      %v6608 = vadd.f32 %v6455, %v6607
      %v6609 = vpop.f32.mrf.mxu0
      %v6610 = vadd.f32 %v6457, %v6609
      %6611 = vmatprep.mubr.bf16.mxu0 %v5961
      %6612 = vmatmul.mubr.bf16.gmra.mxu0 %v5959
      %v6613 = vpop.f32.mrf.mxu0
      %v6614 = vadd.f32 %v6461, %v6613
      %v6615 = vpop.f32.mrf.mxu0
      %v6616 = vadd.f32 %v6463, %v6615
      %v6617 = vpop.f32.mrf.mxu0
      %v6618 = vadd.f32 %v6465, %v6617
      %v6619 = vpop.f32.mrf.mxu0
      %v6620 = vadd.f32 %v6467, %v6619
      %6621 = vmatprep.mubr.bf16.mxu0 %v5969
      %6622 = vmatmul.mubr.bf16.gmra.mxu0 %v5967
      %v6623 = vpop.f32.mrf.mxu0
      %v6624 = vadd.f32 %v6471, %v6623
      %v6625 = vpop.f32.mrf.mxu0
      %v6626 = vadd.f32 %v6473, %v6625
      %v6627 = vpop.f32.mrf.mxu0
      %v6628 = vadd.f32 %v6475, %v6627
      %v6629 = vpop.f32.mrf.mxu0
      %v6630 = vadd.f32 %v6477, %v6629
      %6631 = vmatprep.mubr.bf16.mxu0 %v5977
      %6632 = vmatmul.mubr.bf16.gmra.mxu0 %v5975
      %v6633 = vpop.f32.mrf.mxu0
      %v6634 = vadd.f32 %v6481, %v6633
      %v6635 = vpop.f32.mrf.mxu0
      %v6636 = vadd.f32 %v6483, %v6635
      %v6637 = vpop.f32.mrf.mxu0
      %v6638 = vadd.f32 %v6485, %v6637
      %v6639 = vpop.f32.mrf.mxu0
      %v6640 = vadd.f32 %v6487, %v6639
      %6641 = vmatprep.mubr.bf16.mxu0 %v5985
      %6642 = vmatmul.mubr.bf16.gmra.mxu0 %v5983
      %v6643 = vpop.f32.mrf.mxu0
      %v6644 = vadd.f32 %v6491, %v6643
      %v6645 = vpop.f32.mrf.mxu0
      %v6646 = vadd.f32 %v6493, %v6645
      %v6647 = vpop.f32.mrf.mxu0
      %v6648 = vadd.f32 %v6495, %v6647
      %v6649 = vpop.f32.mrf.mxu0
      %v6650 = vadd.f32 %v6497, %v6649
      %6651 = vmatprep.mubr.bf16.mxu0 %v5993
      %6652 = vmatmul.mubr.bf16.gmra.mxu0 %v5991
      %v6653 = vpop.f32.mrf.mxu0
      %v6654 = vadd.f32 %v6501, %v6653
      %v6655 = vpop.f32.mrf.mxu0
      %v6656 = vadd.f32 %v6503, %v6655
      %v6657 = vpop.f32.mrf.mxu0
      %v6658 = vadd.f32 %v6505, %v6657
      %v6659 = vpop.f32.mrf.mxu0
      %v6660 = vadd.f32 %v6507, %v6659
      %6661 = vmatprep.mubr.bf16.mxu0 %v6001
      %6662 = vmatmul.mubr.bf16.gmra.mxu0 %v5999
      %v6663 = vpop.f32.mrf.mxu0
      %v6664 = vadd.f32 %v6511, %v6663
      %v6665 = vpop.f32.mrf.mxu0
      %v6666 = vadd.f32 %v6513, %v6665
      %v6667 = vpop.f32.mrf.mxu0
      %v6668 = vadd.f32 %v6515, %v6667
      %v6669 = vpop.f32.mrf.mxu0
      %v6670 = vadd.f32 %v6517, %v6669
      %6671 = vmatprep.mubr.bf16.mxu0 %v6009
      %6672 = vmatmul.mubr.bf16.gmra.mxu0 %v6007
      %v6673 = vpop.f32.mrf.mxu0
      %v6674 = vadd.f32 %v6521, %v6673
      %v6675 = vpop.f32.mrf.mxu0
      %v6676 = vadd.f32 %v6523, %v6675
      %v6677 = vpop.f32.mrf.mxu0
      %v6678 = vadd.f32 %v6525, %v6677
      %v6679 = vpop.f32.mrf.mxu0
      %v6680 = vadd.f32 %v6527, %v6679
      %6681 = vmatprep.mubr.bf16.mxu0 %v6017
      %6682 = vmatmul.mubr.bf16.gmra.mxu0 %v6015
      %v6683 = vpop.f32.mrf.mxu0
      %v6684 = vadd.f32 %v6531, %v6683
      %v6685 = vpop.f32.mrf.mxu0
      %v6686 = vadd.f32 %v6533, %v6685
      %v6687 = vpop.f32.mrf.mxu0
      %v6688 = vadd.f32 %v6535, %v6687
      %v6689 = vpop.f32.mrf.mxu0
      %v6690 = vadd.f32 %v6537, %v6689
      %6691 = vdwg.mxu0
      %v6692 = vadd.f32 %v5793, %v6574
      %v6693 = vadd.f32 %v5794, %v6576
      %v6694 = vadd.f32 %v5795, %v6578
      %v6695 = vadd.f32 %v5796, %v6580
      %v6696 = vadd.f32 %v5797, %v6584
      %v6697 = vadd.f32 %v5798, %v6586
      %v6698 = vadd.f32 %v5799, %v6588
      %v6699 = vadd.f32 %v5800, %v6590
      %v6700 = vadd.f32 %v5801, %v6594
      %v6701 = vadd.f32 %v5802, %v6596
      %v6702 = vadd.f32 %v5803, %v6598
      %v6703 = vadd.f32 %v5804, %v6600
      %v6704 = vadd.f32 %v5805, %v6604
      %v6705 = vadd.f32 %v5806, %v6606
      %v6706 = vadd.f32 %v5807, %v6608
      %v6707 = vadd.f32 %v5808, %v6610
      %v6708 = vadd.f32 %v5809, %v6614
      %v6709 = vadd.f32 %v5810, %v6616
      %v6710 = vadd.f32 %v5811, %v6618
      %v6711 = vadd.f32 %v5812, %v6620
      %v6712 = vadd.f32 %v5813, %v6624
      %v6713 = vadd.f32 %v5814, %v6626
      %v6714 = vadd.f32 %v5815, %v6628
      %v6715 = vadd.f32 %v5816, %v6630
      %v6716 = vadd.f32 %v5817, %v6634
      %v6717 = vadd.f32 %v5818, %v6636
      %v6718 = vadd.f32 %v5819, %v6638
      %v6719 = vadd.f32 %v5820, %v6640
      %v6720 = vadd.f32 %v5821, %v6644
      %v6721 = vadd.f32 %v5822, %v6646
      %v6722 = vadd.f32 %v5823, %v6648
      %v6723 = vadd.f32 %v5824, %v6650
      %v6724 = vadd.f32 %v5825, %v6654
      %v6725 = vadd.f32 %v5826, %v6656
      %v6726 = vadd.f32 %v5827, %v6658
      %v6727 = vadd.f32 %v5828, %v6660
      %v6728 = vadd.f32 %v5829, %v6664
      %v6729 = vadd.f32 %v5830, %v6666
      %v6730 = vadd.f32 %v5831, %v6668
      %v6731 = vadd.f32 %v5832, %v6670
      %v6732 = vadd.f32 %v5833, %v6674
      %v6733 = vadd.f32 %v5834, %v6676
      %v6734 = vadd.f32 %v5835, %v6678
      %v6735 = vadd.f32 %v5836, %v6680
      %v6736 = vadd.f32 %v5837, %v6684
      %v6737 = vadd.f32 %v5838, %v6686
      %v6738 = vadd.f32 %v5839, %v6688
      %v6739 = vadd.f32 %v5840, %v6690
      %v6740 = vld [vmem:[#allocation2 + $0x180] sm:$0x77]
      %v6741 = vld [vmem:[#allocation2 + $0x188] sm:$0x77]
      %v6742 = vld [vmem:[%s3 + $0xa00] sm:$0xff]
      %v6743 = vld [vmem:[%s3 + $0xa08] sm:$0xff]
      %v6744 = vld [vmem:[%s3 + $0xa10] sm:$0xff]
      %v6745 = vld [vmem:[%s3 + $0xa18] sm:$0xff]
      %v6746 = vld [vmem:[%s3 + $0xa20] sm:$0xff]
      %v6747 = vld [vmem:[%s3 + $0xa28] sm:$0xff]
      %v6748 = vld [vmem:[%s3 + $0xa30] sm:$0xff]
      %v6749 = vld [vmem:[%s3 + $0xa38] sm:$0xff]
      %v6750 = vld [vmem:[%s3 + $0xa40] sm:$0xff]
      %v6751 = vld [vmem:[%s3 + $0xa48] sm:$0xff]
      %v6752 = vld [vmem:[%s3 + $0xa50] sm:$0xff]
      %v6753 = vld [vmem:[%s3 + $0xa58] sm:$0xff]
      %v6754 = vld [vmem:[%s3 + $0xa60] sm:$0xff]
      %v6755 = vld [vmem:[%s3 + $0xa68] sm:$0xff]
      %v6756 = vld [vmem:[%s3 + $0xa70] sm:$0xff]
      %v6757 = vld [vmem:[%s3 + $0xa78] sm:$0xff]
      %v6758 = vld [vmem:[%s3 + $0xa80] sm:$0xff]
      %v6759 = vld [vmem:[%s3 + $0xa88] sm:$0xff]
      %v6760 = vld [vmem:[%s3 + $0xa90] sm:$0xff]
      %v6761 = vld [vmem:[%s3 + $0xa98] sm:$0xff]
      %v6762 = vld [vmem:[%s3 + $0xaa0] sm:$0xff]
      %v6763 = vld [vmem:[%s3 + $0xaa8] sm:$0xff]
      %v6764 = vld [vmem:[%s3 + $0xab0] sm:$0xff]
      %v6765 = vld [vmem:[%s3 + $0xab8] sm:$0xff]
      %v6766 = vld [vmem:[%s3 + $0xac0] sm:$0xff]
      %v6767 = vld [vmem:[%s3 + $0xac8] sm:$0xff]
      %v6768 = vld [vmem:[%s3 + $0xad0] sm:$0xff]
      %v6769 = vld [vmem:[%s3 + $0xad8] sm:$0xff]
      %v6770 = vld [vmem:[%s3 + $0xae0] sm:$0xff]
      %v6771 = vld [vmem:[%s3 + $0xae8] sm:$0xff]
      %v6772 = vld [vmem:[%s3 + $0xaf0] sm:$0xff]
      %v6773 = vld [vmem:[%s3 + $0xaf8] sm:$0xff]
      %v6774 = vld [vmem:[%s3 + $0xb00] sm:$0xff]
      %v6775 = vld [vmem:[%s3 + $0xb08] sm:$0xff]
      %v6776 = vld [vmem:[%s3 + $0xb10] sm:$0xff]
      %v6777 = vld [vmem:[%s3 + $0xb18] sm:$0xff]
      %v6778 = vld [vmem:[%s3 + $0xb20] sm:$0xff]
      %v6779 = vld [vmem:[%s3 + $0xb28] sm:$0xff]
      %v6780 = vld [vmem:[%s3 + $0xb30] sm:$0xff]
      %v6781 = vld [vmem:[%s3 + $0xb38] sm:$0xff]
      %v6782 = vld [vmem:[%s3 + $0xb40] sm:$0xff]
      %v6783 = vld [vmem:[%s3 + $0xb48] sm:$0xff]
      %v6784 = vld [vmem:[%s3 + $0xb50] sm:$0xff]
      %v6785 = vld [vmem:[%s3 + $0xb58] sm:$0xff]
      %v6786 = vld [vmem:[%s3 + $0xb60] sm:$0xff]
      %v6787 = vld [vmem:[%s3 + $0xb68] sm:$0xff]
      %v6788 = vld [vmem:[%s3 + $0xb70] sm:$0xff]
      %v6789 = vld [vmem:[%s3 + $0xb78] sm:$0xff]
      %v6790 = vld [vmem:[%s3 + $0xb80] sm:$0xff]
      %v6791 = vld [vmem:[%s3 + $0xb88] sm:$0xff]
      %v6792 = vld [vmem:[%s3 + $0xb90] sm:$0xff]
      %v6793 = vld [vmem:[%s3 + $0xb98] sm:$0xff]
      %v6794 = vld [vmem:[%s3 + $0xba0] sm:$0xff]
      %v6795 = vld [vmem:[%s3 + $0xba8] sm:$0xff]
      %v6796 = vld [vmem:[%s3 + $0xbb0] sm:$0xff]
      %v6797 = vld [vmem:[%s3 + $0xbb8] sm:$0xff]
      %v6798 = vld [vmem:[%s3 + $0xbc0] sm:$0xff]
      %v6799 = vld [vmem:[%s3 + $0xbc8] sm:$0xff]
      %v6800 = vld [vmem:[%s3 + $0xbd0] sm:$0xff]
      %v6801 = vld [vmem:[%s3 + $0xbd8] sm:$0xff]
      %v6802 = vld [vmem:[%s3 + $0xbe0] sm:$0xff]
      %v6803 = vld [vmem:[%s3 + $0xbe8] sm:$0xff]
      %v6804 = vld [vmem:[%s3 + $0xbf0] sm:$0xff]
      %v6805 = vld [vmem:[%s3 + $0xbf8] sm:$0xff]
      %v6808 = vunpack.c.l.b16 %v6740
      %v6809 = vunpack.c.h.b16 %v6740
      %v6810 = vunpack.c.l.b16 %v6741
      %v6811 = vunpack.c.h.b16 %v6741
      %v6812 = vpack.c.b16 %v6808, %v6808
      %v6813 = vpack.c.b16 %v6809, %v6809
      %v6814 = vpack.c.b16 %v6810, %v6810
      %v6815 = vpack.c.b16 %v6811, %v6811
      %vm6816 = vsmask.f32 5376
      %v6818 = vshrl.u32 %v5913, 16
      %v6820 = vrot.slane %v6818, 2
      %v6821 = vshll.u32 %v5913, 16
      %v6823 = vrot.slane %v6821, 3
      %v6824 = vor.u32 %v6820, %v6823
      %v6825 = vrot.slane %v2199, 2
      %v6826 = vrot.slane %v2159, 3
      %v6827 = vor.u32 %v6825, %v6826
      %v6828 = vsel %vm6816, %v6824, %v6827
      %v6830 = vshrl.u32 %v5914, 16
      %v6832 = vrot.slane %v6830, 2
      %v6833 = vshll.u32 %v5914, 16
      %v6835 = vrot.slane %v6833, 3
      %v6836 = vor.u32 %v6832, %v6835
      %v6837 = vrot.slane %v2207, 2
      %v6838 = vrot.slane %v2171, 3
      %v6839 = vor.u32 %v6837, %v6838
      %v6840 = vsel %vm6816, %v6836, %v6839
      %v6842 = vshrl.u32 %v5915, 16
      %v6844 = vrot.slane %v6842, 2
      %v6845 = vshll.u32 %v5915, 16
      %v6847 = vrot.slane %v6845, 3
      %v6848 = vor.u32 %v6844, %v6847
      %v6849 = vrot.slane %v2215, 2
      %v6850 = vrot.slane %v2183, 3
      %v6851 = vor.u32 %v6849, %v6850
      %v6852 = vsel %vm6816, %v6848, %v6851
      %v6854 = vshrl.u32 %v5916, 16
      %v6856 = vrot.slane %v6854, 2
      %v6857 = vshll.u32 %v5916, 16
      %v6859 = vrot.slane %v6857, 3
      %v6860 = vor.u32 %v6856, %v6859
      %v6861 = vrot.slane %v2223, 2
      %v6862 = vrot.slane %v2195, 3
      %v6863 = vor.u32 %v6861, %v6862
      %v6864 = vsel %vm6816, %v6860, %v6863
      %v6865 = vrot.slane %v2231, 2
      %v6866 = vrot.slane %v2203, 3
      %v6867 = vor.u32 %v6865, %v6866
      %v6868 = vsel %vm6816, %v6827, %v6867
      %v6869 = vrot.slane %v2239, 2
      %v6870 = vrot.slane %v2211, 3
      %v6871 = vor.u32 %v6869, %v6870
      %v6872 = vsel %vm6816, %v6839, %v6871
      %v6873 = vrot.slane %v2247, 2
      %v6874 = vrot.slane %v2219, 3
      %v6875 = vor.u32 %v6873, %v6874
      %v6876 = vsel %vm6816, %v6851, %v6875
      %v6877 = vrot.slane %v2255, 2
      %v6878 = vrot.slane %v2227, 3
      %v6879 = vor.u32 %v6877, %v6878
      %v6880 = vsel %vm6816, %v6863, %v6879
      %v6881 = vrot.slane %v2263, 2
      %v6882 = vrot.slane %v2235, 3
      %v6883 = vor.u32 %v6881, %v6882
      %v6884 = vsel %vm6816, %v6867, %v6883
      %v6885 = vrot.slane %v2271, 2
      %v6886 = vrot.slane %v2243, 3
      %v6887 = vor.u32 %v6885, %v6886
      %v6888 = vsel %vm6816, %v6871, %v6887
      %v6889 = vrot.slane %v2279, 2
      %v6890 = vrot.slane %v2251, 3
      %v6891 = vor.u32 %v6889, %v6890
      %v6892 = vsel %vm6816, %v6875, %v6891
      %v6893 = vrot.slane %v2287, 2
      %v6894 = vrot.slane %v2259, 3
      %v6895 = vor.u32 %v6893, %v6894
      %v6896 = vsel %vm6816, %v6879, %v6895
      %v6897 = vrot.slane %v2295, 2
      %v6898 = vrot.slane %v2267, 3
      %v6899 = vor.u32 %v6897, %v6898
      %v6900 = vsel %vm6816, %v6883, %v6899
      %v6901 = vrot.slane %v2303, 2
      %v6902 = vrot.slane %v2275, 3
      %v6903 = vor.u32 %v6901, %v6902
      %v6904 = vsel %vm6816, %v6887, %v6903
      %v6905 = vrot.slane %v2311, 2
      %v6906 = vrot.slane %v2283, 3
      %v6907 = vor.u32 %v6905, %v6906
      %v6908 = vsel %vm6816, %v6891, %v6907
      %v6909 = vrot.slane %v2319, 2
      %v6910 = vrot.slane %v2291, 3
      %v6911 = vor.u32 %v6909, %v6910
      %v6912 = vsel %vm6816, %v6895, %v6911
      %v6913 = vrot.slane %v2327, 2
      %v6914 = vrot.slane %v2299, 3
      %v6915 = vor.u32 %v6913, %v6914
      %v6916 = vsel %vm6816, %v6899, %v6915
      %v6917 = vrot.slane %v2335, 2
      %v6918 = vrot.slane %v2307, 3
      %v6919 = vor.u32 %v6917, %v6918
      %v6920 = vsel %vm6816, %v6903, %v6919
      %v6921 = vrot.slane %v2343, 2
      %v6922 = vrot.slane %v2315, 3
      %v6923 = vor.u32 %v6921, %v6922
      %v6924 = vsel %vm6816, %v6907, %v6923
      %v6925 = vrot.slane %v2351, 2
      %v6926 = vrot.slane %v2323, 3
      %v6927 = vor.u32 %v6925, %v6926
      %v6928 = vsel %vm6816, %v6911, %v6927
      %v6929 = vrot.slane %v2359, 2
      %v6930 = vrot.slane %v2331, 3
      %v6931 = vor.u32 %v6929, %v6930
      %v6932 = vsel %vm6816, %v6915, %v6931
      %v6933 = vrot.slane %v2367, 2
      %v6934 = vrot.slane %v2339, 3
      %v6935 = vor.u32 %v6933, %v6934
      %v6936 = vsel %vm6816, %v6919, %v6935
      %v6937 = vrot.slane %v2375, 2
      %v6938 = vrot.slane %v2347, 3
      %v6939 = vor.u32 %v6937, %v6938
      %v6940 = vsel %vm6816, %v6923, %v6939
      %v6941 = vrot.slane %v2383, 2
      %v6942 = vrot.slane %v2355, 3
      %v6943 = vor.u32 %v6941, %v6942
      %v6944 = vsel %vm6816, %v6927, %v6943
      %v6945 = vrot.slane %v2391, 2
      %v6946 = vrot.slane %v2363, 3
      %v6947 = vor.u32 %v6945, %v6946
      %v6948 = vsel %vm6816, %v6931, %v6947
      %v6949 = vrot.slane %v2399, 2
      %v6950 = vrot.slane %v2371, 3
      %v6951 = vor.u32 %v6949, %v6950
      %v6952 = vsel %vm6816, %v6935, %v6951
      %v6953 = vrot.slane %v2407, 2
      %v6954 = vrot.slane %v2379, 3
      %v6955 = vor.u32 %v6953, %v6954
      %v6956 = vsel %vm6816, %v6939, %v6955
      %v6957 = vrot.slane %v2415, 2
      %v6958 = vrot.slane %v2387, 3
      %v6959 = vor.u32 %v6957, %v6958
      %v6960 = vsel %vm6816, %v6943, %v6959
      %v6961 = vrot.slane %v2423, 2
      %v6962 = vrot.slane %v2395, 3
      %v6963 = vor.u32 %v6961, %v6962
      %v6964 = vsel %vm6816, %v6947, %v6963
      %v6965 = vrot.slane %v2431, 2
      %v6966 = vrot.slane %v2403, 3
      %v6967 = vor.u32 %v6965, %v6966
      %v6968 = vsel %vm6816, %v6951, %v6967
      %v6969 = vrot.slane %v2439, 2
      %v6970 = vrot.slane %v2411, 3
      %v6971 = vor.u32 %v6969, %v6970
      %v6972 = vsel %vm6816, %v6955, %v6971
      %v6973 = vrot.slane %v2447, 2
      %v6974 = vrot.slane %v2419, 3
      %v6975 = vor.u32 %v6973, %v6974
      %v6976 = vsel %vm6816, %v6959, %v6975
      %v6977 = vrot.slane %v2455, 2
      %v6978 = vrot.slane %v2427, 3
      %v6979 = vor.u32 %v6977, %v6978
      %v6980 = vsel %vm6816, %v6963, %v6979
      %v6981 = vrot.slane %v2463, 2
      %v6982 = vrot.slane %v2435, 3
      %v6983 = vor.u32 %v6981, %v6982
      %v6984 = vsel %vm6816, %v6967, %v6983
      %v6985 = vrot.slane %v2471, 2
      %v6986 = vrot.slane %v2443, 3
      %v6987 = vor.u32 %v6985, %v6986
      %v6988 = vsel %vm6816, %v6971, %v6987
      %v6989 = vrot.slane %v2479, 2
      %v6990 = vrot.slane %v2451, 3
      %v6991 = vor.u32 %v6989, %v6990
      %v6992 = vsel %vm6816, %v6975, %v6991
      %v6993 = vrot.slane %v2487, 2
      %v6994 = vrot.slane %v2459, 3
      %v6995 = vor.u32 %v6993, %v6994
      %v6996 = vsel %vm6816, %v6979, %v6995
      %v6997 = vrot.slane %v2495, 2
      %v6998 = vrot.slane %v2467, 3
      %v6999 = vor.u32 %v6997, %v6998
      %v7000 = vsel %vm6816, %v6983, %v6999
      %v7001 = vrot.slane %v2503, 2
      %v7002 = vrot.slane %v2475, 3
      %v7003 = vor.u32 %v7001, %v7002
      %v7004 = vsel %vm6816, %v6987, %v7003
      %v7005 = vrot.slane %v2511, 2
      %v7006 = vrot.slane %v2483, 3
      %v7007 = vor.u32 %v7005, %v7006
      %v7008 = vsel %vm6816, %v6991, %v7007
      %v7009 = vrot.slane %v2519, 2
      %v7010 = vrot.slane %v2491, 3
      %v7011 = vor.u32 %v7009, %v7010
      %v7012 = vsel %vm6816, %v6995, %v7011
      %v7013 = vrot.slane %v2527, 2
      %v7014 = vrot.slane %v2499, 3
      %v7015 = vor.u32 %v7013, %v7014
      %v7016 = vsel %vm6816, %v6999, %v7015
      %v7017 = vrot.slane %v2535, 2
      %v7018 = vrot.slane %v2507, 3
      %v7019 = vor.u32 %v7017, %v7018
      %v7020 = vsel %vm6816, %v7003, %v7019
      %v7021 = vrot.slane %v2543, 2
      %v7022 = vrot.slane %v2515, 3
      %v7023 = vor.u32 %v7021, %v7022
      %v7024 = vsel %vm6816, %v7007, %v7023
      %v7026 = vshrl.u32 %v6812, 16
      %v7028 = vrot.slane %v7026, 2
      %v7029 = vshll.u32 %v6812, 16
      %v7031 = vrot.slane %v7029, 3
      %v7032 = vor.u32 %v7028, %v7031
      %v7033 = vsel %vm6816, %v7011, %v7032
      %v7035 = vshrl.u32 %v6813, 16
      %v7037 = vrot.slane %v7035, 2
      %v7038 = vshll.u32 %v6813, 16
      %v7040 = vrot.slane %v7038, 3
      %v7041 = vor.u32 %v7037, %v7040
      %v7042 = vsel %vm6816, %v7015, %v7041
      %v7044 = vshrl.u32 %v6814, 16
      %v7046 = vrot.slane %v7044, 2
      %v7047 = vshll.u32 %v6814, 16
      %v7049 = vrot.slane %v7047, 3
      %v7050 = vor.u32 %v7046, %v7049
      %v7051 = vsel %vm6816, %v7019, %v7050
      %v7053 = vshrl.u32 %v6815, 16
      %v7055 = vrot.slane %v7053, 2
      %v7056 = vshll.u32 %v6815, 16
      %v7058 = vrot.slane %v7056, 3
      %v7059 = vor.u32 %v7055, %v7058
      %v7060 = vsel %vm6816, %v7023, %v7059
      %v7173 = vunpack.c.l.b16 %v6742
      %v7174 = vunpack.c.h.b16 %v6742
      %v7175 = vunpack.c.l.b16 %v6743
      %v7176 = vunpack.c.h.b16 %v6743
      %v7177 = vunpack.c.l.b16 %v6744
      %v7178 = vunpack.c.h.b16 %v6744
      %v7179 = vunpack.c.l.b16 %v6745
      %v7180 = vunpack.c.h.b16 %v6745
      %v7181 = vunpack.c.l.b16 %v6746
      %v7182 = vunpack.c.h.b16 %v6746
      %v7183 = vunpack.c.l.b16 %v6747
      %v7184 = vunpack.c.h.b16 %v6747
      %v7185 = vunpack.c.l.b16 %v6748
      %v7186 = vunpack.c.h.b16 %v6748
      %v7187 = vunpack.c.l.b16 %v6749
      %v7188 = vunpack.c.h.b16 %v6749
      %v7189 = vunpack.c.l.b16 %v6750
      %v7190 = vunpack.c.h.b16 %v6750
      %v7191 = vunpack.c.l.b16 %v6751
      %v7192 = vunpack.c.h.b16 %v6751
      %v7193 = vunpack.c.l.b16 %v6752
      %v7194 = vunpack.c.h.b16 %v6752
      %v7195 = vunpack.c.l.b16 %v6753
      %v7196 = vunpack.c.h.b16 %v6753
      %v7197 = vunpack.c.l.b16 %v6754
      %v7198 = vunpack.c.h.b16 %v6754
      %v7199 = vunpack.c.l.b16 %v6755
      %v7200 = vunpack.c.h.b16 %v6755
      %v7201 = vunpack.c.l.b16 %v6756
      %v7202 = vunpack.c.h.b16 %v6756
      %v7203 = vunpack.c.l.b16 %v6757
      %v7204 = vunpack.c.h.b16 %v6757
      %v7205 = vunpack.c.l.b16 %v6758
      %v7206 = vunpack.c.h.b16 %v6758
      %v7207 = vunpack.c.l.b16 %v6759
      %v7208 = vunpack.c.h.b16 %v6759
      %v7209 = vunpack.c.l.b16 %v6760
      %v7210 = vunpack.c.h.b16 %v6760
      %v7211 = vunpack.c.l.b16 %v6761
      %v7212 = vunpack.c.h.b16 %v6761
      %v7213 = vunpack.c.l.b16 %v6762
      %v7214 = vunpack.c.h.b16 %v6762
      %v7215 = vunpack.c.l.b16 %v6763
      %v7216 = vunpack.c.h.b16 %v6763
      %v7217 = vunpack.c.l.b16 %v6764
      %v7218 = vunpack.c.h.b16 %v6764
      %v7219 = vunpack.c.l.b16 %v6765
      %v7220 = vunpack.c.h.b16 %v6765
      %v7221 = vunpack.c.l.b16 %v6766
      %v7222 = vunpack.c.h.b16 %v6766
      %v7223 = vunpack.c.l.b16 %v6767
      %v7224 = vunpack.c.h.b16 %v6767
      %v7225 = vunpack.c.l.b16 %v6768
      %v7226 = vunpack.c.h.b16 %v6768
      %v7227 = vunpack.c.l.b16 %v6769
      %v7228 = vunpack.c.h.b16 %v6769
      %v7229 = vunpack.c.l.b16 %v6770
      %v7230 = vunpack.c.h.b16 %v6770
      %v7231 = vunpack.c.l.b16 %v6771
      %v7232 = vunpack.c.h.b16 %v6771
      %v7233 = vunpack.c.l.b16 %v6772
      %v7234 = vunpack.c.h.b16 %v6772
      %v7235 = vunpack.c.l.b16 %v6773
      %v7236 = vunpack.c.h.b16 %v6773
      %v7237 = vunpack.c.l.b16 %v6774
      %v7238 = vunpack.c.h.b16 %v6774
      %v7239 = vunpack.c.l.b16 %v6775
      %v7240 = vunpack.c.h.b16 %v6775
      %v7241 = vunpack.c.l.b16 %v6776
      %v7242 = vunpack.c.h.b16 %v6776
      %v7243 = vunpack.c.l.b16 %v6777
      %v7244 = vunpack.c.h.b16 %v6777
      %v7245 = vunpack.c.l.b16 %v6778
      %v7246 = vunpack.c.h.b16 %v6778
      %v7247 = vunpack.c.l.b16 %v6779
      %v7248 = vunpack.c.h.b16 %v6779
      %v7249 = vunpack.c.l.b16 %v6780
      %v7250 = vunpack.c.h.b16 %v6780
      %v7251 = vunpack.c.l.b16 %v6781
      %v7252 = vunpack.c.h.b16 %v6781
      %v7253 = vunpack.c.l.b16 %v6782
      %v7254 = vunpack.c.h.b16 %v6782
      %v7255 = vunpack.c.l.b16 %v6783
      %v7256 = vunpack.c.h.b16 %v6783
      %v7257 = vunpack.c.l.b16 %v6784
      %v7258 = vunpack.c.h.b16 %v6784
      %v7259 = vunpack.c.l.b16 %v6785
      %v7260 = vunpack.c.h.b16 %v6785
      %v7261 = vunpack.c.l.b16 %v6786
      %v7262 = vunpack.c.h.b16 %v6786
      %v7263 = vunpack.c.l.b16 %v6787
      %v7264 = vunpack.c.h.b16 %v6787
      %v7265 = vunpack.c.l.b16 %v6788
      %v7266 = vunpack.c.h.b16 %v6788
      %v7267 = vunpack.c.l.b16 %v6789
      %v7268 = vunpack.c.h.b16 %v6789
      %v7269 = vunpack.c.l.b16 %v6790
      %v7270 = vunpack.c.h.b16 %v6790
      %v7271 = vunpack.c.l.b16 %v6791
      %v7272 = vunpack.c.h.b16 %v6791
      %v7273 = vunpack.c.l.b16 %v6792
      %v7274 = vunpack.c.h.b16 %v6792
      %v7275 = vunpack.c.l.b16 %v6793
      %v7276 = vunpack.c.h.b16 %v6793
      %v7277 = vunpack.c.l.b16 %v6794
      %v7278 = vunpack.c.h.b16 %v6794
      %v7279 = vunpack.c.l.b16 %v6795
      %v7280 = vunpack.c.h.b16 %v6795
      %v7281 = vunpack.c.l.b16 %v6796
      %v7282 = vunpack.c.h.b16 %v6796
      %v7283 = vunpack.c.l.b16 %v6797
      %v7284 = vunpack.c.h.b16 %v6797
      %v7285 = vunpack.c.l.b16 %v6798
      %v7286 = vunpack.c.h.b16 %v6798
      %v7287 = vunpack.c.l.b16 %v6799
      %v7288 = vunpack.c.h.b16 %v6799
      %v7289 = vunpack.c.l.b16 %v6800
      %v7290 = vunpack.c.h.b16 %v6800
      %v7291 = vunpack.c.l.b16 %v6801
      %v7292 = vunpack.c.h.b16 %v6801
      %v7293 = vunpack.c.l.b16 %v6802
      %v7294 = vunpack.c.h.b16 %v6802
      %v7295 = vunpack.c.l.b16 %v6803
      %v7296 = vunpack.c.h.b16 %v6803
      %v7297 = vunpack.c.l.b16 %v6804
      %v7298 = vunpack.c.h.b16 %v6804
      %v7299 = vunpack.c.l.b16 %v6805
      %v7300 = vunpack.c.h.b16 %v6805
      %v7301 = vpack.c.b16 %v7175, %v7173
      %v7302 = vpack.c.b16 %v7176, %v7174
      %v7303 = vpack.c.b16 %v7179, %v7177
      %v7304 = vpack.c.b16 %v7180, %v7178
      %v7305 = vpack.c.b16 %v7183, %v7181
      %v7306 = vpack.c.b16 %v7184, %v7182
      %v7307 = vpack.c.b16 %v7187, %v7185
      %v7308 = vpack.c.b16 %v7188, %v7186
      %v7309 = vpack.c.b16 %v7191, %v7189
      %v7310 = vpack.c.b16 %v7192, %v7190
      %v7311 = vpack.c.b16 %v7195, %v7193
      %v7312 = vpack.c.b16 %v7196, %v7194
      %v7313 = vpack.c.b16 %v7199, %v7197
      %v7314 = vpack.c.b16 %v7200, %v7198
      %v7315 = vpack.c.b16 %v7203, %v7201
      %v7316 = vpack.c.b16 %v7204, %v7202
      %v7317 = vpack.c.b16 %v7207, %v7205
      %v7318 = vpack.c.b16 %v7208, %v7206
      %v7319 = vpack.c.b16 %v7211, %v7209
      %v7320 = vpack.c.b16 %v7212, %v7210
      %v7321 = vpack.c.b16 %v7215, %v7213
      %v7322 = vpack.c.b16 %v7216, %v7214
      %v7323 = vpack.c.b16 %v7219, %v7217
      %v7324 = vpack.c.b16 %v7220, %v7218
      %v7325 = vpack.c.b16 %v7223, %v7221
      %v7326 = vpack.c.b16 %v7224, %v7222
      %v7327 = vpack.c.b16 %v7227, %v7225
      %v7328 = vpack.c.b16 %v7228, %v7226
      %v7329 = vpack.c.b16 %v7231, %v7229
      %v7330 = vpack.c.b16 %v7232, %v7230
      %v7331 = vpack.c.b16 %v7235, %v7233
      %v7332 = vpack.c.b16 %v7236, %v7234
      %v7333 = vpack.c.b16 %v7239, %v7237
      %v7334 = vpack.c.b16 %v7240, %v7238
      %v7335 = vpack.c.b16 %v7243, %v7241
      %v7336 = vpack.c.b16 %v7244, %v7242
      %v7337 = vpack.c.b16 %v7247, %v7245
      %v7338 = vpack.c.b16 %v7248, %v7246
      %v7339 = vpack.c.b16 %v7251, %v7249
      %v7340 = vpack.c.b16 %v7252, %v7250
      %v7341 = vpack.c.b16 %v7255, %v7253
      %v7342 = vpack.c.b16 %v7256, %v7254
      %v7343 = vpack.c.b16 %v7259, %v7257
      %v7344 = vpack.c.b16 %v7260, %v7258
      %v7345 = vpack.c.b16 %v7263, %v7261
      %v7346 = vpack.c.b16 %v7264, %v7262
      %v7347 = vpack.c.b16 %v7267, %v7265
      %v7348 = vpack.c.b16 %v7268, %v7266
      %v7349 = vpack.c.b16 %v7271, %v7269
      %v7350 = vpack.c.b16 %v7272, %v7270
      %v7351 = vpack.c.b16 %v7275, %v7273
      %v7352 = vpack.c.b16 %v7276, %v7274
      %v7353 = vpack.c.b16 %v7279, %v7277
      %v7354 = vpack.c.b16 %v7280, %v7278
      %v7355 = vpack.c.b16 %v7283, %v7281
      %v7356 = vpack.c.b16 %v7284, %v7282
      %v7357 = vpack.c.b16 %v7287, %v7285
      %v7358 = vpack.c.b16 %v7288, %v7286
      %v7359 = vpack.c.b16 %v7291, %v7289
      %v7360 = vpack.c.b16 %v7292, %v7290
      %v7361 = vpack.c.b16 %v7295, %v7293
      %v7362 = vpack.c.b16 %v7296, %v7294
      %v7363 = vpack.c.b16 %v7299, %v7297
      %v7364 = vpack.c.b16 %v7300, %v7298
      %7429 = vmatprep.subr.bf16.mxu0 %v7316
      %7430 = vmatpush1.bf16.msra.mxu0 %v7315
      %7431 = vmatprep.subr.bf16.mxu0 %v7314
      %7432 = vmatpush1.bf16.msra.mxu0 %v7313
      %7433 = vmatprep.subr.bf16.mxu0 %v7312
      %7434 = vmatpush1.bf16.msra.mxu0 %v7311
      %7435 = vmatprep.subr.bf16.mxu0 %v7310
      %7436 = vmatpush1.bf16.msra.mxu0 %v7309
      %7437 = vmatprep.subr.bf16.mxu0 %v7308
      %7438 = vmatpush1.bf16.msra.mxu0 %v7307
      %7439 = vmatprep.subr.bf16.mxu0 %v7306
      %7440 = vmatpush1.bf16.msra.mxu0 %v7305
      %7441 = vmatprep.subr.bf16.mxu0 %v7304
      %7442 = vmatpush1.bf16.msra.mxu0 %v7303
      %7443 = vmatprep.subr.bf16.mxu0 %v7302
      %7444 = vmatpush1.bf16.msra.mxu0 %v7301
      %7445 = vmatprep.subr.bf16.mxu0 %v7332
      %7446 = vmatpush2.bf16.msra.mxu0 %v7331
      %7447 = vmatprep.subr.bf16.mxu0 %v7330
      %7448 = vmatpush2.bf16.msra.mxu0 %v7329
      %7449 = vmatprep.subr.bf16.mxu0 %v7328
      %7450 = vmatpush2.bf16.msra.mxu0 %v7327
      %7451 = vmatprep.subr.bf16.mxu0 %v7326
      %7452 = vmatpush2.bf16.msra.mxu0 %v7325
      %7453 = vmatprep.subr.bf16.mxu0 %v7324
      %7454 = vmatpush2.bf16.msra.mxu0 %v7323
      %7455 = vmatprep.subr.bf16.mxu0 %v7322
      %7456 = vmatpush2.bf16.msra.mxu0 %v7321
      %7457 = vmatprep.subr.bf16.mxu0 %v7320
      %7458 = vmatpush2.bf16.msra.mxu0 %v7319
      %7459 = vmatprep.subr.bf16.mxu0 %v7318
      %7460 = vmatpush2.bf16.msra.mxu0 %v7317
      %7461 = vmatprep.mubr.bf16.mxu0 %v6840
      %7462 = vmatmul.mubr.bf16.gmra.mxu0 %v6828
      %v7463 = vpop.f32.mrf.mxu0
      %v7464 = vadd.f32 0.0, %v7463
      %v7465 = vpop.f32.mrf.mxu0
      %v7466 = vadd.f32 0.0, %v7465
      %v7467 = vpop.f32.mrf.mxu0
      %v7468 = vadd.f32 0.0, %v7467
      %v7469 = vpop.f32.mrf.mxu0
      %v7470 = vadd.f32 0.0, %v7469
      %7471 = vmatprep.mubr.bf16.mxu0 %v6872
      %7472 = vmatmul.mubr.bf16.gmra.mxu0 %v6868
      %v7473 = vpop.f32.mrf.mxu0
      %v7474 = vadd.f32 0.0, %v7473
      %v7475 = vpop.f32.mrf.mxu0
      %v7476 = vadd.f32 0.0, %v7475
      %v7477 = vpop.f32.mrf.mxu0
      %v7478 = vadd.f32 0.0, %v7477
      %v7479 = vpop.f32.mrf.mxu0
      %v7480 = vadd.f32 0.0, %v7479
      %7481 = vmatprep.mubr.bf16.mxu0 %v6888
      %7482 = vmatmul.mubr.bf16.gmra.mxu0 %v6884
      %v7483 = vpop.f32.mrf.mxu0
      %v7484 = vadd.f32 0.0, %v7483
      %v7485 = vpop.f32.mrf.mxu0
      %v7486 = vadd.f32 0.0, %v7485
      %v7487 = vpop.f32.mrf.mxu0
      %v7488 = vadd.f32 0.0, %v7487
      %v7489 = vpop.f32.mrf.mxu0
      %v7490 = vadd.f32 0.0, %v7489
      %7491 = vmatprep.mubr.bf16.mxu0 %v6904
      %7492 = vmatmul.mubr.bf16.gmra.mxu0 %v6900
      %v7493 = vpop.f32.mrf.mxu0
      %v7494 = vadd.f32 0.0, %v7493
      %v7495 = vpop.f32.mrf.mxu0
      %v7496 = vadd.f32 0.0, %v7495
      %v7497 = vpop.f32.mrf.mxu0
      %v7498 = vadd.f32 0.0, %v7497
      %v7499 = vpop.f32.mrf.mxu0
      %v7500 = vadd.f32 0.0, %v7499
      %7501 = vmatprep.mubr.bf16.mxu0 %v6920
      %7502 = vmatmul.mubr.bf16.gmra.mxu0 %v6916
      %v7503 = vpop.f32.mrf.mxu0
      %v7504 = vadd.f32 0.0, %v7503
      %v7505 = vpop.f32.mrf.mxu0
      %v7506 = vadd.f32 0.0, %v7505
      %v7507 = vpop.f32.mrf.mxu0
      %v7508 = vadd.f32 0.0, %v7507
      %v7509 = vpop.f32.mrf.mxu0
      %v7510 = vadd.f32 0.0, %v7509
      %7511 = vmatprep.mubr.bf16.mxu0 %v6936
      %7512 = vmatmul.mubr.bf16.gmra.mxu0 %v6932
      %v7513 = vpop.f32.mrf.mxu0
      %v7514 = vadd.f32 0.0, %v7513
      %v7515 = vpop.f32.mrf.mxu0
      %v7516 = vadd.f32 0.0, %v7515
      %v7517 = vpop.f32.mrf.mxu0
      %v7518 = vadd.f32 0.0, %v7517
      %v7519 = vpop.f32.mrf.mxu0
      %v7520 = vadd.f32 0.0, %v7519
      %7521 = vmatprep.mubr.bf16.mxu0 %v6952
      %7522 = vmatmul.mubr.bf16.gmra.mxu0 %v6948
      %v7523 = vpop.f32.mrf.mxu0
      %v7524 = vadd.f32 0.0, %v7523
      %v7525 = vpop.f32.mrf.mxu0
      %v7526 = vadd.f32 0.0, %v7525
      %v7527 = vpop.f32.mrf.mxu0
      %v7528 = vadd.f32 0.0, %v7527
      %v7529 = vpop.f32.mrf.mxu0
      %v7530 = vadd.f32 0.0, %v7529
      %7531 = vmatprep.mubr.bf16.mxu0 %v6968
      %7532 = vmatmul.mubr.bf16.gmra.mxu0 %v6964
      %v7533 = vpop.f32.mrf.mxu0
      %v7534 = vadd.f32 0.0, %v7533
      %v7535 = vpop.f32.mrf.mxu0
      %v7536 = vadd.f32 0.0, %v7535
      %v7537 = vpop.f32.mrf.mxu0
      %v7538 = vadd.f32 0.0, %v7537
      %v7539 = vpop.f32.mrf.mxu0
      %v7540 = vadd.f32 0.0, %v7539
      %7541 = vmatprep.mubr.bf16.mxu0 %v6984
      %7542 = vmatmul.mubr.bf16.gmra.mxu0 %v6980
      %v7543 = vpop.f32.mrf.mxu0
      %v7544 = vadd.f32 0.0, %v7543
      %v7545 = vpop.f32.mrf.mxu0
      %v7546 = vadd.f32 0.0, %v7545
      %v7547 = vpop.f32.mrf.mxu0
      %v7548 = vadd.f32 0.0, %v7547
      %v7549 = vpop.f32.mrf.mxu0
      %v7550 = vadd.f32 0.0, %v7549
      %7551 = vmatprep.mubr.bf16.mxu0 %v7000
      %7552 = vmatmul.mubr.bf16.gmra.mxu0 %v6996
      %v7553 = vpop.f32.mrf.mxu0
      %v7554 = vadd.f32 0.0, %v7553
      %v7555 = vpop.f32.mrf.mxu0
      %v7556 = vadd.f32 0.0, %v7555
      %v7557 = vpop.f32.mrf.mxu0
      %v7558 = vadd.f32 0.0, %v7557
      %v7559 = vpop.f32.mrf.mxu0
      %v7560 = vadd.f32 0.0, %v7559
      %7561 = vmatprep.mubr.bf16.mxu0 %v7016
      %7562 = vmatmul.mubr.bf16.gmra.mxu0 %v7012
      %v7563 = vpop.f32.mrf.mxu0
      %v7564 = vadd.f32 0.0, %v7563
      %v7565 = vpop.f32.mrf.mxu0
      %v7566 = vadd.f32 0.0, %v7565
      %v7567 = vpop.f32.mrf.mxu0
      %v7568 = vadd.f32 0.0, %v7567
      %v7569 = vpop.f32.mrf.mxu0
      %v7570 = vadd.f32 0.0, %v7569
      %7571 = vmatprep.mubr.bf16.mxu0 %v7042
      %7572 = vmatmul.mubr.bf16.gmra.mxu0 %v7033
      %v7573 = vpop.f32.mrf.mxu0
      %v7574 = vadd.f32 0.0, %v7573
      %v7575 = vpop.f32.mrf.mxu0
      %v7576 = vadd.f32 0.0, %v7575
      %v7577 = vpop.f32.mrf.mxu0
      %v7578 = vadd.f32 0.0, %v7577
      %v7579 = vpop.f32.mrf.mxu0
      %v7580 = vadd.f32 0.0, %v7579
      %7581 = vdwg.mxu0
      %7582 = vmatprep.subr.bf16.mxu0 %v7348
      %7583 = vmatpush1.bf16.msra.mxu0 %v7347
      %7584 = vmatprep.subr.bf16.mxu0 %v7346
      %7585 = vmatpush1.bf16.msra.mxu0 %v7345
      %7586 = vmatprep.subr.bf16.mxu0 %v7344
      %7587 = vmatpush1.bf16.msra.mxu0 %v7343
      %7588 = vmatprep.subr.bf16.mxu0 %v7342
      %7589 = vmatpush1.bf16.msra.mxu0 %v7341
      %7590 = vmatprep.subr.bf16.mxu0 %v7340
      %7591 = vmatpush1.bf16.msra.mxu0 %v7339
      %7592 = vmatprep.subr.bf16.mxu0 %v7338
      %7593 = vmatpush1.bf16.msra.mxu0 %v7337
      %7594 = vmatprep.subr.bf16.mxu0 %v7336
      %7595 = vmatpush1.bf16.msra.mxu0 %v7335
      %7596 = vmatprep.subr.bf16.mxu0 %v7334
      %7597 = vmatpush1.bf16.msra.mxu0 %v7333
      %7598 = vmatprep.subr.bf16.mxu0 %v7364
      %7599 = vmatpush2.bf16.msra.mxu0 %v7363
      %7600 = vmatprep.subr.bf16.mxu0 %v7362
      %7601 = vmatpush2.bf16.msra.mxu0 %v7361
      %7602 = vmatprep.subr.bf16.mxu0 %v7360
      %7603 = vmatpush2.bf16.msra.mxu0 %v7359
      %7604 = vmatprep.subr.bf16.mxu0 %v7358
      %7605 = vmatpush2.bf16.msra.mxu0 %v7357
      %7606 = vmatprep.subr.bf16.mxu0 %v7356
      %7607 = vmatpush2.bf16.msra.mxu0 %v7355
      %7608 = vmatprep.subr.bf16.mxu0 %v7354
      %7609 = vmatpush2.bf16.msra.mxu0 %v7353
      %7610 = vmatprep.subr.bf16.mxu0 %v7352
      %7611 = vmatpush2.bf16.msra.mxu0 %v7351
      %7612 = vmatprep.subr.bf16.mxu0 %v7350
      %7613 = vmatpush2.bf16.msra.mxu0 %v7349
      %7614 = vmatprep.mubr.bf16.mxu0 %v6864
      %7615 = vmatmul.mubr.bf16.gmra.mxu0 %v6852
      %v7616 = vpop.f32.mrf.mxu0
      %v7617 = vadd.f32 %v7464, %v7616
      %v7618 = vpop.f32.mrf.mxu0
      %v7619 = vadd.f32 %v7466, %v7618
      %v7620 = vpop.f32.mrf.mxu0
      %v7621 = vadd.f32 %v7468, %v7620
      %v7622 = vpop.f32.mrf.mxu0
      %v7623 = vadd.f32 %v7470, %v7622
      %7624 = vmatprep.mubr.bf16.mxu0 %v6880
      %7625 = vmatmul.mubr.bf16.gmra.mxu0 %v6876
      %v7626 = vpop.f32.mrf.mxu0
      %v7627 = vadd.f32 %v7474, %v7626
      %v7628 = vpop.f32.mrf.mxu0
      %v7629 = vadd.f32 %v7476, %v7628
      %v7630 = vpop.f32.mrf.mxu0
      %v7631 = vadd.f32 %v7478, %v7630
      %v7632 = vpop.f32.mrf.mxu0
      %v7633 = vadd.f32 %v7480, %v7632
      %7634 = vmatprep.mubr.bf16.mxu0 %v6896
      %7635 = vmatmul.mubr.bf16.gmra.mxu0 %v6892
      %v7636 = vpop.f32.mrf.mxu0
      %v7637 = vadd.f32 %v7484, %v7636
      %v7638 = vpop.f32.mrf.mxu0
      %v7639 = vadd.f32 %v7486, %v7638
      %v7640 = vpop.f32.mrf.mxu0
      %v7641 = vadd.f32 %v7488, %v7640
      %v7642 = vpop.f32.mrf.mxu0
      %v7643 = vadd.f32 %v7490, %v7642
      %7644 = vmatprep.mubr.bf16.mxu0 %v6912
      %7645 = vmatmul.mubr.bf16.gmra.mxu0 %v6908
      %v7646 = vpop.f32.mrf.mxu0
      %v7647 = vadd.f32 %v7494, %v7646
      %v7648 = vpop.f32.mrf.mxu0
      %v7649 = vadd.f32 %v7496, %v7648
      %v7650 = vpop.f32.mrf.mxu0
      %v7651 = vadd.f32 %v7498, %v7650
      %v7652 = vpop.f32.mrf.mxu0
      %v7653 = vadd.f32 %v7500, %v7652
      %7654 = vmatprep.mubr.bf16.mxu0 %v6928
      %7655 = vmatmul.mubr.bf16.gmra.mxu0 %v6924
      %v7656 = vpop.f32.mrf.mxu0
      %v7657 = vadd.f32 %v7504, %v7656
      %v7658 = vpop.f32.mrf.mxu0
      %v7659 = vadd.f32 %v7506, %v7658
      %v7660 = vpop.f32.mrf.mxu0
      %v7661 = vadd.f32 %v7508, %v7660
      %v7662 = vpop.f32.mrf.mxu0
      %v7663 = vadd.f32 %v7510, %v7662
      %7664 = vmatprep.mubr.bf16.mxu0 %v6944
      %7665 = vmatmul.mubr.bf16.gmra.mxu0 %v6940
      %v7666 = vpop.f32.mrf.mxu0
      %v7667 = vadd.f32 %v7514, %v7666
      %v7668 = vpop.f32.mrf.mxu0
      %v7669 = vadd.f32 %v7516, %v7668
      %v7670 = vpop.f32.mrf.mxu0
      %v7671 = vadd.f32 %v7518, %v7670
      %v7672 = vpop.f32.mrf.mxu0
      %v7673 = vadd.f32 %v7520, %v7672
      %7674 = vmatprep.mubr.bf16.mxu0 %v6960
      %7675 = vmatmul.mubr.bf16.gmra.mxu0 %v6956
      %v7676 = vpop.f32.mrf.mxu0
      %v7677 = vadd.f32 %v7524, %v7676
      %v7678 = vpop.f32.mrf.mxu0
      %v7679 = vadd.f32 %v7526, %v7678
      %v7680 = vpop.f32.mrf.mxu0
      %v7681 = vadd.f32 %v7528, %v7680
      %v7682 = vpop.f32.mrf.mxu0
      %v7683 = vadd.f32 %v7530, %v7682
      %7684 = vmatprep.mubr.bf16.mxu0 %v6976
      %7685 = vmatmul.mubr.bf16.gmra.mxu0 %v6972
      %v7686 = vpop.f32.mrf.mxu0
      %v7687 = vadd.f32 %v7534, %v7686
      %v7688 = vpop.f32.mrf.mxu0
      %v7689 = vadd.f32 %v7536, %v7688
      %v7690 = vpop.f32.mrf.mxu0
      %v7691 = vadd.f32 %v7538, %v7690
      %v7692 = vpop.f32.mrf.mxu0
      %v7693 = vadd.f32 %v7540, %v7692
      %7694 = vmatprep.mubr.bf16.mxu0 %v6992
      %7695 = vmatmul.mubr.bf16.gmra.mxu0 %v6988
      %v7696 = vpop.f32.mrf.mxu0
      %v7697 = vadd.f32 %v7544, %v7696
      %v7698 = vpop.f32.mrf.mxu0
      %v7699 = vadd.f32 %v7546, %v7698
      %v7700 = vpop.f32.mrf.mxu0
      %v7701 = vadd.f32 %v7548, %v7700
      %v7702 = vpop.f32.mrf.mxu0
      %v7703 = vadd.f32 %v7550, %v7702
      %7704 = vmatprep.mubr.bf16.mxu0 %v7008
      %7705 = vmatmul.mubr.bf16.gmra.mxu0 %v7004
      %v7706 = vpop.f32.mrf.mxu0
      %v7707 = vadd.f32 %v7554, %v7706
      %v7708 = vpop.f32.mrf.mxu0
      %v7709 = vadd.f32 %v7556, %v7708
      %v7710 = vpop.f32.mrf.mxu0
      %v7711 = vadd.f32 %v7558, %v7710
      %v7712 = vpop.f32.mrf.mxu0
      %v7713 = vadd.f32 %v7560, %v7712
      %7714 = vmatprep.mubr.bf16.mxu0 %v7024
      %7715 = vmatmul.mubr.bf16.gmra.mxu0 %v7020
      %v7716 = vpop.f32.mrf.mxu0
      %v7717 = vadd.f32 %v7564, %v7716
      %v7718 = vpop.f32.mrf.mxu0
      %v7719 = vadd.f32 %v7566, %v7718
      %v7720 = vpop.f32.mrf.mxu0
      %v7721 = vadd.f32 %v7568, %v7720
      %v7722 = vpop.f32.mrf.mxu0
      %v7723 = vadd.f32 %v7570, %v7722
      %7724 = vmatprep.mubr.bf16.mxu0 %v7060
      %7725 = vmatmul.mubr.bf16.gmra.mxu0 %v7051
      %v7726 = vpop.f32.mrf.mxu0
      %v7727 = vadd.f32 %v7574, %v7726
      %v7728 = vpop.f32.mrf.mxu0
      %v7729 = vadd.f32 %v7576, %v7728
      %v7730 = vpop.f32.mrf.mxu0
      %v7731 = vadd.f32 %v7578, %v7730
      %v7732 = vpop.f32.mrf.mxu0
      %v7733 = vadd.f32 %v7580, %v7732
      %7734 = vdwg.mxu0
      %v7735 = vadd.f32 %v6692, %v7617
      %v7736 = vadd.f32 %v6693, %v7619
      %v7737 = vadd.f32 %v6694, %v7621
      %v7738 = vadd.f32 %v6695, %v7623
      %v7739 = vadd.f32 %v6696, %v7627
      %v7740 = vadd.f32 %v6697, %v7629
      %v7741 = vadd.f32 %v6698, %v7631
      %v7742 = vadd.f32 %v6699, %v7633
      %v7743 = vadd.f32 %v6700, %v7637
      %v7744 = vadd.f32 %v6701, %v7639
      %v7745 = vadd.f32 %v6702, %v7641
      %v7746 = vadd.f32 %v6703, %v7643
      %v7747 = vadd.f32 %v6704, %v7647
      %v7748 = vadd.f32 %v6705, %v7649
      %v7749 = vadd.f32 %v6706, %v7651
      %v7750 = vadd.f32 %v6707, %v7653
      %v7751 = vadd.f32 %v6708, %v7657
      %v7752 = vadd.f32 %v6709, %v7659
      %v7753 = vadd.f32 %v6710, %v7661
      %v7754 = vadd.f32 %v6711, %v7663
      %v7755 = vadd.f32 %v6712, %v7667
      %v7756 = vadd.f32 %v6713, %v7669
      %v7757 = vadd.f32 %v6714, %v7671
      %v7758 = vadd.f32 %v6715, %v7673
      %v7759 = vadd.f32 %v6716, %v7677
      %v7760 = vadd.f32 %v6717, %v7679
      %v7761 = vadd.f32 %v6718, %v7681
      %v7762 = vadd.f32 %v6719, %v7683
      %v7763 = vadd.f32 %v6720, %v7687
      %v7764 = vadd.f32 %v6721, %v7689
      %v7765 = vadd.f32 %v6722, %v7691
      %v7766 = vadd.f32 %v6723, %v7693
      %v7767 = vadd.f32 %v6724, %v7697
      %v7768 = vadd.f32 %v6725, %v7699
      %v7769 = vadd.f32 %v6726, %v7701
      %v7770 = vadd.f32 %v6727, %v7703
      %v7771 = vadd.f32 %v6728, %v7707
      %v7772 = vadd.f32 %v6729, %v7709
      %v7773 = vadd.f32 %v6730, %v7711
      %v7774 = vadd.f32 %v6731, %v7713
      %v7775 = vadd.f32 %v6732, %v7717
      %v7776 = vadd.f32 %v6733, %v7719
      %v7777 = vadd.f32 %v6734, %v7721
      %v7778 = vadd.f32 %v6735, %v7723
      %v7779 = vadd.f32 %v6736, %v7727
      %v7780 = vadd.f32 %v6737, %v7729
      %v7781 = vadd.f32 %v6738, %v7731
      %v7782 = vadd.f32 %v6739, %v7733
      %v7783 = vld [vmem:[#allocation2] sm:$0x88]
      %v7784 = vld [vmem:[#allocation2 + $0x8] sm:$0x88]
      %v7785 = vld [vmem:[%s3 + $0xc00] sm:$0xff]
      %v7786 = vld [vmem:[%s3 + $0xc08] sm:$0xff]
      %v7787 = vld [vmem:[%s3 + $0xc10] sm:$0xff]
      %v7788 = vld [vmem:[%s3 + $0xc18] sm:$0xff]
      %v7789 = vld [vmem:[%s3 + $0xc20] sm:$0xff]
      %v7790 = vld [vmem:[%s3 + $0xc28] sm:$0xff]
      %v7791 = vld [vmem:[%s3 + $0xc30] sm:$0xff]
      %v7792 = vld [vmem:[%s3 + $0xc38] sm:$0xff]
      %v7793 = vld [vmem:[%s3 + $0xc40] sm:$0xff]
      %v7794 = vld [vmem:[%s3 + $0xc48] sm:$0xff]
      %v7795 = vld [vmem:[%s3 + $0xc50] sm:$0xff]
      %v7796 = vld [vmem:[%s3 + $0xc58] sm:$0xff]
      %v7797 = vld [vmem:[%s3 + $0xc60] sm:$0xff]
      %v7798 = vld [vmem:[%s3 + $0xc68] sm:$0xff]
      %v7799 = vld [vmem:[%s3 + $0xc70] sm:$0xff]
      %v7800 = vld [vmem:[%s3 + $0xc78] sm:$0xff]
      %v7801 = vld [vmem:[%s3 + $0xc80] sm:$0xff]
      %v7802 = vld [vmem:[%s3 + $0xc88] sm:$0xff]
      %v7803 = vld [vmem:[%s3 + $0xc90] sm:$0xff]
      %v7804 = vld [vmem:[%s3 + $0xc98] sm:$0xff]
      %v7805 = vld [vmem:[%s3 + $0xca0] sm:$0xff]
      %v7806 = vld [vmem:[%s3 + $0xca8] sm:$0xff]
      %v7807 = vld [vmem:[%s3 + $0xcb0] sm:$0xff]
      %v7808 = vld [vmem:[%s3 + $0xcb8] sm:$0xff]
      %v7809 = vld [vmem:[%s3 + $0xcc0] sm:$0xff]
      %v7810 = vld [vmem:[%s3 + $0xcc8] sm:$0xff]
      %v7811 = vld [vmem:[%s3 + $0xcd0] sm:$0xff]
      %v7812 = vld [vmem:[%s3 + $0xcd8] sm:$0xff]
      %v7813 = vld [vmem:[%s3 + $0xce0] sm:$0xff]
      %v7814 = vld [vmem:[%s3 + $0xce8] sm:$0xff]
      %v7815 = vld [vmem:[%s3 + $0xcf0] sm:$0xff]
      %v7816 = vld [vmem:[%s3 + $0xcf8] sm:$0xff]
      %v7817 = vld [vmem:[%s3 + $0xd00] sm:$0xff]
      %v7818 = vld [vmem:[%s3 + $0xd08] sm:$0xff]
      %v7819 = vld [vmem:[%s3 + $0xd10] sm:$0xff]
      %v7820 = vld [vmem:[%s3 + $0xd18] sm:$0xff]
      %v7821 = vld [vmem:[%s3 + $0xd20] sm:$0xff]
      %v7822 = vld [vmem:[%s3 + $0xd28] sm:$0xff]
      %v7823 = vld [vmem:[%s3 + $0xd30] sm:$0xff]
      %v7824 = vld [vmem:[%s3 + $0xd38] sm:$0xff]
      %v7825 = vld [vmem:[%s3 + $0xd40] sm:$0xff]
      %v7826 = vld [vmem:[%s3 + $0xd48] sm:$0xff]
      %v7827 = vld [vmem:[%s3 + $0xd50] sm:$0xff]
      %v7828 = vld [vmem:[%s3 + $0xd58] sm:$0xff]
      %v7829 = vld [vmem:[%s3 + $0xd60] sm:$0xff]
      %v7830 = vld [vmem:[%s3 + $0xd68] sm:$0xff]
      %v7831 = vld [vmem:[%s3 + $0xd70] sm:$0xff]
      %v7832 = vld [vmem:[%s3 + $0xd78] sm:$0xff]
      %v7833 = vld [vmem:[%s3 + $0xd80] sm:$0xff]
      %v7834 = vld [vmem:[%s3 + $0xd88] sm:$0xff]
      %v7835 = vld [vmem:[%s3 + $0xd90] sm:$0xff]
      %v7836 = vld [vmem:[%s3 + $0xd98] sm:$0xff]
      %v7837 = vld [vmem:[%s3 + $0xda0] sm:$0xff]
      %v7838 = vld [vmem:[%s3 + $0xda8] sm:$0xff]
      %v7839 = vld [vmem:[%s3 + $0xdb0] sm:$0xff]
      %v7840 = vld [vmem:[%s3 + $0xdb8] sm:$0xff]
      %v7841 = vld [vmem:[%s3 + $0xdc0] sm:$0xff]
      %v7842 = vld [vmem:[%s3 + $0xdc8] sm:$0xff]
      %v7843 = vld [vmem:[%s3 + $0xdd0] sm:$0xff]
      %v7844 = vld [vmem:[%s3 + $0xdd8] sm:$0xff]
      %v7845 = vld [vmem:[%s3 + $0xde0] sm:$0xff]
      %v7846 = vld [vmem:[%s3 + $0xde8] sm:$0xff]
      %v7847 = vld [vmem:[%s3 + $0xdf0] sm:$0xff]
      %v7848 = vld [vmem:[%s3 + $0xdf8] sm:$0xff]
      %v7851 = vunpack.c.l.b16 %v7783
      %v7852 = vunpack.c.h.b16 %v7783
      %v7853 = vunpack.c.l.b16 %v7784
      %v7854 = vunpack.c.h.b16 %v7784
      %v7855 = vpack.c.b16 %v2002, %v7851
      %v7856 = vpack.c.b16 %v2003, %v7852
      %v7857 = vpack.c.b16 %v2004, %v7853
      %v7858 = vpack.c.b16 %v2005, %v7854
      %vm7859 = vcmask 1044480
      %v7860 = vrot.slane %v7855, 3
      %v7861 = vrot.slane %v2102, 3
      %v7862 = vsel %vm7859, %v7860, %v7861
      %v7863 = vrot.slane %v7856, 3
      %v7864 = vrot.slane %v2103, 3
      %v7865 = vsel %vm7859, %v7863, %v7864
      %v7866 = vrot.slane %v7857, 3
      %v7867 = vrot.slane %v2104, 3
      %v7868 = vsel %vm7859, %v7866, %v7867
      %v7869 = vrot.slane %v7858, 3
      %v7870 = vrot.slane %v2105, 3
      %v7871 = vsel %vm7859, %v7869, %v7870
      %v7872 = vrot.slane %v2106, 3
      %v7873 = vsel %vm7859, %v7861, %v7872
      %v7874 = vrot.slane %v2107, 3
      %v7875 = vsel %vm7859, %v7864, %v7874
      %v7876 = vrot.slane %v2108, 3
      %v7877 = vsel %vm7859, %v7867, %v7876
      %v7878 = vrot.slane %v2109, 3
      %v7879 = vsel %vm7859, %v7870, %v7878
      %v7880 = vrot.slane %v2110, 3
      %v7881 = vsel %vm7859, %v7872, %v7880
      %v7882 = vrot.slane %v2111, 3
      %v7883 = vsel %vm7859, %v7874, %v7882
      %v7884 = vrot.slane %v2112, 3
      %v7885 = vsel %vm7859, %v7876, %v7884
      %v7886 = vrot.slane %v2113, 3
      %v7887 = vsel %vm7859, %v7878, %v7886
      %v7888 = vrot.slane %v2114, 3
      %v7889 = vsel %vm7859, %v7880, %v7888
      %v7890 = vrot.slane %v2115, 3
      %v7891 = vsel %vm7859, %v7882, %v7890
      %v7892 = vrot.slane %v2116, 3
      %v7893 = vsel %vm7859, %v7884, %v7892
      %v7894 = vrot.slane %v2117, 3
      %v7895 = vsel %vm7859, %v7886, %v7894
      %v7896 = vrot.slane %v2118, 3
      %v7897 = vsel %vm7859, %v7888, %v7896
      %v7898 = vrot.slane %v2119, 3
      %v7899 = vsel %vm7859, %v7890, %v7898
      %v7900 = vrot.slane %v2120, 3
      %v7901 = vsel %vm7859, %v7892, %v7900
      %v7902 = vrot.slane %v2121, 3
      %v7903 = vsel %vm7859, %v7894, %v7902
      %v7904 = vrot.slane %v2122, 3
      %v7905 = vsel %vm7859, %v7896, %v7904
      %v7906 = vrot.slane %v2123, 3
      %v7907 = vsel %vm7859, %v7898, %v7906
      %v7908 = vrot.slane %v2124, 3
      %v7909 = vsel %vm7859, %v7900, %v7908
      %v7910 = vrot.slane %v2125, 3
      %v7911 = vsel %vm7859, %v7902, %v7910
      %v7912 = vrot.slane %v2126, 3
      %v7913 = vsel %vm7859, %v7904, %v7912
      %v7914 = vrot.slane %v2127, 3
      %v7915 = vsel %vm7859, %v7906, %v7914
      %v7916 = vrot.slane %v2128, 3
      %v7917 = vsel %vm7859, %v7908, %v7916
      %v7918 = vrot.slane %v2129, 3
      %v7919 = vsel %vm7859, %v7910, %v7918
      %v7920 = vrot.slane %v2130, 3
      %v7921 = vsel %vm7859, %v7912, %v7920
      %v7922 = vrot.slane %v2131, 3
      %v7923 = vsel %vm7859, %v7914, %v7922
      %v7924 = vrot.slane %v2132, 3
      %v7925 = vsel %vm7859, %v7916, %v7924
      %v7926 = vrot.slane %v2133, 3
      %v7927 = vsel %vm7859, %v7918, %v7926
      %v7928 = vrot.slane %v2134, 3
      %v7929 = vsel %vm7859, %v7920, %v7928
      %v7930 = vrot.slane %v2135, 3
      %v7931 = vsel %vm7859, %v7922, %v7930
      %v7932 = vrot.slane %v2136, 3
      %v7933 = vsel %vm7859, %v7924, %v7932
      %v7934 = vrot.slane %v2137, 3
      %v7935 = vsel %vm7859, %v7926, %v7934
      %v7936 = vrot.slane %v2138, 3
      %v7937 = vsel %vm7859, %v7928, %v7936
      %v7938 = vrot.slane %v2139, 3
      %v7939 = vsel %vm7859, %v7930, %v7938
      %v7940 = vrot.slane %v2140, 3
      %v7941 = vsel %vm7859, %v7932, %v7940
      %v7942 = vrot.slane %v2141, 3
      %v7943 = vsel %vm7859, %v7934, %v7942
      %v7944 = vrot.slane %v2142, 3
      %v7945 = vsel %vm7859, %v7936, %v7944
      %v7946 = vrot.slane %v2143, 3
      %v7947 = vsel %vm7859, %v7938, %v7946
      %v7948 = vrot.slane %v2144, 3
      %v7949 = vsel %vm7859, %v7940, %v7948
      %v7950 = vrot.slane %v2145, 3
      %v7951 = vsel %vm7859, %v7942, %v7950
      %v7952 = vrot.slane %v6812, 3
      %v7953 = vsel %vm7859, %v7944, %v7952
      %v7954 = vrot.slane %v6813, 3
      %v7955 = vsel %vm7859, %v7946, %v7954
      %v7956 = vrot.slane %v6814, 3
      %v7957 = vsel %vm7859, %v7948, %v7956
      %v7958 = vrot.slane %v6815, 3
      %v7959 = vsel %vm7859, %v7950, %v7958
      %v8072 = vunpack.c.l.b16 %v7785
      %v8073 = vunpack.c.h.b16 %v7785
      %v8074 = vunpack.c.l.b16 %v7786
      %v8075 = vunpack.c.h.b16 %v7786
      %v8076 = vunpack.c.l.b16 %v7787
      %v8077 = vunpack.c.h.b16 %v7787
      %v8078 = vunpack.c.l.b16 %v7788
      %v8079 = vunpack.c.h.b16 %v7788
      %v8080 = vunpack.c.l.b16 %v7789
      %v8081 = vunpack.c.h.b16 %v7789
      %v8082 = vunpack.c.l.b16 %v7790
      %v8083 = vunpack.c.h.b16 %v7790
      %v8084 = vunpack.c.l.b16 %v7791
      %v8085 = vunpack.c.h.b16 %v7791
      %v8086 = vunpack.c.l.b16 %v7792
      %v8087 = vunpack.c.h.b16 %v7792
      %v8088 = vunpack.c.l.b16 %v7793
      %v8089 = vunpack.c.h.b16 %v7793
      %v8090 = vunpack.c.l.b16 %v7794
      %v8091 = vunpack.c.h.b16 %v7794
      %v8092 = vunpack.c.l.b16 %v7795
      %v8093 = vunpack.c.h.b16 %v7795
      %v8094 = vunpack.c.l.b16 %v7796
      %v8095 = vunpack.c.h.b16 %v7796
      %v8096 = vunpack.c.l.b16 %v7797
      %v8097 = vunpack.c.h.b16 %v7797
      %v8098 = vunpack.c.l.b16 %v7798
      %v8099 = vunpack.c.h.b16 %v7798
      %v8100 = vunpack.c.l.b16 %v7799
      %v8101 = vunpack.c.h.b16 %v7799
      %v8102 = vunpack.c.l.b16 %v7800
      %v8103 = vunpack.c.h.b16 %v7800
      %v8104 = vunpack.c.l.b16 %v7801
      %v8105 = vunpack.c.h.b16 %v7801
      %v8106 = vunpack.c.l.b16 %v7802
      %v8107 = vunpack.c.h.b16 %v7802
      %v8108 = vunpack.c.l.b16 %v7803
      %v8109 = vunpack.c.h.b16 %v7803
      %v8110 = vunpack.c.l.b16 %v7804
      %v8111 = vunpack.c.h.b16 %v7804
      %v8112 = vunpack.c.l.b16 %v7805
      %v8113 = vunpack.c.h.b16 %v7805
      %v8114 = vunpack.c.l.b16 %v7806
      %v8115 = vunpack.c.h.b16 %v7806
      %v8116 = vunpack.c.l.b16 %v7807
      %v8117 = vunpack.c.h.b16 %v7807
      %v8118 = vunpack.c.l.b16 %v7808
      %v8119 = vunpack.c.h.b16 %v7808
      %v8120 = vunpack.c.l.b16 %v7809
      %v8121 = vunpack.c.h.b16 %v7809
      %v8122 = vunpack.c.l.b16 %v7810
      %v8123 = vunpack.c.h.b16 %v7810
      %v8124 = vunpack.c.l.b16 %v7811
      %v8125 = vunpack.c.h.b16 %v7811
      %v8126 = vunpack.c.l.b16 %v7812
      %v8127 = vunpack.c.h.b16 %v7812
      %v8128 = vunpack.c.l.b16 %v7813
      %v8129 = vunpack.c.h.b16 %v7813
      %v8130 = vunpack.c.l.b16 %v7814
      %v8131 = vunpack.c.h.b16 %v7814
      %v8132 = vunpack.c.l.b16 %v7815
      %v8133 = vunpack.c.h.b16 %v7815
      %v8134 = vunpack.c.l.b16 %v7816
      %v8135 = vunpack.c.h.b16 %v7816
      %v8136 = vunpack.c.l.b16 %v7817
      %v8137 = vunpack.c.h.b16 %v7817
      %v8138 = vunpack.c.l.b16 %v7818
      %v8139 = vunpack.c.h.b16 %v7818
      %v8140 = vunpack.c.l.b16 %v7819
      %v8141 = vunpack.c.h.b16 %v7819
      %v8142 = vunpack.c.l.b16 %v7820
      %v8143 = vunpack.c.h.b16 %v7820
      %v8144 = vunpack.c.l.b16 %v7821
      %v8145 = vunpack.c.h.b16 %v7821
      %v8146 = vunpack.c.l.b16 %v7822
      %v8147 = vunpack.c.h.b16 %v7822
      %v8148 = vunpack.c.l.b16 %v7823
      %v8149 = vunpack.c.h.b16 %v7823
      %v8150 = vunpack.c.l.b16 %v7824
      %v8151 = vunpack.c.h.b16 %v7824
      %v8152 = vunpack.c.l.b16 %v7825
      %v8153 = vunpack.c.h.b16 %v7825
      %v8154 = vunpack.c.l.b16 %v7826
      %v8155 = vunpack.c.h.b16 %v7826
      %v8156 = vunpack.c.l.b16 %v7827
      %v8157 = vunpack.c.h.b16 %v7827
      %v8158 = vunpack.c.l.b16 %v7828
      %v8159 = vunpack.c.h.b16 %v7828
      %v8160 = vunpack.c.l.b16 %v7829
      %v8161 = vunpack.c.h.b16 %v7829
      %v8162 = vunpack.c.l.b16 %v7830
      %v8163 = vunpack.c.h.b16 %v7830
      %v8164 = vunpack.c.l.b16 %v7831
      %v8165 = vunpack.c.h.b16 %v7831
      %v8166 = vunpack.c.l.b16 %v7832
      %v8167 = vunpack.c.h.b16 %v7832
      %v8168 = vunpack.c.l.b16 %v7833
      %v8169 = vunpack.c.h.b16 %v7833
      %v8170 = vunpack.c.l.b16 %v7834
      %v8171 = vunpack.c.h.b16 %v7834
      %v8172 = vunpack.c.l.b16 %v7835
      %v8173 = vunpack.c.h.b16 %v7835
      %v8174 = vunpack.c.l.b16 %v7836
      %v8175 = vunpack.c.h.b16 %v7836
      %v8176 = vunpack.c.l.b16 %v7837
      %v8177 = vunpack.c.h.b16 %v7837
      %v8178 = vunpack.c.l.b16 %v7838
      %v8179 = vunpack.c.h.b16 %v7838
      %v8180 = vunpack.c.l.b16 %v7839
      %v8181 = vunpack.c.h.b16 %v7839
      %v8182 = vunpack.c.l.b16 %v7840
      %v8183 = vunpack.c.h.b16 %v7840
      %v8184 = vunpack.c.l.b16 %v7841
      %v8185 = vunpack.c.h.b16 %v7841
      %v8186 = vunpack.c.l.b16 %v7842
      %v8187 = vunpack.c.h.b16 %v7842
      %v8188 = vunpack.c.l.b16 %v7843
      %v8189 = vunpack.c.h.b16 %v7843
      %v8190 = vunpack.c.l.b16 %v7844
      %v8191 = vunpack.c.h.b16 %v7844
      %v8192 = vunpack.c.l.b16 %v7845
      %v8193 = vunpack.c.h.b16 %v7845
      %v8194 = vunpack.c.l.b16 %v7846
      %v8195 = vunpack.c.h.b16 %v7846
      %v8196 = vunpack.c.l.b16 %v7847
      %v8197 = vunpack.c.h.b16 %v7847
      %v8198 = vunpack.c.l.b16 %v7848
      %v8199 = vunpack.c.h.b16 %v7848
      %v8200 = vpack.c.b16 %v8074, %v8072
      %v8201 = vpack.c.b16 %v8075, %v8073
      %v8202 = vpack.c.b16 %v8078, %v8076
      %v8203 = vpack.c.b16 %v8079, %v8077
      %v8204 = vpack.c.b16 %v8082, %v8080
      %v8205 = vpack.c.b16 %v8083, %v8081
      %v8206 = vpack.c.b16 %v8086, %v8084
      %v8207 = vpack.c.b16 %v8087, %v8085
      %v8208 = vpack.c.b16 %v8090, %v8088
      %v8209 = vpack.c.b16 %v8091, %v8089
      %v8210 = vpack.c.b16 %v8094, %v8092
      %v8211 = vpack.c.b16 %v8095, %v8093
      %v8212 = vpack.c.b16 %v8098, %v8096
      %v8213 = vpack.c.b16 %v8099, %v8097
      %v8214 = vpack.c.b16 %v8102, %v8100
      %v8215 = vpack.c.b16 %v8103, %v8101
      %v8216 = vpack.c.b16 %v8106, %v8104
      %v8217 = vpack.c.b16 %v8107, %v8105
      %v8218 = vpack.c.b16 %v8110, %v8108
      %v8219 = vpack.c.b16 %v8111, %v8109
      %v8220 = vpack.c.b16 %v8114, %v8112
      %v8221 = vpack.c.b16 %v8115, %v8113
      %v8222 = vpack.c.b16 %v8118, %v8116
      %v8223 = vpack.c.b16 %v8119, %v8117
      %v8224 = vpack.c.b16 %v8122, %v8120
      %v8225 = vpack.c.b16 %v8123, %v8121
      %v8226 = vpack.c.b16 %v8126, %v8124
      %v8227 = vpack.c.b16 %v8127, %v8125
      %v8228 = vpack.c.b16 %v8130, %v8128
      %v8229 = vpack.c.b16 %v8131, %v8129
      %v8230 = vpack.c.b16 %v8134, %v8132
      %v8231 = vpack.c.b16 %v8135, %v8133
      %v8232 = vpack.c.b16 %v8138, %v8136
      %v8233 = vpack.c.b16 %v8139, %v8137
      %v8234 = vpack.c.b16 %v8142, %v8140
      %v8235 = vpack.c.b16 %v8143, %v8141
      %v8236 = vpack.c.b16 %v8146, %v8144
      %v8237 = vpack.c.b16 %v8147, %v8145
      %v8238 = vpack.c.b16 %v8150, %v8148
      %v8239 = vpack.c.b16 %v8151, %v8149
      %v8240 = vpack.c.b16 %v8154, %v8152
      %v8241 = vpack.c.b16 %v8155, %v8153
      %v8242 = vpack.c.b16 %v8158, %v8156
      %v8243 = vpack.c.b16 %v8159, %v8157
      %v8244 = vpack.c.b16 %v8162, %v8160
      %v8245 = vpack.c.b16 %v8163, %v8161
      %v8246 = vpack.c.b16 %v8166, %v8164
      %v8247 = vpack.c.b16 %v8167, %v8165
      %v8248 = vpack.c.b16 %v8170, %v8168
      %v8249 = vpack.c.b16 %v8171, %v8169
      %v8250 = vpack.c.b16 %v8174, %v8172
      %v8251 = vpack.c.b16 %v8175, %v8173
      %v8252 = vpack.c.b16 %v8178, %v8176
      %v8253 = vpack.c.b16 %v8179, %v8177
      %v8254 = vpack.c.b16 %v8182, %v8180
      %v8255 = vpack.c.b16 %v8183, %v8181
      %v8256 = vpack.c.b16 %v8186, %v8184
      %v8257 = vpack.c.b16 %v8187, %v8185
      %v8258 = vpack.c.b16 %v8190, %v8188
      %v8259 = vpack.c.b16 %v8191, %v8189
      %v8260 = vpack.c.b16 %v8194, %v8192
      %v8261 = vpack.c.b16 %v8195, %v8193
      %v8262 = vpack.c.b16 %v8198, %v8196
      %v8263 = vpack.c.b16 %v8199, %v8197
      %8328 = vmatprep.subr.bf16.mxu0 %v8215
      %8329 = vmatpush1.bf16.msra.mxu0 %v8214
      %8330 = vmatprep.subr.bf16.mxu0 %v8213
      %8331 = vmatpush1.bf16.msra.mxu0 %v8212
      %8332 = vmatprep.subr.bf16.mxu0 %v8211
      %8333 = vmatpush1.bf16.msra.mxu0 %v8210
      %8334 = vmatprep.subr.bf16.mxu0 %v8209
      %8335 = vmatpush1.bf16.msra.mxu0 %v8208
      %8336 = vmatprep.subr.bf16.mxu0 %v8207
      %8337 = vmatpush1.bf16.msra.mxu0 %v8206
      %8338 = vmatprep.subr.bf16.mxu0 %v8205
      %8339 = vmatpush1.bf16.msra.mxu0 %v8204
      %8340 = vmatprep.subr.bf16.mxu0 %v8203
      %8341 = vmatpush1.bf16.msra.mxu0 %v8202
      %8342 = vmatprep.subr.bf16.mxu0 %v8201
      %8343 = vmatpush1.bf16.msra.mxu0 %v8200
      %8344 = vmatprep.subr.bf16.mxu0 %v8231
      %8345 = vmatpush2.bf16.msra.mxu0 %v8230
      %8346 = vmatprep.subr.bf16.mxu0 %v8229
      %8347 = vmatpush2.bf16.msra.mxu0 %v8228
      %8348 = vmatprep.subr.bf16.mxu0 %v8227
      %8349 = vmatpush2.bf16.msra.mxu0 %v8226
      %8350 = vmatprep.subr.bf16.mxu0 %v8225
      %8351 = vmatpush2.bf16.msra.mxu0 %v8224
      %8352 = vmatprep.subr.bf16.mxu0 %v8223
      %8353 = vmatpush2.bf16.msra.mxu0 %v8222
      %8354 = vmatprep.subr.bf16.mxu0 %v8221
      %8355 = vmatpush2.bf16.msra.mxu0 %v8220
      %8356 = vmatprep.subr.bf16.mxu0 %v8219
      %8357 = vmatpush2.bf16.msra.mxu0 %v8218
      %8358 = vmatprep.subr.bf16.mxu0 %v8217
      %8359 = vmatpush2.bf16.msra.mxu0 %v8216
      %8360 = vmatprep.mubr.bf16.mxu0 %v7865
      %8361 = vmatmul.mubr.bf16.gmra.mxu0 %v7862
      %v8362 = vpop.f32.mrf.mxu0
      %v8363 = vadd.f32 0.0, %v8362
      %v8364 = vpop.f32.mrf.mxu0
      %v8365 = vadd.f32 0.0, %v8364
      %v8366 = vpop.f32.mrf.mxu0
      %v8367 = vadd.f32 0.0, %v8366
      %v8368 = vpop.f32.mrf.mxu0
      %v8369 = vadd.f32 0.0, %v8368
      %8370 = vmatprep.mubr.bf16.mxu0 %v7875
      %8371 = vmatmul.mubr.bf16.gmra.mxu0 %v7873
      %v8372 = vpop.f32.mrf.mxu0
      %v8373 = vadd.f32 0.0, %v8372
      %v8374 = vpop.f32.mrf.mxu0
      %v8375 = vadd.f32 0.0, %v8374
      %v8376 = vpop.f32.mrf.mxu0
      %v8377 = vadd.f32 0.0, %v8376
      %v8378 = vpop.f32.mrf.mxu0
      %v8379 = vadd.f32 0.0, %v8378
      %8380 = vmatprep.mubr.bf16.mxu0 %v7883
      %8381 = vmatmul.mubr.bf16.gmra.mxu0 %v7881
      %v8382 = vpop.f32.mrf.mxu0
      %v8383 = vadd.f32 0.0, %v8382
      %v8384 = vpop.f32.mrf.mxu0
      %v8385 = vadd.f32 0.0, %v8384
      %v8386 = vpop.f32.mrf.mxu0
      %v8387 = vadd.f32 0.0, %v8386
      %v8388 = vpop.f32.mrf.mxu0
      %v8389 = vadd.f32 0.0, %v8388
      %8390 = vmatprep.mubr.bf16.mxu0 %v7891
      %8391 = vmatmul.mubr.bf16.gmra.mxu0 %v7889
      %v8392 = vpop.f32.mrf.mxu0
      %v8393 = vadd.f32 0.0, %v8392
      %v8394 = vpop.f32.mrf.mxu0
      %v8395 = vadd.f32 0.0, %v8394
      %v8396 = vpop.f32.mrf.mxu0
      %v8397 = vadd.f32 0.0, %v8396
      %v8398 = vpop.f32.mrf.mxu0
      %v8399 = vadd.f32 0.0, %v8398
      %8400 = vmatprep.mubr.bf16.mxu0 %v7899
      %8401 = vmatmul.mubr.bf16.gmra.mxu0 %v7897
      %v8402 = vpop.f32.mrf.mxu0
      %v8403 = vadd.f32 0.0, %v8402
      %v8404 = vpop.f32.mrf.mxu0
      %v8405 = vadd.f32 0.0, %v8404
      %v8406 = vpop.f32.mrf.mxu0
      %v8407 = vadd.f32 0.0, %v8406
      %v8408 = vpop.f32.mrf.mxu0
      %v8409 = vadd.f32 0.0, %v8408
      %8410 = vmatprep.mubr.bf16.mxu0 %v7907
      %8411 = vmatmul.mubr.bf16.gmra.mxu0 %v7905
      %v8412 = vpop.f32.mrf.mxu0
      %v8413 = vadd.f32 0.0, %v8412
      %v8414 = vpop.f32.mrf.mxu0
      %v8415 = vadd.f32 0.0, %v8414
      %v8416 = vpop.f32.mrf.mxu0
      %v8417 = vadd.f32 0.0, %v8416
      %v8418 = vpop.f32.mrf.mxu0
      %v8419 = vadd.f32 0.0, %v8418
      %8420 = vmatprep.mubr.bf16.mxu0 %v7915
      %8421 = vmatmul.mubr.bf16.gmra.mxu0 %v7913
      %v8422 = vpop.f32.mrf.mxu0
      %v8423 = vadd.f32 0.0, %v8422
      %v8424 = vpop.f32.mrf.mxu0
      %v8425 = vadd.f32 0.0, %v8424
      %v8426 = vpop.f32.mrf.mxu0
      %v8427 = vadd.f32 0.0, %v8426
      %v8428 = vpop.f32.mrf.mxu0
      %v8429 = vadd.f32 0.0, %v8428
      %8430 = vmatprep.mubr.bf16.mxu0 %v7923
      %8431 = vmatmul.mubr.bf16.gmra.mxu0 %v7921
      %v8432 = vpop.f32.mrf.mxu0
      %v8433 = vadd.f32 0.0, %v8432
      %v8434 = vpop.f32.mrf.mxu0
      %v8435 = vadd.f32 0.0, %v8434
      %v8436 = vpop.f32.mrf.mxu0
      %v8437 = vadd.f32 0.0, %v8436
      %v8438 = vpop.f32.mrf.mxu0
      %v8439 = vadd.f32 0.0, %v8438
      %8440 = vmatprep.mubr.bf16.mxu0 %v7931
      %8441 = vmatmul.mubr.bf16.gmra.mxu0 %v7929
      %v8442 = vpop.f32.mrf.mxu0
      %v8443 = vadd.f32 0.0, %v8442
      %v8444 = vpop.f32.mrf.mxu0
      %v8445 = vadd.f32 0.0, %v8444
      %v8446 = vpop.f32.mrf.mxu0
      %v8447 = vadd.f32 0.0, %v8446
      %v8448 = vpop.f32.mrf.mxu0
      %v8449 = vadd.f32 0.0, %v8448
      %8450 = vmatprep.mubr.bf16.mxu0 %v7939
      %8451 = vmatmul.mubr.bf16.gmra.mxu0 %v7937
      %v8452 = vpop.f32.mrf.mxu0
      %v8453 = vadd.f32 0.0, %v8452
      %v8454 = vpop.f32.mrf.mxu0
      %v8455 = vadd.f32 0.0, %v8454
      %v8456 = vpop.f32.mrf.mxu0
      %v8457 = vadd.f32 0.0, %v8456
      %v8458 = vpop.f32.mrf.mxu0
      %v8459 = vadd.f32 0.0, %v8458
      %8460 = vmatprep.mubr.bf16.mxu0 %v7947
      %8461 = vmatmul.mubr.bf16.gmra.mxu0 %v7945
      %v8462 = vpop.f32.mrf.mxu0
      %v8463 = vadd.f32 0.0, %v8462
      %v8464 = vpop.f32.mrf.mxu0
      %v8465 = vadd.f32 0.0, %v8464
      %v8466 = vpop.f32.mrf.mxu0
      %v8467 = vadd.f32 0.0, %v8466
      %v8468 = vpop.f32.mrf.mxu0
      %v8469 = vadd.f32 0.0, %v8468
      %8470 = vmatprep.mubr.bf16.mxu0 %v7955
      %8471 = vmatmul.mubr.bf16.gmra.mxu0 %v7953
      %v8472 = vpop.f32.mrf.mxu0
      %v8473 = vadd.f32 0.0, %v8472
      %v8474 = vpop.f32.mrf.mxu0
      %v8475 = vadd.f32 0.0, %v8474
      %v8476 = vpop.f32.mrf.mxu0
      %v8477 = vadd.f32 0.0, %v8476
      %v8478 = vpop.f32.mrf.mxu0
      %v8479 = vadd.f32 0.0, %v8478
      %8480 = vdwg.mxu0
      %8481 = vmatprep.subr.bf16.mxu0 %v8247
      %8482 = vmatpush1.bf16.msra.mxu0 %v8246
      %8483 = vmatprep.subr.bf16.mxu0 %v8245
      %8484 = vmatpush1.bf16.msra.mxu0 %v8244
      %8485 = vmatprep.subr.bf16.mxu0 %v8243
      %8486 = vmatpush1.bf16.msra.mxu0 %v8242
      %8487 = vmatprep.subr.bf16.mxu0 %v8241
      %8488 = vmatpush1.bf16.msra.mxu0 %v8240
      %8489 = vmatprep.subr.bf16.mxu0 %v8239
      %8490 = vmatpush1.bf16.msra.mxu0 %v8238
      %8491 = vmatprep.subr.bf16.mxu0 %v8237
      %8492 = vmatpush1.bf16.msra.mxu0 %v8236
      %8493 = vmatprep.subr.bf16.mxu0 %v8235
      %8494 = vmatpush1.bf16.msra.mxu0 %v8234
      %8495 = vmatprep.subr.bf16.mxu0 %v8233
      %8496 = vmatpush1.bf16.msra.mxu0 %v8232
      %8497 = vmatprep.subr.bf16.mxu0 %v8263
      %8498 = vmatpush2.bf16.msra.mxu0 %v8262
      %8499 = vmatprep.subr.bf16.mxu0 %v8261
      %8500 = vmatpush2.bf16.msra.mxu0 %v8260
      %8501 = vmatprep.subr.bf16.mxu0 %v8259
      %8502 = vmatpush2.bf16.msra.mxu0 %v8258
      %8503 = vmatprep.subr.bf16.mxu0 %v8257
      %8504 = vmatpush2.bf16.msra.mxu0 %v8256
      %8505 = vmatprep.subr.bf16.mxu0 %v8255
      %8506 = vmatpush2.bf16.msra.mxu0 %v8254
      %8507 = vmatprep.subr.bf16.mxu0 %v8253
      %8508 = vmatpush2.bf16.msra.mxu0 %v8252
      %8509 = vmatprep.subr.bf16.mxu0 %v8251
      %8510 = vmatpush2.bf16.msra.mxu0 %v8250
      %8511 = vmatprep.subr.bf16.mxu0 %v8249
      %8512 = vmatpush2.bf16.msra.mxu0 %v8248
      %8513 = vmatprep.mubr.bf16.mxu0 %v7871
      %8514 = vmatmul.mubr.bf16.gmra.mxu0 %v7868
      %v8515 = vpop.f32.mrf.mxu0
      %v8516 = vadd.f32 %v8363, %v8515
      %v8517 = vpop.f32.mrf.mxu0
      %v8518 = vadd.f32 %v8365, %v8517
      %v8519 = vpop.f32.mrf.mxu0
      %v8520 = vadd.f32 %v8367, %v8519
      %v8521 = vpop.f32.mrf.mxu0
      %v8522 = vadd.f32 %v8369, %v8521
      %8523 = vmatprep.mubr.bf16.mxu0 %v7879
      %8524 = vmatmul.mubr.bf16.gmra.mxu0 %v7877
      %v8525 = vpop.f32.mrf.mxu0
      %v8526 = vadd.f32 %v8373, %v8525
      %v8527 = vpop.f32.mrf.mxu0
      %v8528 = vadd.f32 %v8375, %v8527
      %v8529 = vpop.f32.mrf.mxu0
      %v8530 = vadd.f32 %v8377, %v8529
      %v8531 = vpop.f32.mrf.mxu0
      %v8532 = vadd.f32 %v8379, %v8531
      %8533 = vmatprep.mubr.bf16.mxu0 %v7887
      %8534 = vmatmul.mubr.bf16.gmra.mxu0 %v7885
      %v8535 = vpop.f32.mrf.mxu0
      %v8536 = vadd.f32 %v8383, %v8535
      %v8537 = vpop.f32.mrf.mxu0
      %v8538 = vadd.f32 %v8385, %v8537
      %v8539 = vpop.f32.mrf.mxu0
      %v8540 = vadd.f32 %v8387, %v8539
      %v8541 = vpop.f32.mrf.mxu0
      %v8542 = vadd.f32 %v8389, %v8541
      %8543 = vmatprep.mubr.bf16.mxu0 %v7895
      %8544 = vmatmul.mubr.bf16.gmra.mxu0 %v7893
      %v8545 = vpop.f32.mrf.mxu0
      %v8546 = vadd.f32 %v8393, %v8545
      %v8547 = vpop.f32.mrf.mxu0
      %v8548 = vadd.f32 %v8395, %v8547
      %v8549 = vpop.f32.mrf.mxu0
      %v8550 = vadd.f32 %v8397, %v8549
      %v8551 = vpop.f32.mrf.mxu0
      %v8552 = vadd.f32 %v8399, %v8551
      %8553 = vmatprep.mubr.bf16.mxu0 %v7903
      %8554 = vmatmul.mubr.bf16.gmra.mxu0 %v7901
      %v8555 = vpop.f32.mrf.mxu0
      %v8556 = vadd.f32 %v8403, %v8555
      %v8557 = vpop.f32.mrf.mxu0
      %v8558 = vadd.f32 %v8405, %v8557
      %v8559 = vpop.f32.mrf.mxu0
      %v8560 = vadd.f32 %v8407, %v8559
      %v8561 = vpop.f32.mrf.mxu0
      %v8562 = vadd.f32 %v8409, %v8561
      %8563 = vmatprep.mubr.bf16.mxu0 %v7911
      %8564 = vmatmul.mubr.bf16.gmra.mxu0 %v7909
      %v8565 = vpop.f32.mrf.mxu0
      %v8566 = vadd.f32 %v8413, %v8565
      %v8567 = vpop.f32.mrf.mxu0
      %v8568 = vadd.f32 %v8415, %v8567
      %v8569 = vpop.f32.mrf.mxu0
      %v8570 = vadd.f32 %v8417, %v8569
      %v8571 = vpop.f32.mrf.mxu0
      %v8572 = vadd.f32 %v8419, %v8571
      %8573 = vmatprep.mubr.bf16.mxu0 %v7919
      %8574 = vmatmul.mubr.bf16.gmra.mxu0 %v7917
      %v8575 = vpop.f32.mrf.mxu0
      %v8576 = vadd.f32 %v8423, %v8575
      %v8577 = vpop.f32.mrf.mxu0
      %v8578 = vadd.f32 %v8425, %v8577
      %v8579 = vpop.f32.mrf.mxu0
      %v8580 = vadd.f32 %v8427, %v8579
      %v8581 = vpop.f32.mrf.mxu0
      %v8582 = vadd.f32 %v8429, %v8581
      %8583 = vmatprep.mubr.bf16.mxu0 %v7927
      %8584 = vmatmul.mubr.bf16.gmra.mxu0 %v7925
      %v8585 = vpop.f32.mrf.mxu0
      %v8586 = vadd.f32 %v8433, %v8585
      %v8587 = vpop.f32.mrf.mxu0
      %v8588 = vadd.f32 %v8435, %v8587
      %v8589 = vpop.f32.mrf.mxu0
      %v8590 = vadd.f32 %v8437, %v8589
      %v8591 = vpop.f32.mrf.mxu0
      %v8592 = vadd.f32 %v8439, %v8591
      %8593 = vmatprep.mubr.bf16.mxu0 %v7935
      %8594 = vmatmul.mubr.bf16.gmra.mxu0 %v7933
      %v8595 = vpop.f32.mrf.mxu0
      %v8596 = vadd.f32 %v8443, %v8595
      %v8597 = vpop.f32.mrf.mxu0
      %v8598 = vadd.f32 %v8445, %v8597
      %v8599 = vpop.f32.mrf.mxu0
      %v8600 = vadd.f32 %v8447, %v8599
      %v8601 = vpop.f32.mrf.mxu0
      %v8602 = vadd.f32 %v8449, %v8601
      %8603 = vmatprep.mubr.bf16.mxu0 %v7943
      %8604 = vmatmul.mubr.bf16.gmra.mxu0 %v7941
      %v8605 = vpop.f32.mrf.mxu0
      %v8606 = vadd.f32 %v8453, %v8605
      %v8607 = vpop.f32.mrf.mxu0
      %v8608 = vadd.f32 %v8455, %v8607
      %v8609 = vpop.f32.mrf.mxu0
      %v8610 = vadd.f32 %v8457, %v8609
      %v8611 = vpop.f32.mrf.mxu0
      %v8612 = vadd.f32 %v8459, %v8611
      %8613 = vmatprep.mubr.bf16.mxu0 %v7951
      %8614 = vmatmul.mubr.bf16.gmra.mxu0 %v7949
      %v8615 = vpop.f32.mrf.mxu0
      %v8616 = vadd.f32 %v8463, %v8615
      %v8617 = vpop.f32.mrf.mxu0
      %v8618 = vadd.f32 %v8465, %v8617
      %v8619 = vpop.f32.mrf.mxu0
      %v8620 = vadd.f32 %v8467, %v8619
      %v8621 = vpop.f32.mrf.mxu0
      %v8622 = vadd.f32 %v8469, %v8621
      %8623 = vmatprep.mubr.bf16.mxu0 %v7959
      %8624 = vmatmul.mubr.bf16.gmra.mxu0 %v7957
      %v8625 = vpop.f32.mrf.mxu0
      %v8626 = vadd.f32 %v8473, %v8625
      %v8627 = vpop.f32.mrf.mxu0
      %v8628 = vadd.f32 %v8475, %v8627
      %v8629 = vpop.f32.mrf.mxu0
      %v8630 = vadd.f32 %v8477, %v8629
      %v8631 = vpop.f32.mrf.mxu0
      %v8632 = vadd.f32 %v8479, %v8631
      %8633 = vdwg.mxu0
      %v8634 = vadd.f32 %v7735, %v8516
      %v8635 = vadd.f32 %v7736, %v8518
      %v8636 = vadd.f32 %v7737, %v8520
      %v8637 = vadd.f32 %v7738, %v8522
      %v8638 = vadd.f32 %v7739, %v8526
      %v8639 = vadd.f32 %v7740, %v8528
      %v8640 = vadd.f32 %v7741, %v8530
      %v8641 = vadd.f32 %v7742, %v8532
      %v8642 = vadd.f32 %v7743, %v8536
      %v8643 = vadd.f32 %v7744, %v8538
      %v8644 = vadd.f32 %v7745, %v8540
      %v8645 = vadd.f32 %v7746, %v8542
      %v8646 = vadd.f32 %v7747, %v8546
      %v8647 = vadd.f32 %v7748, %v8548
      %v8648 = vadd.f32 %v7749, %v8550
      %v8649 = vadd.f32 %v7750, %v8552
      %v8650 = vadd.f32 %v7751, %v8556
      %v8651 = vadd.f32 %v7752, %v8558
      %v8652 = vadd.f32 %v7753, %v8560
      %v8653 = vadd.f32 %v7754, %v8562
      %v8654 = vadd.f32 %v7755, %v8566
      %v8655 = vadd.f32 %v7756, %v8568
      %v8656 = vadd.f32 %v7757, %v8570
      %v8657 = vadd.f32 %v7758, %v8572
      %v8658 = vadd.f32 %v7759, %v8576
      %v8659 = vadd.f32 %v7760, %v8578
      %v8660 = vadd.f32 %v7761, %v8580
      %v8661 = vadd.f32 %v7762, %v8582
      %v8662 = vadd.f32 %v7763, %v8586
      %v8663 = vadd.f32 %v7764, %v8588
      %v8664 = vadd.f32 %v7765, %v8590
      %v8665 = vadd.f32 %v7766, %v8592
      %v8666 = vadd.f32 %v7767, %v8596
      %v8667 = vadd.f32 %v7768, %v8598
      %v8668 = vadd.f32 %v7769, %v8600
      %v8669 = vadd.f32 %v7770, %v8602
      %v8670 = vadd.f32 %v7771, %v8606
      %v8671 = vadd.f32 %v7772, %v8608
      %v8672 = vadd.f32 %v7773, %v8610
      %v8673 = vadd.f32 %v7774, %v8612
      %v8674 = vadd.f32 %v7775, %v8616
      %v8675 = vadd.f32 %v7776, %v8618
      %v8676 = vadd.f32 %v7777, %v8620
      %v8677 = vadd.f32 %v7778, %v8622
      %v8678 = vadd.f32 %v7779, %v8626
      %v8679 = vadd.f32 %v7780, %v8628
      %v8680 = vadd.f32 %v7781, %v8630
      %v8681 = vadd.f32 %v7782, %v8632
      %v8682 = vld [vmem:[%s4] sm:$0x3]
      %v8684 = vlaneseq
      %v8685 = vshrl.u32 %v8684, 7
      %v8686 = vsub.s32 0, %v8685
      %v8687 = vrot.slane %v8682, %v8686
      %v8688 = vlaneseq
      %v8689 = vshrl.u32 %v8688, 7
      %v8690 = vsub.s32 1, %v8689
      %v8691 = vrot.slane %v8682, %v8690
      %v8694 = vadd.f32 %v8634, %v8687
      %v8695 = vadd.f32 %v8635, %v8691
      %v8696 = vadd.f32 %v8636, %v8687
      %v8697 = vadd.f32 %v8637, %v8691
      %v8698 = vadd.f32 %v8638, %v8687
      %v8699 = vadd.f32 %v8639, %v8691
      %v8700 = vadd.f32 %v8640, %v8687
      %v8701 = vadd.f32 %v8641, %v8691
      %v8702 = vadd.f32 %v8642, %v8687
      %v8703 = vadd.f32 %v8643, %v8691
      %v8704 = vadd.f32 %v8644, %v8687
      %v8705 = vadd.f32 %v8645, %v8691
      %v8706 = vadd.f32 %v8646, %v8687
      %v8707 = vadd.f32 %v8647, %v8691
      %v8708 = vadd.f32 %v8648, %v8687
      %v8709 = vadd.f32 %v8649, %v8691
      %v8710 = vadd.f32 %v8650, %v8687
      %v8711 = vadd.f32 %v8651, %v8691
      %v8712 = vadd.f32 %v8652, %v8687
      %v8713 = vadd.f32 %v8653, %v8691
      %v8714 = vadd.f32 %v8654, %v8687
      %v8715 = vadd.f32 %v8655, %v8691
      %v8716 = vadd.f32 %v8656, %v8687
      %v8717 = vadd.f32 %v8657, %v8691
      %v8718 = vadd.f32 %v8658, %v8687
      %v8719 = vadd.f32 %v8659, %v8691
      %v8720 = vadd.f32 %v8660, %v8687
      %v8721 = vadd.f32 %v8661, %v8691
      %v8722 = vadd.f32 %v8662, %v8687
      %v8723 = vadd.f32 %v8663, %v8691
      %v8724 = vadd.f32 %v8664, %v8687
      %v8725 = vadd.f32 %v8665, %v8691
      %v8726 = vadd.f32 %v8666, %v8687
      %v8727 = vadd.f32 %v8667, %v8691
      %v8728 = vadd.f32 %v8668, %v8687
      %v8729 = vadd.f32 %v8669, %v8691
      %v8730 = vadd.f32 %v8670, %v8687
      %v8731 = vadd.f32 %v8671, %v8691
      %v8732 = vadd.f32 %v8672, %v8687
      %v8733 = vadd.f32 %v8673, %v8691
      %v8734 = vadd.f32 %v8674, %v8687
      %v8735 = vadd.f32 %v8675, %v8691
      %v8736 = vadd.f32 %v8676, %v8687
      %v8737 = vadd.f32 %v8677, %v8691
      %v8738 = vadd.f32 %v8678, %v8687
      %v8739 = vadd.f32 %v8679, %v8691
      %v8740 = vadd.f32 %v8680, %v8687
      %v8741 = vadd.f32 %v8681, %v8691
      %vm8742 = vcmp.gt.f32.partialorder %v8694, 0.0
      %vm8743 = vcmp.gt.f32.partialorder %v8695, 0.0
      %vm8744 = vcmp.gt.f32.partialorder %v8696, 0.0
      %vm8745 = vcmp.gt.f32.partialorder %v8697, 0.0
      %vm8746 = vcmp.gt.f32.partialorder %v8698, 0.0
      %vm8747 = vcmp.gt.f32.partialorder %v8699, 0.0
      %vm8748 = vcmp.gt.f32.partialorder %v8700, 0.0
      %vm8749 = vcmp.gt.f32.partialorder %v8701, 0.0
      %vm8750 = vcmp.gt.f32.partialorder %v8702, 0.0
      %vm8751 = vcmp.gt.f32.partialorder %v8703, 0.0
      %vm8752 = vcmp.gt.f32.partialorder %v8704, 0.0
      %vm8753 = vcmp.gt.f32.partialorder %v8705, 0.0
      %vm8754 = vcmp.gt.f32.partialorder %v8706, 0.0
      %vm8755 = vcmp.gt.f32.partialorder %v8707, 0.0
      %vm8756 = vcmp.gt.f32.partialorder %v8708, 0.0
      %vm8757 = vcmp.gt.f32.partialorder %v8709, 0.0
      %vm8758 = vcmp.gt.f32.partialorder %v8710, 0.0
      %vm8759 = vcmp.gt.f32.partialorder %v8711, 0.0
      %vm8760 = vcmp.gt.f32.partialorder %v8712, 0.0
      %vm8761 = vcmp.gt.f32.partialorder %v8713, 0.0
      %vm8762 = vcmp.gt.f32.partialorder %v8714, 0.0
      %vm8763 = vcmp.gt.f32.partialorder %v8715, 0.0
      %vm8764 = vcmp.gt.f32.partialorder %v8716, 0.0
      %vm8765 = vcmp.gt.f32.partialorder %v8717, 0.0
      %vm8766 = vcmp.gt.f32.partialorder %v8718, 0.0
      %vm8767 = vcmp.gt.f32.partialorder %v8719, 0.0
      %vm8768 = vcmp.gt.f32.partialorder %v8720, 0.0
      %vm8769 = vcmp.gt.f32.partialorder %v8721, 0.0
      %vm8770 = vcmp.gt.f32.partialorder %v8722, 0.0
      %vm8771 = vcmp.gt.f32.partialorder %v8723, 0.0
      %vm8772 = vcmp.gt.f32.partialorder %v8724, 0.0
      %vm8773 = vcmp.gt.f32.partialorder %v8725, 0.0
      %vm8774 = vcmp.gt.f32.partialorder %v8726, 0.0
      %vm8775 = vcmp.gt.f32.partialorder %v8727, 0.0
      %vm8776 = vcmp.gt.f32.partialorder %v8728, 0.0
      %vm8777 = vcmp.gt.f32.partialorder %v8729, 0.0
      %vm8778 = vcmp.gt.f32.partialorder %v8730, 0.0
      %vm8779 = vcmp.gt.f32.partialorder %v8731, 0.0
      %vm8780 = vcmp.gt.f32.partialorder %v8732, 0.0
      %vm8781 = vcmp.gt.f32.partialorder %v8733, 0.0
      %vm8782 = vcmp.gt.f32.partialorder %v8734, 0.0
      %vm8783 = vcmp.gt.f32.partialorder %v8735, 0.0
      %vm8784 = vcmp.gt.f32.partialorder %v8736, 0.0
      %vm8785 = vcmp.gt.f32.partialorder %v8737, 0.0
      %vm8786 = vcmp.gt.f32.partialorder %v8738, 0.0
      %vm8787 = vcmp.gt.f32.partialorder %v8739, 0.0
      %vm8788 = vcmp.gt.f32.partialorder %v8740, 0.0
      %vm8789 = vcmp.gt.f32.partialorder %v8741, 0.0
      %v8790 = vmul.f32 %v8694, 0.1
      %v8791 = vmul.f32 %v8695, 0.1
      %v8792 = vmul.f32 %v8696, 0.1
      %v8793 = vmul.f32 %v8697, 0.1
      %v8794 = vmul.f32 %v8698, 0.1
      %v8795 = vmul.f32 %v8699, 0.1
      %v8796 = vmul.f32 %v8700, 0.1
      %v8797 = vmul.f32 %v8701, 0.1
      %v8798 = vmul.f32 %v8702, 0.1
      %v8799 = vmul.f32 %v8703, 0.1
      %v8800 = vmul.f32 %v8704, 0.1
      %v8801 = vmul.f32 %v8705, 0.1
      %v8802 = vmul.f32 %v8706, 0.1
      %v8803 = vmul.f32 %v8707, 0.1
      %v8804 = vmul.f32 %v8708, 0.1
      %v8805 = vmul.f32 %v8709, 0.1
      %v8806 = vmul.f32 %v8710, 0.1
      %v8807 = vmul.f32 %v8711, 0.1
      %v8808 = vmul.f32 %v8712, 0.1
      %v8809 = vmul.f32 %v8713, 0.1
      %v8810 = vmul.f32 %v8714, 0.1
      %v8811 = vmul.f32 %v8715, 0.1
      %v8812 = vmul.f32 %v8716, 0.1
      %v8813 = vmul.f32 %v8717, 0.1
      %v8814 = vmul.f32 %v8718, 0.1
      %v8815 = vmul.f32 %v8719, 0.1
      %v8816 = vmul.f32 %v8720, 0.1
      %v8817 = vmul.f32 %v8721, 0.1
      %v8818 = vmul.f32 %v8722, 0.1
      %v8819 = vmul.f32 %v8723, 0.1
      %v8820 = vmul.f32 %v8724, 0.1
      %v8821 = vmul.f32 %v8725, 0.1
      %v8822 = vmul.f32 %v8726, 0.1
      %v8823 = vmul.f32 %v8727, 0.1
      %v8824 = vmul.f32 %v8728, 0.1
      %v8825 = vmul.f32 %v8729, 0.1
      %v8826 = vmul.f32 %v8730, 0.1
      %v8827 = vmul.f32 %v8731, 0.1
      %v8828 = vmul.f32 %v8732, 0.1
      %v8829 = vmul.f32 %v8733, 0.1
      %v8830 = vmul.f32 %v8734, 0.1
      %v8831 = vmul.f32 %v8735, 0.1
      %v8832 = vmul.f32 %v8736, 0.1
      %v8833 = vmul.f32 %v8737, 0.1
      %v8834 = vmul.f32 %v8738, 0.1
      %v8835 = vmul.f32 %v8739, 0.1
      %v8836 = vmul.f32 %v8740, 0.1
      %v8837 = vmul.f32 %v8741, 0.1
      %v8838 = vsel %vm8742, %v8694, %v8790
      %v8839 = vsel %vm8743, %v8695, %v8791
      %v8840 = vsel %vm8744, %v8696, %v8792
      %v8841 = vsel %vm8745, %v8697, %v8793
      %v8842 = vsel %vm8746, %v8698, %v8794
      %v8843 = vsel %vm8747, %v8699, %v8795
      %v8844 = vsel %vm8748, %v8700, %v8796
      %v8845 = vsel %vm8749, %v8701, %v8797
      %v8846 = vsel %vm8750, %v8702, %v8798
      %v8847 = vsel %vm8751, %v8703, %v8799
      %v8848 = vsel %vm8752, %v8704, %v8800
      %v8849 = vsel %vm8753, %v8705, %v8801
      %v8850 = vsel %vm8754, %v8706, %v8802
      %v8851 = vsel %vm8755, %v8707, %v8803
      %v8852 = vsel %vm8756, %v8708, %v8804
      %v8853 = vsel %vm8757, %v8709, %v8805
      %v8854 = vsel %vm8758, %v8710, %v8806
      %v8855 = vsel %vm8759, %v8711, %v8807
      %v8856 = vsel %vm8760, %v8712, %v8808
      %v8857 = vsel %vm8761, %v8713, %v8809
      %v8858 = vsel %vm8762, %v8714, %v8810
      %v8859 = vsel %vm8763, %v8715, %v8811
      %v8860 = vsel %vm8764, %v8716, %v8812
      %v8861 = vsel %vm8765, %v8717, %v8813
      %v8862 = vsel %vm8766, %v8718, %v8814
      %v8863 = vsel %vm8767, %v8719, %v8815
      %v8864 = vsel %vm8768, %v8720, %v8816
      %v8865 = vsel %vm8769, %v8721, %v8817
      %v8866 = vsel %vm8770, %v8722, %v8818
      %v8867 = vsel %vm8771, %v8723, %v8819
      %v8868 = vsel %vm8772, %v8724, %v8820
      %v8869 = vsel %vm8773, %v8725, %v8821
      %v8870 = vsel %vm8774, %v8726, %v8822
      %v8871 = vsel %vm8775, %v8727, %v8823
      %v8872 = vsel %vm8776, %v8728, %v8824
      %v8873 = vsel %vm8777, %v8729, %v8825
      %v8874 = vsel %vm8778, %v8730, %v8826
      %v8875 = vsel %vm8779, %v8731, %v8827
      %v8876 = vsel %vm8780, %v8732, %v8828
      %v8877 = vsel %vm8781, %v8733, %v8829
      %v8878 = vsel %vm8782, %v8734, %v8830
      %v8879 = vsel %vm8783, %v8735, %v8831
      %v8880 = vsel %vm8784, %v8736, %v8832
      %v8881 = vsel %vm8785, %v8737, %v8833
      %v8882 = vsel %vm8786, %v8738, %v8834
      %v8883 = vsel %vm8787, %v8739, %v8835
      %v8884 = vsel %vm8788, %v8740, %v8836
      %v8885 = vsel %vm8789, %v8741, %v8837
      %v8886 = vpack.c.bf16 %v8840, %v8838
      %v8887 = vpack.c.bf16 %v8841, %v8839
      %v8888 = vpack.c.bf16 %v8844, %v8842
      %v8889 = vpack.c.bf16 %v8845, %v8843
      %v8890 = vpack.c.bf16 %v8848, %v8846
      %v8891 = vpack.c.bf16 %v8849, %v8847
      %v8892 = vpack.c.bf16 %v8852, %v8850
      %v8893 = vpack.c.bf16 %v8853, %v8851
      %v8894 = vpack.c.bf16 %v8856, %v8854
      %v8895 = vpack.c.bf16 %v8857, %v8855
      %v8896 = vpack.c.bf16 %v8860, %v8858
      %v8897 = vpack.c.bf16 %v8861, %v8859
      %v8898 = vpack.c.bf16 %v8864, %v8862
      %v8899 = vpack.c.bf16 %v8865, %v8863
      %v8900 = vpack.c.bf16 %v8868, %v8866
      %v8901 = vpack.c.bf16 %v8869, %v8867
      %v8902 = vpack.c.bf16 %v8872, %v8870
      %v8903 = vpack.c.bf16 %v8873, %v8871
      %v8904 = vpack.c.bf16 %v8876, %v8874
      %v8905 = vpack.c.bf16 %v8877, %v8875
      %v8906 = vpack.c.bf16 %v8880, %v8878
      %v8907 = vpack.c.bf16 %v8881, %v8879
      %v8908 = vpack.c.bf16 %v8884, %v8882
      %v8909 = vpack.c.bf16 %v8885, %v8883
      %v8934 = vunpack.c.l.b16 %v8886
      %v8935 = vunpack.c.l.b16 %v8887
      %v8936 = vunpack.c.h.b16 %v8886
      %v8937 = vunpack.c.h.b16 %v8887
      %v8938 = vunpack.c.l.b16 %v8888
      %v8939 = vunpack.c.l.b16 %v8889
      %v8940 = vunpack.c.h.b16 %v8888
      %v8941 = vunpack.c.h.b16 %v8889
      %v8942 = vunpack.c.l.b16 %v8890
      %v8943 = vunpack.c.l.b16 %v8891
      %v8944 = vunpack.c.h.b16 %v8890
      %v8945 = vunpack.c.h.b16 %v8891
      %v8946 = vunpack.c.l.b16 %v8892
      %v8947 = vunpack.c.l.b16 %v8893
      %v8948 = vunpack.c.h.b16 %v8892
      %v8949 = vunpack.c.h.b16 %v8893
      %v8950 = vunpack.c.l.b16 %v8894
      %v8951 = vunpack.c.l.b16 %v8895
      %v8952 = vunpack.c.h.b16 %v8894
      %v8953 = vunpack.c.h.b16 %v8895
      %v8954 = vunpack.c.l.b16 %v8896
      %v8955 = vunpack.c.l.b16 %v8897
      %v8956 = vunpack.c.h.b16 %v8896
      %v8957 = vunpack.c.h.b16 %v8897
      %v8958 = vunpack.c.l.b16 %v8898
      %v8959 = vunpack.c.l.b16 %v8899
      %v8960 = vunpack.c.h.b16 %v8898
      %v8961 = vunpack.c.h.b16 %v8899
      %v8962 = vunpack.c.l.b16 %v8900
      %v8963 = vunpack.c.l.b16 %v8901
      %v8964 = vunpack.c.h.b16 %v8900
      %v8965 = vunpack.c.h.b16 %v8901
      %v8966 = vunpack.c.l.b16 %v8902
      %v8967 = vunpack.c.l.b16 %v8903
      %v8968 = vunpack.c.h.b16 %v8902
      %v8969 = vunpack.c.h.b16 %v8903
      %v8970 = vunpack.c.l.b16 %v8904
      %v8971 = vunpack.c.l.b16 %v8905
      %v8972 = vunpack.c.h.b16 %v8904
      %v8973 = vunpack.c.h.b16 %v8905
      %v8974 = vunpack.c.l.b16 %v8906
      %v8975 = vunpack.c.l.b16 %v8907
      %v8976 = vunpack.c.h.b16 %v8906
      %v8977 = vunpack.c.h.b16 %v8907
      %v8978 = vunpack.c.l.b16 %v8908
      %v8979 = vunpack.c.l.b16 %v8909
      %v8980 = vunpack.c.h.b16 %v8908
      %v8981 = vunpack.c.h.b16 %v8909
      %v8982 = vpack.c.b16 %v8935, %v8934
      %v8983 = vpack.c.b16 %v8937, %v8936
      %v8984 = vpack.c.b16 %v8939, %v8938
      %v8985 = vpack.c.b16 %v8941, %v8940
      %v8986 = vpack.c.b16 %v8943, %v8942
      %v8987 = vpack.c.b16 %v8945, %v8944
      %v8988 = vpack.c.b16 %v8947, %v8946
      %v8989 = vpack.c.b16 %v8949, %v8948
      %v8990 = vpack.c.b16 %v8951, %v8950
      %v8991 = vpack.c.b16 %v8953, %v8952
      %v8992 = vpack.c.b16 %v8955, %v8954
      %v8993 = vpack.c.b16 %v8957, %v8956
      %v8994 = vpack.c.b16 %v8959, %v8958
      %v8995 = vpack.c.b16 %v8961, %v8960
      %v8996 = vpack.c.b16 %v8963, %v8962
      %v8997 = vpack.c.b16 %v8965, %v8964
      %v8998 = vpack.c.b16 %v8967, %v8966
      %v8999 = vpack.c.b16 %v8969, %v8968
      %v9000 = vpack.c.b16 %v8971, %v8970
      %v9001 = vpack.c.b16 %v8973, %v8972
      %v9002 = vpack.c.b16 %v8975, %v8974
      %v9003 = vpack.c.b16 %v8977, %v8976
      %v9004 = vpack.c.b16 %v8979, %v8978
      %v9005 = vpack.c.b16 %v8981, %v8980
      %9030 = vst [vmem:[#allocation3] sm:$0xff] %v8982
      %9031 = vst [vmem:[#allocation3 + $0x8] sm:$0xff] %v8983
      %9032 = vst [vmem:[#allocation3 + $0x10] sm:$0xff] %v8984
      %9033 = vst [vmem:[#allocation3 + $0x18] sm:$0xff] %v8985
      %9034 = vst [vmem:[#allocation3 + $0x20] sm:$0xff] %v8986
      %9035 = vst [vmem:[#allocation3 + $0x28] sm:$0xff] %v8987
      %9036 = vst [vmem:[#allocation3 + $0x30] sm:$0xff] %v8988
      %9037 = vst [vmem:[#allocation3 + $0x38] sm:$0xff] %v8989
      %9038 = vst [vmem:[#allocation3 + $0x40] sm:$0xff] %v8990
      %9039 = vst [vmem:[#allocation3 + $0x48] sm:$0xff] %v8991
      %9040 = vst [vmem:[#allocation3 + $0x50] sm:$0xff] %v8992
      %9041 = vst [vmem:[#allocation3 + $0x58] sm:$0xff] %v8993
      %9042 = vst [vmem:[#allocation3 + $0x60] sm:$0xff] %v8994
      %9043 = vst [vmem:[#allocation3 + $0x68] sm:$0xff] %v8995
      %9044 = vst [vmem:[#allocation3 + $0x70] sm:$0xff] %v8996
      %9045 = vst [vmem:[#allocation3 + $0x78] sm:$0xff] %v8997
      %9046 = vst [vmem:[#allocation3 + $0x80] sm:$0xff] %v8998
      %9047 = vst [vmem:[#allocation3 + $0x88] sm:$0xff] %v8999
      %9048 = vst [vmem:[#allocation3 + $0x90] sm:$0xff] %v9000
      %9049 = vst [vmem:[#allocation3 + $0x98] sm:$0xff] %v9001
      %9050 = vst [vmem:[#allocation3 + $0xa0] sm:$0xff] %v9002
      %9051 = vst [vmem:[#allocation3 + $0xa8] sm:$0xff] %v9003
      %9052 = vst [vmem:[#allocation3 + $0xb0] sm:$0xff] %v9004
      %9053 = vst [vmem:[#allocation3 + $0xb8] sm:$0xff] %v9005
      %9054 = vst [vmem:[#allocation3 + $0xc0] sm:$0xff] 0
      %9055 = vst [vmem:[#allocation3 + $0xc8] sm:$0xff] 0
      %v9056 = vld [vmem:[#allocation3] sm:$0xff]
      %v9057 = vld [vmem:[#allocation3 + $0x8] sm:$0xff]
      %v9058 = vld [vmem:[#allocation3 + $0x10] sm:$0xff]
      %v9059 = vld [vmem:[#allocation3 + $0x18] sm:$0xff]
      %v9060 = vld [vmem:[#allocation3 + $0x20] sm:$0xff]
      %v9061 = vld [vmem:[#allocation3 + $0x28] sm:$0xff]
      %v9062 = vld [vmem:[#allocation3 + $0x30] sm:$0xff]
      %v9063 = vld [vmem:[#allocation3 + $0x38] sm:$0xff]
      %v9064 = vld [vmem:[#allocation3 + $0x40] sm:$0xff]
      %v9065 = vld [vmem:[#allocation3 + $0x48] sm:$0xff]
      %v9066 = vld [vmem:[#allocation3 + $0x50] sm:$0xff]
      %v9067 = vld [vmem:[#allocation3 + $0x58] sm:$0xff]
      %v9068 = vld [vmem:[#allocation3 + $0x60] sm:$0xff]
      %v9069 = vld [vmem:[#allocation3 + $0x68] sm:$0xff]
      %v9070 = vld [vmem:[#allocation3 + $0x70] sm:$0xff]
      %v9071 = vld [vmem:[#allocation3 + $0x78] sm:$0xff]
      %v9072 = vld [vmem:[#allocation3 + $0x80] sm:$0xff]
      %v9073 = vld [vmem:[#allocation3 + $0x88] sm:$0xff]
      %v9074 = vld [vmem:[#allocation3 + $0x90] sm:$0xff]
      %v9075 = vld [vmem:[#allocation3 + $0x98] sm:$0xff]
      %v9076 = vld [vmem:[#allocation3 + $0xa0] sm:$0xff]
      %v9077 = vld [vmem:[#allocation3 + $0xa8] sm:$0xff]
      %v9078 = vld [vmem:[#allocation3 + $0xb0] sm:$0xff]
      %v9079 = vld [vmem:[#allocation3 + $0xb8] sm:$0xff]
      %v9080 = vld [vmem:[%s5] sm:$0xf]
      %v9081 = vld [vmem:[%s5 + $0x4] sm:$0xf]
      %v9082 = vld [vmem:[%s5 + $0x8] sm:$0xf]
      %v9083 = vld [vmem:[%s5 + $0xc] sm:$0xf]
      %v9084 = vld [vmem:[%s5 + $0x10] sm:$0xf]
      %v9085 = vld [vmem:[%s5 + $0x14] sm:$0xf]
      %v9086 = vld [vmem:[%s5 + $0x18] sm:$0xf]
      %v9087 = vld [vmem:[%s5 + $0x1c] sm:$0xf]
      %v9088 = vld [vmem:[%s5 + $0x20] sm:$0xf]
      %v9089 = vld [vmem:[%s5 + $0x24] sm:$0xf]
      %v9090 = vld [vmem:[%s5 + $0x28] sm:$0xf]
      %v9091 = vld [vmem:[%s5 + $0x2c] sm:$0xf]
      %v9092 = vld [vmem:[%s5 + $0x30] sm:$0xf]
      %v9093 = vld [vmem:[%s5 + $0x34] sm:$0xf]
      %v9094 = vld [vmem:[%s5 + $0x38] sm:$0xf]
      %v9095 = vld [vmem:[%s5 + $0x3c] sm:$0xf]
      %v9096 = vld [vmem:[%s5 + $0x40] sm:$0xf]
      %v9097 = vld [vmem:[%s5 + $0x44] sm:$0xf]
      %v9098 = vld [vmem:[%s5 + $0x48] sm:$0xf]
      %v9099 = vld [vmem:[%s5 + $0x4c] sm:$0xf]
      %v9100 = vld [vmem:[%s5 + $0x50] sm:$0xf]
      %v9101 = vld [vmem:[%s5 + $0x54] sm:$0xf]
      %v9102 = vld [vmem:[%s5 + $0x58] sm:$0xf]
      %v9103 = vld [vmem:[%s5 + $0x5c] sm:$0xf]
      %v9104 = vld [vmem:[%s5 + $0x60] sm:$0xf]
      %v9105 = vld [vmem:[%s5 + $0x64] sm:$0xf]
      %v9106 = vld [vmem:[%s5 + $0x68] sm:$0xf]
      %v9107 = vld [vmem:[%s5 + $0x6c] sm:$0xf]
      %v9108 = vld [vmem:[%s5 + $0x70] sm:$0xf]
      %v9109 = vld [vmem:[%s5 + $0x74] sm:$0xf]
      %v9110 = vld [vmem:[%s5 + $0x78] sm:$0xf]
      %v9111 = vld [vmem:[%s5 + $0x7c] sm:$0xf]
      %v9112 = vld [vmem:[#allocation3 + $0xc0] sm:$0x11]
      %v9113 = vld [vmem:[%s5 + $0x80] sm:$0xf]
      %v9114 = vld [vmem:[%s5 + $0x84] sm:$0xf]
      %v9115 = vld [vmem:[%s5 + $0x88] sm:$0xf]
      %v9116 = vld [vmem:[%s5 + $0x8c] sm:$0xf]
      %v9117 = vld [vmem:[%s5 + $0x90] sm:$0xf]
      %v9118 = vld [vmem:[%s5 + $0x94] sm:$0xf]
      %v9119 = vld [vmem:[%s5 + $0x98] sm:$0xf]
      %v9120 = vld [vmem:[%s5 + $0x9c] sm:$0xf]
      %v9121 = vld [vmem:[%s5 + $0xa0] sm:$0xf]
      %v9122 = vld [vmem:[%s5 + $0xa4] sm:$0xf]
      %v9123 = vld [vmem:[%s5 + $0xa8] sm:$0xf]
      %v9124 = vld [vmem:[%s5 + $0xac] sm:$0xf]
      %v9125 = vld [vmem:[%s5 + $0xb0] sm:$0xf]
      %v9126 = vld [vmem:[%s5 + $0xb4] sm:$0xf]
      %v9127 = vld [vmem:[%s5 + $0xb8] sm:$0xf]
      %v9128 = vld [vmem:[%s5 + $0xbc] sm:$0xf]
      %v9129 = vld [vmem:[%s5 + $0xc0] sm:$0xf]
      %v9130 = vld [vmem:[%s5 + $0xc4] sm:$0xf]
      %v9131 = vld [vmem:[%s5 + $0xc8] sm:$0xf]
      %v9132 = vld [vmem:[%s5 + $0xcc] sm:$0xf]
      %v9133 = vld [vmem:[%s5 + $0xd0] sm:$0xf]
      %v9134 = vld [vmem:[%s5 + $0xd4] sm:$0xf]
      %v9135 = vld [vmem:[%s5 + $0xd8] sm:$0xf]
      %v9136 = vld [vmem:[%s5 + $0xdc] sm:$0xf]
      %v9137 = vld [vmem:[%s5 + $0xe0] sm:$0xf]
      %v9138 = vld [vmem:[%s5 + $0xe4] sm:$0xf]
      %v9139 = vld [vmem:[%s5 + $0xe8] sm:$0xf]
      %v9140 = vld [vmem:[%s5 + $0xec] sm:$0xf]
      %v9141 = vld [vmem:[%s5 + $0xf0] sm:$0xf]
      %v9142 = vld [vmem:[%s5 + $0xf4] sm:$0xf]
      %v9143 = vld [vmem:[%s5 + $0xf8] sm:$0xf]
      %v9144 = vld [vmem:[%s5 + $0xfc] sm:$0xf]
      %v9170 = vunpack.c.l.b16 %v9056
      %v9171 = vunpack.c.h.b16 %v9056
      %v9172 = vunpack.c.l.b16 %v9057
      %v9173 = vunpack.c.h.b16 %v9057
      %v9174 = vunpack.c.l.b16 %v9058
      %v9175 = vunpack.c.h.b16 %v9058
      %v9176 = vunpack.c.l.b16 %v9059
      %v9177 = vunpack.c.h.b16 %v9059
      %v9178 = vunpack.c.l.b16 %v9060
      %v9179 = vunpack.c.h.b16 %v9060
      %v9180 = vunpack.c.l.b16 %v9061
      %v9181 = vunpack.c.h.b16 %v9061
      %v9182 = vunpack.c.l.b16 %v9062
      %v9183 = vunpack.c.h.b16 %v9062
      %v9184 = vunpack.c.l.b16 %v9063
      %v9185 = vunpack.c.h.b16 %v9063
      %v9186 = vunpack.c.l.b16 %v9064
      %v9187 = vunpack.c.h.b16 %v9064
      %v9188 = vunpack.c.l.b16 %v9065
      %v9189 = vunpack.c.h.b16 %v9065
      %v9190 = vunpack.c.l.b16 %v9066
      %v9191 = vunpack.c.h.b16 %v9066
      %v9192 = vunpack.c.l.b16 %v9067
      %v9193 = vunpack.c.h.b16 %v9067
      %v9194 = vunpack.c.l.b16 %v9068
      %v9195 = vunpack.c.h.b16 %v9068
      %v9196 = vunpack.c.l.b16 %v9069
      %v9197 = vunpack.c.h.b16 %v9069
      %v9198 = vunpack.c.l.b16 %v9070
      %v9199 = vunpack.c.h.b16 %v9070
      %v9200 = vunpack.c.l.b16 %v9071
      %v9201 = vunpack.c.h.b16 %v9071
      %v9202 = vunpack.c.l.b16 %v9072
      %v9203 = vunpack.c.h.b16 %v9072
      %v9204 = vunpack.c.l.b16 %v9073
      %v9205 = vunpack.c.h.b16 %v9073
      %v9206 = vunpack.c.l.b16 %v9074
      %v9207 = vunpack.c.h.b16 %v9074
      %v9208 = vunpack.c.l.b16 %v9075
      %v9209 = vunpack.c.h.b16 %v9075
      %v9210 = vunpack.c.l.b16 %v9076
      %v9211 = vunpack.c.h.b16 %v9076
      %v9212 = vunpack.c.l.b16 %v9077
      %v9213 = vunpack.c.h.b16 %v9077
      %v9214 = vunpack.c.l.b16 %v9078
      %v9215 = vunpack.c.h.b16 %v9078
      %v9216 = vunpack.c.l.b16 %v9079
      %v9217 = vunpack.c.h.b16 %v9079
      %v9218 = vunpack.c.l.b16 %v9112
      %v9219 = vunpack.c.h.b16 %v9112
      %v9220 = vpack.c.b16 %v9172, %v9170
      %v9221 = vpack.c.b16 %v9173, %v9171
      %v9222 = vpack.c.b16 %v9176, %v9174
      %v9223 = vpack.c.b16 %v9177, %v9175
      %v9224 = vpack.c.b16 %v9180, %v9178
      %v9225 = vpack.c.b16 %v9181, %v9179
      %v9226 = vpack.c.b16 %v9184, %v9182
      %v9227 = vpack.c.b16 %v9185, %v9183
      %v9228 = vpack.c.b16 %v9188, %v9186
      %v9229 = vpack.c.b16 %v9189, %v9187
      %v9230 = vpack.c.b16 %v9192, %v9190
      %v9231 = vpack.c.b16 %v9193, %v9191
      %v9232 = vpack.c.b16 %v9196, %v9194
      %v9233 = vpack.c.b16 %v9197, %v9195
      %v9234 = vpack.c.b16 %v9200, %v9198
      %v9235 = vpack.c.b16 %v9201, %v9199
      %v9236 = vpack.c.b16 %v9204, %v9202
      %v9237 = vpack.c.b16 %v9205, %v9203
      %v9238 = vpack.c.b16 %v9208, %v9206
      %v9239 = vpack.c.b16 %v9209, %v9207
      %v9240 = vpack.c.b16 %v9212, %v9210
      %v9241 = vpack.c.b16 %v9213, %v9211
      %v9242 = vpack.c.b16 %v9216, %v9214
      %v9243 = vpack.c.b16 %v9217, %v9215
      %v9244 = vpack.c.b16 %v9218, %v9218
      %v9245 = vpack.c.b16 %v9219, %v9219
      %v9247 = vshrl.u32 %v9220, 16
      %v9249 = vshll.u32 %v9220, 16
      %v9251 = vrot.slane %v9249, 1
      %v9252 = vor.u32 %v9247, %v9251
      %v9254 = vshll.u32 %v9222, 16
      %v9256 = vrot.slane %v9254, 1
      %v9257 = vsel %vm2150, %v9252, %v9256
      %v9259 = vshrl.u32 %v9221, 16
      %v9261 = vshll.u32 %v9221, 16
      %v9263 = vrot.slane %v9261, 1
      %v9264 = vor.u32 %v9259, %v9263
      %v9266 = vshll.u32 %v9223, 16
      %v9268 = vrot.slane %v9266, 1
      %v9269 = vsel %vm2150, %v9264, %v9268
      %v9270 = vshrl.u32 %v9222, 16
      %v9272 = vor.u32 %v9270, %v9256
      %v9274 = vshll.u32 %v9224, 16
      %v9276 = vrot.slane %v9274, 1
      %v9277 = vsel %vm2150, %v9272, %v9276
      %v9278 = vshrl.u32 %v9223, 16
      %v9280 = vor.u32 %v9278, %v9268
      %v9282 = vshll.u32 %v9225, 16
      %v9284 = vrot.slane %v9282, 1
      %v9285 = vsel %vm2150, %v9280, %v9284
      %v9286 = vshrl.u32 %v9224, 16
      %v9288 = vor.u32 %v9286, %v9276
      %v9290 = vshll.u32 %v9226, 16
      %v9292 = vrot.slane %v9290, 1
      %v9293 = vsel %vm2150, %v9288, %v9292
      %v9294 = vshrl.u32 %v9225, 16
      %v9296 = vor.u32 %v9294, %v9284
      %v9298 = vshll.u32 %v9227, 16
      %v9300 = vrot.slane %v9298, 1
      %v9301 = vsel %vm2150, %v9296, %v9300
      %v9302 = vshrl.u32 %v9226, 16
      %v9304 = vor.u32 %v9302, %v9292
      %v9306 = vshll.u32 %v9228, 16
      %v9308 = vrot.slane %v9306, 1
      %v9309 = vsel %vm2150, %v9304, %v9308
      %v9310 = vshrl.u32 %v9227, 16
      %v9312 = vor.u32 %v9310, %v9300
      %v9314 = vshll.u32 %v9229, 16
      %v9316 = vrot.slane %v9314, 1
      %v9317 = vsel %vm2150, %v9312, %v9316
      %v9318 = vshrl.u32 %v9228, 16
      %v9320 = vor.u32 %v9318, %v9308
      %v9322 = vshll.u32 %v9230, 16
      %v9324 = vrot.slane %v9322, 1
      %v9325 = vsel %vm2150, %v9320, %v9324
      %v9326 = vshrl.u32 %v9229, 16
      %v9328 = vor.u32 %v9326, %v9316
      %v9330 = vshll.u32 %v9231, 16
      %v9332 = vrot.slane %v9330, 1
      %v9333 = vsel %vm2150, %v9328, %v9332
      %v9334 = vshrl.u32 %v9230, 16
      %v9336 = vor.u32 %v9334, %v9324
      %v9338 = vshll.u32 %v9232, 16
      %v9340 = vrot.slane %v9338, 1
      %v9341 = vsel %vm2150, %v9336, %v9340
      %v9342 = vshrl.u32 %v9231, 16
      %v9344 = vor.u32 %v9342, %v9332
      %v9346 = vshll.u32 %v9233, 16
      %v9348 = vrot.slane %v9346, 1
      %v9349 = vsel %vm2150, %v9344, %v9348
      %v9350 = vshrl.u32 %v9232, 16
      %v9352 = vor.u32 %v9350, %v9340
      %v9354 = vshll.u32 %v9234, 16
      %v9356 = vrot.slane %v9354, 1
      %v9357 = vsel %vm2150, %v9352, %v9356
      %v9358 = vshrl.u32 %v9233, 16
      %v9360 = vor.u32 %v9358, %v9348
      %v9362 = vshll.u32 %v9235, 16
      %v9364 = vrot.slane %v9362, 1
      %v9365 = vsel %vm2150, %v9360, %v9364
      %v9366 = vshrl.u32 %v9234, 16
      %v9368 = vor.u32 %v9366, %v9356
      %v9370 = vshll.u32 %v9236, 16
      %v9372 = vrot.slane %v9370, 1
      %v9373 = vsel %vm2150, %v9368, %v9372
      %v9374 = vshrl.u32 %v9235, 16
      %v9376 = vor.u32 %v9374, %v9364
      %v9378 = vshll.u32 %v9237, 16
      %v9380 = vrot.slane %v9378, 1
      %v9381 = vsel %vm2150, %v9376, %v9380
      %v9382 = vshrl.u32 %v9236, 16
      %v9384 = vor.u32 %v9382, %v9372
      %v9386 = vshll.u32 %v9238, 16
      %v9388 = vrot.slane %v9386, 1
      %v9389 = vsel %vm2150, %v9384, %v9388
      %v9390 = vshrl.u32 %v9237, 16
      %v9392 = vor.u32 %v9390, %v9380
      %v9394 = vshll.u32 %v9239, 16
      %v9396 = vrot.slane %v9394, 1
      %v9397 = vsel %vm2150, %v9392, %v9396
      %v9398 = vshrl.u32 %v9238, 16
      %v9400 = vor.u32 %v9398, %v9388
      %v9402 = vshll.u32 %v9240, 16
      %v9404 = vrot.slane %v9402, 1
      %v9405 = vsel %vm2150, %v9400, %v9404
      %v9406 = vshrl.u32 %v9239, 16
      %v9408 = vor.u32 %v9406, %v9396
      %v9410 = vshll.u32 %v9241, 16
      %v9412 = vrot.slane %v9410, 1
      %v9413 = vsel %vm2150, %v9408, %v9412
      %v9414 = vshrl.u32 %v9240, 16
      %v9416 = vor.u32 %v9414, %v9404
      %v9418 = vshll.u32 %v9242, 16
      %v9420 = vrot.slane %v9418, 1
      %v9421 = vsel %vm2150, %v9416, %v9420
      %v9422 = vshrl.u32 %v9241, 16
      %v9424 = vor.u32 %v9422, %v9412
      %v9426 = vshll.u32 %v9243, 16
      %v9428 = vrot.slane %v9426, 1
      %v9429 = vsel %vm2150, %v9424, %v9428
      %v9430 = vshrl.u32 %v9242, 16
      %v9432 = vor.u32 %v9430, %v9420
      %v9434 = vshll.u32 %v9244, 16
      %v9436 = vrot.slane %v9434, 1
      %v9437 = vsel %vm2150, %v9432, %v9436
      %v9438 = vshrl.u32 %v9243, 16
      %v9440 = vor.u32 %v9438, %v9428
      %v9442 = vshll.u32 %v9245, 16
      %v9444 = vrot.slane %v9442, 1
      %v9445 = vsel %vm2150, %v9440, %v9444
      %v9502 = vunpack.c.l.b16 %v9113
      %v9503 = vunpack.c.l.b16 %v9114
      %v9504 = vunpack.c.l.b16 %v9115
      %v9505 = vunpack.c.l.b16 %v9116
      %v9506 = vunpack.c.l.b16 %v9117
      %v9507 = vunpack.c.l.b16 %v9118
      %v9508 = vunpack.c.l.b16 %v9119
      %v9509 = vunpack.c.l.b16 %v9120
      %v9510 = vunpack.c.l.b16 %v9121
      %v9511 = vunpack.c.l.b16 %v9122
      %v9512 = vunpack.c.l.b16 %v9123
      %v9513 = vunpack.c.l.b16 %v9124
      %v9514 = vunpack.c.l.b16 %v9125
      %v9515 = vunpack.c.l.b16 %v9126
      %v9516 = vunpack.c.l.b16 %v9127
      %v9517 = vunpack.c.l.b16 %v9128
      %v9518 = vunpack.c.l.b16 %v9129
      %v9519 = vunpack.c.l.b16 %v9130
      %v9520 = vunpack.c.l.b16 %v9131
      %v9521 = vunpack.c.l.b16 %v9132
      %v9522 = vunpack.c.l.b16 %v9133
      %v9523 = vunpack.c.l.b16 %v9134
      %v9524 = vunpack.c.l.b16 %v9135
      %v9525 = vunpack.c.l.b16 %v9136
      %v9526 = vunpack.c.l.b16 %v9137
      %v9527 = vunpack.c.l.b16 %v9138
      %v9528 = vunpack.c.l.b16 %v9139
      %v9529 = vunpack.c.l.b16 %v9140
      %v9530 = vunpack.c.l.b16 %v9141
      %v9531 = vunpack.c.l.b16 %v9142
      %v9532 = vunpack.c.l.b16 %v9143
      %v9533 = vunpack.c.l.b16 %v9144
      %v9534 = vpack.c.b16 %v9503, %v9502
      %v9535 = vpack.c.b16 %v9505, %v9504
      %v9536 = vpack.c.b16 %v9507, %v9506
      %v9537 = vpack.c.b16 %v9509, %v9508
      %v9538 = vpack.c.b16 %v9511, %v9510
      %v9539 = vpack.c.b16 %v9513, %v9512
      %v9540 = vpack.c.b16 %v9515, %v9514
      %v9541 = vpack.c.b16 %v9517, %v9516
      %v9542 = vpack.c.b16 %v9519, %v9518
      %v9543 = vpack.c.b16 %v9521, %v9520
      %v9544 = vpack.c.b16 %v9523, %v9522
      %v9545 = vpack.c.b16 %v9525, %v9524
      %v9546 = vpack.c.b16 %v9527, %v9526
      %v9547 = vpack.c.b16 %v9529, %v9528
      %v9548 = vpack.c.b16 %v9531, %v9530
      %v9549 = vpack.c.b16 %v9533, %v9532
      %9566 = vmatprep.subr.bf16.mxu0 0
      %9567 = vmatpush1.bf16.msra.mxu0 %v9541
      %9568 = vmatprep.subr.bf16.mxu0 0
      %9569 = vmatpush1.bf16.msra.mxu0 %v9540
      %9570 = vmatprep.subr.bf16.mxu0 0
      %9571 = vmatpush1.bf16.msra.mxu0 %v9539
      %9572 = vmatprep.subr.bf16.mxu0 0
      %9573 = vmatpush1.bf16.msra.mxu0 %v9538
      %9574 = vmatprep.subr.bf16.mxu0 0
      %9575 = vmatpush1.bf16.msra.mxu0 %v9537
      %9576 = vmatprep.subr.bf16.mxu0 0
      %9577 = vmatpush1.bf16.msra.mxu0 %v9536
      %9578 = vmatprep.subr.bf16.mxu0 0
      %9579 = vmatpush1.bf16.msra.mxu0 %v9535
      %9580 = vmatprep.subr.bf16.mxu0 0
      %9581 = vmatpush1.bf16.msra.mxu0 %v9534
      %9582 = vmatprep.subr.bf16.mxu0 0
      %9583 = vmatpush2.bf16.msra.mxu0 %v9549
      %9584 = vmatprep.subr.bf16.mxu0 0
      %9585 = vmatpush2.bf16.msra.mxu0 %v9548
      %9586 = vmatprep.subr.bf16.mxu0 0
      %9587 = vmatpush2.bf16.msra.mxu0 %v9547
      %9588 = vmatprep.subr.bf16.mxu0 0
      %9589 = vmatpush2.bf16.msra.mxu0 %v9546
      %9590 = vmatprep.subr.bf16.mxu0 0
      %9591 = vmatpush2.bf16.msra.mxu0 %v9545
      %9592 = vmatprep.subr.bf16.mxu0 0
      %9593 = vmatpush2.bf16.msra.mxu0 %v9544
      %9594 = vmatprep.subr.bf16.mxu0 0
      %9595 = vmatpush2.bf16.msra.mxu0 %v9543
      %9596 = vmatprep.subr.bf16.mxu0 0
      %9597 = vmatpush2.bf16.msra.mxu0 %v9542
      %9598 = vmatprep.mubr.bf16.mxu0 %v9269
      %9599 = vmatmul.mubr.bf16.gmra.mxu0 %v9257
      %v9600 = vpop.f32.mrf.mxu0
      %v9601 = vadd.f32 0.0, %v9600
      %v9602 = vpop.f32.mrf.mxu0
      %v9603 = vpop.f32.mrf.mxu0
      %v9604 = vadd.f32 0.0, %v9603
      %v9605 = vpop.f32.mrf.mxu0
      %9606 = vmatprep.mubr.bf16.mxu0 %v9285
      %9607 = vmatmul.mubr.bf16.gmra.mxu0 %v9277
      %v9608 = vpop.f32.mrf.mxu0
      %v9609 = vadd.f32 0.0, %v9608
      %v9610 = vpop.f32.mrf.mxu0
      %v9611 = vpop.f32.mrf.mxu0
      %v9612 = vadd.f32 0.0, %v9611
      %v9613 = vpop.f32.mrf.mxu0
      %9614 = vmatprep.mubr.bf16.mxu0 %v9301
      %9615 = vmatmul.mubr.bf16.gmra.mxu0 %v9293
      %v9616 = vpop.f32.mrf.mxu0
      %v9617 = vadd.f32 0.0, %v9616
      %v9618 = vpop.f32.mrf.mxu0
      %v9619 = vpop.f32.mrf.mxu0
      %v9620 = vadd.f32 0.0, %v9619
      %v9621 = vpop.f32.mrf.mxu0
      %9622 = vmatprep.mubr.bf16.mxu0 %v9317
      %9623 = vmatmul.mubr.bf16.gmra.mxu0 %v9309
      %v9624 = vpop.f32.mrf.mxu0
      %v9625 = vadd.f32 0.0, %v9624
      %v9626 = vpop.f32.mrf.mxu0
      %v9627 = vpop.f32.mrf.mxu0
      %v9628 = vadd.f32 0.0, %v9627
      %v9629 = vpop.f32.mrf.mxu0
      %9630 = vmatprep.mubr.bf16.mxu0 %v9333
      %9631 = vmatmul.mubr.bf16.gmra.mxu0 %v9325
      %v9632 = vpop.f32.mrf.mxu0
      %v9633 = vadd.f32 0.0, %v9632
      %v9634 = vpop.f32.mrf.mxu0
      %v9635 = vpop.f32.mrf.mxu0
      %v9636 = vadd.f32 0.0, %v9635
      %v9637 = vpop.f32.mrf.mxu0
      %9638 = vmatprep.mubr.bf16.mxu0 %v9349
      %9639 = vmatmul.mubr.bf16.gmra.mxu0 %v9341
      %v9640 = vpop.f32.mrf.mxu0
      %v9641 = vadd.f32 0.0, %v9640
      %v9642 = vpop.f32.mrf.mxu0
      %v9643 = vpop.f32.mrf.mxu0
      %v9644 = vadd.f32 0.0, %v9643
      %v9645 = vpop.f32.mrf.mxu0
      %9646 = vmatprep.mubr.bf16.mxu0 %v9365
      %9647 = vmatmul.mubr.bf16.gmra.mxu0 %v9357
      %v9648 = vpop.f32.mrf.mxu0
      %v9649 = vadd.f32 0.0, %v9648
      %v9650 = vpop.f32.mrf.mxu0
      %v9651 = vpop.f32.mrf.mxu0
      %v9652 = vadd.f32 0.0, %v9651
      %v9653 = vpop.f32.mrf.mxu0
      %9654 = vmatprep.mubr.bf16.mxu0 %v9381
      %9655 = vmatmul.mubr.bf16.gmra.mxu0 %v9373
      %v9656 = vpop.f32.mrf.mxu0
      %v9657 = vadd.f32 0.0, %v9656
      %v9658 = vpop.f32.mrf.mxu0
      %v9659 = vpop.f32.mrf.mxu0
      %v9660 = vadd.f32 0.0, %v9659
      %v9661 = vpop.f32.mrf.mxu0
      %9662 = vmatprep.mubr.bf16.mxu0 %v9397
      %9663 = vmatmul.mubr.bf16.gmra.mxu0 %v9389
      %v9664 = vpop.f32.mrf.mxu0
      %v9665 = vadd.f32 0.0, %v9664
      %v9666 = vpop.f32.mrf.mxu0
      %v9667 = vpop.f32.mrf.mxu0
      %v9668 = vadd.f32 0.0, %v9667
      %v9669 = vpop.f32.mrf.mxu0
      %9670 = vmatprep.mubr.bf16.mxu0 %v9413
      %9671 = vmatmul.mubr.bf16.gmra.mxu0 %v9405
      %v9672 = vpop.f32.mrf.mxu0
      %v9673 = vadd.f32 0.0, %v9672
      %v9674 = vpop.f32.mrf.mxu0
      %v9675 = vpop.f32.mrf.mxu0
      %v9676 = vadd.f32 0.0, %v9675
      %v9677 = vpop.f32.mrf.mxu0
      %9678 = vmatprep.mubr.bf16.mxu0 %v9429
      %9679 = vmatmul.mubr.bf16.gmra.mxu0 %v9421
      %v9680 = vpop.f32.mrf.mxu0
      %v9681 = vadd.f32 0.0, %v9680
      %v9682 = vpop.f32.mrf.mxu0
      %v9683 = vpop.f32.mrf.mxu0
      %v9684 = vadd.f32 0.0, %v9683
      %v9685 = vpop.f32.mrf.mxu0
      %9686 = vmatprep.mubr.bf16.mxu0 %v9445
      %9687 = vmatmul.mubr.bf16.gmra.mxu0 %v9437
      %v9688 = vpop.f32.mrf.mxu0
      %v9689 = vadd.f32 0.0, %v9688
      %v9690 = vpop.f32.mrf.mxu0
      %v9691 = vpop.f32.mrf.mxu0
      %v9692 = vadd.f32 0.0, %v9691
      %v9693 = vpop.f32.mrf.mxu0
      %9694 = vdwg.mxu0
      %v9751 = vunpack.c.l.b16 %v9080
      %v9752 = vunpack.c.l.b16 %v9081
      %v9753 = vunpack.c.l.b16 %v9082
      %v9754 = vunpack.c.l.b16 %v9083
      %v9755 = vunpack.c.l.b16 %v9084
      %v9756 = vunpack.c.l.b16 %v9085
      %v9757 = vunpack.c.l.b16 %v9086
      %v9758 = vunpack.c.l.b16 %v9087
      %v9759 = vunpack.c.l.b16 %v9088
      %v9760 = vunpack.c.l.b16 %v9089
      %v9761 = vunpack.c.l.b16 %v9090
      %v9762 = vunpack.c.l.b16 %v9091
      %v9763 = vunpack.c.l.b16 %v9092
      %v9764 = vunpack.c.l.b16 %v9093
      %v9765 = vunpack.c.l.b16 %v9094
      %v9766 = vunpack.c.l.b16 %v9095
      %v9767 = vunpack.c.l.b16 %v9096
      %v9768 = vunpack.c.l.b16 %v9097
      %v9769 = vunpack.c.l.b16 %v9098
      %v9770 = vunpack.c.l.b16 %v9099
      %v9771 = vunpack.c.l.b16 %v9100
      %v9772 = vunpack.c.l.b16 %v9101
      %v9773 = vunpack.c.l.b16 %v9102
      %v9774 = vunpack.c.l.b16 %v9103
      %v9775 = vunpack.c.l.b16 %v9104
      %v9776 = vunpack.c.l.b16 %v9105
      %v9777 = vunpack.c.l.b16 %v9106
      %v9778 = vunpack.c.l.b16 %v9107
      %v9779 = vunpack.c.l.b16 %v9108
      %v9780 = vunpack.c.l.b16 %v9109
      %v9781 = vunpack.c.l.b16 %v9110
      %v9782 = vunpack.c.l.b16 %v9111
      %v9783 = vpack.c.b16 %v9752, %v9751
      %v9784 = vpack.c.b16 %v9754, %v9753
      %v9785 = vpack.c.b16 %v9756, %v9755
      %v9786 = vpack.c.b16 %v9758, %v9757
      %v9787 = vpack.c.b16 %v9760, %v9759
      %v9788 = vpack.c.b16 %v9762, %v9761
      %v9789 = vpack.c.b16 %v9764, %v9763
      %v9790 = vpack.c.b16 %v9766, %v9765
      %v9791 = vpack.c.b16 %v9768, %v9767
      %v9792 = vpack.c.b16 %v9770, %v9769
      %v9793 = vpack.c.b16 %v9772, %v9771
      %v9794 = vpack.c.b16 %v9774, %v9773
      %v9795 = vpack.c.b16 %v9776, %v9775
      %v9796 = vpack.c.b16 %v9778, %v9777
      %v9797 = vpack.c.b16 %v9780, %v9779
      %v9798 = vpack.c.b16 %v9782, %v9781
      %9815 = vmatprep.subr.bf16.mxu0 0
      %9816 = vmatpush1.bf16.msra.mxu0 %v9790
      %9817 = vmatprep.subr.bf16.mxu0 0
      %9818 = vmatpush1.bf16.msra.mxu0 %v9789
      %9819 = vmatprep.subr.bf16.mxu0 0
      %9820 = vmatpush1.bf16.msra.mxu0 %v9788
      %9821 = vmatprep.subr.bf16.mxu0 0
      %9822 = vmatpush1.bf16.msra.mxu0 %v9787
      %9823 = vmatprep.subr.bf16.mxu0 0
      %9824 = vmatpush1.bf16.msra.mxu0 %v9786
      %9825 = vmatprep.subr.bf16.mxu0 0
      %9826 = vmatpush1.bf16.msra.mxu0 %v9785
      %9827 = vmatprep.subr.bf16.mxu0 0
      %9828 = vmatpush1.bf16.msra.mxu0 %v9784
      %9829 = vmatprep.subr.bf16.mxu0 0
      %9830 = vmatpush1.bf16.msra.mxu0 %v9783
      %9831 = vmatprep.subr.bf16.mxu0 0
      %9832 = vmatpush2.bf16.msra.mxu0 %v9798
      %9833 = vmatprep.subr.bf16.mxu0 0
      %9834 = vmatpush2.bf16.msra.mxu0 %v9797
      %9835 = vmatprep.subr.bf16.mxu0 0
      %9836 = vmatpush2.bf16.msra.mxu0 %v9796
      %9837 = vmatprep.subr.bf16.mxu0 0
      %9838 = vmatpush2.bf16.msra.mxu0 %v9795
      %9839 = vmatprep.subr.bf16.mxu0 0
      %9840 = vmatpush2.bf16.msra.mxu0 %v9794
      %9841 = vmatprep.subr.bf16.mxu0 0
      %9842 = vmatpush2.bf16.msra.mxu0 %v9793
      %9843 = vmatprep.subr.bf16.mxu0 0
      %9844 = vmatpush2.bf16.msra.mxu0 %v9792
      %9845 = vmatprep.subr.bf16.mxu0 0
      %9846 = vmatpush2.bf16.msra.mxu0 %v9791
      %9847 = vmatprep.mubr.bf16.mxu0 %v9221
      %9848 = vmatmul.mubr.bf16.gmra.mxu0 %v9220
      %v9849 = vpop.f32.mrf.mxu0
      %v9850 = vadd.f32 %v9601, %v9849
      %v9851 = vpop.f32.mrf.mxu0
      %v9852 = vpop.f32.mrf.mxu0
      %v9853 = vadd.f32 %v9604, %v9852
      %v9854 = vpop.f32.mrf.mxu0
      %9855 = vmatprep.mubr.bf16.mxu0 %v9223
      %9856 = vmatmul.mubr.bf16.gmra.mxu0 %v9222
      %v9857 = vpop.f32.mrf.mxu0
      %v9858 = vadd.f32 %v9609, %v9857
      %v9859 = vpop.f32.mrf.mxu0
      %v9860 = vpop.f32.mrf.mxu0
      %v9861 = vadd.f32 %v9612, %v9860
      %v9862 = vpop.f32.mrf.mxu0
      %9863 = vmatprep.mubr.bf16.mxu0 %v9225
      %9864 = vmatmul.mubr.bf16.gmra.mxu0 %v9224
      %v9865 = vpop.f32.mrf.mxu0
      %v9866 = vadd.f32 %v9617, %v9865
      %v9867 = vpop.f32.mrf.mxu0
      %v9868 = vpop.f32.mrf.mxu0
      %v9869 = vadd.f32 %v9620, %v9868
      %v9870 = vpop.f32.mrf.mxu0
      %9871 = vmatprep.mubr.bf16.mxu0 %v9227
      %9872 = vmatmul.mubr.bf16.gmra.mxu0 %v9226
      %v9873 = vpop.f32.mrf.mxu0
      %v9874 = vadd.f32 %v9625, %v9873
      %v9875 = vpop.f32.mrf.mxu0
      %v9876 = vpop.f32.mrf.mxu0
      %v9877 = vadd.f32 %v9628, %v9876
      %v9878 = vpop.f32.mrf.mxu0
      %9879 = vmatprep.mubr.bf16.mxu0 %v9229
      %9880 = vmatmul.mubr.bf16.gmra.mxu0 %v9228
      %v9881 = vpop.f32.mrf.mxu0
      %v9882 = vadd.f32 %v9633, %v9881
      %v9883 = vpop.f32.mrf.mxu0
      %v9884 = vpop.f32.mrf.mxu0
      %v9885 = vadd.f32 %v9636, %v9884
      %v9886 = vpop.f32.mrf.mxu0
      %9887 = vmatprep.mubr.bf16.mxu0 %v9231
      %9888 = vmatmul.mubr.bf16.gmra.mxu0 %v9230
      %v9889 = vpop.f32.mrf.mxu0
      %v9890 = vadd.f32 %v9641, %v9889
      %v9891 = vpop.f32.mrf.mxu0
      %v9892 = vpop.f32.mrf.mxu0
      %v9893 = vadd.f32 %v9644, %v9892
      %v9894 = vpop.f32.mrf.mxu0
      %9895 = vmatprep.mubr.bf16.mxu0 %v9233
      %9896 = vmatmul.mubr.bf16.gmra.mxu0 %v9232
      %v9897 = vpop.f32.mrf.mxu0
      %v9898 = vadd.f32 %v9649, %v9897
      %v9899 = vpop.f32.mrf.mxu0
      %v9900 = vpop.f32.mrf.mxu0
      %v9901 = vadd.f32 %v9652, %v9900
      %v9902 = vpop.f32.mrf.mxu0
      %9903 = vmatprep.mubr.bf16.mxu0 %v9235
      %9904 = vmatmul.mubr.bf16.gmra.mxu0 %v9234
      %v9905 = vpop.f32.mrf.mxu0
      %v9906 = vadd.f32 %v9657, %v9905
      %v9907 = vpop.f32.mrf.mxu0
      %v9908 = vpop.f32.mrf.mxu0
      %v9909 = vadd.f32 %v9660, %v9908
      %v9910 = vpop.f32.mrf.mxu0
      %9911 = vmatprep.mubr.bf16.mxu0 %v9237
      %9912 = vmatmul.mubr.bf16.gmra.mxu0 %v9236
      %v9913 = vpop.f32.mrf.mxu0
      %v9914 = vadd.f32 %v9665, %v9913
      %v9915 = vpop.f32.mrf.mxu0
      %v9916 = vpop.f32.mrf.mxu0
      %v9917 = vadd.f32 %v9668, %v9916
      %v9918 = vpop.f32.mrf.mxu0
      %9919 = vmatprep.mubr.bf16.mxu0 %v9239
      %9920 = vmatmul.mubr.bf16.gmra.mxu0 %v9238
      %v9921 = vpop.f32.mrf.mxu0
      %v9922 = vadd.f32 %v9673, %v9921
      %v9923 = vpop.f32.mrf.mxu0
      %v9924 = vpop.f32.mrf.mxu0
      %v9925 = vadd.f32 %v9676, %v9924
      %v9926 = vpop.f32.mrf.mxu0
      %9927 = vmatprep.mubr.bf16.mxu0 %v9241
      %9928 = vmatmul.mubr.bf16.gmra.mxu0 %v9240
      %v9929 = vpop.f32.mrf.mxu0
      %v9930 = vadd.f32 %v9681, %v9929
      %v9931 = vpop.f32.mrf.mxu0
      %v9932 = vpop.f32.mrf.mxu0
      %v9933 = vadd.f32 %v9684, %v9932
      %v9934 = vpop.f32.mrf.mxu0
      %9935 = vmatprep.mubr.bf16.mxu0 %v9243
      %9936 = vmatmul.mubr.bf16.gmra.mxu0 %v9242
      %v9937 = vpop.f32.mrf.mxu0
      %v9938 = vadd.f32 %v9689, %v9937
      %v9939 = vpop.f32.mrf.mxu0
      %v9940 = vpop.f32.mrf.mxu0
      %v9941 = vadd.f32 %v9692, %v9940
      %v9942 = vpop.f32.mrf.mxu0
      %9943 = vdwg.mxu0
      %v9944 = vld [vmem:[#allocation3] sm:$0xee]
      %v9945 = vld [vmem:[%s5 + $0x100] sm:$0xf]
      %v9946 = vld [vmem:[%s5 + $0x104] sm:$0xf]
      %v9947 = vld [vmem:[%s5 + $0x108] sm:$0xf]
      %v9948 = vld [vmem:[%s5 + $0x10c] sm:$0xf]
      %v9949 = vld [vmem:[%s5 + $0x110] sm:$0xf]
      %v9950 = vld [vmem:[%s5 + $0x114] sm:$0xf]
      %v9951 = vld [vmem:[%s5 + $0x118] sm:$0xf]
      %v9952 = vld [vmem:[%s5 + $0x11c] sm:$0xf]
      %v9953 = vld [vmem:[%s5 + $0x120] sm:$0xf]
      %v9954 = vld [vmem:[%s5 + $0x124] sm:$0xf]
      %v9955 = vld [vmem:[%s5 + $0x128] sm:$0xf]
      %v9956 = vld [vmem:[%s5 + $0x12c] sm:$0xf]
      %v9957 = vld [vmem:[%s5 + $0x130] sm:$0xf]
      %v9958 = vld [vmem:[%s5 + $0x134] sm:$0xf]
      %v9959 = vld [vmem:[%s5 + $0x138] sm:$0xf]
      %v9960 = vld [vmem:[%s5 + $0x13c] sm:$0xf]
      %v9961 = vld [vmem:[%s5 + $0x140] sm:$0xf]
      %v9962 = vld [vmem:[%s5 + $0x144] sm:$0xf]
      %v9963 = vld [vmem:[%s5 + $0x148] sm:$0xf]
      %v9964 = vld [vmem:[%s5 + $0x14c] sm:$0xf]
      %v9965 = vld [vmem:[%s5 + $0x150] sm:$0xf]
      %v9966 = vld [vmem:[%s5 + $0x154] sm:$0xf]
      %v9967 = vld [vmem:[%s5 + $0x158] sm:$0xf]
      %v9968 = vld [vmem:[%s5 + $0x15c] sm:$0xf]
      %v9969 = vld [vmem:[%s5 + $0x160] sm:$0xf]
      %v9970 = vld [vmem:[%s5 + $0x164] sm:$0xf]
      %v9971 = vld [vmem:[%s5 + $0x168] sm:$0xf]
      %v9972 = vld [vmem:[%s5 + $0x16c] sm:$0xf]
      %v9973 = vld [vmem:[%s5 + $0x170] sm:$0xf]
      %v9974 = vld [vmem:[%s5 + $0x174] sm:$0xf]
      %v9975 = vld [vmem:[%s5 + $0x178] sm:$0xf]
      %v9976 = vld [vmem:[%s5 + $0x17c] sm:$0xf]
      %v9978 = vunpack.c.l.b16 %v9944
      %v9979 = vunpack.c.h.b16 %v9944
      %v9980 = vpack.c.b16 %v9172, %v9978
      %v9981 = vpack.c.b16 %v9173, %v9979
      %v9982 = vrot.slane %v9980, 1
      %v9983 = vrot.slane %v9222, 1
      %v9984 = vsel %vm3975, %v9982, %v9983
      %v9985 = vrot.slane %v9981, 1
      %v9986 = vrot.slane %v9223, 1
      %v9987 = vsel %vm3975, %v9985, %v9986
      %v9988 = vrot.slane %v9224, 1
      %v9989 = vsel %vm3975, %v9983, %v9988
      %v9990 = vrot.slane %v9225, 1
      %v9991 = vsel %vm3975, %v9986, %v9990
      %v9992 = vrot.slane %v9226, 1
      %v9993 = vsel %vm3975, %v9988, %v9992
      %v9994 = vrot.slane %v9227, 1
      %v9995 = vsel %vm3975, %v9990, %v9994
      %v9996 = vrot.slane %v9228, 1
      %v9997 = vsel %vm3975, %v9992, %v9996
      %v9998 = vrot.slane %v9229, 1
      %v9999 = vsel %vm3975, %v9994, %v9998
      %v10000 = vrot.slane %v9230, 1
      %v10001 = vsel %vm3975, %v9996, %v10000
      %v10002 = vrot.slane %v9231, 1
      %v10003 = vsel %vm3975, %v9998, %v10002
      %v10004 = vrot.slane %v9232, 1
      %v10005 = vsel %vm3975, %v10000, %v10004
      %v10006 = vrot.slane %v9233, 1
      %v10007 = vsel %vm3975, %v10002, %v10006
      %v10008 = vrot.slane %v9234, 1
      %v10009 = vsel %vm3975, %v10004, %v10008
      %v10010 = vrot.slane %v9235, 1
      %v10011 = vsel %vm3975, %v10006, %v10010
      %v10012 = vrot.slane %v9236, 1
      %v10013 = vsel %vm3975, %v10008, %v10012
      %v10014 = vrot.slane %v9237, 1
      %v10015 = vsel %vm3975, %v10010, %v10014
      %v10016 = vrot.slane %v9238, 1
      %v10017 = vsel %vm3975, %v10012, %v10016
      %v10018 = vrot.slane %v9239, 1
      %v10019 = vsel %vm3975, %v10014, %v10018
      %v10020 = vrot.slane %v9240, 1
      %v10021 = vsel %vm3975, %v10016, %v10020
      %v10022 = vrot.slane %v9241, 1
      %v10023 = vsel %vm3975, %v10018, %v10022
      %v10024 = vrot.slane %v9242, 1
      %v10025 = vsel %vm3975, %v10020, %v10024
      %v10026 = vrot.slane %v9243, 1
      %v10027 = vsel %vm3975, %v10022, %v10026
      %v10028 = vrot.slane %v9244, 1
      %v10029 = vsel %vm3975, %v10024, %v10028
      %v10030 = vrot.slane %v9245, 1
      %v10031 = vsel %vm3975, %v10026, %v10030
      %v10088 = vunpack.c.l.b16 %v9945
      %v10089 = vunpack.c.l.b16 %v9946
      %v10090 = vunpack.c.l.b16 %v9947
      %v10091 = vunpack.c.l.b16 %v9948
      %v10092 = vunpack.c.l.b16 %v9949
      %v10093 = vunpack.c.l.b16 %v9950
      %v10094 = vunpack.c.l.b16 %v9951
      %v10095 = vunpack.c.l.b16 %v9952
      %v10096 = vunpack.c.l.b16 %v9953
      %v10097 = vunpack.c.l.b16 %v9954
      %v10098 = vunpack.c.l.b16 %v9955
      %v10099 = vunpack.c.l.b16 %v9956
      %v10100 = vunpack.c.l.b16 %v9957
      %v10101 = vunpack.c.l.b16 %v9958
      %v10102 = vunpack.c.l.b16 %v9959
      %v10103 = vunpack.c.l.b16 %v9960
      %v10104 = vunpack.c.l.b16 %v9961
      %v10105 = vunpack.c.l.b16 %v9962
      %v10106 = vunpack.c.l.b16 %v9963
      %v10107 = vunpack.c.l.b16 %v9964
      %v10108 = vunpack.c.l.b16 %v9965
      %v10109 = vunpack.c.l.b16 %v9966
      %v10110 = vunpack.c.l.b16 %v9967
      %v10111 = vunpack.c.l.b16 %v9968
      %v10112 = vunpack.c.l.b16 %v9969
      %v10113 = vunpack.c.l.b16 %v9970
      %v10114 = vunpack.c.l.b16 %v9971
      %v10115 = vunpack.c.l.b16 %v9972
      %v10116 = vunpack.c.l.b16 %v9973
      %v10117 = vunpack.c.l.b16 %v9974
      %v10118 = vunpack.c.l.b16 %v9975
      %v10119 = vunpack.c.l.b16 %v9976
      %v10120 = vpack.c.b16 %v10089, %v10088
      %v10121 = vpack.c.b16 %v10091, %v10090
      %v10122 = vpack.c.b16 %v10093, %v10092
      %v10123 = vpack.c.b16 %v10095, %v10094
      %v10124 = vpack.c.b16 %v10097, %v10096
      %v10125 = vpack.c.b16 %v10099, %v10098
      %v10126 = vpack.c.b16 %v10101, %v10100
      %v10127 = vpack.c.b16 %v10103, %v10102
      %v10128 = vpack.c.b16 %v10105, %v10104
      %v10129 = vpack.c.b16 %v10107, %v10106
      %v10130 = vpack.c.b16 %v10109, %v10108
      %v10131 = vpack.c.b16 %v10111, %v10110
      %v10132 = vpack.c.b16 %v10113, %v10112
      %v10133 = vpack.c.b16 %v10115, %v10114
      %v10134 = vpack.c.b16 %v10117, %v10116
      %v10135 = vpack.c.b16 %v10119, %v10118
      %10152 = vmatprep.subr.bf16.mxu0 0
      %10153 = vmatpush1.bf16.msra.mxu0 %v10127
      %10154 = vmatprep.subr.bf16.mxu0 0
      %10155 = vmatpush1.bf16.msra.mxu0 %v10126
      %10156 = vmatprep.subr.bf16.mxu0 0
      %10157 = vmatpush1.bf16.msra.mxu0 %v10125
      %10158 = vmatprep.subr.bf16.mxu0 0
      %10159 = vmatpush1.bf16.msra.mxu0 %v10124
      %10160 = vmatprep.subr.bf16.mxu0 0
      %10161 = vmatpush1.bf16.msra.mxu0 %v10123
      %10162 = vmatprep.subr.bf16.mxu0 0
      %10163 = vmatpush1.bf16.msra.mxu0 %v10122
      %10164 = vmatprep.subr.bf16.mxu0 0
      %10165 = vmatpush1.bf16.msra.mxu0 %v10121
      %10166 = vmatprep.subr.bf16.mxu0 0
      %10167 = vmatpush1.bf16.msra.mxu0 %v10120
      %10168 = vmatprep.subr.bf16.mxu0 0
      %10169 = vmatpush2.bf16.msra.mxu0 %v10135
      %10170 = vmatprep.subr.bf16.mxu0 0
      %10171 = vmatpush2.bf16.msra.mxu0 %v10134
      %10172 = vmatprep.subr.bf16.mxu0 0
      %10173 = vmatpush2.bf16.msra.mxu0 %v10133
      %10174 = vmatprep.subr.bf16.mxu0 0
      %10175 = vmatpush2.bf16.msra.mxu0 %v10132
      %10176 = vmatprep.subr.bf16.mxu0 0
      %10177 = vmatpush2.bf16.msra.mxu0 %v10131
      %10178 = vmatprep.subr.bf16.mxu0 0
      %10179 = vmatpush2.bf16.msra.mxu0 %v10130
      %10180 = vmatprep.subr.bf16.mxu0 0
      %10181 = vmatpush2.bf16.msra.mxu0 %v10129
      %10182 = vmatprep.subr.bf16.mxu0 0
      %10183 = vmatpush2.bf16.msra.mxu0 %v10128
      %10184 = vmatprep.mubr.bf16.mxu0 %v9987
      %10185 = vmatmul.mubr.bf16.gmra.mxu0 %v9984
      %v10186 = vpop.f32.mrf.mxu0
      %v10187 = vadd.f32 0.0, %v10186
      %v10188 = vpop.f32.mrf.mxu0
      %v10189 = vpop.f32.mrf.mxu0
      %v10190 = vadd.f32 0.0, %v10189
      %v10191 = vpop.f32.mrf.mxu0
      %10192 = vmatprep.mubr.bf16.mxu0 %v9991
      %10193 = vmatmul.mubr.bf16.gmra.mxu0 %v9989
      %v10194 = vpop.f32.mrf.mxu0
      %v10195 = vadd.f32 0.0, %v10194
      %v10196 = vpop.f32.mrf.mxu0
      %v10197 = vpop.f32.mrf.mxu0
      %v10198 = vadd.f32 0.0, %v10197
      %v10199 = vpop.f32.mrf.mxu0
      %10200 = vmatprep.mubr.bf16.mxu0 %v9995
      %10201 = vmatmul.mubr.bf16.gmra.mxu0 %v9993
      %v10202 = vpop.f32.mrf.mxu0
      %v10203 = vadd.f32 0.0, %v10202
      %v10204 = vpop.f32.mrf.mxu0
      %v10205 = vpop.f32.mrf.mxu0
      %v10206 = vadd.f32 0.0, %v10205
      %v10207 = vpop.f32.mrf.mxu0
      %10208 = vmatprep.mubr.bf16.mxu0 %v9999
      %10209 = vmatmul.mubr.bf16.gmra.mxu0 %v9997
      %v10210 = vpop.f32.mrf.mxu0
      %v10211 = vadd.f32 0.0, %v10210
      %v10212 = vpop.f32.mrf.mxu0
      %v10213 = vpop.f32.mrf.mxu0
      %v10214 = vadd.f32 0.0, %v10213
      %v10215 = vpop.f32.mrf.mxu0
      %10216 = vmatprep.mubr.bf16.mxu0 %v10003
      %10217 = vmatmul.mubr.bf16.gmra.mxu0 %v10001
      %v10218 = vpop.f32.mrf.mxu0
      %v10219 = vadd.f32 0.0, %v10218
      %v10220 = vpop.f32.mrf.mxu0
      %v10221 = vpop.f32.mrf.mxu0
      %v10222 = vadd.f32 0.0, %v10221
      %v10223 = vpop.f32.mrf.mxu0
      %10224 = vmatprep.mubr.bf16.mxu0 %v10007
      %10225 = vmatmul.mubr.bf16.gmra.mxu0 %v10005
      %v10226 = vpop.f32.mrf.mxu0
      %v10227 = vadd.f32 0.0, %v10226
      %v10228 = vpop.f32.mrf.mxu0
      %v10229 = vpop.f32.mrf.mxu0
      %v10230 = vadd.f32 0.0, %v10229
      %v10231 = vpop.f32.mrf.mxu0
      %10232 = vmatprep.mubr.bf16.mxu0 %v10011
      %10233 = vmatmul.mubr.bf16.gmra.mxu0 %v10009
      %v10234 = vpop.f32.mrf.mxu0
      %v10235 = vadd.f32 0.0, %v10234
      %v10236 = vpop.f32.mrf.mxu0
      %v10237 = vpop.f32.mrf.mxu0
      %v10238 = vadd.f32 0.0, %v10237
      %v10239 = vpop.f32.mrf.mxu0
      %10240 = vmatprep.mubr.bf16.mxu0 %v10015
      %10241 = vmatmul.mubr.bf16.gmra.mxu0 %v10013
      %v10242 = vpop.f32.mrf.mxu0
      %v10243 = vadd.f32 0.0, %v10242
      %v10244 = vpop.f32.mrf.mxu0
      %v10245 = vpop.f32.mrf.mxu0
      %v10246 = vadd.f32 0.0, %v10245
      %v10247 = vpop.f32.mrf.mxu0
      %10248 = vmatprep.mubr.bf16.mxu0 %v10019
      %10249 = vmatmul.mubr.bf16.gmra.mxu0 %v10017
      %v10250 = vpop.f32.mrf.mxu0
      %v10251 = vadd.f32 0.0, %v10250
      %v10252 = vpop.f32.mrf.mxu0
      %v10253 = vpop.f32.mrf.mxu0
      %v10254 = vadd.f32 0.0, %v10253
      %v10255 = vpop.f32.mrf.mxu0
      %10256 = vmatprep.mubr.bf16.mxu0 %v10023
      %10257 = vmatmul.mubr.bf16.gmra.mxu0 %v10021
      %v10258 = vpop.f32.mrf.mxu0
      %v10259 = vadd.f32 0.0, %v10258
      %v10260 = vpop.f32.mrf.mxu0
      %v10261 = vpop.f32.mrf.mxu0
      %v10262 = vadd.f32 0.0, %v10261
      %v10263 = vpop.f32.mrf.mxu0
      %10264 = vmatprep.mubr.bf16.mxu0 %v10027
      %10265 = vmatmul.mubr.bf16.gmra.mxu0 %v10025
      %v10266 = vpop.f32.mrf.mxu0
      %v10267 = vadd.f32 0.0, %v10266
      %v10268 = vpop.f32.mrf.mxu0
      %v10269 = vpop.f32.mrf.mxu0
      %v10270 = vadd.f32 0.0, %v10269
      %v10271 = vpop.f32.mrf.mxu0
      %10272 = vmatprep.mubr.bf16.mxu0 %v10031
      %10273 = vmatmul.mubr.bf16.gmra.mxu0 %v10029
      %v10274 = vpop.f32.mrf.mxu0
      %v10275 = vadd.f32 0.0, %v10274
      %v10276 = vpop.f32.mrf.mxu0
      %v10277 = vpop.f32.mrf.mxu0
      %v10278 = vadd.f32 0.0, %v10277
      %v10279 = vpop.f32.mrf.mxu0
      %10280 = vdwg.mxu0
      %v10281 = vadd.f32 %v9850, %v10187
      %v10282 = vadd.f32 %v9853, %v10190
      %v10283 = vadd.f32 %v9858, %v10195
      %v10284 = vadd.f32 %v9861, %v10198
      %v10285 = vadd.f32 %v9866, %v10203
      %v10286 = vadd.f32 %v9869, %v10206
      %v10287 = vadd.f32 %v9874, %v10211
      %v10288 = vadd.f32 %v9877, %v10214
      %v10289 = vadd.f32 %v9882, %v10219
      %v10290 = vadd.f32 %v9885, %v10222
      %v10291 = vadd.f32 %v9890, %v10227
      %v10292 = vadd.f32 %v9893, %v10230
      %v10293 = vadd.f32 %v9898, %v10235
      %v10294 = vadd.f32 %v9901, %v10238
      %v10295 = vadd.f32 %v9906, %v10243
      %v10296 = vadd.f32 %v9909, %v10246
      %v10297 = vadd.f32 %v9914, %v10251
      %v10298 = vadd.f32 %v9917, %v10254
      %v10299 = vadd.f32 %v9922, %v10259
      %v10300 = vadd.f32 %v9925, %v10262
      %v10301 = vadd.f32 %v9930, %v10267
      %v10302 = vadd.f32 %v9933, %v10270
      %v10303 = vadd.f32 %v9938, %v10275
      %v10304 = vadd.f32 %v9941, %v10278
      %v10305 = vld [vmem:[#allocation3 + $0xc0] sm:$0x33]
      %v10306 = vld [vmem:[%s5 + $0x180] sm:$0xf]
      %v10307 = vld [vmem:[%s5 + $0x184] sm:$0xf]
      %v10308 = vld [vmem:[%s5 + $0x188] sm:$0xf]
      %v10309 = vld [vmem:[%s5 + $0x18c] sm:$0xf]
      %v10310 = vld [vmem:[%s5 + $0x190] sm:$0xf]
      %v10311 = vld [vmem:[%s5 + $0x194] sm:$0xf]
      %v10312 = vld [vmem:[%s5 + $0x198] sm:$0xf]
      %v10313 = vld [vmem:[%s5 + $0x19c] sm:$0xf]
      %v10314 = vld [vmem:[%s5 + $0x1a0] sm:$0xf]
      %v10315 = vld [vmem:[%s5 + $0x1a4] sm:$0xf]
      %v10316 = vld [vmem:[%s5 + $0x1a8] sm:$0xf]
      %v10317 = vld [vmem:[%s5 + $0x1ac] sm:$0xf]
      %v10318 = vld [vmem:[%s5 + $0x1b0] sm:$0xf]
      %v10319 = vld [vmem:[%s5 + $0x1b4] sm:$0xf]
      %v10320 = vld [vmem:[%s5 + $0x1b8] sm:$0xf]
      %v10321 = vld [vmem:[%s5 + $0x1bc] sm:$0xf]
      %v10322 = vld [vmem:[%s5 + $0x1c0] sm:$0xf]
      %v10323 = vld [vmem:[%s5 + $0x1c4] sm:$0xf]
      %v10324 = vld [vmem:[%s5 + $0x1c8] sm:$0xf]
      %v10325 = vld [vmem:[%s5 + $0x1cc] sm:$0xf]
      %v10326 = vld [vmem:[%s5 + $0x1d0] sm:$0xf]
      %v10327 = vld [vmem:[%s5 + $0x1d4] sm:$0xf]
      %v10328 = vld [vmem:[%s5 + $0x1d8] sm:$0xf]
      %v10329 = vld [vmem:[%s5 + $0x1dc] sm:$0xf]
      %v10330 = vld [vmem:[%s5 + $0x1e0] sm:$0xf]
      %v10331 = vld [vmem:[%s5 + $0x1e4] sm:$0xf]
      %v10332 = vld [vmem:[%s5 + $0x1e8] sm:$0xf]
      %v10333 = vld [vmem:[%s5 + $0x1ec] sm:$0xf]
      %v10334 = vld [vmem:[%s5 + $0x1f0] sm:$0xf]
      %v10335 = vld [vmem:[%s5 + $0x1f4] sm:$0xf]
      %v10336 = vld [vmem:[%s5 + $0x1f8] sm:$0xf]
      %v10337 = vld [vmem:[%s5 + $0x1fc] sm:$0xf]
      %v10339 = vunpack.c.l.b16 %v10305
      %v10340 = vunpack.c.h.b16 %v10305
      %v10341 = vpack.c.b16 %v10339, %v10339
      %v10342 = vpack.c.b16 %v10340, %v10340
      %v10344 = vshrl.u32 %v9980, 16
      %v10346 = vrot.slane %v10344, 1
      %v10347 = vshll.u32 %v9980, 16
      %v10349 = vrot.slane %v10347, 2
      %v10350 = vor.u32 %v10346, %v10349
      %v10351 = vrot.slane %v9270, 1
      %v10352 = vrot.slane %v9254, 2
      %v10353 = vor.u32 %v10351, %v10352
      %v10354 = vsel %vm4874, %v10350, %v10353
      %v10356 = vshrl.u32 %v9981, 16
      %v10358 = vrot.slane %v10356, 1
      %v10359 = vshll.u32 %v9981, 16
      %v10361 = vrot.slane %v10359, 2
      %v10362 = vor.u32 %v10358, %v10361
      %v10363 = vrot.slane %v9278, 1
      %v10364 = vrot.slane %v9266, 2
      %v10365 = vor.u32 %v10363, %v10364
      %v10366 = vsel %vm4874, %v10362, %v10365
      %v10367 = vrot.slane %v9286, 1
      %v10368 = vrot.slane %v9274, 2
      %v10369 = vor.u32 %v10367, %v10368
      %v10370 = vsel %vm4874, %v10353, %v10369
      %v10371 = vrot.slane %v9294, 1
      %v10372 = vrot.slane %v9282, 2
      %v10373 = vor.u32 %v10371, %v10372
      %v10374 = vsel %vm4874, %v10365, %v10373
      %v10375 = vrot.slane %v9302, 1
      %v10376 = vrot.slane %v9290, 2
      %v10377 = vor.u32 %v10375, %v10376
      %v10378 = vsel %vm4874, %v10369, %v10377
      %v10379 = vrot.slane %v9310, 1
      %v10380 = vrot.slane %v9298, 2
      %v10381 = vor.u32 %v10379, %v10380
      %v10382 = vsel %vm4874, %v10373, %v10381
      %v10383 = vrot.slane %v9318, 1
      %v10384 = vrot.slane %v9306, 2
      %v10385 = vor.u32 %v10383, %v10384
      %v10386 = vsel %vm4874, %v10377, %v10385
      %v10387 = vrot.slane %v9326, 1
      %v10388 = vrot.slane %v9314, 2
      %v10389 = vor.u32 %v10387, %v10388
      %v10390 = vsel %vm4874, %v10381, %v10389
      %v10391 = vrot.slane %v9334, 1
      %v10392 = vrot.slane %v9322, 2
      %v10393 = vor.u32 %v10391, %v10392
      %v10394 = vsel %vm4874, %v10385, %v10393
      %v10395 = vrot.slane %v9342, 1
      %v10396 = vrot.slane %v9330, 2
      %v10397 = vor.u32 %v10395, %v10396
      %v10398 = vsel %vm4874, %v10389, %v10397
      %v10399 = vrot.slane %v9350, 1
      %v10400 = vrot.slane %v9338, 2
      %v10401 = vor.u32 %v10399, %v10400
      %v10402 = vsel %vm4874, %v10393, %v10401
      %v10403 = vrot.slane %v9358, 1
      %v10404 = vrot.slane %v9346, 2
      %v10405 = vor.u32 %v10403, %v10404
      %v10406 = vsel %vm4874, %v10397, %v10405
      %v10407 = vrot.slane %v9366, 1
      %v10408 = vrot.slane %v9354, 2
      %v10409 = vor.u32 %v10407, %v10408
      %v10410 = vsel %vm4874, %v10401, %v10409
      %v10411 = vrot.slane %v9374, 1
      %v10412 = vrot.slane %v9362, 2
      %v10413 = vor.u32 %v10411, %v10412
      %v10414 = vsel %vm4874, %v10405, %v10413
      %v10415 = vrot.slane %v9382, 1
      %v10416 = vrot.slane %v9370, 2
      %v10417 = vor.u32 %v10415, %v10416
      %v10418 = vsel %vm4874, %v10409, %v10417
      %v10419 = vrot.slane %v9390, 1
      %v10420 = vrot.slane %v9378, 2
      %v10421 = vor.u32 %v10419, %v10420
      %v10422 = vsel %vm4874, %v10413, %v10421
      %v10423 = vrot.slane %v9398, 1
      %v10424 = vrot.slane %v9386, 2
      %v10425 = vor.u32 %v10423, %v10424
      %v10426 = vsel %vm4874, %v10417, %v10425
      %v10427 = vrot.slane %v9406, 1
      %v10428 = vrot.slane %v9394, 2
      %v10429 = vor.u32 %v10427, %v10428
      %v10430 = vsel %vm4874, %v10421, %v10429
      %v10431 = vrot.slane %v9414, 1
      %v10432 = vrot.slane %v9402, 2
      %v10433 = vor.u32 %v10431, %v10432
      %v10434 = vsel %vm4874, %v10425, %v10433
      %v10435 = vrot.slane %v9422, 1
      %v10436 = vrot.slane %v9410, 2
      %v10437 = vor.u32 %v10435, %v10436
      %v10438 = vsel %vm4874, %v10429, %v10437
      %v10439 = vrot.slane %v9430, 1
      %v10440 = vrot.slane %v9418, 2
      %v10441 = vor.u32 %v10439, %v10440
      %v10442 = vsel %vm4874, %v10433, %v10441
      %v10443 = vrot.slane %v9438, 1
      %v10444 = vrot.slane %v9426, 2
      %v10445 = vor.u32 %v10443, %v10444
      %v10446 = vsel %vm4874, %v10437, %v10445
      %v10448 = vshrl.u32 %v10341, 16
      %v10450 = vrot.slane %v10448, 1
      %v10451 = vshll.u32 %v10341, 16
      %v10453 = vrot.slane %v10451, 2
      %v10454 = vor.u32 %v10450, %v10453
      %v10455 = vsel %vm4874, %v10441, %v10454
      %v10457 = vshrl.u32 %v10342, 16
      %v10459 = vrot.slane %v10457, 1
      %v10460 = vshll.u32 %v10342, 16
      %v10462 = vrot.slane %v10460, 2
      %v10463 = vor.u32 %v10459, %v10462
      %v10464 = vsel %vm4874, %v10445, %v10463
      %v10521 = vunpack.c.l.b16 %v10306
      %v10522 = vunpack.c.l.b16 %v10307
      %v10523 = vunpack.c.l.b16 %v10308
      %v10524 = vunpack.c.l.b16 %v10309
      %v10525 = vunpack.c.l.b16 %v10310
      %v10526 = vunpack.c.l.b16 %v10311
      %v10527 = vunpack.c.l.b16 %v10312
      %v10528 = vunpack.c.l.b16 %v10313
      %v10529 = vunpack.c.l.b16 %v10314
      %v10530 = vunpack.c.l.b16 %v10315
      %v10531 = vunpack.c.l.b16 %v10316
      %v10532 = vunpack.c.l.b16 %v10317
      %v10533 = vunpack.c.l.b16 %v10318
      %v10534 = vunpack.c.l.b16 %v10319
      %v10535 = vunpack.c.l.b16 %v10320
      %v10536 = vunpack.c.l.b16 %v10321
      %v10537 = vunpack.c.l.b16 %v10322
      %v10538 = vunpack.c.l.b16 %v10323
      %v10539 = vunpack.c.l.b16 %v10324
      %v10540 = vunpack.c.l.b16 %v10325
      %v10541 = vunpack.c.l.b16 %v10326
      %v10542 = vunpack.c.l.b16 %v10327
      %v10543 = vunpack.c.l.b16 %v10328
      %v10544 = vunpack.c.l.b16 %v10329
      %v10545 = vunpack.c.l.b16 %v10330
      %v10546 = vunpack.c.l.b16 %v10331
      %v10547 = vunpack.c.l.b16 %v10332
      %v10548 = vunpack.c.l.b16 %v10333
      %v10549 = vunpack.c.l.b16 %v10334
      %v10550 = vunpack.c.l.b16 %v10335
      %v10551 = vunpack.c.l.b16 %v10336
      %v10552 = vunpack.c.l.b16 %v10337
      %v10553 = vpack.c.b16 %v10522, %v10521
      %v10554 = vpack.c.b16 %v10524, %v10523
      %v10555 = vpack.c.b16 %v10526, %v10525
      %v10556 = vpack.c.b16 %v10528, %v10527
      %v10557 = vpack.c.b16 %v10530, %v10529
      %v10558 = vpack.c.b16 %v10532, %v10531
      %v10559 = vpack.c.b16 %v10534, %v10533
      %v10560 = vpack.c.b16 %v10536, %v10535
      %v10561 = vpack.c.b16 %v10538, %v10537
      %v10562 = vpack.c.b16 %v10540, %v10539
      %v10563 = vpack.c.b16 %v10542, %v10541
      %v10564 = vpack.c.b16 %v10544, %v10543
      %v10565 = vpack.c.b16 %v10546, %v10545
      %v10566 = vpack.c.b16 %v10548, %v10547
      %v10567 = vpack.c.b16 %v10550, %v10549
      %v10568 = vpack.c.b16 %v10552, %v10551
      %10585 = vmatprep.subr.bf16.mxu0 0
      %10586 = vmatpush1.bf16.msra.mxu0 %v10560
      %10587 = vmatprep.subr.bf16.mxu0 0
      %10588 = vmatpush1.bf16.msra.mxu0 %v10559
      %10589 = vmatprep.subr.bf16.mxu0 0
      %10590 = vmatpush1.bf16.msra.mxu0 %v10558
      %10591 = vmatprep.subr.bf16.mxu0 0
      %10592 = vmatpush1.bf16.msra.mxu0 %v10557
      %10593 = vmatprep.subr.bf16.mxu0 0
      %10594 = vmatpush1.bf16.msra.mxu0 %v10556
      %10595 = vmatprep.subr.bf16.mxu0 0
      %10596 = vmatpush1.bf16.msra.mxu0 %v10555
      %10597 = vmatprep.subr.bf16.mxu0 0
      %10598 = vmatpush1.bf16.msra.mxu0 %v10554
      %10599 = vmatprep.subr.bf16.mxu0 0
      %10600 = vmatpush1.bf16.msra.mxu0 %v10553
      %10601 = vmatprep.subr.bf16.mxu0 0
      %10602 = vmatpush2.bf16.msra.mxu0 %v10568
      %10603 = vmatprep.subr.bf16.mxu0 0
      %10604 = vmatpush2.bf16.msra.mxu0 %v10567
      %10605 = vmatprep.subr.bf16.mxu0 0
      %10606 = vmatpush2.bf16.msra.mxu0 %v10566
      %10607 = vmatprep.subr.bf16.mxu0 0
      %10608 = vmatpush2.bf16.msra.mxu0 %v10565
      %10609 = vmatprep.subr.bf16.mxu0 0
      %10610 = vmatpush2.bf16.msra.mxu0 %v10564
      %10611 = vmatprep.subr.bf16.mxu0 0
      %10612 = vmatpush2.bf16.msra.mxu0 %v10563
      %10613 = vmatprep.subr.bf16.mxu0 0
      %10614 = vmatpush2.bf16.msra.mxu0 %v10562
      %10615 = vmatprep.subr.bf16.mxu0 0
      %10616 = vmatpush2.bf16.msra.mxu0 %v10561
      %10617 = vmatprep.mubr.bf16.mxu0 %v10366
      %10618 = vmatmul.mubr.bf16.gmra.mxu0 %v10354
      %v10619 = vpop.f32.mrf.mxu0
      %v10620 = vadd.f32 0.0, %v10619
      %v10621 = vpop.f32.mrf.mxu0
      %v10622 = vpop.f32.mrf.mxu0
      %v10623 = vadd.f32 0.0, %v10622
      %v10624 = vpop.f32.mrf.mxu0
      %10625 = vmatprep.mubr.bf16.mxu0 %v10374
      %10626 = vmatmul.mubr.bf16.gmra.mxu0 %v10370
      %v10627 = vpop.f32.mrf.mxu0
      %v10628 = vadd.f32 0.0, %v10627
      %v10629 = vpop.f32.mrf.mxu0
      %v10630 = vpop.f32.mrf.mxu0
      %v10631 = vadd.f32 0.0, %v10630
      %v10632 = vpop.f32.mrf.mxu0
      %10633 = vmatprep.mubr.bf16.mxu0 %v10382
      %10634 = vmatmul.mubr.bf16.gmra.mxu0 %v10378
      %v10635 = vpop.f32.mrf.mxu0
      %v10636 = vadd.f32 0.0, %v10635
      %v10637 = vpop.f32.mrf.mxu0
      %v10638 = vpop.f32.mrf.mxu0
      %v10639 = vadd.f32 0.0, %v10638
      %v10640 = vpop.f32.mrf.mxu0
      %10641 = vmatprep.mubr.bf16.mxu0 %v10390
      %10642 = vmatmul.mubr.bf16.gmra.mxu0 %v10386
      %v10643 = vpop.f32.mrf.mxu0
      %v10644 = vadd.f32 0.0, %v10643
      %v10645 = vpop.f32.mrf.mxu0
      %v10646 = vpop.f32.mrf.mxu0
      %v10647 = vadd.f32 0.0, %v10646
      %v10648 = vpop.f32.mrf.mxu0
      %10649 = vmatprep.mubr.bf16.mxu0 %v10398
      %10650 = vmatmul.mubr.bf16.gmra.mxu0 %v10394
      %v10651 = vpop.f32.mrf.mxu0
      %v10652 = vadd.f32 0.0, %v10651
      %v10653 = vpop.f32.mrf.mxu0
      %v10654 = vpop.f32.mrf.mxu0
      %v10655 = vadd.f32 0.0, %v10654
      %v10656 = vpop.f32.mrf.mxu0
      %10657 = vmatprep.mubr.bf16.mxu0 %v10406
      %10658 = vmatmul.mubr.bf16.gmra.mxu0 %v10402
      %v10659 = vpop.f32.mrf.mxu0
      %v10660 = vadd.f32 0.0, %v10659
      %v10661 = vpop.f32.mrf.mxu0
      %v10662 = vpop.f32.mrf.mxu0
      %v10663 = vadd.f32 0.0, %v10662
      %v10664 = vpop.f32.mrf.mxu0
      %10665 = vmatprep.mubr.bf16.mxu0 %v10414
      %10666 = vmatmul.mubr.bf16.gmra.mxu0 %v10410
      %v10667 = vpop.f32.mrf.mxu0
      %v10668 = vadd.f32 0.0, %v10667
      %v10669 = vpop.f32.mrf.mxu0
      %v10670 = vpop.f32.mrf.mxu0
      %v10671 = vadd.f32 0.0, %v10670
      %v10672 = vpop.f32.mrf.mxu0
      %10673 = vmatprep.mubr.bf16.mxu0 %v10422
      %10674 = vmatmul.mubr.bf16.gmra.mxu0 %v10418
      %v10675 = vpop.f32.mrf.mxu0
      %v10676 = vadd.f32 0.0, %v10675
      %v10677 = vpop.f32.mrf.mxu0
      %v10678 = vpop.f32.mrf.mxu0
      %v10679 = vadd.f32 0.0, %v10678
      %v10680 = vpop.f32.mrf.mxu0
      %10681 = vmatprep.mubr.bf16.mxu0 %v10430
      %10682 = vmatmul.mubr.bf16.gmra.mxu0 %v10426
      %v10683 = vpop.f32.mrf.mxu0
      %v10684 = vadd.f32 0.0, %v10683
      %v10685 = vpop.f32.mrf.mxu0
      %v10686 = vpop.f32.mrf.mxu0
      %v10687 = vadd.f32 0.0, %v10686
      %v10688 = vpop.f32.mrf.mxu0
      %10689 = vmatprep.mubr.bf16.mxu0 %v10438
      %10690 = vmatmul.mubr.bf16.gmra.mxu0 %v10434
      %v10691 = vpop.f32.mrf.mxu0
      %v10692 = vadd.f32 0.0, %v10691
      %v10693 = vpop.f32.mrf.mxu0
      %v10694 = vpop.f32.mrf.mxu0
      %v10695 = vadd.f32 0.0, %v10694
      %v10696 = vpop.f32.mrf.mxu0
      %10697 = vmatprep.mubr.bf16.mxu0 %v10446
      %10698 = vmatmul.mubr.bf16.gmra.mxu0 %v10442
      %v10699 = vpop.f32.mrf.mxu0
      %v10700 = vadd.f32 0.0, %v10699
      %v10701 = vpop.f32.mrf.mxu0
      %v10702 = vpop.f32.mrf.mxu0
      %v10703 = vadd.f32 0.0, %v10702
      %v10704 = vpop.f32.mrf.mxu0
      %10705 = vmatprep.mubr.bf16.mxu0 %v10464
      %10706 = vmatmul.mubr.bf16.gmra.mxu0 %v10455
      %v10707 = vpop.f32.mrf.mxu0
      %v10708 = vadd.f32 0.0, %v10707
      %v10709 = vpop.f32.mrf.mxu0
      %v10710 = vpop.f32.mrf.mxu0
      %v10711 = vadd.f32 0.0, %v10710
      %v10712 = vpop.f32.mrf.mxu0
      %10713 = vdwg.mxu0
      %v10714 = vadd.f32 %v10281, %v10620
      %v10715 = vadd.f32 %v10282, %v10623
      %v10716 = vadd.f32 %v10283, %v10628
      %v10717 = vadd.f32 %v10284, %v10631
      %v10718 = vadd.f32 %v10285, %v10636
      %v10719 = vadd.f32 %v10286, %v10639
      %v10720 = vadd.f32 %v10287, %v10644
      %v10721 = vadd.f32 %v10288, %v10647
      %v10722 = vadd.f32 %v10289, %v10652
      %v10723 = vadd.f32 %v10290, %v10655
      %v10724 = vadd.f32 %v10291, %v10660
      %v10725 = vadd.f32 %v10292, %v10663
      %v10726 = vadd.f32 %v10293, %v10668
      %v10727 = vadd.f32 %v10294, %v10671
      %v10728 = vadd.f32 %v10295, %v10676
      %v10729 = vadd.f32 %v10296, %v10679
      %v10730 = vadd.f32 %v10297, %v10684
      %v10731 = vadd.f32 %v10298, %v10687
      %v10732 = vadd.f32 %v10299, %v10692
      %v10733 = vadd.f32 %v10300, %v10695
      %v10734 = vadd.f32 %v10301, %v10700
      %v10735 = vadd.f32 %v10302, %v10703
      %v10736 = vadd.f32 %v10303, %v10708
      %v10737 = vadd.f32 %v10304, %v10711
      %v10738 = vld [vmem:[#allocation3] sm:$0xcc]
      %v10739 = vld [vmem:[%s5 + $0x200] sm:$0xf]
      %v10740 = vld [vmem:[%s5 + $0x204] sm:$0xf]
      %v10741 = vld [vmem:[%s5 + $0x208] sm:$0xf]
      %v10742 = vld [vmem:[%s5 + $0x20c] sm:$0xf]
      %v10743 = vld [vmem:[%s5 + $0x210] sm:$0xf]
      %v10744 = vld [vmem:[%s5 + $0x214] sm:$0xf]
      %v10745 = vld [vmem:[%s5 + $0x218] sm:$0xf]
      %v10746 = vld [vmem:[%s5 + $0x21c] sm:$0xf]
      %v10747 = vld [vmem:[%s5 + $0x220] sm:$0xf]
      %v10748 = vld [vmem:[%s5 + $0x224] sm:$0xf]
      %v10749 = vld [vmem:[%s5 + $0x228] sm:$0xf]
      %v10750 = vld [vmem:[%s5 + $0x22c] sm:$0xf]
      %v10751 = vld [vmem:[%s5 + $0x230] sm:$0xf]
      %v10752 = vld [vmem:[%s5 + $0x234] sm:$0xf]
      %v10753 = vld [vmem:[%s5 + $0x238] sm:$0xf]
      %v10754 = vld [vmem:[%s5 + $0x23c] sm:$0xf]
      %v10755 = vld [vmem:[%s5 + $0x240] sm:$0xf]
      %v10756 = vld [vmem:[%s5 + $0x244] sm:$0xf]
      %v10757 = vld [vmem:[%s5 + $0x248] sm:$0xf]
      %v10758 = vld [vmem:[%s5 + $0x24c] sm:$0xf]
      %v10759 = vld [vmem:[%s5 + $0x250] sm:$0xf]
      %v10760 = vld [vmem:[%s5 + $0x254] sm:$0xf]
      %v10761 = vld [vmem:[%s5 + $0x258] sm:$0xf]
      %v10762 = vld [vmem:[%s5 + $0x25c] sm:$0xf]
      %v10763 = vld [vmem:[%s5 + $0x260] sm:$0xf]
      %v10764 = vld [vmem:[%s5 + $0x264] sm:$0xf]
      %v10765 = vld [vmem:[%s5 + $0x268] sm:$0xf]
      %v10766 = vld [vmem:[%s5 + $0x26c] sm:$0xf]
      %v10767 = vld [vmem:[%s5 + $0x270] sm:$0xf]
      %v10768 = vld [vmem:[%s5 + $0x274] sm:$0xf]
      %v10769 = vld [vmem:[%s5 + $0x278] sm:$0xf]
      %v10770 = vld [vmem:[%s5 + $0x27c] sm:$0xf]
      %v10772 = vunpack.c.l.b16 %v10738
      %v10773 = vunpack.c.h.b16 %v10738
      %v10774 = vpack.c.b16 %v9172, %v10772
      %v10775 = vpack.c.b16 %v9173, %v10773
      %v10776 = vrot.slane %v10774, 2
      %v10777 = vrot.slane %v9222, 2
      %v10778 = vsel %vm5917, %v10776, %v10777
      %v10779 = vrot.slane %v10775, 2
      %v10780 = vrot.slane %v9223, 2
      %v10781 = vsel %vm5917, %v10779, %v10780
      %v10782 = vrot.slane %v9224, 2
      %v10783 = vsel %vm5917, %v10777, %v10782
      %v10784 = vrot.slane %v9225, 2
      %v10785 = vsel %vm5917, %v10780, %v10784
      %v10786 = vrot.slane %v9226, 2
      %v10787 = vsel %vm5917, %v10782, %v10786
      %v10788 = vrot.slane %v9227, 2
      %v10789 = vsel %vm5917, %v10784, %v10788
      %v10790 = vrot.slane %v9228, 2
      %v10791 = vsel %vm5917, %v10786, %v10790
      %v10792 = vrot.slane %v9229, 2
      %v10793 = vsel %vm5917, %v10788, %v10792
      %v10794 = vrot.slane %v9230, 2
      %v10795 = vsel %vm5917, %v10790, %v10794
      %v10796 = vrot.slane %v9231, 2
      %v10797 = vsel %vm5917, %v10792, %v10796
      %v10798 = vrot.slane %v9232, 2
      %v10799 = vsel %vm5917, %v10794, %v10798
      %v10800 = vrot.slane %v9233, 2
      %v10801 = vsel %vm5917, %v10796, %v10800
      %v10802 = vrot.slane %v9234, 2
      %v10803 = vsel %vm5917, %v10798, %v10802
      %v10804 = vrot.slane %v9235, 2
      %v10805 = vsel %vm5917, %v10800, %v10804
      %v10806 = vrot.slane %v9236, 2
      %v10807 = vsel %vm5917, %v10802, %v10806
      %v10808 = vrot.slane %v9237, 2
      %v10809 = vsel %vm5917, %v10804, %v10808
      %v10810 = vrot.slane %v9238, 2
      %v10811 = vsel %vm5917, %v10806, %v10810
      %v10812 = vrot.slane %v9239, 2
      %v10813 = vsel %vm5917, %v10808, %v10812
      %v10814 = vrot.slane %v9240, 2
      %v10815 = vsel %vm5917, %v10810, %v10814
      %v10816 = vrot.slane %v9241, 2
      %v10817 = vsel %vm5917, %v10812, %v10816
      %v10818 = vrot.slane %v9242, 2
      %v10819 = vsel %vm5917, %v10814, %v10818
      %v10820 = vrot.slane %v9243, 2
      %v10821 = vsel %vm5917, %v10816, %v10820
      %v10822 = vrot.slane %v10341, 2
      %v10823 = vsel %vm5917, %v10818, %v10822
      %v10824 = vrot.slane %v10342, 2
      %v10825 = vsel %vm5917, %v10820, %v10824
      %v10882 = vunpack.c.l.b16 %v10739
      %v10883 = vunpack.c.l.b16 %v10740
      %v10884 = vunpack.c.l.b16 %v10741
      %v10885 = vunpack.c.l.b16 %v10742
      %v10886 = vunpack.c.l.b16 %v10743
      %v10887 = vunpack.c.l.b16 %v10744
      %v10888 = vunpack.c.l.b16 %v10745
      %v10889 = vunpack.c.l.b16 %v10746
      %v10890 = vunpack.c.l.b16 %v10747
      %v10891 = vunpack.c.l.b16 %v10748
      %v10892 = vunpack.c.l.b16 %v10749
      %v10893 = vunpack.c.l.b16 %v10750
      %v10894 = vunpack.c.l.b16 %v10751
      %v10895 = vunpack.c.l.b16 %v10752
      %v10896 = vunpack.c.l.b16 %v10753
      %v10897 = vunpack.c.l.b16 %v10754
      %v10898 = vunpack.c.l.b16 %v10755
      %v10899 = vunpack.c.l.b16 %v10756
      %v10900 = vunpack.c.l.b16 %v10757
      %v10901 = vunpack.c.l.b16 %v10758
      %v10902 = vunpack.c.l.b16 %v10759
      %v10903 = vunpack.c.l.b16 %v10760
      %v10904 = vunpack.c.l.b16 %v10761
      %v10905 = vunpack.c.l.b16 %v10762
      %v10906 = vunpack.c.l.b16 %v10763
      %v10907 = vunpack.c.l.b16 %v10764
      %v10908 = vunpack.c.l.b16 %v10765
      %v10909 = vunpack.c.l.b16 %v10766
      %v10910 = vunpack.c.l.b16 %v10767
      %v10911 = vunpack.c.l.b16 %v10768
      %v10912 = vunpack.c.l.b16 %v10769
      %v10913 = vunpack.c.l.b16 %v10770
      %v10914 = vpack.c.b16 %v10883, %v10882
      %v10915 = vpack.c.b16 %v10885, %v10884
      %v10916 = vpack.c.b16 %v10887, %v10886
      %v10917 = vpack.c.b16 %v10889, %v10888
      %v10918 = vpack.c.b16 %v10891, %v10890
      %v10919 = vpack.c.b16 %v10893, %v10892
      %v10920 = vpack.c.b16 %v10895, %v10894
      %v10921 = vpack.c.b16 %v10897, %v10896
      %v10922 = vpack.c.b16 %v10899, %v10898
      %v10923 = vpack.c.b16 %v10901, %v10900
      %v10924 = vpack.c.b16 %v10903, %v10902
      %v10925 = vpack.c.b16 %v10905, %v10904
      %v10926 = vpack.c.b16 %v10907, %v10906
      %v10927 = vpack.c.b16 %v10909, %v10908
      %v10928 = vpack.c.b16 %v10911, %v10910
      %v10929 = vpack.c.b16 %v10913, %v10912
      %10946 = vmatprep.subr.bf16.mxu0 0
      %10947 = vmatpush1.bf16.msra.mxu0 %v10921
      %10948 = vmatprep.subr.bf16.mxu0 0
      %10949 = vmatpush1.bf16.msra.mxu0 %v10920
      %10950 = vmatprep.subr.bf16.mxu0 0
      %10951 = vmatpush1.bf16.msra.mxu0 %v10919
      %10952 = vmatprep.subr.bf16.mxu0 0
      %10953 = vmatpush1.bf16.msra.mxu0 %v10918
      %10954 = vmatprep.subr.bf16.mxu0 0
      %10955 = vmatpush1.bf16.msra.mxu0 %v10917
      %10956 = vmatprep.subr.bf16.mxu0 0
      %10957 = vmatpush1.bf16.msra.mxu0 %v10916
      %10958 = vmatprep.subr.bf16.mxu0 0
      %10959 = vmatpush1.bf16.msra.mxu0 %v10915
      %10960 = vmatprep.subr.bf16.mxu0 0
      %10961 = vmatpush1.bf16.msra.mxu0 %v10914
      %10962 = vmatprep.subr.bf16.mxu0 0
      %10963 = vmatpush2.bf16.msra.mxu0 %v10929
      %10964 = vmatprep.subr.bf16.mxu0 0
      %10965 = vmatpush2.bf16.msra.mxu0 %v10928
      %10966 = vmatprep.subr.bf16.mxu0 0
      %10967 = vmatpush2.bf16.msra.mxu0 %v10927
      %10968 = vmatprep.subr.bf16.mxu0 0
      %10969 = vmatpush2.bf16.msra.mxu0 %v10926
      %10970 = vmatprep.subr.bf16.mxu0 0
      %10971 = vmatpush2.bf16.msra.mxu0 %v10925
      %10972 = vmatprep.subr.bf16.mxu0 0
      %10973 = vmatpush2.bf16.msra.mxu0 %v10924
      %10974 = vmatprep.subr.bf16.mxu0 0
      %10975 = vmatpush2.bf16.msra.mxu0 %v10923
      %10976 = vmatprep.subr.bf16.mxu0 0
      %10977 = vmatpush2.bf16.msra.mxu0 %v10922
      %10978 = vmatprep.mubr.bf16.mxu0 %v10781
      %10979 = vmatmul.mubr.bf16.gmra.mxu0 %v10778
      %v10980 = vpop.f32.mrf.mxu0
      %v10981 = vadd.f32 0.0, %v10980
      %v10982 = vpop.f32.mrf.mxu0
      %v10983 = vpop.f32.mrf.mxu0
      %v10984 = vadd.f32 0.0, %v10983
      %v10985 = vpop.f32.mrf.mxu0
      %10986 = vmatprep.mubr.bf16.mxu0 %v10785
      %10987 = vmatmul.mubr.bf16.gmra.mxu0 %v10783
      %v10988 = vpop.f32.mrf.mxu0
      %v10989 = vadd.f32 0.0, %v10988
      %v10990 = vpop.f32.mrf.mxu0
      %v10991 = vpop.f32.mrf.mxu0
      %v10992 = vadd.f32 0.0, %v10991
      %v10993 = vpop.f32.mrf.mxu0
      %10994 = vmatprep.mubr.bf16.mxu0 %v10789
      %10995 = vmatmul.mubr.bf16.gmra.mxu0 %v10787
      %v10996 = vpop.f32.mrf.mxu0
      %v10997 = vadd.f32 0.0, %v10996
      %v10998 = vpop.f32.mrf.mxu0
      %v10999 = vpop.f32.mrf.mxu0
      %v11000 = vadd.f32 0.0, %v10999
      %v11001 = vpop.f32.mrf.mxu0
      %11002 = vmatprep.mubr.bf16.mxu0 %v10793
      %11003 = vmatmul.mubr.bf16.gmra.mxu0 %v10791
      %v11004 = vpop.f32.mrf.mxu0
      %v11005 = vadd.f32 0.0, %v11004
      %v11006 = vpop.f32.mrf.mxu0
      %v11007 = vpop.f32.mrf.mxu0
      %v11008 = vadd.f32 0.0, %v11007
      %v11009 = vpop.f32.mrf.mxu0
      %11010 = vmatprep.mubr.bf16.mxu0 %v10797
      %11011 = vmatmul.mubr.bf16.gmra.mxu0 %v10795
      %v11012 = vpop.f32.mrf.mxu0
      %v11013 = vadd.f32 0.0, %v11012
      %v11014 = vpop.f32.mrf.mxu0
      %v11015 = vpop.f32.mrf.mxu0
      %v11016 = vadd.f32 0.0, %v11015
      %v11017 = vpop.f32.mrf.mxu0
      %11018 = vmatprep.mubr.bf16.mxu0 %v10801
      %11019 = vmatmul.mubr.bf16.gmra.mxu0 %v10799
      %v11020 = vpop.f32.mrf.mxu0
      %v11021 = vadd.f32 0.0, %v11020
      %v11022 = vpop.f32.mrf.mxu0
      %v11023 = vpop.f32.mrf.mxu0
      %v11024 = vadd.f32 0.0, %v11023
      %v11025 = vpop.f32.mrf.mxu0
      %11026 = vmatprep.mubr.bf16.mxu0 %v10805
      %11027 = vmatmul.mubr.bf16.gmra.mxu0 %v10803
      %v11028 = vpop.f32.mrf.mxu0
      %v11029 = vadd.f32 0.0, %v11028
      %v11030 = vpop.f32.mrf.mxu0
      %v11031 = vpop.f32.mrf.mxu0
      %v11032 = vadd.f32 0.0, %v11031
      %v11033 = vpop.f32.mrf.mxu0
      %11034 = vmatprep.mubr.bf16.mxu0 %v10809
      %11035 = vmatmul.mubr.bf16.gmra.mxu0 %v10807
      %v11036 = vpop.f32.mrf.mxu0
      %v11037 = vadd.f32 0.0, %v11036
      %v11038 = vpop.f32.mrf.mxu0
      %v11039 = vpop.f32.mrf.mxu0
      %v11040 = vadd.f32 0.0, %v11039
      %v11041 = vpop.f32.mrf.mxu0
      %11042 = vmatprep.mubr.bf16.mxu0 %v10813
      %11043 = vmatmul.mubr.bf16.gmra.mxu0 %v10811
      %v11044 = vpop.f32.mrf.mxu0
      %v11045 = vadd.f32 0.0, %v11044
      %v11046 = vpop.f32.mrf.mxu0
      %v11047 = vpop.f32.mrf.mxu0
      %v11048 = vadd.f32 0.0, %v11047
      %v11049 = vpop.f32.mrf.mxu0
      %11050 = vmatprep.mubr.bf16.mxu0 %v10817
      %11051 = vmatmul.mubr.bf16.gmra.mxu0 %v10815
      %v11052 = vpop.f32.mrf.mxu0
      %v11053 = vadd.f32 0.0, %v11052
      %v11054 = vpop.f32.mrf.mxu0
      %v11055 = vpop.f32.mrf.mxu0
      %v11056 = vadd.f32 0.0, %v11055
      %v11057 = vpop.f32.mrf.mxu0
      %11058 = vmatprep.mubr.bf16.mxu0 %v10821
      %11059 = vmatmul.mubr.bf16.gmra.mxu0 %v10819
      %v11060 = vpop.f32.mrf.mxu0
      %v11061 = vadd.f32 0.0, %v11060
      %v11062 = vpop.f32.mrf.mxu0
      %v11063 = vpop.f32.mrf.mxu0
      %v11064 = vadd.f32 0.0, %v11063
      %v11065 = vpop.f32.mrf.mxu0
      %11066 = vmatprep.mubr.bf16.mxu0 %v10825
      %11067 = vmatmul.mubr.bf16.gmra.mxu0 %v10823
      %v11068 = vpop.f32.mrf.mxu0
      %v11069 = vadd.f32 0.0, %v11068
      %v11070 = vpop.f32.mrf.mxu0
      %v11071 = vpop.f32.mrf.mxu0
      %v11072 = vadd.f32 0.0, %v11071
      %v11073 = vpop.f32.mrf.mxu0
      %11074 = vdwg.mxu0
      %v11075 = vadd.f32 %v10714, %v10981
      %v11076 = vadd.f32 %v10715, %v10984
      %v11077 = vadd.f32 %v10716, %v10989
      %v11078 = vadd.f32 %v10717, %v10992
      %v11079 = vadd.f32 %v10718, %v10997
      %v11080 = vadd.f32 %v10719, %v11000
      %v11081 = vadd.f32 %v10720, %v11005
      %v11082 = vadd.f32 %v10721, %v11008
      %v11083 = vadd.f32 %v10722, %v11013
      %v11084 = vadd.f32 %v10723, %v11016
      %v11085 = vadd.f32 %v10724, %v11021
      %v11086 = vadd.f32 %v10725, %v11024
      %v11087 = vadd.f32 %v10726, %v11029
      %v11088 = vadd.f32 %v10727, %v11032
      %v11089 = vadd.f32 %v10728, %v11037
      %v11090 = vadd.f32 %v10729, %v11040
      %v11091 = vadd.f32 %v10730, %v11045
      %v11092 = vadd.f32 %v10731, %v11048
      %v11093 = vadd.f32 %v10732, %v11053
      %v11094 = vadd.f32 %v10733, %v11056
      %v11095 = vadd.f32 %v10734, %v11061
      %v11096 = vadd.f32 %v10735, %v11064
      %v11097 = vadd.f32 %v10736, %v11069
      %v11098 = vadd.f32 %v10737, %v11072
      %v11099 = vld [vmem:[#allocation3 + $0xc0] sm:$0x77]
      %v11100 = vld [vmem:[%s5 + $0x280] sm:$0xf]
      %v11101 = vld [vmem:[%s5 + $0x284] sm:$0xf]
      %v11102 = vld [vmem:[%s5 + $0x288] sm:$0xf]
      %v11103 = vld [vmem:[%s5 + $0x28c] sm:$0xf]
      %v11104 = vld [vmem:[%s5 + $0x290] sm:$0xf]
      %v11105 = vld [vmem:[%s5 + $0x294] sm:$0xf]
      %v11106 = vld [vmem:[%s5 + $0x298] sm:$0xf]
      %v11107 = vld [vmem:[%s5 + $0x29c] sm:$0xf]
      %v11108 = vld [vmem:[%s5 + $0x2a0] sm:$0xf]
      %v11109 = vld [vmem:[%s5 + $0x2a4] sm:$0xf]
      %v11110 = vld [vmem:[%s5 + $0x2a8] sm:$0xf]
      %v11111 = vld [vmem:[%s5 + $0x2ac] sm:$0xf]
      %v11112 = vld [vmem:[%s5 + $0x2b0] sm:$0xf]
      %v11113 = vld [vmem:[%s5 + $0x2b4] sm:$0xf]
      %v11114 = vld [vmem:[%s5 + $0x2b8] sm:$0xf]
      %v11115 = vld [vmem:[%s5 + $0x2bc] sm:$0xf]
      %v11116 = vld [vmem:[%s5 + $0x2c0] sm:$0xf]
      %v11117 = vld [vmem:[%s5 + $0x2c4] sm:$0xf]
      %v11118 = vld [vmem:[%s5 + $0x2c8] sm:$0xf]
      %v11119 = vld [vmem:[%s5 + $0x2cc] sm:$0xf]
      %v11120 = vld [vmem:[%s5 + $0x2d0] sm:$0xf]
      %v11121 = vld [vmem:[%s5 + $0x2d4] sm:$0xf]
      %v11122 = vld [vmem:[%s5 + $0x2d8] sm:$0xf]
      %v11123 = vld [vmem:[%s5 + $0x2dc] sm:$0xf]
      %v11124 = vld [vmem:[%s5 + $0x2e0] sm:$0xf]
      %v11125 = vld [vmem:[%s5 + $0x2e4] sm:$0xf]
      %v11126 = vld [vmem:[%s5 + $0x2e8] sm:$0xf]
      %v11127 = vld [vmem:[%s5 + $0x2ec] sm:$0xf]
      %v11128 = vld [vmem:[%s5 + $0x2f0] sm:$0xf]
      %v11129 = vld [vmem:[%s5 + $0x2f4] sm:$0xf]
      %v11130 = vld [vmem:[%s5 + $0x2f8] sm:$0xf]
      %v11131 = vld [vmem:[%s5 + $0x2fc] sm:$0xf]
      %v11133 = vunpack.c.l.b16 %v11099
      %v11134 = vunpack.c.h.b16 %v11099
      %v11135 = vpack.c.b16 %v11133, %v11133
      %v11136 = vpack.c.b16 %v11134, %v11134
      %v11138 = vshrl.u32 %v10774, 16
      %v11140 = vrot.slane %v11138, 2
      %v11141 = vshll.u32 %v10774, 16
      %v11143 = vrot.slane %v11141, 3
      %v11144 = vor.u32 %v11140, %v11143
      %v11145 = vrot.slane %v9270, 2
      %v11146 = vrot.slane %v9254, 3
      %v11147 = vor.u32 %v11145, %v11146
      %v11148 = vsel %vm6816, %v11144, %v11147
      %v11150 = vshrl.u32 %v10775, 16
      %v11152 = vrot.slane %v11150, 2
      %v11153 = vshll.u32 %v10775, 16
      %v11155 = vrot.slane %v11153, 3
      %v11156 = vor.u32 %v11152, %v11155
      %v11157 = vrot.slane %v9278, 2
      %v11158 = vrot.slane %v9266, 3
      %v11159 = vor.u32 %v11157, %v11158
      %v11160 = vsel %vm6816, %v11156, %v11159
      %v11161 = vrot.slane %v9286, 2
      %v11162 = vrot.slane %v9274, 3
      %v11163 = vor.u32 %v11161, %v11162
      %v11164 = vsel %vm6816, %v11147, %v11163
      %v11165 = vrot.slane %v9294, 2
      %v11166 = vrot.slane %v9282, 3
      %v11167 = vor.u32 %v11165, %v11166
      %v11168 = vsel %vm6816, %v11159, %v11167
      %v11169 = vrot.slane %v9302, 2
      %v11170 = vrot.slane %v9290, 3
      %v11171 = vor.u32 %v11169, %v11170
      %v11172 = vsel %vm6816, %v11163, %v11171
      %v11173 = vrot.slane %v9310, 2
      %v11174 = vrot.slane %v9298, 3
      %v11175 = vor.u32 %v11173, %v11174
      %v11176 = vsel %vm6816, %v11167, %v11175
      %v11177 = vrot.slane %v9318, 2
      %v11178 = vrot.slane %v9306, 3
      %v11179 = vor.u32 %v11177, %v11178
      %v11180 = vsel %vm6816, %v11171, %v11179
      %v11181 = vrot.slane %v9326, 2
      %v11182 = vrot.slane %v9314, 3
      %v11183 = vor.u32 %v11181, %v11182
      %v11184 = vsel %vm6816, %v11175, %v11183
      %v11185 = vrot.slane %v9334, 2
      %v11186 = vrot.slane %v9322, 3
      %v11187 = vor.u32 %v11185, %v11186
      %v11188 = vsel %vm6816, %v11179, %v11187
      %v11189 = vrot.slane %v9342, 2
      %v11190 = vrot.slane %v9330, 3
      %v11191 = vor.u32 %v11189, %v11190
      %v11192 = vsel %vm6816, %v11183, %v11191
      %v11193 = vrot.slane %v9350, 2
      %v11194 = vrot.slane %v9338, 3
      %v11195 = vor.u32 %v11193, %v11194
      %v11196 = vsel %vm6816, %v11187, %v11195
      %v11197 = vrot.slane %v9358, 2
      %v11198 = vrot.slane %v9346, 3
      %v11199 = vor.u32 %v11197, %v11198
      %v11200 = vsel %vm6816, %v11191, %v11199
      %v11201 = vrot.slane %v9366, 2
      %v11202 = vrot.slane %v9354, 3
      %v11203 = vor.u32 %v11201, %v11202
      %v11204 = vsel %vm6816, %v11195, %v11203
      %v11205 = vrot.slane %v9374, 2
      %v11206 = vrot.slane %v9362, 3
      %v11207 = vor.u32 %v11205, %v11206
      %v11208 = vsel %vm6816, %v11199, %v11207
      %v11209 = vrot.slane %v9382, 2
      %v11210 = vrot.slane %v9370, 3
      %v11211 = vor.u32 %v11209, %v11210
      %v11212 = vsel %vm6816, %v11203, %v11211
      %v11213 = vrot.slane %v9390, 2
      %v11214 = vrot.slane %v9378, 3
      %v11215 = vor.u32 %v11213, %v11214
      %v11216 = vsel %vm6816, %v11207, %v11215
      %v11217 = vrot.slane %v9398, 2
      %v11218 = vrot.slane %v9386, 3
      %v11219 = vor.u32 %v11217, %v11218
      %v11220 = vsel %vm6816, %v11211, %v11219
      %v11221 = vrot.slane %v9406, 2
      %v11222 = vrot.slane %v9394, 3
      %v11223 = vor.u32 %v11221, %v11222
      %v11224 = vsel %vm6816, %v11215, %v11223
      %v11225 = vrot.slane %v9414, 2
      %v11226 = vrot.slane %v9402, 3
      %v11227 = vor.u32 %v11225, %v11226
      %v11228 = vsel %vm6816, %v11219, %v11227
      %v11229 = vrot.slane %v9422, 2
      %v11230 = vrot.slane %v9410, 3
      %v11231 = vor.u32 %v11229, %v11230
      %v11232 = vsel %vm6816, %v11223, %v11231
      %v11233 = vrot.slane %v9430, 2
      %v11234 = vrot.slane %v9418, 3
      %v11235 = vor.u32 %v11233, %v11234
      %v11236 = vsel %vm6816, %v11227, %v11235
      %v11237 = vrot.slane %v9438, 2
      %v11238 = vrot.slane %v9426, 3
      %v11239 = vor.u32 %v11237, %v11238
      %v11240 = vsel %vm6816, %v11231, %v11239
      %v11242 = vshrl.u32 %v11135, 16
      %v11244 = vrot.slane %v11242, 2
      %v11245 = vshll.u32 %v11135, 16
      %v11247 = vrot.slane %v11245, 3
      %v11248 = vor.u32 %v11244, %v11247
      %v11249 = vsel %vm6816, %v11235, %v11248
      %v11251 = vshrl.u32 %v11136, 16
      %v11253 = vrot.slane %v11251, 2
      %v11254 = vshll.u32 %v11136, 16
      %v11256 = vrot.slane %v11254, 3
      %v11257 = vor.u32 %v11253, %v11256
      %v11258 = vsel %vm6816, %v11239, %v11257
      %v11315 = vunpack.c.l.b16 %v11100
      %v11316 = vunpack.c.l.b16 %v11101
      %v11317 = vunpack.c.l.b16 %v11102
      %v11318 = vunpack.c.l.b16 %v11103
      %v11319 = vunpack.c.l.b16 %v11104
      %v11320 = vunpack.c.l.b16 %v11105
      %v11321 = vunpack.c.l.b16 %v11106
      %v11322 = vunpack.c.l.b16 %v11107
      %v11323 = vunpack.c.l.b16 %v11108
      %v11324 = vunpack.c.l.b16 %v11109
      %v11325 = vunpack.c.l.b16 %v11110
      %v11326 = vunpack.c.l.b16 %v11111
      %v11327 = vunpack.c.l.b16 %v11112
      %v11328 = vunpack.c.l.b16 %v11113
      %v11329 = vunpack.c.l.b16 %v11114
      %v11330 = vunpack.c.l.b16 %v11115
      %v11331 = vunpack.c.l.b16 %v11116
      %v11332 = vunpack.c.l.b16 %v11117
      %v11333 = vunpack.c.l.b16 %v11118
      %v11334 = vunpack.c.l.b16 %v11119
      %v11335 = vunpack.c.l.b16 %v11120
      %v11336 = vunpack.c.l.b16 %v11121
      %v11337 = vunpack.c.l.b16 %v11122
      %v11338 = vunpack.c.l.b16 %v11123
      %v11339 = vunpack.c.l.b16 %v11124
      %v11340 = vunpack.c.l.b16 %v11125
      %v11341 = vunpack.c.l.b16 %v11126
      %v11342 = vunpack.c.l.b16 %v11127
      %v11343 = vunpack.c.l.b16 %v11128
      %v11344 = vunpack.c.l.b16 %v11129
      %v11345 = vunpack.c.l.b16 %v11130
      %v11346 = vunpack.c.l.b16 %v11131
      %v11347 = vpack.c.b16 %v11316, %v11315
      %v11348 = vpack.c.b16 %v11318, %v11317
      %v11349 = vpack.c.b16 %v11320, %v11319
      %v11350 = vpack.c.b16 %v11322, %v11321
      %v11351 = vpack.c.b16 %v11324, %v11323
      %v11352 = vpack.c.b16 %v11326, %v11325
      %v11353 = vpack.c.b16 %v11328, %v11327
      %v11354 = vpack.c.b16 %v11330, %v11329
      %v11355 = vpack.c.b16 %v11332, %v11331
      %v11356 = vpack.c.b16 %v11334, %v11333
      %v11357 = vpack.c.b16 %v11336, %v11335
      %v11358 = vpack.c.b16 %v11338, %v11337
      %v11359 = vpack.c.b16 %v11340, %v11339
      %v11360 = vpack.c.b16 %v11342, %v11341
      %v11361 = vpack.c.b16 %v11344, %v11343
      %v11362 = vpack.c.b16 %v11346, %v11345
      %11379 = vmatprep.subr.bf16.mxu0 0
      %11380 = vmatpush1.bf16.msra.mxu0 %v11354
      %11381 = vmatprep.subr.bf16.mxu0 0
      %11382 = vmatpush1.bf16.msra.mxu0 %v11353
      %11383 = vmatprep.subr.bf16.mxu0 0
      %11384 = vmatpush1.bf16.msra.mxu0 %v11352
      %11385 = vmatprep.subr.bf16.mxu0 0
      %11386 = vmatpush1.bf16.msra.mxu0 %v11351
      %11387 = vmatprep.subr.bf16.mxu0 0
      %11388 = vmatpush1.bf16.msra.mxu0 %v11350
      %11389 = vmatprep.subr.bf16.mxu0 0
      %11390 = vmatpush1.bf16.msra.mxu0 %v11349
      %11391 = vmatprep.subr.bf16.mxu0 0
      %11392 = vmatpush1.bf16.msra.mxu0 %v11348
      %11393 = vmatprep.subr.bf16.mxu0 0
      %11394 = vmatpush1.bf16.msra.mxu0 %v11347
      %11395 = vmatprep.subr.bf16.mxu0 0
      %11396 = vmatpush2.bf16.msra.mxu0 %v11362
      %11397 = vmatprep.subr.bf16.mxu0 0
      %11398 = vmatpush2.bf16.msra.mxu0 %v11361
      %11399 = vmatprep.subr.bf16.mxu0 0
      %11400 = vmatpush2.bf16.msra.mxu0 %v11360
      %11401 = vmatprep.subr.bf16.mxu0 0
      %11402 = vmatpush2.bf16.msra.mxu0 %v11359
      %11403 = vmatprep.subr.bf16.mxu0 0
      %11404 = vmatpush2.bf16.msra.mxu0 %v11358
      %11405 = vmatprep.subr.bf16.mxu0 0
      %11406 = vmatpush2.bf16.msra.mxu0 %v11357
      %11407 = vmatprep.subr.bf16.mxu0 0
      %11408 = vmatpush2.bf16.msra.mxu0 %v11356
      %11409 = vmatprep.subr.bf16.mxu0 0
      %11410 = vmatpush2.bf16.msra.mxu0 %v11355
      %11411 = vmatprep.mubr.bf16.mxu0 %v11160
      %11412 = vmatmul.mubr.bf16.gmra.mxu0 %v11148
      %v11413 = vpop.f32.mrf.mxu0
      %v11414 = vadd.f32 0.0, %v11413
      %v11415 = vpop.f32.mrf.mxu0
      %v11416 = vpop.f32.mrf.mxu0
      %v11417 = vadd.f32 0.0, %v11416
      %v11418 = vpop.f32.mrf.mxu0
      %11419 = vmatprep.mubr.bf16.mxu0 %v11168
      %11420 = vmatmul.mubr.bf16.gmra.mxu0 %v11164
      %v11421 = vpop.f32.mrf.mxu0
      %v11422 = vadd.f32 0.0, %v11421
      %v11423 = vpop.f32.mrf.mxu0
      %v11424 = vpop.f32.mrf.mxu0
      %v11425 = vadd.f32 0.0, %v11424
      %v11426 = vpop.f32.mrf.mxu0
      %11427 = vmatprep.mubr.bf16.mxu0 %v11176
      %11428 = vmatmul.mubr.bf16.gmra.mxu0 %v11172
      %v11429 = vpop.f32.mrf.mxu0
      %v11430 = vadd.f32 0.0, %v11429
      %v11431 = vpop.f32.mrf.mxu0
      %v11432 = vpop.f32.mrf.mxu0
      %v11433 = vadd.f32 0.0, %v11432
      %v11434 = vpop.f32.mrf.mxu0
      %11435 = vmatprep.mubr.bf16.mxu0 %v11184
      %11436 = vmatmul.mubr.bf16.gmra.mxu0 %v11180
      %v11437 = vpop.f32.mrf.mxu0
      %v11438 = vadd.f32 0.0, %v11437
      %v11439 = vpop.f32.mrf.mxu0
      %v11440 = vpop.f32.mrf.mxu0
      %v11441 = vadd.f32 0.0, %v11440
      %v11442 = vpop.f32.mrf.mxu0
      %11443 = vmatprep.mubr.bf16.mxu0 %v11192
      %11444 = vmatmul.mubr.bf16.gmra.mxu0 %v11188
      %v11445 = vpop.f32.mrf.mxu0
      %v11446 = vadd.f32 0.0, %v11445
      %v11447 = vpop.f32.mrf.mxu0
      %v11448 = vpop.f32.mrf.mxu0
      %v11449 = vadd.f32 0.0, %v11448
      %v11450 = vpop.f32.mrf.mxu0
      %11451 = vmatprep.mubr.bf16.mxu0 %v11200
      %11452 = vmatmul.mubr.bf16.gmra.mxu0 %v11196
      %v11453 = vpop.f32.mrf.mxu0
      %v11454 = vadd.f32 0.0, %v11453
      %v11455 = vpop.f32.mrf.mxu0
      %v11456 = vpop.f32.mrf.mxu0
      %v11457 = vadd.f32 0.0, %v11456
      %v11458 = vpop.f32.mrf.mxu0
      %11459 = vmatprep.mubr.bf16.mxu0 %v11208
      %11460 = vmatmul.mubr.bf16.gmra.mxu0 %v11204
      %v11461 = vpop.f32.mrf.mxu0
      %v11462 = vadd.f32 0.0, %v11461
      %v11463 = vpop.f32.mrf.mxu0
      %v11464 = vpop.f32.mrf.mxu0
      %v11465 = vadd.f32 0.0, %v11464
      %v11466 = vpop.f32.mrf.mxu0
      %11467 = vmatprep.mubr.bf16.mxu0 %v11216
      %11468 = vmatmul.mubr.bf16.gmra.mxu0 %v11212
      %v11469 = vpop.f32.mrf.mxu0
      %v11470 = vadd.f32 0.0, %v11469
      %v11471 = vpop.f32.mrf.mxu0
      %v11472 = vpop.f32.mrf.mxu0
      %v11473 = vadd.f32 0.0, %v11472
      %v11474 = vpop.f32.mrf.mxu0
      %11475 = vmatprep.mubr.bf16.mxu0 %v11224
      %11476 = vmatmul.mubr.bf16.gmra.mxu0 %v11220
      %v11477 = vpop.f32.mrf.mxu0
      %v11478 = vadd.f32 0.0, %v11477
      %v11479 = vpop.f32.mrf.mxu0
      %v11480 = vpop.f32.mrf.mxu0
      %v11481 = vadd.f32 0.0, %v11480
      %v11482 = vpop.f32.mrf.mxu0
      %11483 = vmatprep.mubr.bf16.mxu0 %v11232
      %11484 = vmatmul.mubr.bf16.gmra.mxu0 %v11228
      %v11485 = vpop.f32.mrf.mxu0
      %v11486 = vadd.f32 0.0, %v11485
      %v11487 = vpop.f32.mrf.mxu0
      %v11488 = vpop.f32.mrf.mxu0
      %v11489 = vadd.f32 0.0, %v11488
      %v11490 = vpop.f32.mrf.mxu0
      %11491 = vmatprep.mubr.bf16.mxu0 %v11240
      %11492 = vmatmul.mubr.bf16.gmra.mxu0 %v11236
      %v11493 = vpop.f32.mrf.mxu0
      %v11494 = vadd.f32 0.0, %v11493
      %v11495 = vpop.f32.mrf.mxu0
      %v11496 = vpop.f32.mrf.mxu0
      %v11497 = vadd.f32 0.0, %v11496
      %v11498 = vpop.f32.mrf.mxu0
      %11499 = vmatprep.mubr.bf16.mxu0 %v11258
      %11500 = vmatmul.mubr.bf16.gmra.mxu0 %v11249
      %v11501 = vpop.f32.mrf.mxu0
      %v11502 = vadd.f32 0.0, %v11501
      %v11503 = vpop.f32.mrf.mxu0
      %v11504 = vpop.f32.mrf.mxu0
      %v11505 = vadd.f32 0.0, %v11504
      %v11506 = vpop.f32.mrf.mxu0
      %11507 = vdwg.mxu0
      %v11508 = vadd.f32 %v11075, %v11414
      %v11509 = vadd.f32 %v11076, %v11417
      %v11510 = vadd.f32 %v11077, %v11422
      %v11511 = vadd.f32 %v11078, %v11425
      %v11512 = vadd.f32 %v11079, %v11430
      %v11513 = vadd.f32 %v11080, %v11433
      %v11514 = vadd.f32 %v11081, %v11438
      %v11515 = vadd.f32 %v11082, %v11441
      %v11516 = vadd.f32 %v11083, %v11446
      %v11517 = vadd.f32 %v11084, %v11449
      %v11518 = vadd.f32 %v11085, %v11454
      %v11519 = vadd.f32 %v11086, %v11457
      %v11520 = vadd.f32 %v11087, %v11462
      %v11521 = vadd.f32 %v11088, %v11465
      %v11522 = vadd.f32 %v11089, %v11470
      %v11523 = vadd.f32 %v11090, %v11473
      %v11524 = vadd.f32 %v11091, %v11478
      %v11525 = vadd.f32 %v11092, %v11481
      %v11526 = vadd.f32 %v11093, %v11486
      %v11527 = vadd.f32 %v11094, %v11489
      %v11528 = vadd.f32 %v11095, %v11494
      %v11529 = vadd.f32 %v11096, %v11497
      %v11530 = vadd.f32 %v11097, %v11502
      %v11531 = vadd.f32 %v11098, %v11505
      %v11532 = vld [vmem:[#allocation3] sm:$0x88]
      %v11533 = vld [vmem:[%s5 + $0x300] sm:$0xf]
      %v11534 = vld [vmem:[%s5 + $0x304] sm:$0xf]
      %v11535 = vld [vmem:[%s5 + $0x308] sm:$0xf]
      %v11536 = vld [vmem:[%s5 + $0x30c] sm:$0xf]
      %v11537 = vld [vmem:[%s5 + $0x310] sm:$0xf]
      %v11538 = vld [vmem:[%s5 + $0x314] sm:$0xf]
      %v11539 = vld [vmem:[%s5 + $0x318] sm:$0xf]
      %v11540 = vld [vmem:[%s5 + $0x31c] sm:$0xf]
      %v11541 = vld [vmem:[%s5 + $0x320] sm:$0xf]
      %v11542 = vld [vmem:[%s5 + $0x324] sm:$0xf]
      %v11543 = vld [vmem:[%s5 + $0x328] sm:$0xf]
      %v11544 = vld [vmem:[%s5 + $0x32c] sm:$0xf]
      %v11545 = vld [vmem:[%s5 + $0x330] sm:$0xf]
      %v11546 = vld [vmem:[%s5 + $0x334] sm:$0xf]
      %v11547 = vld [vmem:[%s5 + $0x338] sm:$0xf]
      %v11548 = vld [vmem:[%s5 + $0x33c] sm:$0xf]
      %v11549 = vld [vmem:[%s5 + $0x340] sm:$0xf]
      %v11550 = vld [vmem:[%s5 + $0x344] sm:$0xf]
      %v11551 = vld [vmem:[%s5 + $0x348] sm:$0xf]
      %v11552 = vld [vmem:[%s5 + $0x34c] sm:$0xf]
      %v11553 = vld [vmem:[%s5 + $0x350] sm:$0xf]
      %v11554 = vld [vmem:[%s5 + $0x354] sm:$0xf]
      %v11555 = vld [vmem:[%s5 + $0x358] sm:$0xf]
      %v11556 = vld [vmem:[%s5 + $0x35c] sm:$0xf]
      %v11557 = vld [vmem:[%s5 + $0x360] sm:$0xf]
      %v11558 = vld [vmem:[%s5 + $0x364] sm:$0xf]
      %v11559 = vld [vmem:[%s5 + $0x368] sm:$0xf]
      %v11560 = vld [vmem:[%s5 + $0x36c] sm:$0xf]
      %v11561 = vld [vmem:[%s5 + $0x370] sm:$0xf]
      %v11562 = vld [vmem:[%s5 + $0x374] sm:$0xf]
      %v11563 = vld [vmem:[%s5 + $0x378] sm:$0xf]
      %v11564 = vld [vmem:[%s5 + $0x37c] sm:$0xf]
      %v11566 = vunpack.c.l.b16 %v11532
      %v11567 = vunpack.c.h.b16 %v11532
      %v11568 = vpack.c.b16 %v9172, %v11566
      %v11569 = vpack.c.b16 %v9173, %v11567
      %v11570 = vrot.slane %v11568, 3
      %v11571 = vrot.slane %v9222, 3
      %v11572 = vsel %vm7859, %v11570, %v11571
      %v11573 = vrot.slane %v11569, 3
      %v11574 = vrot.slane %v9223, 3
      %v11575 = vsel %vm7859, %v11573, %v11574
      %v11576 = vrot.slane %v9224, 3
      %v11577 = vsel %vm7859, %v11571, %v11576
      %v11578 = vrot.slane %v9225, 3
      %v11579 = vsel %vm7859, %v11574, %v11578
      %v11580 = vrot.slane %v9226, 3
      %v11581 = vsel %vm7859, %v11576, %v11580
      %v11582 = vrot.slane %v9227, 3
      %v11583 = vsel %vm7859, %v11578, %v11582
      %v11584 = vrot.slane %v9228, 3
      %v11585 = vsel %vm7859, %v11580, %v11584
      %v11586 = vrot.slane %v9229, 3
      %v11587 = vsel %vm7859, %v11582, %v11586
      %v11588 = vrot.slane %v9230, 3
      %v11589 = vsel %vm7859, %v11584, %v11588
      %v11590 = vrot.slane %v9231, 3
      %v11591 = vsel %vm7859, %v11586, %v11590
      %v11592 = vrot.slane %v9232, 3
      %v11593 = vsel %vm7859, %v11588, %v11592
      %v11594 = vrot.slane %v9233, 3
      %v11595 = vsel %vm7859, %v11590, %v11594
      %v11596 = vrot.slane %v9234, 3
      %v11597 = vsel %vm7859, %v11592, %v11596
      %v11598 = vrot.slane %v9235, 3
      %v11599 = vsel %vm7859, %v11594, %v11598
      %v11600 = vrot.slane %v9236, 3
      %v11601 = vsel %vm7859, %v11596, %v11600
      %v11602 = vrot.slane %v9237, 3
      %v11603 = vsel %vm7859, %v11598, %v11602
      %v11604 = vrot.slane %v9238, 3
      %v11605 = vsel %vm7859, %v11600, %v11604
      %v11606 = vrot.slane %v9239, 3
      %v11607 = vsel %vm7859, %v11602, %v11606
      %v11608 = vrot.slane %v9240, 3
      %v11609 = vsel %vm7859, %v11604, %v11608
      %v11610 = vrot.slane %v9241, 3
      %v11611 = vsel %vm7859, %v11606, %v11610
      %v11612 = vrot.slane %v9242, 3
      %v11613 = vsel %vm7859, %v11608, %v11612
      %v11614 = vrot.slane %v9243, 3
      %v11615 = vsel %vm7859, %v11610, %v11614
      %v11616 = vrot.slane %v11135, 3
      %v11617 = vsel %vm7859, %v11612, %v11616
      %v11618 = vrot.slane %v11136, 3
      %v11619 = vsel %vm7859, %v11614, %v11618
      %v11676 = vunpack.c.l.b16 %v11533
      %v11677 = vunpack.c.l.b16 %v11534
      %v11678 = vunpack.c.l.b16 %v11535
      %v11679 = vunpack.c.l.b16 %v11536
      %v11680 = vunpack.c.l.b16 %v11537
      %v11681 = vunpack.c.l.b16 %v11538
      %v11682 = vunpack.c.l.b16 %v11539
      %v11683 = vunpack.c.l.b16 %v11540
      %v11684 = vunpack.c.l.b16 %v11541
      %v11685 = vunpack.c.l.b16 %v11542
      %v11686 = vunpack.c.l.b16 %v11543
      %v11687 = vunpack.c.l.b16 %v11544
      %v11688 = vunpack.c.l.b16 %v11545
      %v11689 = vunpack.c.l.b16 %v11546
      %v11690 = vunpack.c.l.b16 %v11547
      %v11691 = vunpack.c.l.b16 %v11548
      %v11692 = vunpack.c.l.b16 %v11549
      %v11693 = vunpack.c.l.b16 %v11550
      %v11694 = vunpack.c.l.b16 %v11551
      %v11695 = vunpack.c.l.b16 %v11552
      %v11696 = vunpack.c.l.b16 %v11553
      %v11697 = vunpack.c.l.b16 %v11554
      %v11698 = vunpack.c.l.b16 %v11555
      %v11699 = vunpack.c.l.b16 %v11556
      %v11700 = vunpack.c.l.b16 %v11557
      %v11701 = vunpack.c.l.b16 %v11558
      %v11702 = vunpack.c.l.b16 %v11559
      %v11703 = vunpack.c.l.b16 %v11560
      %v11704 = vunpack.c.l.b16 %v11561
      %v11705 = vunpack.c.l.b16 %v11562
      %v11706 = vunpack.c.l.b16 %v11563
      %v11707 = vunpack.c.l.b16 %v11564
      %v11708 = vpack.c.b16 %v11677, %v11676
      %v11709 = vpack.c.b16 %v11679, %v11678
      %v11710 = vpack.c.b16 %v11681, %v11680
      %v11711 = vpack.c.b16 %v11683, %v11682
      %v11712 = vpack.c.b16 %v11685, %v11684
      %v11713 = vpack.c.b16 %v11687, %v11686
      %v11714 = vpack.c.b16 %v11689, %v11688
      %v11715 = vpack.c.b16 %v11691, %v11690
      %v11716 = vpack.c.b16 %v11693, %v11692
      %v11717 = vpack.c.b16 %v11695, %v11694
      %v11718 = vpack.c.b16 %v11697, %v11696
      %v11719 = vpack.c.b16 %v11699, %v11698
      %v11720 = vpack.c.b16 %v11701, %v11700
      %v11721 = vpack.c.b16 %v11703, %v11702
      %v11722 = vpack.c.b16 %v11705, %v11704
      %v11723 = vpack.c.b16 %v11707, %v11706
      %11740 = vmatprep.subr.bf16.mxu0 0
      %11741 = vmatpush1.bf16.msra.mxu0 %v11715
      %11742 = vmatprep.subr.bf16.mxu0 0
      %11743 = vmatpush1.bf16.msra.mxu0 %v11714
      %11744 = vmatprep.subr.bf16.mxu0 0
      %11745 = vmatpush1.bf16.msra.mxu0 %v11713
      %11746 = vmatprep.subr.bf16.mxu0 0
      %11747 = vmatpush1.bf16.msra.mxu0 %v11712
      %11748 = vmatprep.subr.bf16.mxu0 0
      %11749 = vmatpush1.bf16.msra.mxu0 %v11711
      %11750 = vmatprep.subr.bf16.mxu0 0
      %11751 = vmatpush1.bf16.msra.mxu0 %v11710
      %11752 = vmatprep.subr.bf16.mxu0 0
      %11753 = vmatpush1.bf16.msra.mxu0 %v11709
      %11754 = vmatprep.subr.bf16.mxu0 0
      %11755 = vmatpush1.bf16.msra.mxu0 %v11708
      %11756 = vmatprep.subr.bf16.mxu0 0
      %11757 = vmatpush2.bf16.msra.mxu0 %v11723
      %11758 = vmatprep.subr.bf16.mxu0 0
      %11759 = vmatpush2.bf16.msra.mxu0 %v11722
      %11760 = vmatprep.subr.bf16.mxu0 0
      %11761 = vmatpush2.bf16.msra.mxu0 %v11721
      %11762 = vmatprep.subr.bf16.mxu0 0
      %11763 = vmatpush2.bf16.msra.mxu0 %v11720
      %11764 = vmatprep.subr.bf16.mxu0 0
      %11765 = vmatpush2.bf16.msra.mxu0 %v11719
      %11766 = vmatprep.subr.bf16.mxu0 0
      %11767 = vmatpush2.bf16.msra.mxu0 %v11718
      %11768 = vmatprep.subr.bf16.mxu0 0
      %11769 = vmatpush2.bf16.msra.mxu0 %v11717
      %11770 = vmatprep.subr.bf16.mxu0 0
      %11771 = vmatpush2.bf16.msra.mxu0 %v11716
      %11772 = vmatprep.mubr.bf16.mxu0 %v11575
      %11773 = vmatmul.mubr.bf16.gmra.mxu0 %v11572
      %v11774 = vpop.f32.mrf.mxu0
      %v11775 = vadd.f32 0.0, %v11774
      %v11776 = vpop.f32.mrf.mxu0
      %v11777 = vpop.f32.mrf.mxu0
      %v11778 = vadd.f32 0.0, %v11777
      %v11779 = vpop.f32.mrf.mxu0
      %11780 = vmatprep.mubr.bf16.mxu0 %v11579
      %11781 = vmatmul.mubr.bf16.gmra.mxu0 %v11577
      %v11782 = vpop.f32.mrf.mxu0
      %v11783 = vadd.f32 0.0, %v11782
      %v11784 = vpop.f32.mrf.mxu0
      %v11785 = vpop.f32.mrf.mxu0
      %v11786 = vadd.f32 0.0, %v11785
      %v11787 = vpop.f32.mrf.mxu0
      %11788 = vmatprep.mubr.bf16.mxu0 %v11583
      %11789 = vmatmul.mubr.bf16.gmra.mxu0 %v11581
      %v11790 = vpop.f32.mrf.mxu0
      %v11791 = vadd.f32 0.0, %v11790
      %v11792 = vpop.f32.mrf.mxu0
      %v11793 = vpop.f32.mrf.mxu0
      %v11794 = vadd.f32 0.0, %v11793
      %v11795 = vpop.f32.mrf.mxu0
      %11796 = vmatprep.mubr.bf16.mxu0 %v11587
      %11797 = vmatmul.mubr.bf16.gmra.mxu0 %v11585
      %v11798 = vpop.f32.mrf.mxu0
      %v11799 = vadd.f32 0.0, %v11798
      %v11800 = vpop.f32.mrf.mxu0
      %v11801 = vpop.f32.mrf.mxu0
      %v11802 = vadd.f32 0.0, %v11801
      %v11803 = vpop.f32.mrf.mxu0
      %11804 = vmatprep.mubr.bf16.mxu0 %v11591
      %11805 = vmatmul.mubr.bf16.gmra.mxu0 %v11589
      %v11806 = vpop.f32.mrf.mxu0
      %v11807 = vadd.f32 0.0, %v11806
      %v11808 = vpop.f32.mrf.mxu0
      %v11809 = vpop.f32.mrf.mxu0
      %v11810 = vadd.f32 0.0, %v11809
      %v11811 = vpop.f32.mrf.mxu0
      %11812 = vmatprep.mubr.bf16.mxu0 %v11595
      %11813 = vmatmul.mubr.bf16.gmra.mxu0 %v11593
      %v11814 = vpop.f32.mrf.mxu0
      %v11815 = vadd.f32 0.0, %v11814
      %v11816 = vpop.f32.mrf.mxu0
      %v11817 = vpop.f32.mrf.mxu0
      %v11818 = vadd.f32 0.0, %v11817
      %v11819 = vpop.f32.mrf.mxu0
      %11820 = vmatprep.mubr.bf16.mxu0 %v11599
      %11821 = vmatmul.mubr.bf16.gmra.mxu0 %v11597
      %v11822 = vpop.f32.mrf.mxu0
      %v11823 = vadd.f32 0.0, %v11822
      %v11824 = vpop.f32.mrf.mxu0
      %v11825 = vpop.f32.mrf.mxu0
      %v11826 = vadd.f32 0.0, %v11825
      %v11827 = vpop.f32.mrf.mxu0
      %11828 = vmatprep.mubr.bf16.mxu0 %v11603
      %11829 = vmatmul.mubr.bf16.gmra.mxu0 %v11601
      %v11830 = vpop.f32.mrf.mxu0
      %v11831 = vadd.f32 0.0, %v11830
      %v11832 = vpop.f32.mrf.mxu0
      %v11833 = vpop.f32.mrf.mxu0
      %v11834 = vadd.f32 0.0, %v11833
      %v11835 = vpop.f32.mrf.mxu0
      %11836 = vmatprep.mubr.bf16.mxu0 %v11607
      %11837 = vmatmul.mubr.bf16.gmra.mxu0 %v11605
      %v11838 = vpop.f32.mrf.mxu0
      %v11839 = vadd.f32 0.0, %v11838
      %v11840 = vpop.f32.mrf.mxu0
      %v11841 = vpop.f32.mrf.mxu0
      %v11842 = vadd.f32 0.0, %v11841
      %v11843 = vpop.f32.mrf.mxu0
      %11844 = vmatprep.mubr.bf16.mxu0 %v11611
      %11845 = vmatmul.mubr.bf16.gmra.mxu0 %v11609
      %v11846 = vpop.f32.mrf.mxu0
      %v11847 = vadd.f32 0.0, %v11846
      %v11848 = vpop.f32.mrf.mxu0
      %v11849 = vpop.f32.mrf.mxu0
      %v11850 = vadd.f32 0.0, %v11849
      %v11851 = vpop.f32.mrf.mxu0
      %11852 = vmatprep.mubr.bf16.mxu0 %v11615
      %11853 = vmatmul.mubr.bf16.gmra.mxu0 %v11613
      %v11854 = vpop.f32.mrf.mxu0
      %v11855 = vadd.f32 0.0, %v11854
      %v11856 = vpop.f32.mrf.mxu0
      %v11857 = vpop.f32.mrf.mxu0
      %v11858 = vadd.f32 0.0, %v11857
      %v11859 = vpop.f32.mrf.mxu0
      %11860 = vmatprep.mubr.bf16.mxu0 %v11619
      %11861 = vmatmul.mubr.bf16.gmra.mxu0 %v11617
      %v11862 = vpop.f32.mrf.mxu0
      %v11863 = vadd.f32 0.0, %v11862
      %v11864 = vpop.f32.mrf.mxu0
      %v11865 = vpop.f32.mrf.mxu0
      %v11866 = vadd.f32 0.0, %v11865
      %v11867 = vpop.f32.mrf.mxu0
      %11868 = vdwg.mxu0
      %v11869 = vadd.f32 %v11508, %v11775
      %v11870 = vadd.f32 %v11509, %v11778
      %v11871 = vadd.f32 %v11510, %v11783
      %v11872 = vadd.f32 %v11511, %v11786
      %v11873 = vadd.f32 %v11512, %v11791
      %v11874 = vadd.f32 %v11513, %v11794
      %v11875 = vadd.f32 %v11514, %v11799
      %v11876 = vadd.f32 %v11515, %v11802
      %v11877 = vadd.f32 %v11516, %v11807
      %v11878 = vadd.f32 %v11517, %v11810
      %v11879 = vadd.f32 %v11518, %v11815
      %v11880 = vadd.f32 %v11519, %v11818
      %v11881 = vadd.f32 %v11520, %v11823
      %v11882 = vadd.f32 %v11521, %v11826
      %v11883 = vadd.f32 %v11522, %v11831
      %v11884 = vadd.f32 %v11523, %v11834
      %v11885 = vadd.f32 %v11524, %v11839
      %v11886 = vadd.f32 %v11525, %v11842
      %v11887 = vadd.f32 %v11526, %v11847
      %v11888 = vadd.f32 %v11527, %v11850
      %v11889 = vadd.f32 %v11528, %v11855
      %v11890 = vadd.f32 %v11529, %v11858
      %v11891 = vadd.f32 %v11530, %v11863
      %v11892 = vadd.f32 %v11531, %v11866
      %v11893 = vld [vmem:[#allocation3 + $0xc0] sm:$0xff]
      %v11894 = vld [vmem:[%s5 + $0x380] sm:$0xf]
      %v11895 = vld [vmem:[%s5 + $0x384] sm:$0xf]
      %v11896 = vld [vmem:[%s5 + $0x388] sm:$0xf]
      %v11897 = vld [vmem:[%s5 + $0x38c] sm:$0xf]
      %v11898 = vld [vmem:[%s5 + $0x390] sm:$0xf]
      %v11899 = vld [vmem:[%s5 + $0x394] sm:$0xf]
      %v11900 = vld [vmem:[%s5 + $0x398] sm:$0xf]
      %v11901 = vld [vmem:[%s5 + $0x39c] sm:$0xf]
      %v11902 = vld [vmem:[%s5 + $0x3a0] sm:$0xf]
      %v11903 = vld [vmem:[%s5 + $0x3a4] sm:$0xf]
      %v11904 = vld [vmem:[%s5 + $0x3a8] sm:$0xf]
      %v11905 = vld [vmem:[%s5 + $0x3ac] sm:$0xf]
      %v11906 = vld [vmem:[%s5 + $0x3b0] sm:$0xf]
      %v11907 = vld [vmem:[%s5 + $0x3b4] sm:$0xf]
      %v11908 = vld [vmem:[%s5 + $0x3b8] sm:$0xf]
      %v11909 = vld [vmem:[%s5 + $0x3bc] sm:$0xf]
      %v11910 = vld [vmem:[%s5 + $0x3c0] sm:$0xf]
      %v11911 = vld [vmem:[%s5 + $0x3c4] sm:$0xf]
      %v11912 = vld [vmem:[%s5 + $0x3c8] sm:$0xf]
      %v11913 = vld [vmem:[%s5 + $0x3cc] sm:$0xf]
      %v11914 = vld [vmem:[%s5 + $0x3d0] sm:$0xf]
      %v11915 = vld [vmem:[%s5 + $0x3d4] sm:$0xf]
      %v11916 = vld [vmem:[%s5 + $0x3d8] sm:$0xf]
      %v11917 = vld [vmem:[%s5 + $0x3dc] sm:$0xf]
      %v11918 = vld [vmem:[%s5 + $0x3e0] sm:$0xf]
      %v11919 = vld [vmem:[%s5 + $0x3e4] sm:$0xf]
      %v11920 = vld [vmem:[%s5 + $0x3e8] sm:$0xf]
      %v11921 = vld [vmem:[%s5 + $0x3ec] sm:$0xf]
      %v11922 = vld [vmem:[%s5 + $0x3f0] sm:$0xf]
      %v11923 = vld [vmem:[%s5 + $0x3f4] sm:$0xf]
      %v11924 = vld [vmem:[%s5 + $0x3f8] sm:$0xf]
      %v11925 = vld [vmem:[%s5 + $0x3fc] sm:$0xf]
      %v11927 = vunpack.c.l.b16 %v11893
      %v11928 = vunpack.c.h.b16 %v11893
      %v11929 = vpack.c.b16 %v11927, %v11927
      %v11930 = vpack.c.b16 %v11928, %v11928
      %vm11931 = vsmask.f32 4352
      %v11933 = vshrl.u32 %v11568, 16
      %v11935 = vrot.slane %v11933, 3
      %v11936 = vshll.u32 %v11568, 16
      %v11938 = vrot.slane %v11936, 4
      %v11939 = vor.u32 %v11935, %v11938
      %v11940 = vrot.slane %v9270, 3
      %v11941 = vrot.slane %v9254, 4
      %v11942 = vor.u32 %v11940, %v11941
      %v11943 = vsel %vm11931, %v11939, %v11942
      %v11945 = vshrl.u32 %v11569, 16
      %v11947 = vrot.slane %v11945, 3
      %v11948 = vshll.u32 %v11569, 16
      %v11950 = vrot.slane %v11948, 4
      %v11951 = vor.u32 %v11947, %v11950
      %v11952 = vrot.slane %v9278, 3
      %v11953 = vrot.slane %v9266, 4
      %v11954 = vor.u32 %v11952, %v11953
      %v11955 = vsel %vm11931, %v11951, %v11954
      %v11956 = vrot.slane %v9286, 3
      %v11957 = vrot.slane %v9274, 4
      %v11958 = vor.u32 %v11956, %v11957
      %v11959 = vsel %vm11931, %v11942, %v11958
      %v11960 = vrot.slane %v9294, 3
      %v11961 = vrot.slane %v9282, 4
      %v11962 = vor.u32 %v11960, %v11961
      %v11963 = vsel %vm11931, %v11954, %v11962
      %v11964 = vrot.slane %v9302, 3
      %v11965 = vrot.slane %v9290, 4
      %v11966 = vor.u32 %v11964, %v11965
      %v11967 = vsel %vm11931, %v11958, %v11966
      %v11968 = vrot.slane %v9310, 3
      %v11969 = vrot.slane %v9298, 4
      %v11970 = vor.u32 %v11968, %v11969
      %v11971 = vsel %vm11931, %v11962, %v11970
      %v11972 = vrot.slane %v9318, 3
      %v11973 = vrot.slane %v9306, 4
      %v11974 = vor.u32 %v11972, %v11973
      %v11975 = vsel %vm11931, %v11966, %v11974
      %v11976 = vrot.slane %v9326, 3
      %v11977 = vrot.slane %v9314, 4
      %v11978 = vor.u32 %v11976, %v11977
      %v11979 = vsel %vm11931, %v11970, %v11978
      %v11980 = vrot.slane %v9334, 3
      %v11981 = vrot.slane %v9322, 4
      %v11982 = vor.u32 %v11980, %v11981
      %v11983 = vsel %vm11931, %v11974, %v11982
      %v11984 = vrot.slane %v9342, 3
      %v11985 = vrot.slane %v9330, 4
      %v11986 = vor.u32 %v11984, %v11985
      %v11987 = vsel %vm11931, %v11978, %v11986
      %v11988 = vrot.slane %v9350, 3
      %v11989 = vrot.slane %v9338, 4
      %v11990 = vor.u32 %v11988, %v11989
      %v11991 = vsel %vm11931, %v11982, %v11990
      %v11992 = vrot.slane %v9358, 3
      %v11993 = vrot.slane %v9346, 4
      %v11994 = vor.u32 %v11992, %v11993
      %v11995 = vsel %vm11931, %v11986, %v11994
      %v11996 = vrot.slane %v9366, 3
      %v11997 = vrot.slane %v9354, 4
      %v11998 = vor.u32 %v11996, %v11997
      %v11999 = vsel %vm11931, %v11990, %v11998
      %v12000 = vrot.slane %v9374, 3
      %v12001 = vrot.slane %v9362, 4
      %v12002 = vor.u32 %v12000, %v12001
      %v12003 = vsel %vm11931, %v11994, %v12002
      %v12004 = vrot.slane %v9382, 3
      %v12005 = vrot.slane %v9370, 4
      %v12006 = vor.u32 %v12004, %v12005
      %v12007 = vsel %vm11931, %v11998, %v12006
      %v12008 = vrot.slane %v9390, 3
      %v12009 = vrot.slane %v9378, 4
      %v12010 = vor.u32 %v12008, %v12009
      %v12011 = vsel %vm11931, %v12002, %v12010
      %v12012 = vrot.slane %v9398, 3
      %v12013 = vrot.slane %v9386, 4
      %v12014 = vor.u32 %v12012, %v12013
      %v12015 = vsel %vm11931, %v12006, %v12014
      %v12016 = vrot.slane %v9406, 3
      %v12017 = vrot.slane %v9394, 4
      %v12018 = vor.u32 %v12016, %v12017
      %v12019 = vsel %vm11931, %v12010, %v12018
      %v12020 = vrot.slane %v9414, 3
      %v12021 = vrot.slane %v9402, 4
      %v12022 = vor.u32 %v12020, %v12021
      %v12023 = vsel %vm11931, %v12014, %v12022
      %v12024 = vrot.slane %v9422, 3
      %v12025 = vrot.slane %v9410, 4
      %v12026 = vor.u32 %v12024, %v12025
      %v12027 = vsel %vm11931, %v12018, %v12026
      %v12028 = vrot.slane %v9430, 3
      %v12029 = vrot.slane %v9418, 4
      %v12030 = vor.u32 %v12028, %v12029
      %v12031 = vsel %vm11931, %v12022, %v12030
      %v12032 = vrot.slane %v9438, 3
      %v12033 = vrot.slane %v9426, 4
      %v12034 = vor.u32 %v12032, %v12033
      %v12035 = vsel %vm11931, %v12026, %v12034
      %v12037 = vshrl.u32 %v11929, 16
      %v12039 = vrot.slane %v12037, 3
      %v12040 = vshll.u32 %v11929, 16
      %v12042 = vrot.slane %v12040, 4
      %v12043 = vor.u32 %v12039, %v12042
      %v12044 = vsel %vm11931, %v12030, %v12043
      %v12046 = vshrl.u32 %v11930, 16
      %v12048 = vrot.slane %v12046, 3
      %v12049 = vshll.u32 %v11930, 16
      %v12051 = vrot.slane %v12049, 4
      %v12052 = vor.u32 %v12048, %v12051
      %v12053 = vsel %vm11931, %v12034, %v12052
      %v12110 = vunpack.c.l.b16 %v11894
      %v12111 = vunpack.c.l.b16 %v11895
      %v12112 = vunpack.c.l.b16 %v11896
      %v12113 = vunpack.c.l.b16 %v11897
      %v12114 = vunpack.c.l.b16 %v11898
      %v12115 = vunpack.c.l.b16 %v11899
      %v12116 = vunpack.c.l.b16 %v11900
      %v12117 = vunpack.c.l.b16 %v11901
      %v12118 = vunpack.c.l.b16 %v11902
      %v12119 = vunpack.c.l.b16 %v11903
      %v12120 = vunpack.c.l.b16 %v11904
      %v12121 = vunpack.c.l.b16 %v11905
      %v12122 = vunpack.c.l.b16 %v11906
      %v12123 = vunpack.c.l.b16 %v11907
      %v12124 = vunpack.c.l.b16 %v11908
      %v12125 = vunpack.c.l.b16 %v11909
      %v12126 = vunpack.c.l.b16 %v11910
      %v12127 = vunpack.c.l.b16 %v11911
      %v12128 = vunpack.c.l.b16 %v11912
      %v12129 = vunpack.c.l.b16 %v11913
      %v12130 = vunpack.c.l.b16 %v11914
      %v12131 = vunpack.c.l.b16 %v11915
      %v12132 = vunpack.c.l.b16 %v11916
      %v12133 = vunpack.c.l.b16 %v11917
      %v12134 = vunpack.c.l.b16 %v11918
      %v12135 = vunpack.c.l.b16 %v11919
      %v12136 = vunpack.c.l.b16 %v11920
      %v12137 = vunpack.c.l.b16 %v11921
      %v12138 = vunpack.c.l.b16 %v11922
      %v12139 = vunpack.c.l.b16 %v11923
      %v12140 = vunpack.c.l.b16 %v11924
      %v12141 = vunpack.c.l.b16 %v11925
      %v12142 = vpack.c.b16 %v12111, %v12110
      %v12143 = vpack.c.b16 %v12113, %v12112
      %v12144 = vpack.c.b16 %v12115, %v12114
      %v12145 = vpack.c.b16 %v12117, %v12116
      %v12146 = vpack.c.b16 %v12119, %v12118
      %v12147 = vpack.c.b16 %v12121, %v12120
      %v12148 = vpack.c.b16 %v12123, %v12122
      %v12149 = vpack.c.b16 %v12125, %v12124
      %v12150 = vpack.c.b16 %v12127, %v12126
      %v12151 = vpack.c.b16 %v12129, %v12128
      %v12152 = vpack.c.b16 %v12131, %v12130
      %v12153 = vpack.c.b16 %v12133, %v12132
      %v12154 = vpack.c.b16 %v12135, %v12134
      %v12155 = vpack.c.b16 %v12137, %v12136
      %v12156 = vpack.c.b16 %v12139, %v12138
      %v12157 = vpack.c.b16 %v12141, %v12140
      %12174 = vmatprep.subr.bf16.mxu0 0
      %12175 = vmatpush1.bf16.msra.mxu0 %v12149
      %12176 = vmatprep.subr.bf16.mxu0 0
      %12177 = vmatpush1.bf16.msra.mxu0 %v12148
      %12178 = vmatprep.subr.bf16.mxu0 0
      %12179 = vmatpush1.bf16.msra.mxu0 %v12147
      %12180 = vmatprep.subr.bf16.mxu0 0
      %12181 = vmatpush1.bf16.msra.mxu0 %v12146
      %12182 = vmatprep.subr.bf16.mxu0 0
      %12183 = vmatpush1.bf16.msra.mxu0 %v12145
      %12184 = vmatprep.subr.bf16.mxu0 0
      %12185 = vmatpush1.bf16.msra.mxu0 %v12144
      %12186 = vmatprep.subr.bf16.mxu0 0
      %12187 = vmatpush1.bf16.msra.mxu0 %v12143
      %12188 = vmatprep.subr.bf16.mxu0 0
      %12189 = vmatpush1.bf16.msra.mxu0 %v12142
      %12190 = vmatprep.subr.bf16.mxu0 0
      %12191 = vmatpush2.bf16.msra.mxu0 %v12157
      %12192 = vmatprep.subr.bf16.mxu0 0
      %12193 = vmatpush2.bf16.msra.mxu0 %v12156
      %12194 = vmatprep.subr.bf16.mxu0 0
      %12195 = vmatpush2.bf16.msra.mxu0 %v12155
      %12196 = vmatprep.subr.bf16.mxu0 0
      %12197 = vmatpush2.bf16.msra.mxu0 %v12154
      %12198 = vmatprep.subr.bf16.mxu0 0
      %12199 = vmatpush2.bf16.msra.mxu0 %v12153
      %12200 = vmatprep.subr.bf16.mxu0 0
      %12201 = vmatpush2.bf16.msra.mxu0 %v12152
      %12202 = vmatprep.subr.bf16.mxu0 0
      %12203 = vmatpush2.bf16.msra.mxu0 %v12151
      %12204 = vmatprep.subr.bf16.mxu0 0
      %12205 = vmatpush2.bf16.msra.mxu0 %v12150
      %12206 = vmatprep.mubr.bf16.mxu0 %v11955
      %12207 = vmatmul.mubr.bf16.gmra.mxu0 %v11943
      %v12208 = vpop.f32.mrf.mxu0
      %v12209 = vadd.f32 0.0, %v12208
      %v12210 = vpop.f32.mrf.mxu0
      %v12211 = vpop.f32.mrf.mxu0
      %v12212 = vadd.f32 0.0, %v12211
      %v12213 = vpop.f32.mrf.mxu0
      %12214 = vmatprep.mubr.bf16.mxu0 %v11963
      %12215 = vmatmul.mubr.bf16.gmra.mxu0 %v11959
      %v12216 = vpop.f32.mrf.mxu0
      %v12217 = vadd.f32 0.0, %v12216
      %v12218 = vpop.f32.mrf.mxu0
      %v12219 = vpop.f32.mrf.mxu0
      %v12220 = vadd.f32 0.0, %v12219
      %v12221 = vpop.f32.mrf.mxu0
      %12222 = vmatprep.mubr.bf16.mxu0 %v11971
      %12223 = vmatmul.mubr.bf16.gmra.mxu0 %v11967
      %v12224 = vpop.f32.mrf.mxu0
      %v12225 = vadd.f32 0.0, %v12224
      %v12226 = vpop.f32.mrf.mxu0
      %v12227 = vpop.f32.mrf.mxu0
      %v12228 = vadd.f32 0.0, %v12227
      %v12229 = vpop.f32.mrf.mxu0
      %12230 = vmatprep.mubr.bf16.mxu0 %v11979
      %12231 = vmatmul.mubr.bf16.gmra.mxu0 %v11975
      %v12232 = vpop.f32.mrf.mxu0
      %v12233 = vadd.f32 0.0, %v12232
      %v12234 = vpop.f32.mrf.mxu0
      %v12235 = vpop.f32.mrf.mxu0
      %v12236 = vadd.f32 0.0, %v12235
      %v12237 = vpop.f32.mrf.mxu0
      %12238 = vmatprep.mubr.bf16.mxu0 %v11987
      %12239 = vmatmul.mubr.bf16.gmra.mxu0 %v11983
      %v12240 = vpop.f32.mrf.mxu0
      %v12241 = vadd.f32 0.0, %v12240
      %v12242 = vpop.f32.mrf.mxu0
      %v12243 = vpop.f32.mrf.mxu0
      %v12244 = vadd.f32 0.0, %v12243
      %v12245 = vpop.f32.mrf.mxu0
      %12246 = vmatprep.mubr.bf16.mxu0 %v11995
      %12247 = vmatmul.mubr.bf16.gmra.mxu0 %v11991
      %v12248 = vpop.f32.mrf.mxu0
      %v12249 = vadd.f32 0.0, %v12248
      %v12250 = vpop.f32.mrf.mxu0
      %v12251 = vpop.f32.mrf.mxu0
      %v12252 = vadd.f32 0.0, %v12251
      %v12253 = vpop.f32.mrf.mxu0
      %12254 = vmatprep.mubr.bf16.mxu0 %v12003
      %12255 = vmatmul.mubr.bf16.gmra.mxu0 %v11999
      %v12256 = vpop.f32.mrf.mxu0
      %v12257 = vadd.f32 0.0, %v12256
      %v12258 = vpop.f32.mrf.mxu0
      %v12259 = vpop.f32.mrf.mxu0
      %v12260 = vadd.f32 0.0, %v12259
      %v12261 = vpop.f32.mrf.mxu0
      %12262 = vmatprep.mubr.bf16.mxu0 %v12011
      %12263 = vmatmul.mubr.bf16.gmra.mxu0 %v12007
      %v12264 = vpop.f32.mrf.mxu0
      %v12265 = vadd.f32 0.0, %v12264
      %v12266 = vpop.f32.mrf.mxu0
      %v12267 = vpop.f32.mrf.mxu0
      %v12268 = vadd.f32 0.0, %v12267
      %v12269 = vpop.f32.mrf.mxu0
      %12270 = vmatprep.mubr.bf16.mxu0 %v12019
      %12271 = vmatmul.mubr.bf16.gmra.mxu0 %v12015
      %v12272 = vpop.f32.mrf.mxu0
      %v12273 = vadd.f32 0.0, %v12272
      %v12274 = vpop.f32.mrf.mxu0
      %v12275 = vpop.f32.mrf.mxu0
      %v12276 = vadd.f32 0.0, %v12275
      %v12277 = vpop.f32.mrf.mxu0
      %12278 = vmatprep.mubr.bf16.mxu0 %v12027
      %12279 = vmatmul.mubr.bf16.gmra.mxu0 %v12023
      %v12280 = vpop.f32.mrf.mxu0
      %v12281 = vadd.f32 0.0, %v12280
      %v12282 = vpop.f32.mrf.mxu0
      %v12283 = vpop.f32.mrf.mxu0
      %v12284 = vadd.f32 0.0, %v12283
      %v12285 = vpop.f32.mrf.mxu0
      %12286 = vmatprep.mubr.bf16.mxu0 %v12035
      %12287 = vmatmul.mubr.bf16.gmra.mxu0 %v12031
      %v12288 = vpop.f32.mrf.mxu0
      %v12289 = vadd.f32 0.0, %v12288
      %v12290 = vpop.f32.mrf.mxu0
      %v12291 = vpop.f32.mrf.mxu0
      %v12292 = vadd.f32 0.0, %v12291
      %v12293 = vpop.f32.mrf.mxu0
      %12294 = vmatprep.mubr.bf16.mxu0 %v12053
      %12295 = vmatmul.mubr.bf16.gmra.mxu0 %v12044
      %v12296 = vpop.f32.mrf.mxu0
      %v12297 = vadd.f32 0.0, %v12296
      %v12298 = vpop.f32.mrf.mxu0
      %v12299 = vpop.f32.mrf.mxu0
      %v12300 = vadd.f32 0.0, %v12299
      %v12301 = vpop.f32.mrf.mxu0
      %12302 = vdwg.mxu0
      %v12303 = vadd.f32 %v11869, %v12209
      %v12304 = vadd.f32 %v11870, %v12212
      %v12305 = vadd.f32 %v11871, %v12217
      %v12306 = vadd.f32 %v11872, %v12220
      %v12307 = vadd.f32 %v11873, %v12225
      %v12308 = vadd.f32 %v11874, %v12228
      %v12309 = vadd.f32 %v11875, %v12233
      %v12310 = vadd.f32 %v11876, %v12236
      %v12311 = vadd.f32 %v11877, %v12241
      %v12312 = vadd.f32 %v11878, %v12244
      %v12313 = vadd.f32 %v11879, %v12249
      %v12314 = vadd.f32 %v11880, %v12252
      %v12315 = vadd.f32 %v11881, %v12257
      %v12316 = vadd.f32 %v11882, %v12260
      %v12317 = vadd.f32 %v11883, %v12265
      %v12318 = vadd.f32 %v11884, %v12268
      %v12319 = vadd.f32 %v11885, %v12273
      %v12320 = vadd.f32 %v11886, %v12276
      %v12321 = vadd.f32 %v11887, %v12281
      %v12322 = vadd.f32 %v11888, %v12284
      %v12323 = vadd.f32 %v11889, %v12289
      %v12324 = vadd.f32 %v11890, %v12292
      %v12325 = vadd.f32 %v11891, %v12297
      %v12326 = vadd.f32 %v11892, %v12300
      %v12327 = vld [vmem:[%s5 + $0x400] sm:$0xf]
      %v12328 = vld [vmem:[%s5 + $0x404] sm:$0xf]
      %v12329 = vld [vmem:[%s5 + $0x408] sm:$0xf]
      %v12330 = vld [vmem:[%s5 + $0x40c] sm:$0xf]
      %v12331 = vld [vmem:[%s5 + $0x410] sm:$0xf]
      %v12332 = vld [vmem:[%s5 + $0x414] sm:$0xf]
      %v12333 = vld [vmem:[%s5 + $0x418] sm:$0xf]
      %v12334 = vld [vmem:[%s5 + $0x41c] sm:$0xf]
      %v12335 = vld [vmem:[%s5 + $0x420] sm:$0xf]
      %v12336 = vld [vmem:[%s5 + $0x424] sm:$0xf]
      %v12337 = vld [vmem:[%s5 + $0x428] sm:$0xf]
      %v12338 = vld [vmem:[%s5 + $0x42c] sm:$0xf]
      %v12339 = vld [vmem:[%s5 + $0x430] sm:$0xf]
      %v12340 = vld [vmem:[%s5 + $0x434] sm:$0xf]
      %v12341 = vld [vmem:[%s5 + $0x438] sm:$0xf]
      %v12342 = vld [vmem:[%s5 + $0x43c] sm:$0xf]
      %v12343 = vld [vmem:[%s5 + $0x440] sm:$0xf]
      %v12344 = vld [vmem:[%s5 + $0x444] sm:$0xf]
      %v12345 = vld [vmem:[%s5 + $0x448] sm:$0xf]
      %v12346 = vld [vmem:[%s5 + $0x44c] sm:$0xf]
      %v12347 = vld [vmem:[%s5 + $0x450] sm:$0xf]
      %v12348 = vld [vmem:[%s5 + $0x454] sm:$0xf]
      %v12349 = vld [vmem:[%s5 + $0x458] sm:$0xf]
      %v12350 = vld [vmem:[%s5 + $0x45c] sm:$0xf]
      %v12351 = vld [vmem:[%s5 + $0x460] sm:$0xf]
      %v12352 = vld [vmem:[%s5 + $0x464] sm:$0xf]
      %v12353 = vld [vmem:[%s5 + $0x468] sm:$0xf]
      %v12354 = vld [vmem:[%s5 + $0x46c] sm:$0xf]
      %v12355 = vld [vmem:[%s5 + $0x470] sm:$0xf]
      %v12356 = vld [vmem:[%s5 + $0x474] sm:$0xf]
      %v12357 = vld [vmem:[%s5 + $0x478] sm:$0xf]
      %v12358 = vld [vmem:[%s5 + $0x47c] sm:$0xf]
      %v12359 = vpack.c.b16 %v9174, %v9172
      %v12360 = vpack.c.b16 %v9175, %v9173
      %v12361 = vpack.c.b16 %v9178, %v9176
      %v12362 = vpack.c.b16 %v9179, %v9177
      %v12363 = vpack.c.b16 %v9182, %v9180
      %v12364 = vpack.c.b16 %v9183, %v9181
      %v12365 = vpack.c.b16 %v9186, %v9184
      %v12366 = vpack.c.b16 %v9187, %v9185
      %v12367 = vpack.c.b16 %v9190, %v9188
      %v12368 = vpack.c.b16 %v9191, %v9189
      %v12369 = vpack.c.b16 %v9194, %v9192
      %v12370 = vpack.c.b16 %v9195, %v9193
      %v12371 = vpack.c.b16 %v9198, %v9196
      %v12372 = vpack.c.b16 %v9199, %v9197
      %v12373 = vpack.c.b16 %v9202, %v9200
      %v12374 = vpack.c.b16 %v9203, %v9201
      %v12375 = vpack.c.b16 %v9206, %v9204
      %v12376 = vpack.c.b16 %v9207, %v9205
      %v12377 = vpack.c.b16 %v9210, %v9208
      %v12378 = vpack.c.b16 %v9211, %v9209
      %v12379 = vpack.c.b16 %v9214, %v9212
      %v12380 = vpack.c.b16 %v9215, %v9213
      %v12381 = vpack.c.b16 %v11927, %v9216
      %v12382 = vpack.c.b16 %v11928, %v9217
      %v12439 = vunpack.c.l.b16 %v12327
      %v12440 = vunpack.c.l.b16 %v12328
      %v12441 = vunpack.c.l.b16 %v12329
      %v12442 = vunpack.c.l.b16 %v12330
      %v12443 = vunpack.c.l.b16 %v12331
      %v12444 = vunpack.c.l.b16 %v12332
      %v12445 = vunpack.c.l.b16 %v12333
      %v12446 = vunpack.c.l.b16 %v12334
      %v12447 = vunpack.c.l.b16 %v12335
      %v12448 = vunpack.c.l.b16 %v12336
      %v12449 = vunpack.c.l.b16 %v12337
      %v12450 = vunpack.c.l.b16 %v12338
      %v12451 = vunpack.c.l.b16 %v12339
      %v12452 = vunpack.c.l.b16 %v12340
      %v12453 = vunpack.c.l.b16 %v12341
      %v12454 = vunpack.c.l.b16 %v12342
      %v12455 = vunpack.c.l.b16 %v12343
      %v12456 = vunpack.c.l.b16 %v12344
      %v12457 = vunpack.c.l.b16 %v12345
      %v12458 = vunpack.c.l.b16 %v12346
      %v12459 = vunpack.c.l.b16 %v12347
      %v12460 = vunpack.c.l.b16 %v12348
      %v12461 = vunpack.c.l.b16 %v12349
      %v12462 = vunpack.c.l.b16 %v12350
      %v12463 = vunpack.c.l.b16 %v12351
      %v12464 = vunpack.c.l.b16 %v12352
      %v12465 = vunpack.c.l.b16 %v12353
      %v12466 = vunpack.c.l.b16 %v12354
      %v12467 = vunpack.c.l.b16 %v12355
      %v12468 = vunpack.c.l.b16 %v12356
      %v12469 = vunpack.c.l.b16 %v12357
      %v12470 = vunpack.c.l.b16 %v12358
      %v12471 = vpack.c.b16 %v12440, %v12439
      %v12472 = vpack.c.b16 %v12442, %v12441
      %v12473 = vpack.c.b16 %v12444, %v12443
      %v12474 = vpack.c.b16 %v12446, %v12445
      %v12475 = vpack.c.b16 %v12448, %v12447
      %v12476 = vpack.c.b16 %v12450, %v12449
      %v12477 = vpack.c.b16 %v12452, %v12451
      %v12478 = vpack.c.b16 %v12454, %v12453
      %v12479 = vpack.c.b16 %v12456, %v12455
      %v12480 = vpack.c.b16 %v12458, %v12457
      %v12481 = vpack.c.b16 %v12460, %v12459
      %v12482 = vpack.c.b16 %v12462, %v12461
      %v12483 = vpack.c.b16 %v12464, %v12463
      %v12484 = vpack.c.b16 %v12466, %v12465
      %v12485 = vpack.c.b16 %v12468, %v12467
      %v12486 = vpack.c.b16 %v12470, %v12469
      %12503 = vmatprep.subr.bf16.mxu0 0
      %12504 = vmatpush1.bf16.msra.mxu0 %v12478
      %12505 = vmatprep.subr.bf16.mxu0 0
      %12506 = vmatpush1.bf16.msra.mxu0 %v12477
      %12507 = vmatprep.subr.bf16.mxu0 0
      %12508 = vmatpush1.bf16.msra.mxu0 %v12476
      %12509 = vmatprep.subr.bf16.mxu0 0
      %12510 = vmatpush1.bf16.msra.mxu0 %v12475
      %12511 = vmatprep.subr.bf16.mxu0 0
      %12512 = vmatpush1.bf16.msra.mxu0 %v12474
      %12513 = vmatprep.subr.bf16.mxu0 0
      %12514 = vmatpush1.bf16.msra.mxu0 %v12473
      %12515 = vmatprep.subr.bf16.mxu0 0
      %12516 = vmatpush1.bf16.msra.mxu0 %v12472
      %12517 = vmatprep.subr.bf16.mxu0 0
      %12518 = vmatpush1.bf16.msra.mxu0 %v12471
      %12519 = vmatprep.subr.bf16.mxu0 0
      %12520 = vmatpush2.bf16.msra.mxu0 %v12486
      %12521 = vmatprep.subr.bf16.mxu0 0
      %12522 = vmatpush2.bf16.msra.mxu0 %v12485
      %12523 = vmatprep.subr.bf16.mxu0 0
      %12524 = vmatpush2.bf16.msra.mxu0 %v12484
      %12525 = vmatprep.subr.bf16.mxu0 0
      %12526 = vmatpush2.bf16.msra.mxu0 %v12483
      %12527 = vmatprep.subr.bf16.mxu0 0
      %12528 = vmatpush2.bf16.msra.mxu0 %v12482
      %12529 = vmatprep.subr.bf16.mxu0 0
      %12530 = vmatpush2.bf16.msra.mxu0 %v12481
      %12531 = vmatprep.subr.bf16.mxu0 0
      %12532 = vmatpush2.bf16.msra.mxu0 %v12480
      %12533 = vmatprep.subr.bf16.mxu0 0
      %12534 = vmatpush2.bf16.msra.mxu0 %v12479
      %12535 = vmatprep.mubr.bf16.mxu0 %v12360
      %12536 = vmatmul.mubr.bf16.gmra.mxu0 %v12359
      %v12537 = vpop.f32.mrf.mxu0
      %v12538 = vadd.f32 0.0, %v12537
      %v12539 = vpop.f32.mrf.mxu0
      %v12540 = vpop.f32.mrf.mxu0
      %v12541 = vadd.f32 0.0, %v12540
      %v12542 = vpop.f32.mrf.mxu0
      %12543 = vmatprep.mubr.bf16.mxu0 %v12362
      %12544 = vmatmul.mubr.bf16.gmra.mxu0 %v12361
      %v12545 = vpop.f32.mrf.mxu0
      %v12546 = vadd.f32 0.0, %v12545
      %v12547 = vpop.f32.mrf.mxu0
      %v12548 = vpop.f32.mrf.mxu0
      %v12549 = vadd.f32 0.0, %v12548
      %v12550 = vpop.f32.mrf.mxu0
      %12551 = vmatprep.mubr.bf16.mxu0 %v12364
      %12552 = vmatmul.mubr.bf16.gmra.mxu0 %v12363
      %v12553 = vpop.f32.mrf.mxu0
      %v12554 = vadd.f32 0.0, %v12553
      %v12555 = vpop.f32.mrf.mxu0
      %v12556 = vpop.f32.mrf.mxu0
      %v12557 = vadd.f32 0.0, %v12556
      %v12558 = vpop.f32.mrf.mxu0
      %12559 = vmatprep.mubr.bf16.mxu0 %v12366
      %12560 = vmatmul.mubr.bf16.gmra.mxu0 %v12365
      %v12561 = vpop.f32.mrf.mxu0
      %v12562 = vadd.f32 0.0, %v12561
      %v12563 = vpop.f32.mrf.mxu0
      %v12564 = vpop.f32.mrf.mxu0
      %v12565 = vadd.f32 0.0, %v12564
      %v12566 = vpop.f32.mrf.mxu0
      %12567 = vmatprep.mubr.bf16.mxu0 %v12368
      %12568 = vmatmul.mubr.bf16.gmra.mxu0 %v12367
      %v12569 = vpop.f32.mrf.mxu0
      %v12570 = vadd.f32 0.0, %v12569
      %v12571 = vpop.f32.mrf.mxu0
      %v12572 = vpop.f32.mrf.mxu0
      %v12573 = vadd.f32 0.0, %v12572
      %v12574 = vpop.f32.mrf.mxu0
      %12575 = vmatprep.mubr.bf16.mxu0 %v12370
      %12576 = vmatmul.mubr.bf16.gmra.mxu0 %v12369
      %v12577 = vpop.f32.mrf.mxu0
      %v12578 = vadd.f32 0.0, %v12577
      %v12579 = vpop.f32.mrf.mxu0
      %v12580 = vpop.f32.mrf.mxu0
      %v12581 = vadd.f32 0.0, %v12580
      %v12582 = vpop.f32.mrf.mxu0
      %12583 = vmatprep.mubr.bf16.mxu0 %v12372
      %12584 = vmatmul.mubr.bf16.gmra.mxu0 %v12371
      %v12585 = vpop.f32.mrf.mxu0
      %v12586 = vadd.f32 0.0, %v12585
      %v12587 = vpop.f32.mrf.mxu0
      %v12588 = vpop.f32.mrf.mxu0
      %v12589 = vadd.f32 0.0, %v12588
      %v12590 = vpop.f32.mrf.mxu0
      %12591 = vmatprep.mubr.bf16.mxu0 %v12374
      %12592 = vmatmul.mubr.bf16.gmra.mxu0 %v12373
      %v12593 = vpop.f32.mrf.mxu0
      %v12594 = vadd.f32 0.0, %v12593
      %v12595 = vpop.f32.mrf.mxu0
      %v12596 = vpop.f32.mrf.mxu0
      %v12597 = vadd.f32 0.0, %v12596
      %v12598 = vpop.f32.mrf.mxu0
      %12599 = vmatprep.mubr.bf16.mxu0 %v12376
      %12600 = vmatmul.mubr.bf16.gmra.mxu0 %v12375
      %v12601 = vpop.f32.mrf.mxu0
      %v12602 = vadd.f32 0.0, %v12601
      %v12603 = vpop.f32.mrf.mxu0
      %v12604 = vpop.f32.mrf.mxu0
      %v12605 = vadd.f32 0.0, %v12604
      %v12606 = vpop.f32.mrf.mxu0
      %12607 = vmatprep.mubr.bf16.mxu0 %v12378
      %12608 = vmatmul.mubr.bf16.gmra.mxu0 %v12377
      %v12609 = vpop.f32.mrf.mxu0
      %v12610 = vadd.f32 0.0, %v12609
      %v12611 = vpop.f32.mrf.mxu0
      %v12612 = vpop.f32.mrf.mxu0
      %v12613 = vadd.f32 0.0, %v12612
      %v12614 = vpop.f32.mrf.mxu0
      %12615 = vmatprep.mubr.bf16.mxu0 %v12380
      %12616 = vmatmul.mubr.bf16.gmra.mxu0 %v12379
      %v12617 = vpop.f32.mrf.mxu0
      %v12618 = vadd.f32 0.0, %v12617
      %v12619 = vpop.f32.mrf.mxu0
      %v12620 = vpop.f32.mrf.mxu0
      %v12621 = vadd.f32 0.0, %v12620
      %v12622 = vpop.f32.mrf.mxu0
      %12623 = vmatprep.mubr.bf16.mxu0 %v12382
      %12624 = vmatmul.mubr.bf16.gmra.mxu0 %v12381
      %v12625 = vpop.f32.mrf.mxu0
      %v12626 = vadd.f32 0.0, %v12625
      %v12627 = vpop.f32.mrf.mxu0
      %v12628 = vpop.f32.mrf.mxu0
      %v12629 = vadd.f32 0.0, %v12628
      %v12630 = vpop.f32.mrf.mxu0
      %12631 = vdwg.mxu0
      %v12632 = vadd.f32 %v12303, %v12538
      %v12633 = vadd.f32 %v12304, %v12541
      %v12634 = vadd.f32 %v12305, %v12546
      %v12635 = vadd.f32 %v12306, %v12549
      %v12636 = vadd.f32 %v12307, %v12554
      %v12637 = vadd.f32 %v12308, %v12557
      %v12638 = vadd.f32 %v12309, %v12562
      %v12639 = vadd.f32 %v12310, %v12565
      %v12640 = vadd.f32 %v12311, %v12570
      %v12641 = vadd.f32 %v12312, %v12573
      %v12642 = vadd.f32 %v12313, %v12578
      %v12643 = vadd.f32 %v12314, %v12581
      %v12644 = vadd.f32 %v12315, %v12586
      %v12645 = vadd.f32 %v12316, %v12589
      %v12646 = vadd.f32 %v12317, %v12594
      %v12647 = vadd.f32 %v12318, %v12597
      %v12648 = vadd.f32 %v12319, %v12602
      %v12649 = vadd.f32 %v12320, %v12605
      %v12650 = vadd.f32 %v12321, %v12610
      %v12651 = vadd.f32 %v12322, %v12613
      %v12652 = vadd.f32 %v12323, %v12618
      %v12653 = vadd.f32 %v12324, %v12621
      %v12654 = vadd.f32 %v12325, %v12626
      %v12655 = vadd.f32 %v12326, %v12629
      %v12656 = vld [vmem:[#allocation3 + $0x8] sm:$0xff]
      %v12657 = vld [vmem:[#allocation3 + $0x10] sm:$0xff]
      %v12658 = vld [vmem:[#allocation3 + $0x18] sm:$0xff]
      %v12659 = vld [vmem:[#allocation3 + $0x20] sm:$0xff]
      %v12660 = vld [vmem:[#allocation3 + $0x28] sm:$0xff]
      %v12661 = vld [vmem:[#allocation3 + $0x30] sm:$0xff]
      %v12662 = vld [vmem:[#allocation3 + $0x38] sm:$0xff]
      %v12663 = vld [vmem:[#allocation3 + $0x40] sm:$0xff]
      %v12664 = vld [vmem:[#allocation3 + $0x48] sm:$0xff]
      %v12665 = vld [vmem:[#allocation3 + $0x50] sm:$0xff]
      %v12666 = vld [vmem:[#allocation3 + $0x58] sm:$0xff]
      %v12667 = vld [vmem:[#allocation3 + $0x60] sm:$0xff]
      %v12668 = vld [vmem:[#allocation3 + $0x68] sm:$0xff]
      %v12669 = vld [vmem:[#allocation3 + $0x70] sm:$0xff]
      %v12670 = vld [vmem:[#allocation3 + $0x78] sm:$0xff]
      %v12671 = vld [vmem:[#allocation3 + $0x80] sm:$0xff]
      %v12672 = vld [vmem:[#allocation3 + $0x88] sm:$0xff]
      %v12673 = vld [vmem:[#allocation3 + $0x90] sm:$0xff]
      %v12674 = vld [vmem:[#allocation3 + $0x98] sm:$0xff]
      %v12675 = vld [vmem:[#allocation3 + $0xa0] sm:$0xff]
      %v12676 = vld [vmem:[#allocation3 + $0xa8] sm:$0xff]
      %v12677 = vld [vmem:[#allocation3 + $0xb0] sm:$0xff]
      %v12678 = vld [vmem:[#allocation3 + $0xb8] sm:$0xff]
      %v12679 = vld [vmem:[#allocation3 + $0xc0] sm:$0xff]
      %v12680 = vld [vmem:[#allocation3 + $0xc8] sm:$0x11]
      %v12681 = vld [vmem:[%s5 + $0x480] sm:$0xf]
      %v12682 = vld [vmem:[%s5 + $0x484] sm:$0xf]
      %v12683 = vld [vmem:[%s5 + $0x488] sm:$0xf]
      %v12684 = vld [vmem:[%s5 + $0x48c] sm:$0xf]
      %v12685 = vld [vmem:[%s5 + $0x490] sm:$0xf]
      %v12686 = vld [vmem:[%s5 + $0x494] sm:$0xf]
      %v12687 = vld [vmem:[%s5 + $0x498] sm:$0xf]
      %v12688 = vld [vmem:[%s5 + $0x49c] sm:$0xf]
      %v12689 = vld [vmem:[%s5 + $0x4a0] sm:$0xf]
      %v12690 = vld [vmem:[%s5 + $0x4a4] sm:$0xf]
      %v12691 = vld [vmem:[%s5 + $0x4a8] sm:$0xf]
      %v12692 = vld [vmem:[%s5 + $0x4ac] sm:$0xf]
      %v12693 = vld [vmem:[%s5 + $0x4b0] sm:$0xf]
      %v12694 = vld [vmem:[%s5 + $0x4b4] sm:$0xf]
      %v12695 = vld [vmem:[%s5 + $0x4b8] sm:$0xf]
      %v12696 = vld [vmem:[%s5 + $0x4bc] sm:$0xf]
      %v12697 = vld [vmem:[%s5 + $0x4c0] sm:$0xf]
      %v12698 = vld [vmem:[%s5 + $0x4c4] sm:$0xf]
      %v12699 = vld [vmem:[%s5 + $0x4c8] sm:$0xf]
      %v12700 = vld [vmem:[%s5 + $0x4cc] sm:$0xf]
      %v12701 = vld [vmem:[%s5 + $0x4d0] sm:$0xf]
      %v12702 = vld [vmem:[%s5 + $0x4d4] sm:$0xf]
      %v12703 = vld [vmem:[%s5 + $0x4d8] sm:$0xf]
      %v12704 = vld [vmem:[%s5 + $0x4dc] sm:$0xf]
      %v12705 = vld [vmem:[%s5 + $0x4e0] sm:$0xf]
      %v12706 = vld [vmem:[%s5 + $0x4e4] sm:$0xf]
      %v12707 = vld [vmem:[%s5 + $0x4e8] sm:$0xf]
      %v12708 = vld [vmem:[%s5 + $0x4ec] sm:$0xf]
      %v12709 = vld [vmem:[%s5 + $0x4f0] sm:$0xf]
      %v12710 = vld [vmem:[%s5 + $0x4f4] sm:$0xf]
      %v12711 = vld [vmem:[%s5 + $0x4f8] sm:$0xf]
      %v12712 = vld [vmem:[%s5 + $0x4fc] sm:$0xf]
      %v12738 = vunpack.c.l.b16 %v12656
      %v12739 = vunpack.c.h.b16 %v12656
      %v12740 = vunpack.c.l.b16 %v12657
      %v12741 = vunpack.c.h.b16 %v12657
      %v12742 = vunpack.c.l.b16 %v12658
      %v12743 = vunpack.c.h.b16 %v12658
      %v12744 = vunpack.c.l.b16 %v12659
      %v12745 = vunpack.c.h.b16 %v12659
      %v12746 = vunpack.c.l.b16 %v12660
      %v12747 = vunpack.c.h.b16 %v12660
      %v12748 = vunpack.c.l.b16 %v12661
      %v12749 = vunpack.c.h.b16 %v12661
      %v12750 = vunpack.c.l.b16 %v12662
      %v12751 = vunpack.c.h.b16 %v12662
      %v12752 = vunpack.c.l.b16 %v12663
      %v12753 = vunpack.c.h.b16 %v12663
      %v12754 = vunpack.c.l.b16 %v12664
      %v12755 = vunpack.c.h.b16 %v12664
      %v12756 = vunpack.c.l.b16 %v12665
      %v12757 = vunpack.c.h.b16 %v12665
      %v12758 = vunpack.c.l.b16 %v12666
      %v12759 = vunpack.c.h.b16 %v12666
      %v12760 = vunpack.c.l.b16 %v12667
      %v12761 = vunpack.c.h.b16 %v12667
      %v12762 = vunpack.c.l.b16 %v12668
      %v12763 = vunpack.c.h.b16 %v12668
      %v12764 = vunpack.c.l.b16 %v12669
      %v12765 = vunpack.c.h.b16 %v12669
      %v12766 = vunpack.c.l.b16 %v12670
      %v12767 = vunpack.c.h.b16 %v12670
      %v12768 = vunpack.c.l.b16 %v12671
      %v12769 = vunpack.c.h.b16 %v12671
      %v12770 = vunpack.c.l.b16 %v12672
      %v12771 = vunpack.c.h.b16 %v12672
      %v12772 = vunpack.c.l.b16 %v12673
      %v12773 = vunpack.c.h.b16 %v12673
      %v12774 = vunpack.c.l.b16 %v12674
      %v12775 = vunpack.c.h.b16 %v12674
      %v12776 = vunpack.c.l.b16 %v12675
      %v12777 = vunpack.c.h.b16 %v12675
      %v12778 = vunpack.c.l.b16 %v12676
      %v12779 = vunpack.c.h.b16 %v12676
      %v12780 = vunpack.c.l.b16 %v12677
      %v12781 = vunpack.c.h.b16 %v12677
      %v12782 = vunpack.c.l.b16 %v12678
      %v12783 = vunpack.c.h.b16 %v12678
      %v12784 = vunpack.c.l.b16 %v12679
      %v12785 = vunpack.c.h.b16 %v12679
      %v12786 = vunpack.c.l.b16 %v12680
      %v12787 = vunpack.c.h.b16 %v12680
      %v12788 = vpack.c.b16 %v12740, %v12738
      %v12789 = vpack.c.b16 %v12741, %v12739
      %v12790 = vpack.c.b16 %v12744, %v12742
      %v12791 = vpack.c.b16 %v12745, %v12743
      %v12792 = vpack.c.b16 %v12748, %v12746
      %v12793 = vpack.c.b16 %v12749, %v12747
      %v12794 = vpack.c.b16 %v12752, %v12750
      %v12795 = vpack.c.b16 %v12753, %v12751
      %v12796 = vpack.c.b16 %v12756, %v12754
      %v12797 = vpack.c.b16 %v12757, %v12755
      %v12798 = vpack.c.b16 %v12760, %v12758
      %v12799 = vpack.c.b16 %v12761, %v12759
      %v12800 = vpack.c.b16 %v12764, %v12762
      %v12801 = vpack.c.b16 %v12765, %v12763
      %v12802 = vpack.c.b16 %v12768, %v12766
      %v12803 = vpack.c.b16 %v12769, %v12767
      %v12804 = vpack.c.b16 %v12772, %v12770
      %v12805 = vpack.c.b16 %v12773, %v12771
      %v12806 = vpack.c.b16 %v12776, %v12774
      %v12807 = vpack.c.b16 %v12777, %v12775
      %v12808 = vpack.c.b16 %v12780, %v12778
      %v12809 = vpack.c.b16 %v12781, %v12779
      %v12810 = vpack.c.b16 %v12784, %v12782
      %v12811 = vpack.c.b16 %v12785, %v12783
      %v12812 = vpack.c.b16 %v12786, %v12786
      %v12813 = vpack.c.b16 %v12787, %v12787
      %v12815 = vshrl.u32 %v12788, 16
      %v12817 = vshll.u32 %v12788, 16
      %v12819 = vrot.slane %v12817, 1
      %v12820 = vor.u32 %v12815, %v12819
      %v12822 = vshll.u32 %v12790, 16
      %v12824 = vrot.slane %v12822, 1
      %v12825 = vsel %vm2150, %v12820, %v12824
      %v12827 = vshrl.u32 %v12789, 16
      %v12829 = vshll.u32 %v12789, 16
      %v12831 = vrot.slane %v12829, 1
      %v12832 = vor.u32 %v12827, %v12831
      %v12834 = vshll.u32 %v12791, 16
      %v12836 = vrot.slane %v12834, 1
      %v12837 = vsel %vm2150, %v12832, %v12836
      %v12838 = vshrl.u32 %v12790, 16
      %v12840 = vor.u32 %v12838, %v12824
      %v12842 = vshll.u32 %v12792, 16
      %v12844 = vrot.slane %v12842, 1
      %v12845 = vsel %vm2150, %v12840, %v12844
      %v12846 = vshrl.u32 %v12791, 16
      %v12848 = vor.u32 %v12846, %v12836
      %v12850 = vshll.u32 %v12793, 16
      %v12852 = vrot.slane %v12850, 1
      %v12853 = vsel %vm2150, %v12848, %v12852
      %v12854 = vshrl.u32 %v12792, 16
      %v12856 = vor.u32 %v12854, %v12844
      %v12858 = vshll.u32 %v12794, 16
      %v12860 = vrot.slane %v12858, 1
      %v12861 = vsel %vm2150, %v12856, %v12860
      %v12862 = vshrl.u32 %v12793, 16
      %v12864 = vor.u32 %v12862, %v12852
      %v12866 = vshll.u32 %v12795, 16
      %v12868 = vrot.slane %v12866, 1
      %v12869 = vsel %vm2150, %v12864, %v12868
      %v12870 = vshrl.u32 %v12794, 16
      %v12872 = vor.u32 %v12870, %v12860
      %v12874 = vshll.u32 %v12796, 16
      %v12876 = vrot.slane %v12874, 1
      %v12877 = vsel %vm2150, %v12872, %v12876
      %v12878 = vshrl.u32 %v12795, 16
      %v12880 = vor.u32 %v12878, %v12868
      %v12882 = vshll.u32 %v12797, 16
      %v12884 = vrot.slane %v12882, 1
      %v12885 = vsel %vm2150, %v12880, %v12884
      %v12886 = vshrl.u32 %v12796, 16
      %v12888 = vor.u32 %v12886, %v12876
      %v12890 = vshll.u32 %v12798, 16
      %v12892 = vrot.slane %v12890, 1
      %v12893 = vsel %vm2150, %v12888, %v12892
      %v12894 = vshrl.u32 %v12797, 16
      %v12896 = vor.u32 %v12894, %v12884
      %v12898 = vshll.u32 %v12799, 16
      %v12900 = vrot.slane %v12898, 1
      %v12901 = vsel %vm2150, %v12896, %v12900
      %v12902 = vshrl.u32 %v12798, 16
      %v12904 = vor.u32 %v12902, %v12892
      %v12906 = vshll.u32 %v12800, 16
      %v12908 = vrot.slane %v12906, 1
      %v12909 = vsel %vm2150, %v12904, %v12908
      %v12910 = vshrl.u32 %v12799, 16
      %v12912 = vor.u32 %v12910, %v12900
      %v12914 = vshll.u32 %v12801, 16
      %v12916 = vrot.slane %v12914, 1
      %v12917 = vsel %vm2150, %v12912, %v12916
      %v12918 = vshrl.u32 %v12800, 16
      %v12920 = vor.u32 %v12918, %v12908
      %v12922 = vshll.u32 %v12802, 16
      %v12924 = vrot.slane %v12922, 1
      %v12925 = vsel %vm2150, %v12920, %v12924
      %v12926 = vshrl.u32 %v12801, 16
      %v12928 = vor.u32 %v12926, %v12916
      %v12930 = vshll.u32 %v12803, 16
      %v12932 = vrot.slane %v12930, 1
      %v12933 = vsel %vm2150, %v12928, %v12932
      %v12934 = vshrl.u32 %v12802, 16
      %v12936 = vor.u32 %v12934, %v12924
      %v12938 = vshll.u32 %v12804, 16
      %v12940 = vrot.slane %v12938, 1
      %v12941 = vsel %vm2150, %v12936, %v12940
      %v12942 = vshrl.u32 %v12803, 16
      %v12944 = vor.u32 %v12942, %v12932
      %v12946 = vshll.u32 %v12805, 16
      %v12948 = vrot.slane %v12946, 1
      %v12949 = vsel %vm2150, %v12944, %v12948
      %v12950 = vshrl.u32 %v12804, 16
      %v12952 = vor.u32 %v12950, %v12940
      %v12954 = vshll.u32 %v12806, 16
      %v12956 = vrot.slane %v12954, 1
      %v12957 = vsel %vm2150, %v12952, %v12956
      %v12958 = vshrl.u32 %v12805, 16
      %v12960 = vor.u32 %v12958, %v12948
      %v12962 = vshll.u32 %v12807, 16
      %v12964 = vrot.slane %v12962, 1
      %v12965 = vsel %vm2150, %v12960, %v12964
      %v12966 = vshrl.u32 %v12806, 16
      %v12968 = vor.u32 %v12966, %v12956
      %v12970 = vshll.u32 %v12808, 16
      %v12972 = vrot.slane %v12970, 1
      %v12973 = vsel %vm2150, %v12968, %v12972
      %v12974 = vshrl.u32 %v12807, 16
      %v12976 = vor.u32 %v12974, %v12964
      %v12978 = vshll.u32 %v12809, 16
      %v12980 = vrot.slane %v12978, 1
      %v12981 = vsel %vm2150, %v12976, %v12980
      %v12982 = vshrl.u32 %v12808, 16
      %v12984 = vor.u32 %v12982, %v12972
      %v12986 = vshll.u32 %v12810, 16
      %v12988 = vrot.slane %v12986, 1
      %v12989 = vsel %vm2150, %v12984, %v12988
      %v12990 = vshrl.u32 %v12809, 16
      %v12992 = vor.u32 %v12990, %v12980
      %v12994 = vshll.u32 %v12811, 16
      %v12996 = vrot.slane %v12994, 1
      %v12997 = vsel %vm2150, %v12992, %v12996
      %v12998 = vshrl.u32 %v12810, 16
      %v13000 = vor.u32 %v12998, %v12988
      %v13002 = vshll.u32 %v12812, 16
      %v13004 = vrot.slane %v13002, 1
      %v13005 = vsel %vm2150, %v13000, %v13004
      %v13006 = vshrl.u32 %v12811, 16
      %v13008 = vor.u32 %v13006, %v12996
      %v13010 = vshll.u32 %v12813, 16
      %v13012 = vrot.slane %v13010, 1
      %v13013 = vsel %vm2150, %v13008, %v13012
      %v13070 = vunpack.c.l.b16 %v12681
      %v13071 = vunpack.c.l.b16 %v12682
      %v13072 = vunpack.c.l.b16 %v12683
      %v13073 = vunpack.c.l.b16 %v12684
      %v13074 = vunpack.c.l.b16 %v12685
      %v13075 = vunpack.c.l.b16 %v12686
      %v13076 = vunpack.c.l.b16 %v12687
      %v13077 = vunpack.c.l.b16 %v12688
      %v13078 = vunpack.c.l.b16 %v12689
      %v13079 = vunpack.c.l.b16 %v12690
      %v13080 = vunpack.c.l.b16 %v12691
      %v13081 = vunpack.c.l.b16 %v12692
      %v13082 = vunpack.c.l.b16 %v12693
      %v13083 = vunpack.c.l.b16 %v12694
      %v13084 = vunpack.c.l.b16 %v12695
      %v13085 = vunpack.c.l.b16 %v12696
      %v13086 = vunpack.c.l.b16 %v12697
      %v13087 = vunpack.c.l.b16 %v12698
      %v13088 = vunpack.c.l.b16 %v12699
      %v13089 = vunpack.c.l.b16 %v12700
      %v13090 = vunpack.c.l.b16 %v12701
      %v13091 = vunpack.c.l.b16 %v12702
      %v13092 = vunpack.c.l.b16 %v12703
      %v13093 = vunpack.c.l.b16 %v12704
      %v13094 = vunpack.c.l.b16 %v12705
      %v13095 = vunpack.c.l.b16 %v12706
      %v13096 = vunpack.c.l.b16 %v12707
      %v13097 = vunpack.c.l.b16 %v12708
      %v13098 = vunpack.c.l.b16 %v12709
      %v13099 = vunpack.c.l.b16 %v12710
      %v13100 = vunpack.c.l.b16 %v12711
      %v13101 = vunpack.c.l.b16 %v12712
      %v13102 = vpack.c.b16 %v13071, %v13070
      %v13103 = vpack.c.b16 %v13073, %v13072
      %v13104 = vpack.c.b16 %v13075, %v13074
      %v13105 = vpack.c.b16 %v13077, %v13076
      %v13106 = vpack.c.b16 %v13079, %v13078
      %v13107 = vpack.c.b16 %v13081, %v13080
      %v13108 = vpack.c.b16 %v13083, %v13082
      %v13109 = vpack.c.b16 %v13085, %v13084
      %v13110 = vpack.c.b16 %v13087, %v13086
      %v13111 = vpack.c.b16 %v13089, %v13088
      %v13112 = vpack.c.b16 %v13091, %v13090
      %v13113 = vpack.c.b16 %v13093, %v13092
      %v13114 = vpack.c.b16 %v13095, %v13094
      %v13115 = vpack.c.b16 %v13097, %v13096
      %v13116 = vpack.c.b16 %v13099, %v13098
      %v13117 = vpack.c.b16 %v13101, %v13100
      %13134 = vmatprep.subr.bf16.mxu0 0
      %13135 = vmatpush1.bf16.msra.mxu0 %v13109
      %13136 = vmatprep.subr.bf16.mxu0 0
      %13137 = vmatpush1.bf16.msra.mxu0 %v13108
      %13138 = vmatprep.subr.bf16.mxu0 0
      %13139 = vmatpush1.bf16.msra.mxu0 %v13107
      %13140 = vmatprep.subr.bf16.mxu0 0
      %13141 = vmatpush1.bf16.msra.mxu0 %v13106
      %13142 = vmatprep.subr.bf16.mxu0 0
      %13143 = vmatpush1.bf16.msra.mxu0 %v13105
      %13144 = vmatprep.subr.bf16.mxu0 0
      %13145 = vmatpush1.bf16.msra.mxu0 %v13104
      %13146 = vmatprep.subr.bf16.mxu0 0
      %13147 = vmatpush1.bf16.msra.mxu0 %v13103
      %13148 = vmatprep.subr.bf16.mxu0 0
      %13149 = vmatpush1.bf16.msra.mxu0 %v13102
      %13150 = vmatprep.subr.bf16.mxu0 0
      %13151 = vmatpush2.bf16.msra.mxu0 %v13117
      %13152 = vmatprep.subr.bf16.mxu0 0
      %13153 = vmatpush2.bf16.msra.mxu0 %v13116
      %13154 = vmatprep.subr.bf16.mxu0 0
      %13155 = vmatpush2.bf16.msra.mxu0 %v13115
      %13156 = vmatprep.subr.bf16.mxu0 0
      %13157 = vmatpush2.bf16.msra.mxu0 %v13114
      %13158 = vmatprep.subr.bf16.mxu0 0
      %13159 = vmatpush2.bf16.msra.mxu0 %v13113
      %13160 = vmatprep.subr.bf16.mxu0 0
      %13161 = vmatpush2.bf16.msra.mxu0 %v13112
      %13162 = vmatprep.subr.bf16.mxu0 0
      %13163 = vmatpush2.bf16.msra.mxu0 %v13111
      %13164 = vmatprep.subr.bf16.mxu0 0
      %13165 = vmatpush2.bf16.msra.mxu0 %v13110
      %13166 = vmatprep.mubr.bf16.mxu0 %v12837
      %13167 = vmatmul.mubr.bf16.gmra.mxu0 %v12825
      %v13168 = vpop.f32.mrf.mxu0
      %v13169 = vadd.f32 0.0, %v13168
      %v13170 = vpop.f32.mrf.mxu0
      %v13171 = vpop.f32.mrf.mxu0
      %v13172 = vadd.f32 0.0, %v13171
      %v13173 = vpop.f32.mrf.mxu0
      %13174 = vmatprep.mubr.bf16.mxu0 %v12853
      %13175 = vmatmul.mubr.bf16.gmra.mxu0 %v12845
      %v13176 = vpop.f32.mrf.mxu0
      %v13177 = vadd.f32 0.0, %v13176
      %v13178 = vpop.f32.mrf.mxu0
      %v13179 = vpop.f32.mrf.mxu0
      %v13180 = vadd.f32 0.0, %v13179
      %v13181 = vpop.f32.mrf.mxu0
      %13182 = vmatprep.mubr.bf16.mxu0 %v12869
      %13183 = vmatmul.mubr.bf16.gmra.mxu0 %v12861
      %v13184 = vpop.f32.mrf.mxu0
      %v13185 = vadd.f32 0.0, %v13184
      %v13186 = vpop.f32.mrf.mxu0
      %v13187 = vpop.f32.mrf.mxu0
      %v13188 = vadd.f32 0.0, %v13187
      %v13189 = vpop.f32.mrf.mxu0
      %13190 = vmatprep.mubr.bf16.mxu0 %v12885
      %13191 = vmatmul.mubr.bf16.gmra.mxu0 %v12877
      %v13192 = vpop.f32.mrf.mxu0
      %v13193 = vadd.f32 0.0, %v13192
      %v13194 = vpop.f32.mrf.mxu0
      %v13195 = vpop.f32.mrf.mxu0
      %v13196 = vadd.f32 0.0, %v13195
      %v13197 = vpop.f32.mrf.mxu0
      %13198 = vmatprep.mubr.bf16.mxu0 %v12901
      %13199 = vmatmul.mubr.bf16.gmra.mxu0 %v12893
      %v13200 = vpop.f32.mrf.mxu0
      %v13201 = vadd.f32 0.0, %v13200
      %v13202 = vpop.f32.mrf.mxu0
      %v13203 = vpop.f32.mrf.mxu0
      %v13204 = vadd.f32 0.0, %v13203
      %v13205 = vpop.f32.mrf.mxu0
      %13206 = vmatprep.mubr.bf16.mxu0 %v12917
      %13207 = vmatmul.mubr.bf16.gmra.mxu0 %v12909
      %v13208 = vpop.f32.mrf.mxu0
      %v13209 = vadd.f32 0.0, %v13208
      %v13210 = vpop.f32.mrf.mxu0
      %v13211 = vpop.f32.mrf.mxu0
      %v13212 = vadd.f32 0.0, %v13211
      %v13213 = vpop.f32.mrf.mxu0
      %13214 = vmatprep.mubr.bf16.mxu0 %v12933
      %13215 = vmatmul.mubr.bf16.gmra.mxu0 %v12925
      %v13216 = vpop.f32.mrf.mxu0
      %v13217 = vadd.f32 0.0, %v13216
      %v13218 = vpop.f32.mrf.mxu0
      %v13219 = vpop.f32.mrf.mxu0
      %v13220 = vadd.f32 0.0, %v13219
      %v13221 = vpop.f32.mrf.mxu0
      %13222 = vmatprep.mubr.bf16.mxu0 %v12949
      %13223 = vmatmul.mubr.bf16.gmra.mxu0 %v12941
      %v13224 = vpop.f32.mrf.mxu0
      %v13225 = vadd.f32 0.0, %v13224
      %v13226 = vpop.f32.mrf.mxu0
      %v13227 = vpop.f32.mrf.mxu0
      %v13228 = vadd.f32 0.0, %v13227
      %v13229 = vpop.f32.mrf.mxu0
      %13230 = vmatprep.mubr.bf16.mxu0 %v12965
      %13231 = vmatmul.mubr.bf16.gmra.mxu0 %v12957
      %v13232 = vpop.f32.mrf.mxu0
      %v13233 = vadd.f32 0.0, %v13232
      %v13234 = vpop.f32.mrf.mxu0
      %v13235 = vpop.f32.mrf.mxu0
      %v13236 = vadd.f32 0.0, %v13235
      %v13237 = vpop.f32.mrf.mxu0
      %13238 = vmatprep.mubr.bf16.mxu0 %v12981
      %13239 = vmatmul.mubr.bf16.gmra.mxu0 %v12973
      %v13240 = vpop.f32.mrf.mxu0
      %v13241 = vadd.f32 0.0, %v13240
      %v13242 = vpop.f32.mrf.mxu0
      %v13243 = vpop.f32.mrf.mxu0
      %v13244 = vadd.f32 0.0, %v13243
      %v13245 = vpop.f32.mrf.mxu0
      %13246 = vmatprep.mubr.bf16.mxu0 %v12997
      %13247 = vmatmul.mubr.bf16.gmra.mxu0 %v12989
      %v13248 = vpop.f32.mrf.mxu0
      %v13249 = vadd.f32 0.0, %v13248
      %v13250 = vpop.f32.mrf.mxu0
      %v13251 = vpop.f32.mrf.mxu0
      %v13252 = vadd.f32 0.0, %v13251
      %v13253 = vpop.f32.mrf.mxu0
      %13254 = vmatprep.mubr.bf16.mxu0 %v13013
      %13255 = vmatmul.mubr.bf16.gmra.mxu0 %v13005
      %v13256 = vpop.f32.mrf.mxu0
      %v13257 = vadd.f32 0.0, %v13256
      %v13258 = vpop.f32.mrf.mxu0
      %v13259 = vpop.f32.mrf.mxu0
      %v13260 = vadd.f32 0.0, %v13259
      %v13261 = vpop.f32.mrf.mxu0
      %13262 = vdwg.mxu0
      %v13263 = vadd.f32 %v12632, %v13169
      %v13264 = vadd.f32 %v12633, %v13172
      %v13265 = vadd.f32 %v12634, %v13177
      %v13266 = vadd.f32 %v12635, %v13180
      %v13267 = vadd.f32 %v12636, %v13185
      %v13268 = vadd.f32 %v12637, %v13188
      %v13269 = vadd.f32 %v12638, %v13193
      %v13270 = vadd.f32 %v12639, %v13196
      %v13271 = vadd.f32 %v12640, %v13201
      %v13272 = vadd.f32 %v12641, %v13204
      %v13273 = vadd.f32 %v12642, %v13209
      %v13274 = vadd.f32 %v12643, %v13212
      %v13275 = vadd.f32 %v12644, %v13217
      %v13276 = vadd.f32 %v12645, %v13220
      %v13277 = vadd.f32 %v12646, %v13225
      %v13278 = vadd.f32 %v12647, %v13228
      %v13279 = vadd.f32 %v12648, %v13233
      %v13280 = vadd.f32 %v12649, %v13236
      %v13281 = vadd.f32 %v12650, %v13241
      %v13282 = vadd.f32 %v12651, %v13244
      %v13283 = vadd.f32 %v12652, %v13249
      %v13284 = vadd.f32 %v12653, %v13252
      %v13285 = vadd.f32 %v12654, %v13257
      %v13286 = vadd.f32 %v12655, %v13260
      %v13287 = vld [vmem:[#allocation3 + $0x8] sm:$0xee]
      %v13288 = vld [vmem:[%s5 + $0x500] sm:$0xf]
      %v13289 = vld [vmem:[%s5 + $0x504] sm:$0xf]
      %v13290 = vld [vmem:[%s5 + $0x508] sm:$0xf]
      %v13291 = vld [vmem:[%s5 + $0x50c] sm:$0xf]
      %v13292 = vld [vmem:[%s5 + $0x510] sm:$0xf]
      %v13293 = vld [vmem:[%s5 + $0x514] sm:$0xf]
      %v13294 = vld [vmem:[%s5 + $0x518] sm:$0xf]
      %v13295 = vld [vmem:[%s5 + $0x51c] sm:$0xf]
      %v13296 = vld [vmem:[%s5 + $0x520] sm:$0xf]
      %v13297 = vld [vmem:[%s5 + $0x524] sm:$0xf]
      %v13298 = vld [vmem:[%s5 + $0x528] sm:$0xf]
      %v13299 = vld [vmem:[%s5 + $0x52c] sm:$0xf]
      %v13300 = vld [vmem:[%s5 + $0x530] sm:$0xf]
      %v13301 = vld [vmem:[%s5 + $0x534] sm:$0xf]
      %v13302 = vld [vmem:[%s5 + $0x538] sm:$0xf]
      %v13303 = vld [vmem:[%s5 + $0x53c] sm:$0xf]
      %v13304 = vld [vmem:[%s5 + $0x540] sm:$0xf]
      %v13305 = vld [vmem:[%s5 + $0x544] sm:$0xf]
      %v13306 = vld [vmem:[%s5 + $0x548] sm:$0xf]
      %v13307 = vld [vmem:[%s5 + $0x54c] sm:$0xf]
      %v13308 = vld [vmem:[%s5 + $0x550] sm:$0xf]
      %v13309 = vld [vmem:[%s5 + $0x554] sm:$0xf]
      %v13310 = vld [vmem:[%s5 + $0x558] sm:$0xf]
      %v13311 = vld [vmem:[%s5 + $0x55c] sm:$0xf]
      %v13312 = vld [vmem:[%s5 + $0x560] sm:$0xf]
      %v13313 = vld [vmem:[%s5 + $0x564] sm:$0xf]
      %v13314 = vld [vmem:[%s5 + $0x568] sm:$0xf]
      %v13315 = vld [vmem:[%s5 + $0x56c] sm:$0xf]
      %v13316 = vld [vmem:[%s5 + $0x570] sm:$0xf]
      %v13317 = vld [vmem:[%s5 + $0x574] sm:$0xf]
      %v13318 = vld [vmem:[%s5 + $0x578] sm:$0xf]
      %v13319 = vld [vmem:[%s5 + $0x57c] sm:$0xf]
      %v13321 = vunpack.c.l.b16 %v13287
      %v13322 = vunpack.c.h.b16 %v13287
      %v13323 = vpack.c.b16 %v12740, %v13321
      %v13324 = vpack.c.b16 %v12741, %v13322
      %v13325 = vrot.slane %v13323, 1
      %v13326 = vrot.slane %v12790, 1
      %v13327 = vsel %vm3975, %v13325, %v13326
      %v13328 = vrot.slane %v13324, 1
      %v13329 = vrot.slane %v12791, 1
      %v13330 = vsel %vm3975, %v13328, %v13329
      %v13331 = vrot.slane %v12792, 1
      %v13332 = vsel %vm3975, %v13326, %v13331
      %v13333 = vrot.slane %v12793, 1
      %v13334 = vsel %vm3975, %v13329, %v13333
      %v13335 = vrot.slane %v12794, 1
      %v13336 = vsel %vm3975, %v13331, %v13335
      %v13337 = vrot.slane %v12795, 1
      %v13338 = vsel %vm3975, %v13333, %v13337
      %v13339 = vrot.slane %v12796, 1
      %v13340 = vsel %vm3975, %v13335, %v13339
      %v13341 = vrot.slane %v12797, 1
      %v13342 = vsel %vm3975, %v13337, %v13341
      %v13343 = vrot.slane %v12798, 1
      %v13344 = vsel %vm3975, %v13339, %v13343
      %v13345 = vrot.slane %v12799, 1
      %v13346 = vsel %vm3975, %v13341, %v13345
      %v13347 = vrot.slane %v12800, 1
      %v13348 = vsel %vm3975, %v13343, %v13347
      %v13349 = vrot.slane %v12801, 1
      %v13350 = vsel %vm3975, %v13345, %v13349
      %v13351 = vrot.slane %v12802, 1
      %v13352 = vsel %vm3975, %v13347, %v13351
      %v13353 = vrot.slane %v12803, 1
      %v13354 = vsel %vm3975, %v13349, %v13353
      %v13355 = vrot.slane %v12804, 1
      %v13356 = vsel %vm3975, %v13351, %v13355
      %v13357 = vrot.slane %v12805, 1
      %v13358 = vsel %vm3975, %v13353, %v13357
      %v13359 = vrot.slane %v12806, 1
      %v13360 = vsel %vm3975, %v13355, %v13359
      %v13361 = vrot.slane %v12807, 1
      %v13362 = vsel %vm3975, %v13357, %v13361
      %v13363 = vrot.slane %v12808, 1
      %v13364 = vsel %vm3975, %v13359, %v13363
      %v13365 = vrot.slane %v12809, 1
      %v13366 = vsel %vm3975, %v13361, %v13365
      %v13367 = vrot.slane %v12810, 1
      %v13368 = vsel %vm3975, %v13363, %v13367
      %v13369 = vrot.slane %v12811, 1
      %v13370 = vsel %vm3975, %v13365, %v13369
      %v13371 = vrot.slane %v12812, 1
      %v13372 = vsel %vm3975, %v13367, %v13371
      %v13373 = vrot.slane %v12813, 1
      %v13374 = vsel %vm3975, %v13369, %v13373
      %v13431 = vunpack.c.l.b16 %v13288
      %v13432 = vunpack.c.l.b16 %v13289
      %v13433 = vunpack.c.l.b16 %v13290
      %v13434 = vunpack.c.l.b16 %v13291
      %v13435 = vunpack.c.l.b16 %v13292
      %v13436 = vunpack.c.l.b16 %v13293
      %v13437 = vunpack.c.l.b16 %v13294
      %v13438 = vunpack.c.l.b16 %v13295
      %v13439 = vunpack.c.l.b16 %v13296
      %v13440 = vunpack.c.l.b16 %v13297
      %v13441 = vunpack.c.l.b16 %v13298
      %v13442 = vunpack.c.l.b16 %v13299
      %v13443 = vunpack.c.l.b16 %v13300
      %v13444 = vunpack.c.l.b16 %v13301
      %v13445 = vunpack.c.l.b16 %v13302
      %v13446 = vunpack.c.l.b16 %v13303
      %v13447 = vunpack.c.l.b16 %v13304
      %v13448 = vunpack.c.l.b16 %v13305
      %v13449 = vunpack.c.l.b16 %v13306
      %v13450 = vunpack.c.l.b16 %v13307
      %v13451 = vunpack.c.l.b16 %v13308
      %v13452 = vunpack.c.l.b16 %v13309
      %v13453 = vunpack.c.l.b16 %v13310
      %v13454 = vunpack.c.l.b16 %v13311
      %v13455 = vunpack.c.l.b16 %v13312
      %v13456 = vunpack.c.l.b16 %v13313
      %v13457 = vunpack.c.l.b16 %v13314
      %v13458 = vunpack.c.l.b16 %v13315
      %v13459 = vunpack.c.l.b16 %v13316
      %v13460 = vunpack.c.l.b16 %v13317
      %v13461 = vunpack.c.l.b16 %v13318
      %v13462 = vunpack.c.l.b16 %v13319
      %v13463 = vpack.c.b16 %v13432, %v13431
      %v13464 = vpack.c.b16 %v13434, %v13433
      %v13465 = vpack.c.b16 %v13436, %v13435
      %v13466 = vpack.c.b16 %v13438, %v13437
      %v13467 = vpack.c.b16 %v13440, %v13439
      %v13468 = vpack.c.b16 %v13442, %v13441
      %v13469 = vpack.c.b16 %v13444, %v13443
      %v13470 = vpack.c.b16 %v13446, %v13445
      %v13471 = vpack.c.b16 %v13448, %v13447
      %v13472 = vpack.c.b16 %v13450, %v13449
      %v13473 = vpack.c.b16 %v13452, %v13451
      %v13474 = vpack.c.b16 %v13454, %v13453
      %v13475 = vpack.c.b16 %v13456, %v13455
      %v13476 = vpack.c.b16 %v13458, %v13457
      %v13477 = vpack.c.b16 %v13460, %v13459
      %v13478 = vpack.c.b16 %v13462, %v13461
      %13495 = vmatprep.subr.bf16.mxu0 0
      %13496 = vmatpush1.bf16.msra.mxu0 %v13470
      %13497 = vmatprep.subr.bf16.mxu0 0
      %13498 = vmatpush1.bf16.msra.mxu0 %v13469
      %13499 = vmatprep.subr.bf16.mxu0 0
      %13500 = vmatpush1.bf16.msra.mxu0 %v13468
      %13501 = vmatprep.subr.bf16.mxu0 0
      %13502 = vmatpush1.bf16.msra.mxu0 %v13467
      %13503 = vmatprep.subr.bf16.mxu0 0
      %13504 = vmatpush1.bf16.msra.mxu0 %v13466
      %13505 = vmatprep.subr.bf16.mxu0 0
      %13506 = vmatpush1.bf16.msra.mxu0 %v13465
      %13507 = vmatprep.subr.bf16.mxu0 0
      %13508 = vmatpush1.bf16.msra.mxu0 %v13464
      %13509 = vmatprep.subr.bf16.mxu0 0
      %13510 = vmatpush1.bf16.msra.mxu0 %v13463
      %13511 = vmatprep.subr.bf16.mxu0 0
      %13512 = vmatpush2.bf16.msra.mxu0 %v13478
      %13513 = vmatprep.subr.bf16.mxu0 0
      %13514 = vmatpush2.bf16.msra.mxu0 %v13477
      %13515 = vmatprep.subr.bf16.mxu0 0
      %13516 = vmatpush2.bf16.msra.mxu0 %v13476
      %13517 = vmatprep.subr.bf16.mxu0 0
      %13518 = vmatpush2.bf16.msra.mxu0 %v13475
      %13519 = vmatprep.subr.bf16.mxu0 0
      %13520 = vmatpush2.bf16.msra.mxu0 %v13474
      %13521 = vmatprep.subr.bf16.mxu0 0
      %13522 = vmatpush2.bf16.msra.mxu0 %v13473
      %13523 = vmatprep.subr.bf16.mxu0 0
      %13524 = vmatpush2.bf16.msra.mxu0 %v13472
      %13525 = vmatprep.subr.bf16.mxu0 0
      %13526 = vmatpush2.bf16.msra.mxu0 %v13471
      %13527 = vmatprep.mubr.bf16.mxu0 %v13330
      %13528 = vmatmul.mubr.bf16.gmra.mxu0 %v13327
      %v13529 = vpop.f32.mrf.mxu0
      %v13530 = vadd.f32 0.0, %v13529
      %v13531 = vpop.f32.mrf.mxu0
      %v13532 = vpop.f32.mrf.mxu0
      %v13533 = vadd.f32 0.0, %v13532
      %v13534 = vpop.f32.mrf.mxu0
      %13535 = vmatprep.mubr.bf16.mxu0 %v13334
      %13536 = vmatmul.mubr.bf16.gmra.mxu0 %v13332
      %v13537 = vpop.f32.mrf.mxu0
      %v13538 = vadd.f32 0.0, %v13537
      %v13539 = vpop.f32.mrf.mxu0
      %v13540 = vpop.f32.mrf.mxu0
      %v13541 = vadd.f32 0.0, %v13540
      %v13542 = vpop.f32.mrf.mxu0
      %13543 = vmatprep.mubr.bf16.mxu0 %v13338
      %13544 = vmatmul.mubr.bf16.gmra.mxu0 %v13336
      %v13545 = vpop.f32.mrf.mxu0
      %v13546 = vadd.f32 0.0, %v13545
      %v13547 = vpop.f32.mrf.mxu0
      %v13548 = vpop.f32.mrf.mxu0
      %v13549 = vadd.f32 0.0, %v13548
      %v13550 = vpop.f32.mrf.mxu0
      %13551 = vmatprep.mubr.bf16.mxu0 %v13342
      %13552 = vmatmul.mubr.bf16.gmra.mxu0 %v13340
      %v13553 = vpop.f32.mrf.mxu0
      %v13554 = vadd.f32 0.0, %v13553
      %v13555 = vpop.f32.mrf.mxu0
      %v13556 = vpop.f32.mrf.mxu0
      %v13557 = vadd.f32 0.0, %v13556
      %v13558 = vpop.f32.mrf.mxu0
      %13559 = vmatprep.mubr.bf16.mxu0 %v13346
      %13560 = vmatmul.mubr.bf16.gmra.mxu0 %v13344
      %v13561 = vpop.f32.mrf.mxu0
      %v13562 = vadd.f32 0.0, %v13561
      %v13563 = vpop.f32.mrf.mxu0
      %v13564 = vpop.f32.mrf.mxu0
      %v13565 = vadd.f32 0.0, %v13564
      %v13566 = vpop.f32.mrf.mxu0
      %13567 = vmatprep.mubr.bf16.mxu0 %v13350
      %13568 = vmatmul.mubr.bf16.gmra.mxu0 %v13348
      %v13569 = vpop.f32.mrf.mxu0
      %v13570 = vadd.f32 0.0, %v13569
      %v13571 = vpop.f32.mrf.mxu0
      %v13572 = vpop.f32.mrf.mxu0
      %v13573 = vadd.f32 0.0, %v13572
      %v13574 = vpop.f32.mrf.mxu0
      %13575 = vmatprep.mubr.bf16.mxu0 %v13354
      %13576 = vmatmul.mubr.bf16.gmra.mxu0 %v13352
      %v13577 = vpop.f32.mrf.mxu0
      %v13578 = vadd.f32 0.0, %v13577
      %v13579 = vpop.f32.mrf.mxu0
      %v13580 = vpop.f32.mrf.mxu0
      %v13581 = vadd.f32 0.0, %v13580
      %v13582 = vpop.f32.mrf.mxu0
      %13583 = vmatprep.mubr.bf16.mxu0 %v13358
      %13584 = vmatmul.mubr.bf16.gmra.mxu0 %v13356
      %v13585 = vpop.f32.mrf.mxu0
      %v13586 = vadd.f32 0.0, %v13585
      %v13587 = vpop.f32.mrf.mxu0
      %v13588 = vpop.f32.mrf.mxu0
      %v13589 = vadd.f32 0.0, %v13588
      %v13590 = vpop.f32.mrf.mxu0
      %13591 = vmatprep.mubr.bf16.mxu0 %v13362
      %13592 = vmatmul.mubr.bf16.gmra.mxu0 %v13360
      %v13593 = vpop.f32.mrf.mxu0
      %v13594 = vadd.f32 0.0, %v13593
      %v13595 = vpop.f32.mrf.mxu0
      %v13596 = vpop.f32.mrf.mxu0
      %v13597 = vadd.f32 0.0, %v13596
      %v13598 = vpop.f32.mrf.mxu0
      %13599 = vmatprep.mubr.bf16.mxu0 %v13366
      %13600 = vmatmul.mubr.bf16.gmra.mxu0 %v13364
      %v13601 = vpop.f32.mrf.mxu0
      %v13602 = vadd.f32 0.0, %v13601
      %v13603 = vpop.f32.mrf.mxu0
      %v13604 = vpop.f32.mrf.mxu0
      %v13605 = vadd.f32 0.0, %v13604
      %v13606 = vpop.f32.mrf.mxu0
      %13607 = vmatprep.mubr.bf16.mxu0 %v13370
      %13608 = vmatmul.mubr.bf16.gmra.mxu0 %v13368
      %v13609 = vpop.f32.mrf.mxu0
      %v13610 = vadd.f32 0.0, %v13609
      %v13611 = vpop.f32.mrf.mxu0
      %v13612 = vpop.f32.mrf.mxu0
      %v13613 = vadd.f32 0.0, %v13612
      %v13614 = vpop.f32.mrf.mxu0
      %13615 = vmatprep.mubr.bf16.mxu0 %v13374
      %13616 = vmatmul.mubr.bf16.gmra.mxu0 %v13372
      %v13617 = vpop.f32.mrf.mxu0
      %v13618 = vadd.f32 0.0, %v13617
      %v13619 = vpop.f32.mrf.mxu0
      %v13620 = vpop.f32.mrf.mxu0
      %v13621 = vadd.f32 0.0, %v13620
      %v13622 = vpop.f32.mrf.mxu0
      %13623 = vdwg.mxu0
      %v13624 = vadd.f32 %v13263, %v13530
      %v13625 = vadd.f32 %v13264, %v13533
      %v13626 = vadd.f32 %v13265, %v13538
      %v13627 = vadd.f32 %v13266, %v13541
      %v13628 = vadd.f32 %v13267, %v13546
      %v13629 = vadd.f32 %v13268, %v13549
      %v13630 = vadd.f32 %v13269, %v13554
      %v13631 = vadd.f32 %v13270, %v13557
      %v13632 = vadd.f32 %v13271, %v13562
      %v13633 = vadd.f32 %v13272, %v13565
      %v13634 = vadd.f32 %v13273, %v13570
      %v13635 = vadd.f32 %v13274, %v13573
      %v13636 = vadd.f32 %v13275, %v13578
      %v13637 = vadd.f32 %v13276, %v13581
      %v13638 = vadd.f32 %v13277, %v13586
      %v13639 = vadd.f32 %v13278, %v13589
      %v13640 = vadd.f32 %v13279, %v13594
      %v13641 = vadd.f32 %v13280, %v13597
      %v13642 = vadd.f32 %v13281, %v13602
      %v13643 = vadd.f32 %v13282, %v13605
      %v13644 = vadd.f32 %v13283, %v13610
      %v13645 = vadd.f32 %v13284, %v13613
      %v13646 = vadd.f32 %v13285, %v13618
      %v13647 = vadd.f32 %v13286, %v13621
      %v13648 = vld [vmem:[%s6] sm:$0x1]
      %v13650 = vlaneseq
      %v13651 = vshrl.u32 %v13650, 7
      %v13652 = vsub.s32 0, %v13651
      %v13653 = vrot.slane %v13648, %v13652
      %v13655 = vadd.f32 %v13624, %v13653
      %v13656 = vadd.f32 %v13625, %v13653
      %v13657 = vadd.f32 %v13626, %v13653
      %v13658 = vadd.f32 %v13627, %v13653
      %v13659 = vadd.f32 %v13628, %v13653
      %v13660 = vadd.f32 %v13629, %v13653
      %v13661 = vadd.f32 %v13630, %v13653
      %v13662 = vadd.f32 %v13631, %v13653
      %v13663 = vadd.f32 %v13632, %v13653
      %v13664 = vadd.f32 %v13633, %v13653
      %v13665 = vadd.f32 %v13634, %v13653
      %v13666 = vadd.f32 %v13635, %v13653
      %v13667 = vadd.f32 %v13636, %v13653
      %v13668 = vadd.f32 %v13637, %v13653
      %v13669 = vadd.f32 %v13638, %v13653
      %v13670 = vadd.f32 %v13639, %v13653
      %v13671 = vadd.f32 %v13640, %v13653
      %v13672 = vadd.f32 %v13641, %v13653
      %v13673 = vadd.f32 %v13642, %v13653
      %v13674 = vadd.f32 %v13643, %v13653
      %v13675 = vadd.f32 %v13644, %v13653
      %v13676 = vadd.f32 %v13645, %v13653
      %v13677 = vadd.f32 %v13646, %v13653
      %v13678 = vadd.f32 %v13647, %v13653
      %vm13679 = vcmp.gt.f32.partialorder %v13655, 0.0
      %vm13680 = vcmp.gt.f32.partialorder %v13656, 0.0
      %vm13681 = vcmp.gt.f32.partialorder %v13657, 0.0
      %vm13682 = vcmp.gt.f32.partialorder %v13658, 0.0
      %vm13683 = vcmp.gt.f32.partialorder %v13659, 0.0
      %vm13684 = vcmp.gt.f32.partialorder %v13660, 0.0
      %vm13685 = vcmp.gt.f32.partialorder %v13661, 0.0
      %vm13686 = vcmp.gt.f32.partialorder %v13662, 0.0
      %vm13687 = vcmp.gt.f32.partialorder %v13663, 0.0
      %vm13688 = vcmp.gt.f32.partialorder %v13664, 0.0
      %vm13689 = vcmp.gt.f32.partialorder %v13665, 0.0
      %vm13690 = vcmp.gt.f32.partialorder %v13666, 0.0
      %vm13691 = vcmp.gt.f32.partialorder %v13667, 0.0
      %vm13692 = vcmp.gt.f32.partialorder %v13668, 0.0
      %vm13693 = vcmp.gt.f32.partialorder %v13669, 0.0
      %vm13694 = vcmp.gt.f32.partialorder %v13670, 0.0
      %vm13695 = vcmp.gt.f32.partialorder %v13671, 0.0
      %vm13696 = vcmp.gt.f32.partialorder %v13672, 0.0
      %vm13697 = vcmp.gt.f32.partialorder %v13673, 0.0
      %vm13698 = vcmp.gt.f32.partialorder %v13674, 0.0
      %vm13699 = vcmp.gt.f32.partialorder %v13675, 0.0
      %vm13700 = vcmp.gt.f32.partialorder %v13676, 0.0
      %vm13701 = vcmp.gt.f32.partialorder %v13677, 0.0
      %vm13702 = vcmp.gt.f32.partialorder %v13678, 0.0
      %v13703 = vmul.f32 %v13655, 0.1
      %v13704 = vmul.f32 %v13656, 0.1
      %v13705 = vmul.f32 %v13657, 0.1
      %v13706 = vmul.f32 %v13658, 0.1
      %v13707 = vmul.f32 %v13659, 0.1
      %v13708 = vmul.f32 %v13660, 0.1
      %v13709 = vmul.f32 %v13661, 0.1
      %v13710 = vmul.f32 %v13662, 0.1
      %v13711 = vmul.f32 %v13663, 0.1
      %v13712 = vmul.f32 %v13664, 0.1
      %v13713 = vmul.f32 %v13665, 0.1
      %v13714 = vmul.f32 %v13666, 0.1
      %v13715 = vmul.f32 %v13667, 0.1
      %v13716 = vmul.f32 %v13668, 0.1
      %v13717 = vmul.f32 %v13669, 0.1
      %v13718 = vmul.f32 %v13670, 0.1
      %v13719 = vmul.f32 %v13671, 0.1
      %v13720 = vmul.f32 %v13672, 0.1
      %v13721 = vmul.f32 %v13673, 0.1
      %v13722 = vmul.f32 %v13674, 0.1
      %v13723 = vmul.f32 %v13675, 0.1
      %v13724 = vmul.f32 %v13676, 0.1
      %v13725 = vmul.f32 %v13677, 0.1
      %v13726 = vmul.f32 %v13678, 0.1
      %v13727 = vsel %vm13679, %v13655, %v13703
      %v13728 = vsel %vm13680, %v13656, %v13704
      %v13729 = vsel %vm13681, %v13657, %v13705
      %v13730 = vsel %vm13682, %v13658, %v13706
      %v13731 = vsel %vm13683, %v13659, %v13707
      %v13732 = vsel %vm13684, %v13660, %v13708
      %v13733 = vsel %vm13685, %v13661, %v13709
      %v13734 = vsel %vm13686, %v13662, %v13710
      %v13735 = vsel %vm13687, %v13663, %v13711
      %v13736 = vsel %vm13688, %v13664, %v13712
      %v13737 = vsel %vm13689, %v13665, %v13713
      %v13738 = vsel %vm13690, %v13666, %v13714
      %v13739 = vsel %vm13691, %v13667, %v13715
      %v13740 = vsel %vm13692, %v13668, %v13716
      %v13741 = vsel %vm13693, %v13669, %v13717
      %v13742 = vsel %vm13694, %v13670, %v13718
      %v13743 = vsel %vm13695, %v13671, %v13719
      %v13744 = vsel %vm13696, %v13672, %v13720
      %v13745 = vsel %vm13697, %v13673, %v13721
      %v13746 = vsel %vm13698, %v13674, %v13722
      %v13747 = vsel %vm13699, %v13675, %v13723
      %v13748 = vsel %vm13700, %v13676, %v13724
      %v13749 = vsel %vm13701, %v13677, %v13725
      %v13750 = vsel %vm13702, %v13678, %v13726
      %13751 = vst [vmem:[%s283] sm:$0xff] %v13727
      %13752 = vst [vmem:[%s283 + $0x8] sm:$0xff] %v13728
      %13753 = vst [vmem:[%s283 + $0x10] sm:$0xff] %v13729
      %13754 = vst [vmem:[%s283 + $0x18] sm:$0xff] %v13730
      %13755 = vst [vmem:[%s283 + $0x20] sm:$0xff] %v13731
      %13756 = vst [vmem:[%s283 + $0x28] sm:$0xff] %v13732
      %13757 = vst [vmem:[%s283 + $0x30] sm:$0xff] %v13733
      %13758 = vst [vmem:[%s283 + $0x38] sm:$0xff] %v13734
      %13759 = vst [vmem:[%s283 + $0x40] sm:$0xff] %v13735
      %13760 = vst [vmem:[%s283 + $0x48] sm:$0xff] %v13736
      %13761 = vst [vmem:[%s283 + $0x50] sm:$0xff] %v13737
      %13762 = vst [vmem:[%s283 + $0x58] sm:$0xff] %v13738
      %13763 = vst [vmem:[%s283 + $0x60] sm:$0xff] %v13739
      %13764 = vst [vmem:[%s283 + $0x68] sm:$0xff] %v13740
      %13765 = vst [vmem:[%s283 + $0x70] sm:$0xff] %v13741
      %13766 = vst [vmem:[%s283 + $0x78] sm:$0xff] %v13742
      %13767 = vst [vmem:[%s283 + $0x80] sm:$0xff] %v13743
      %13768 = vst [vmem:[%s283 + $0x88] sm:$0xff] %v13744
      %13769 = vst [vmem:[%s283 + $0x90] sm:$0xff] %v13745
      %13770 = vst [vmem:[%s283 + $0x98] sm:$0xff] %v13746
      %13771 = vst [vmem:[%s283 + $0xa0] sm:$0xff] %v13747
      %13772 = vst [vmem:[%s283 + $0xa8] sm:$0xff] %v13748
      %13773 = vst [vmem:[%s283 + $0xb0] sm:$0xff] %v13749
      %13774 = vst [vmem:[%s283 + $0xb8] sm:$0xff] %v13750
      %s13775 = smul.u32 24, %s18
      %p13776 = scmp.lt.s32.totalorder %s13775, 47
      %s13777 = scalar_select %p13776, %s13775, 47
      %s13778 = smul.addr %s13777, 8
      %s13779 = scalar_lea.vmem %s7, %s13778
      // Predicated region
      $region49: #{conv_block_forward.1} parent=47 // pred_check
        %p13780 = pneg %p188
      $region50: #{conv_block_forward.1} parent=47 // pred_check_branch
        %13782 = sbr.rel (%p13780) target = $region52
      $region51: #{conv_block_forward.1} parent=47 // pred_region
        %s13783 = smul.u32 24, %s18
      $region52: #{conv_block_forward.1} parent=47 // pred_fallthru
        _
    $region48: #{conv_block_forward.1} parent=5 // pred_fallthru
      _
    %p13784 = scmp.le.s32.totalorder 2, %s13
    // Predicated region
    $region53: #{conv_block_forward.1} parent=5 // pred_check
      %p13785 = pneg %p13784
    $region54: #{conv_block_forward.1} parent=5 // pred_check_branch
      %13787 = sbr.rel (%p13785) target = $region56
    $region55: #{conv_block_forward.1} parent=5 // pred_region
      %s13788 = ssub.s32 %s13, 2
      // Predicated region
      $region57: #{conv_block_forward.1} parent=55 // pred_check
        %p13789 = pneg %p194
      $region58: #{conv_block_forward.1} parent=55 // pred_check_branch
        %13791 = sbr.rel (%p13789) target = $region60
      $region59: #{conv_block_forward.1} parent=55 // pred_region
        %s13792 = smul.u32 24, %s19
        %p13793 = scmp.lt.s32.totalorder %s13792, 47
        %s13794 = scalar_select %p13793, %s13792, 47
        %s13795 = smul.addr %s13794, 8
        %s13796 = scalar_lea.vmem %s7, %s13795
      $region60: #{conv_block_forward.1} parent=55 // pred_fallthru
        _
    $region56: #{conv_block_forward.1} parent=5 // pred_fallthru
      _
  $region6: #{conv_block_forward.1} parent=0 // loop_footer
    %s17 = sadd.s32 1, %s13
  $region7: #{conv_block_forward.1} parent=0 // loop_footer_branch
    %12 = sbr.rel target = $region3
  $region8: #{conv_block_forward.1} parent=0 // loop_exit
    _

</llo_original>
